<compile_context>
chip_gen: v5e
topology: v5e:2x2
jax: 0.10.0
libtpu: 0.0.40
codegen_flags: <defaults>
</compile_context>

<pallas_src>
import jax
import jax.numpy as jnp
from jax.experimental import pallas as pl
from jax.experimental.pallas import tpu as pltpu


def _round_up(x, m):
    return ((x + m - 1) // m) * m


# ----------------------- chip-generation heuristics -----------------------

def _device_kind():
    try:
        return jax.devices()[0].device_kind.lower()
    except Exception:
        return ""


_KIND = _device_kind()
# bf16 VALU/EUP exists on v6e/v7x; keep f32 feature expansion on v5e (and unknown chips).
_HAS_BF16_VPU = ("v6" in _KIND) or ("v7" in _KIND)
# Chips with 2 TensorCores per chip benefit from >=2 "parallel" grid steps per call.
_MULTI_TC = ("v7" in _KIND) or ("v4" in _KIND) or ("v5p" in _KIND)


# ----------------------- Pallas matmul kernel (conv hot path) -----------------------

def _matmul_kernel(a_ref, b_ref, o_ref):
    o_ref[...] = jnp.dot(a_ref[...], b_ref[...], preferred_element_type=jnp.float32)


def _pick_tile_m(Mp, multi_tc):
    # Largest power-of-two tile (<=512) dividing Mp.  Only force >=2 grid steps on
    # multi-TC chips; on single-TC v5e/v6e one full-M step avoids per-step overhead.
    cap = 512
    if multi_tc and Mp >= 32:
        cap = min(cap, Mp // 2)
    for t in (512, 256, 128, 64, 32, 16):
        if t <= cap and Mp % t == 0:
            return t
    return 16


def pallas_matmul(a, b):
    """a: (M, K), b: (K, N) -> (M, N) f32.  Operands in bf16, f32 MXU accumulation.
    K and N are zero-padded to multiples of 128 (unmasked loads + lane-dense stores),
    M to a multiple of 16 (native bf16 sublane tile)."""
    M, K = a.shape
    K2, N = b.shape
    assert K == K2
    if a.dtype != jnp.bfloat16:
        a = a.astype(jnp.bfloat16)
    if b.dtype != jnp.bfloat16:
        b = b.astype(jnp.bfloat16)
    Mp = _round_up(M, 16)
    Kp = _round_up(K, 128)
    Np = _round_up(N, 128)
    if (Mp, Kp) != (M, K):
        a = jnp.pad(a, ((0, Mp - M), (0, Kp - K)))
    if (Kp, Np) != (K, N):
        b = jnp.pad(b, ((0, Kp - K), (0, Np - N)))
    tm = _pick_tile_m(Mp, _MULTI_TC)
    out = pl.pallas_call(
        _matmul_kernel,
        out_shape=jax.ShapeDtypeStruct((Mp, Np), jnp.float32),
        grid_spec=pltpu.PrefetchScalarGridSpec(
            num_scalar_prefetch=0,
            grid=(Mp // tm,),
            in_specs=[
                pl.BlockSpec((tm, Kp), lambda i: (i, 0)),
                pl.BlockSpec((Kp, Np), lambda i: (0, 0)),   # resident weight block
            ],
            out_specs=pl.BlockSpec((tm, Np), lambda i: (i, 0)),
        ),
        compiler_params=pltpu.CompilerParams(dimension_semantics=("parallel",)),
    )(a, b)
    return out[:M, :N]


# ----------------------- Pallas KAN-convolution kernel -----------------------
# TODO(synk): KAN_Conv is not defined in the provided source; implemented following the
# Convolutional-KANs KANLinear semantics (SiLU base term + cubic B-spline term,
# grid_size=5, spline_order=3, grid range [-1, 1]) with deterministic synthetic weights;
# the standalone spline scaler / curve2coeff init is omitted.

_GRID_SIZE = 5
_SPLINE_ORDER = 3
_GRID_RANGE = (-1.0, 1.0)
_N_BASES = _GRID_SIZE + _SPLINE_ORDER  # 8 B-spline basis functions per input feature
_N_CONVS = 2                           # two parallel KAN kernels (kernel_size == 3 path)


def _bspline_grid():
    h = (_GRID_RANGE[1] - _GRID_RANGE[0]) / _GRID_SIZE
    n = _GRID_SIZE + 2 * _SPLINE_ORDER + 1
    return [_GRID_RANGE[0] - _SPLINE_ORDER * h + i * h for i in range(n)]


def _make_kan_kernel(feat_dtype):
    grid = _bspline_grid()
    n_knots = len(grid)            # 12
    n_b = n_knots - 1              # 11 order-0 bases

    def kernel(w_ref, x_ref, o_ref):
        # w_ref: (N_CONVS*9*(1+N_BASES),) f32 in SMEM (scalar reads broadcast over lanes)
        # x_ref: (9, tm, 128) per-channel 3x3 patches, one 128-lane channel chunk
        # o_ref: (N_CONVS, tm, 128) f32 — lane-dense, unmasked stores
        tm = x_ref.shape[1]
        cw = x_ref.shape[2]
        acc = [jnp.zeros((tm, cw), jnp.float32) for _ in range(_N_CONVS)]
        for k in range(9):
            xk = x_ref[k]
            xf = xk.astype(jnp.float32)
            silu = xf * jax.nn.sigmoid(xf)          # SiLU base activation (EUP)
            for n in range(_N_CONVS):
                acc[n] = acc[n] + w_ref[(n * 9 + k) * (1 + _N_BASES)] * silu
            # Spline feature expansion in feat_dtype (bf16 on v6e/v7x, f32 on v5e).
            xs = xk.astype(feat_dtype)
            # t_i = x - knot_i, computed once per tap (12 subs instead of ~54)
            t = [xs - grid[i] for i in range(n_knots)]
            # order-0 indicator bases (half-open intervals, matching efficient-kan)
            bases = [
                jnp.logical_and(t[i] >= 0, t[i + 1] < 0).astype(feat_dtype)
                for i in range(n_b)
            ]
            # In-place Cox-de Boor recursion with Python-precomputed reciprocals:
            # multiplies only, no tensor divides on the long-latency path.
            for d in range(1, _SPLINE_ORDER + 1):
                for i in range(n_b - d):
                    inv_l = 1.0 / (grid[i + d] - grid[i])
                    neg_inv_r = -1.0 / (grid[i + d + 1] - grid[i + 1])
                    bases[i] = (t[i] * inv_l) * bases[i] + \
                               (t[i + d + 1] * neg_inv_r) * bases[i + 1]
            for b in range(_N_BASES):
                for n in range(_N_CONVS):
                    acc[n] = acc[n] + w_ref[(n * 9 + k) * (1 + _N_BASES) + 1 + b] * bases[b]
        for n in range(_N_CONVS):
            o_ref[n, :, :] = acc[n]
    return kernel


def pallas_kan_conv_apply(patches, w_flat, feat_dtype):
    """patches: (9, M, C) per-channel patches (C on lanes);
    w_flat: (N_CONVS*9*(1+N_BASES),) f32 -> output (N_CONVS, M, C) f32."""
    KK, M, C = patches.shape
    assert KK == 9
    Cp = _round_up(C, 128)
    if Cp != C:
        patches = jnp.pad(patches, ((0, 0), (0, 0), (0, Cp - C)))
    # Channel axis is chunked into 128-lane slabs inside the kernel, so the row tile
    # can grow (16 f32 / 32 bf16) without blowing the vreg budget; the 2-D grid also
    # gives >=2 "parallel" steps for v7x's dual TensorCores even when M is tiny.
    row_base = 16 if patches.dtype == jnp.bfloat16 else 8
    row_pref = 32 if feat_dtype == jnp.bfloat16 else 16
    tm = min(row_pref, _round_up(M, row_base))
    Mp = _round_up(M, tm)
    if Mp != M:
        patches = jnp.pad(patches, ((0, 0), (0, Mp - M), (0, 0)))
    out = pl.pallas_call(
        _make_kan_kernel(feat_dtype),
        out_shape=jax.ShapeDtypeStruct((_N_CONVS, Mp, Cp), jnp.float32),
        grid_spec=pltpu.PrefetchScalarGridSpec(
            num_scalar_prefetch=0,
            grid=(Mp // tm, Cp // 128),
            in_specs=[
                pl.BlockSpec(memory_space=pltpu.MemorySpace.SMEM),   # tiny weight table
                pl.BlockSpec((KK, tm, 128), lambda i, j: (0, i, j)),
            ],
            out_specs=pl.BlockSpec((_N_CONVS, tm, 128), lambda i, j: (0, i, j)),
        ),
        compiler_params=pltpu.CompilerParams(
            dimension_semantics=("parallel", "parallel")),
    )(w_flat, patches)
    return out[:, :M, :C]


# ----------------------- JAX glue (im2col, BN, pooling) -----------------------

def im2col(x, kh, kw, stride, pad):
    B, H, W, C = x.shape
    xp = jnp.pad(x, ((0, 0), (pad, pad), (pad, pad), (0, 0)))
    OH = (H + 2 * pad - kh) // stride + 1
    OW = (W + 2 * pad - kw) // stride + 1
    cols = []
    for i in range(kh):
        for j in range(kw):
            cols.append(xp[:, i:i + stride * OH:stride, j:j + stride * OW:stride, :])
    patches = jnp.stack(cols, axis=3)  # (B, OH, OW, KH*KW, C)
    return patches, (B, OH, OW)


def kan_im2col(x, kh, kw, stride, pad, dtype):
    """Per-channel patches in (KH*KW, B*OH*OW, C) layout (channels stay lane-minor)."""
    B, H, W, C = x.shape
    xp = jnp.pad(x.astype(dtype), ((0, 0), (pad, pad), (pad, pad), (0, 0)))
    OH = (H + 2 * pad - kh) // stride + 1
    OW = (W + 2 * pad - kw) // stride + 1
    cols = []
    for i in range(kh):
        for j in range(kw):
            cols.append(
                xp[:, i:i + stride * OH:stride, j:j + stride * OW:stride, :].reshape(B * OH * OW, C))
    return jnp.stack(cols, axis=0), (B, OH, OW)     # (KH*KW, M, C)


def conv2d_pallas(x, w, stride, pad):
    kh, kw, ic, oc = w.shape
    # Cast to bf16 *before* im2col: the duplicated patches are materialized in bf16
    # (half the HBM bytes) and no separate cast pass is needed inside pallas_matmul.
    patches, (B, OH, OW) = im2col(x.astype(jnp.bfloat16), kh, kw, stride, pad)
    a = patches.reshape(B * OH * OW, kh * kw * ic)
    out = pallas_matmul(a, w.reshape(kh * kw * ic, oc).astype(jnp.bfloat16))
    return out.reshape(B, OH, OW, oc)


def batchnorm_train(x, eps=1e-5):
    mean = jnp.mean(x, axis=(0, 1, 2), keepdims=True)
    var = jnp.mean(jnp.square(x - mean), axis=(0, 1, 2), keepdims=True)
    return (x - mean) * jax.lax.rsqrt(var + eps)


def relu(x):
    return jnp.maximum(x, 0.0)


def maxpool_3x3_s2_p1(x):
    return jax.lax.reduce_window(
        x, -jnp.inf, jax.lax.max,
        window_dimensions=(1, 3, 3, 1),
        window_strides=(1, 2, 2, 1),
        padding=((0, 0), (1, 1), (1, 1), (0, 0)))


def maxpool_k16(x):
    B, H, W, C = x.shape
    return x.reshape(B, H // 16, 16, W // 16, 16, C).max(axis=(2, 4))


# ----------------------- Parameter init (deterministic, synthetic) -----------------------

def init_params(key):
    keys = jax.random.split(key, 9)

    def kconv(k, kh, kw, ic, oc):
        # kaiming_normal_(mode='fan_out', nonlinearity='relu'): std = sqrt(2 / (oc*kh*kw))
        std = (2.0 / (oc * kh * kw)) ** 0.5
        return std * jax.random.normal(k, (kh, kw, ic, oc), jnp.float32)

    p = {
        "stem": kconv(keys[0], 7, 7, 3, 64),
        "l1_conv1": kconv(keys[1], 3, 3, 64, 64),
        "l1_conv2": kconv(keys[2], 3, 3, 64, 64),
        "l2_conv1": kconv(keys[3], 1, 1, 64, 128),
        "l2_conv2": kconv(keys[4], 3, 3, 128, 128),
        "l2_conv3": kconv(keys[5], 1, 1, 128, 256),
        "l2_down": kconv(keys[6], 1, 1, 64, 256),
    }
    # KAN conv: 2 parallel KAN kernels, each KANLinear(9 -> 1).
    # Flat weight layout: index (n, k, g) with g=0 the SiLU base weight, g=1..8 spline.
    kk = 9
    base_w = jax.random.normal(keys[7], (_N_CONVS, kk), jnp.float32) * (1.0 / kk ** 0.5)
    spline_w = jax.random.normal(keys[8], (_N_CONVS, kk, _N_BASES), jnp.float32) * 0.1
    p["kan_w"] = jnp.concatenate([base_w[:, :, None], spline_w], axis=2).reshape(-1)
    return p


# ----------------------- Full CNNKan forward -----------------------

def cnn_kan_forward(X_nchw, params):
    X = jnp.transpose(X_nchw, (0, 2, 3, 1)).astype(jnp.float32)   # -> NHWC
    # ---- mask branch ----
    mask0 = (X[:, :, :, 1] > -1.7).astype(jnp.float32)[..., None]  # (B,H,W,1)
    mask1 = maxpool_k16(mask0)                                     # (B,H/16,W/16,1)
    mh, mw = mask1.shape[1], mask1.shape[2]
    mask_sum = jnp.sum(mask1, axis=(1, 2, 3))                      # (B,)
    mask_rate = (mh * mw) / jnp.maximum(mask_sum, 1.0)             # guard div-by-zero

    # ---- ResConvKAN stem ----
    x = conv2d_pallas(X, params["stem"], stride=2, pad=3)
    x = relu(batchnorm_train(x))
    x = maxpool_3x3_s2_p1(x)

    # ---- layer1: BasicBlock(64 -> 64, stride 1, no downsample) ----
    identity = x
    out = conv2d_pallas(x, params["l1_conv1"], 1, 1)
    out = relu(batchnorm_train(out))
    out = conv2d_pallas(out, params["l1_conv2"], 1, 1)
    out = batchnorm_train(out)
    x = relu(out + identity)

    # ---- layer2: Bottleneck(64 -> 256, stride 2, 1x1 downsample) ----
    identity = x
    out = conv2d_pallas(x, params["l2_conv1"], 1, 0)
    out = relu(batchnorm_train(out))
    out = conv2d_pallas(out, params["l2_conv2"], 2, 1)
    out = relu(batchnorm_train(out))
    out = conv2d_pallas(out, params["l2_conv3"], 1, 0)
    out = batchnorm_train(out)
    identity = batchnorm_train(conv2d_pallas(identity, params["l2_down"], 2, 0))
    x = relu(out + identity)                                       # (B, H/8, W/8, 256)

    # ---- KAN convolution: per-channel 3x3, stride 2, pad 1, 2 parallel KAN kernels ----
    feat_dtype = jnp.bfloat16 if _HAS_BF16_VPU else jnp.float32
    patch_dtype = jnp.bfloat16 if _HAS_BF16_VPU else jnp.float32
    patches, (B, OH, OW) = kan_im2col(x, 3, 3, 2, 1, patch_dtype)  # (9, M, 256)
    C = x.shape[-1]
    kan_out = pallas_kan_conv_apply(patches, params["kan_w"], feat_dtype)   # (2, M, C)
    kan_out = kan_out.reshape(_N_CONVS, B, OH, OW, C)
    # TODO(synk): output channel order is kernel-major (kan0 channels then kan1 channels);
    # the undefined KAN_Conv reference could interleave instead (irrelevant after pooling).

    # ---- mask multiply, adaptive avgpool(1,1), flatten, mask_rate scaling ----
    masked = kan_out * mask1[None]                                 # broadcast over conv axis
    pooled = jnp.mean(masked, axis=(2, 3))                         # (2, B, C)
    feat = jnp.transpose(pooled, (1, 0, 2)).reshape(B, _N_CONVS * C)   # (B, 512), kernel-major
    return feat * mask_rate[:, None]                               # (B, 512)


if __name__ == "__main__":
    key = jax.random.PRNGKey(0)
    pkey, xkey = jax.random.split(key)
    params = init_params(pkey)
    X = jax.random.normal(xkey, (2, 3, 32, 32), jnp.float32)       # NCHW, like PyTorch
    fwd = jax.jit(cnn_kan_forward)
    out = fwd(X, params)
    out = jax.block_until_ready(out)
    assert out.shape == (2, 512)
    assert bool(jnp.all(jnp.isfinite(out)))
    print("KERNEL_OK")
</pallas_src>

<mosaic_0001>
module attributes {stable_mosaic.version = 11 : i64} {
  func.func @_matmul_kernel(%arg0: i32, %arg1: memref<512x256xbf16, #tpu.memory_space<vmem>>, %arg2: memref<256x128xbf16, #tpu.memory_space<vmem>>, %arg3: memref<512x128xf32, #tpu.memory_space<vmem>>) attributes {dimension_semantics = [#tpu.dimension_semantics<parallel>], iteration_bounds = array<i64: 1>, scalar_prefetch = 0 : i64, scratch_operands = 0 : i64, tpu.core_type = #tpu.core_type<tc>, window_params = [{transform_indices = @transform_0, window_bounds = array<i64: 512, 256>}, {pipeline_mode = #tpu.pipeline_mode<synchronous>, transform_indices = @transform_1, window_bounds = array<i64: 256, 128>}, {transform_indices = @transform_2, window_bounds = array<i64: 512, 128>}]} {
    %c0 = arith.constant 0 : index
    %c0_0 = arith.constant 0 : index
    %0 = vector.load %arg1[%c0, %c0_0] : memref<512x256xbf16, #tpu.memory_space<vmem>>, vector<512x256xbf16>
    %c0_1 = arith.constant 0 : index
    %c0_2 = arith.constant 0 : index
    %1 = vector.load %arg2[%c0_1, %c0_2] : memref<256x128xbf16, #tpu.memory_space<vmem>>, vector<256x128xbf16>
    %cst = arith.constant dense<0.000000e+00> : vector<512x128xf32>
    %2 = tpu.matmul %0, %1, %cst {dimension_numbers = #tpu.dot_dimension_numbers<[1], [0], [0], [1], [0, 0, 1, 1], [], []>} : vector<512x256xbf16>, vector<256x128xbf16>, vector<512x128xf32> -> vector<512x128xf32>
    %c0_3 = arith.constant 0 : index
    %c0_4 = arith.constant 0 : index
    %3 = vector.load %arg3[%c0_3, %c0_4] : memref<512x128xf32, #tpu.memory_space<vmem>>, vector<512x128xf32>
    tpu.vector_store %arg3[%c0_3, %c0_4], %2 {strides = array<i32>} : memref<512x128xf32, #tpu.memory_space<vmem>>, vector<512x128xf32>,
    return
  }
  func.func @transform_0(%arg0: i32) -> (i32, i32) {
    %c0_i32 = arith.constant 0 : i32
    %c0_i32_0 = arith.constant 0 : i32
    return %arg0, %c0_i32 : i32, i32
  }
  func.func @transform_1(%arg0: i32) -> (i32, i32) {
    %c0_i32 = arith.constant 0 : i32
    %c0_i32_0 = arith.constant 0 : i32
    %c0_i32_1 = arith.constant 0 : i32
    return %c0_i32, %c0_i32_0 : i32, i32
  }
  func.func @transform_2(%arg0: i32) -> (i32, i32) {
    %c0_i32 = arith.constant 0 : i32
    %c0_i32_0 = arith.constant 0 : i32
    return %arg0, %c0_i32 : i32, i32
  }
}

module attributes {stable_mosaic.version = 11 : i64} {
  func.func @_matmul_kernel(%arg0: i32, %arg1: memref<128x640xbf16, #tpu.memory_space<vmem>>, %arg2: memref<640x128xbf16, #tpu.memory_space<vmem>>, %arg3: memref<128x128xf32, #tpu.memory_space<vmem>>) attributes {dimension_semantics = [#tpu.dimension_semantics<parallel>], iteration_bounds = array<i64: 1>, scalar_prefetch = 0 : i64, scratch_operands = 0 : i64, tpu.core_type = #tpu.core_type<tc>, window_params = [{transform_indices = @transform_0, window_bounds = array<i64: 128, 640>}, {pipeline_mode = #tpu.pipeline_mode<synchronous>, transform_indices = @transform_1, window_bounds = array<i64: 640, 128>}, {transform_indices = @transform_2, window_bounds = array<i64: 128, 128>}]} {
    %c0 = arith.constant 0 : index
    %c0_0 = arith.constant 0 : index
    %0 = vector.load %arg1[%c0, %c0_0] : memref<128x640xbf16, #tpu.memory_space<vmem>>, vector<128x640xbf16>
    %c0_1 = arith.constant 0 : index
    %c0_2 = arith.constant 0 : index
    %1 = vector.load %arg2[%c0_1, %c0_2] : memref<640x128xbf16, #tpu.memory_space<vmem>>, vector<640x128xbf16>
    %cst = arith.constant dense<0.000000e+00> : vector<128x128xf32>
    %2 = tpu.matmul %0, %1, %cst {dimension_numbers = #tpu.dot_dimension_numbers<[1], [0], [0], [1], [0, 0, 1, 1], [], []>} : vector<128x640xbf16>, vector<640x128xbf16>, vector<128x128xf32> -> vector<128x128xf32>
    %c0_3 = arith.constant 0 : index
    %c0_4 = arith.constant 0 : index
    %3 = vector.load %arg3[%c0_3, %c0_4] : memref<128x128xf32, #tpu.memory_space<vmem>>, vector<128x128xf32>
    tpu.vector_store %arg3[%c0_3, %c0_4], %2 {strides = array<i32>} : memref<128x128xf32, #tpu.memory_space<vmem>>, vector<128x128xf32>,
    return
  }
  func.func @transform_0(%arg0: i32) -> (i32, i32) {
    %c0_i32 = arith.constant 0 : i32
    %c0_i32_0 = arith.constant 0 : i32
    return %arg0, %c0_i32 : i32, i32
  }
  func.func @transform_1(%arg0: i32) -> (i32, i32) {
    %c0_i32 = arith.constant 0 : i32
    %c0_i32_0 = arith.constant 0 : i32
    %c0_i32_1 = arith.constant 0 : i32
    return %c0_i32, %c0_i32_0 : i32, i32
  }
  func.func @transform_2(%arg0: i32) -> (i32, i32) {
    %c0_i32 = arith.constant 0 : i32
    %c0_i32_0 = arith.constant 0 : i32
    return %arg0, %c0_i32 : i32, i32
  }
}

module attributes {stable_mosaic.version = 11 : i64} {
  func.func @_matmul_kernel(%arg0: i32, %arg1: memref<128x128xbf16, #tpu.memory_space<vmem>>, %arg2: memref<128x128xbf16, #tpu.memory_space<vmem>>, %arg3: memref<128x128xf32, #tpu.memory_space<vmem>>) attributes {dimension_semantics = [#tpu.dimension_semantics<parallel>], iteration_bounds = array<i64: 1>, scalar_prefetch = 0 : i64, scratch_operands = 0 : i64, tpu.core_type = #tpu.core_type<tc>, window_params = [{transform_indices = @transform_0, window_bounds = array<i64: 128, 128>}, {pipeline_mode = #tpu.pipeline_mode<synchronous>, transform_indices = @transform_1, window_bounds = array<i64: 128, 128>}, {transform_indices = @transform_2, window_bounds = array<i64: 128, 128>}]} {
    %c0 = arith.constant 0 : index
    %c0_0 = arith.constant 0 : index
    %0 = vector.load %arg1[%c0, %c0_0] : memref<128x128xbf16, #tpu.memory_space<vmem>>, vector<128x128xbf16>
    %c0_1 = arith.constant 0 : index
    %c0_2 = arith.constant 0 : index
    %1 = vector.load %arg2[%c0_1, %c0_2] : memref<128x128xbf16, #tpu.memory_space<vmem>>, vector<128x128xbf16>
    %cst = arith.constant dense<0.000000e+00> : vector<128x128xf32>
    %2 = tpu.matmul %0, %1, %cst {dimension_numbers = #tpu.dot_dimension_numbers<[1], [0], [0], [1], [0, 0, 1, 1], [], []>} : vector<128x128xbf16>, vector<128x128xbf16>, vector<128x128xf32> -> vector<128x128xf32>
    %c0_3 = arith.constant 0 : index
    %c0_4 = arith.constant 0 : index
    %3 = vector.load %arg3[%c0_3, %c0_4] : memref<128x128xf32, #tpu.memory_space<vmem>>, vector<128x128xf32>
    tpu.vector_store %arg3[%c0_3, %c0_4], %2 {strides = array<i32>} : memref<128x128xf32, #tpu.memory_space<vmem>>, vector<128x128xf32>,
    return
  }
  func.func @transform_0(%arg0: i32) -> (i32, i32) {
    %c0_i32 = arith.constant 0 : i32
    %c0_i32_0 = arith.constant 0 : i32
    return %arg0, %c0_i32 : i32, i32
  }
  func.func @transform_1(%arg0: i32) -> (i32, i32) {
    %c0_i32 = arith.constant 0 : i32
    %c0_i32_0 = arith.constant 0 : i32
    %c0_i32_1 = arith.constant 0 : i32
    return %c0_i32, %c0_i32_0 : i32, i32
  }
  func.func @transform_2(%arg0: i32) -> (i32, i32) {
    %c0_i32 = arith.constant 0 : i32
    %c0_i32_0 = arith.constant 0 : i32
    return %arg0, %c0_i32 : i32, i32
  }
}

module attributes {stable_mosaic.version = 11 : i64} {
  func.func @_matmul_kernel(%arg0: i32, %arg1: memref<32x1152xbf16, #tpu.memory_space<vmem>>, %arg2: memref<1152x128xbf16, #tpu.memory_space<vmem>>, %arg3: memref<32x128xf32, #tpu.memory_space<vmem>>) attributes {dimension_semantics = [#tpu.dimension_semantics<parallel>], iteration_bounds = array<i64: 1>, scalar_prefetch = 0 : i64, scratch_operands = 0 : i64, tpu.core_type = #tpu.core_type<tc>, window_params = [{transform_indices = @transform_0, window_bounds = array<i64: 32, 1152>}, {pipeline_mode = #tpu.pipeline_mode<synchronous>, transform_indices = @transform_1, window_bounds = array<i64: 1152, 128>}, {transform_indices = @transform_2, window_bounds = array<i64: 32, 128>}]} {
    %c0 = arith.constant 0 : index
    %c0_0 = arith.constant 0 : index
    %0 = vector.load %arg1[%c0, %c0_0] : memref<32x1152xbf16, #tpu.memory_space<vmem>>, vector<32x1152xbf16>
    %c0_1 = arith.constant 0 : index
    %c0_2 = arith.constant 0 : index
    %1 = vector.load %arg2[%c0_1, %c0_2] : memref<1152x128xbf16, #tpu.memory_space<vmem>>, vector<1152x128xbf16>
    %cst = arith.constant dense<0.000000e+00> : vector<32x128xf32>
    %2 = tpu.matmul %0, %1, %cst {dimension_numbers = #tpu.dot_dimension_numbers<[1], [0], [0], [1], [0, 0, 1, 1], [], []>} : vector<32x1152xbf16>, vector<1152x128xbf16>, vector<32x128xf32> -> vector<32x128xf32>
    %c0_3 = arith.constant 0 : index
    %c0_4 = arith.constant 0 : index
    %3 = vector.load %arg3[%c0_3, %c0_4] : memref<32x128xf32, #tpu.memory_space<vmem>>, vector<32x128xf32>
    tpu.vector_store %arg3[%c0_3, %c0_4], %2 {strides = array<i32>} : memref<32x128xf32, #tpu.memory_space<vmem>>, vector<32x128xf32>,
    return
  }
  func.func @transform_0(%arg0: i32) -> (i32, i32) {
    %c0_i32 = arith.constant 0 : i32
    %c0_i32_0 = arith.constant 0 : i32
    return %arg0, %c0_i32 : i32, i32
  }
  func.func @transform_1(%arg0: i32) -> (i32, i32) {
    %c0_i32 = arith.constant 0 : i32
    %c0_i32_0 = arith.constant 0 : i32
    %c0_i32_1 = arith.constant 0 : i32
    return %c0_i32, %c0_i32_0 : i32, i32
  }
  func.func @transform_2(%arg0: i32) -> (i32, i32) {
    %c0_i32 = arith.constant 0 : i32
    %c0_i32_0 = arith.constant 0 : i32
    return %arg0, %c0_i32 : i32, i32
  }
}

module attributes {stable_mosaic.version = 11 : i64} {
  func.func @_matmul_kernel(%arg0: i32, %arg1: memref<32x128xbf16, #tpu.memory_space<vmem>>, %arg2: memref<128x256xbf16, #tpu.memory_space<vmem>>, %arg3: memref<32x256xf32, #tpu.memory_space<vmem>>) attributes {dimension_semantics = [#tpu.dimension_semantics<parallel>], iteration_bounds = array<i64: 1>, scalar_prefetch = 0 : i64, scratch_operands = 0 : i64, tpu.core_type = #tpu.core_type<tc>, window_params = [{transform_indices = @transform_0, window_bounds = array<i64: 32, 128>}, {pipeline_mode = #tpu.pipeline_mode<synchronous>, transform_indices = @transform_1, window_bounds = array<i64: 128, 256>}, {transform_indices = @transform_2, window_bounds = array<i64: 32, 256>}]} {
    %c0 = arith.constant 0 : index
    %c0_0 = arith.constant 0 : index
    %0 = vector.load %arg1[%c0, %c0_0] : memref<32x128xbf16, #tpu.memory_space<vmem>>, vector<32x128xbf16>
    %c0_1 = arith.constant 0 : index
    %c0_2 = arith.constant 0 : index
    %1 = vector.load %arg2[%c0_1, %c0_2] : memref<128x256xbf16, #tpu.memory_space<vmem>>, vector<128x256xbf16>
    %cst = arith.constant dense<0.000000e+00> : vector<32x256xf32>
    %2 = tpu.matmul %0, %1, %cst {dimension_numbers = #tpu.dot_dimension_numbers<[1], [0], [0], [1], [0, 0, 1, 1], [], []>} : vector<32x128xbf16>, vector<128x256xbf16>, vector<32x256xf32> -> vector<32x256xf32>
    %c0_3 = arith.constant 0 : index
    %c0_4 = arith.constant 0 : index
    %3 = vector.load %arg3[%c0_3, %c0_4] : memref<32x256xf32, #tpu.memory_space<vmem>>, vector<32x256xf32>
    tpu.vector_store %arg3[%c0_3, %c0_4], %2 {strides = array<i32>} : memref<32x256xf32, #tpu.memory_space<vmem>>, vector<32x256xf32>,
    return
  }
  func.func @transform_0(%arg0: i32) -> (i32, i32) {
    %c0_i32 = arith.constant 0 : i32
    %c0_i32_0 = arith.constant 0 : i32
    return %arg0, %c0_i32 : i32, i32
  }
  func.func @transform_1(%arg0: i32) -> (i32, i32) {
    %c0_i32 = arith.constant 0 : i32
    %c0_i32_0 = arith.constant 0 : i32
    %c0_i32_1 = arith.constant 0 : i32
    return %c0_i32, %c0_i32_0 : i32, i32
  }
  func.func @transform_2(%arg0: i32) -> (i32, i32) {
    %c0_i32 = arith.constant 0 : i32
    %c0_i32_0 = arith.constant 0 : i32
    return %arg0, %c0_i32 : i32, i32
  }
}

module attributes {stable_mosaic.version = 11 : i64} {
  func.func @kernel(%arg0: i32, %arg1: i32, %arg2: memref<162xf32, #tpu.memory_space<smem>>, %arg3: memref<9x8x128xf32, #tpu.memory_space<vmem>>, %arg4: memref<2x8x128xf32, #tpu.memory_space<vmem>>) attributes {dimension_semantics = [#tpu.dimension_semantics<parallel>, #tpu.dimension_semantics<parallel>], iteration_bounds = array<i64: 1, 2>, scalar_prefetch = 0 : i64, scratch_operands = 0 : i64, tpu.core_type = #tpu.core_type<tc>, window_params = [{transform_indices = @transform_0, window_bounds = array<i64: 162>}, {transform_indices = @transform_1, window_bounds = array<i64: 9, 8, 128>}, {transform_indices = @transform_2, window_bounds = array<i64: 2, 8, 128>}]} {
    %cst = arith.constant 0.000000e+00 : f32
    %0 = vector.broadcast %cst : f32 to vector<8x128xf32>
    %cst_0 = arith.constant 0.000000e+00 : f32
    %1 = vector.broadcast %cst_0 : f32 to vector<8x128xf32>
    %c0 = arith.constant 0 : index
    %c0_1 = arith.constant 0 : index
    %c0_2 = arith.constant 0 : index
    %2 = vector.load %arg3[%c0, %c0_1, %c0_2] : memref<9x8x128xf32, #tpu.memory_space<vmem>>, vector<1x8x128xf32>
    %3 = vector.shape_cast %2 : vector<1x8x128xf32> to vector<8x128xf32>
    %4 = arith.negf %3 : vector<8x128xf32>
    %5 = math.exp %4 : vector<8x128xf32>
    %cst_3 = arith.constant 1.000000e+00 : f32
    %6 = vector.broadcast %cst_3 : f32 to vector<8x128xf32>
    %7 = arith.addf %6, %5 : vector<8x128xf32>
    %8 = arith.divf %6, %7 : vector<8x128xf32>
    %9 = arith.mulf %3, %8 : vector<8x128xf32>
    %c0_4 = arith.constant 0 : index
    %10 = memref.load %arg2[%c0_4] : memref<162xf32, #tpu.memory_space<smem>>
    %11 = vector.broadcast %10 : f32 to vector<8x128xf32>
    %12 = arith.mulf %11, %9 : vector<8x128xf32>
    %13 = arith.addf %0, %12 : vector<8x128xf32>
    %c81 = arith.constant 81 : index
    %14 = memref.load %arg2[%c81] : memref<162xf32, #tpu.memory_space<smem>>
    %15 = vector.broadcast %14 : f32 to vector<8x128xf32>
    %16 = arith.mulf %15, %9 : vector<8x128xf32>
    %17 = arith.addf %1, %16 : vector<8x128xf32>
    %cst_5 = arith.constant -2.200000e+00 : f32
    %18 = vector.broadcast %cst_5 : f32 to vector<8x128xf32>
    %19 = arith.subf %3, %18 : vector<8x128xf32>
    %cst_6 = arith.constant -1.800000e+00 : f32
    %20 = vector.broadcast %cst_6 : f32 to vector<8x128xf32>
    %21 = arith.subf %3, %20 : vector<8x128xf32>
    %cst_7 = arith.constant -1.400000e+00 : f32
    %22 = vector.broadcast %cst_7 : f32 to vector<8x128xf32>
    %23 = arith.subf %3, %22 : vector<8x128xf32>
    %cst_8 = arith.constant -1.000000e+00 : f32
    %24 = vector.broadcast %cst_8 : f32 to vector<8x128xf32>
    %25 = arith.subf %3, %24 : vector<8x128xf32>
    %cst_9 = arith.constant -6.000000e-01 : f32
    %26 = vector.broadcast %cst_9 : f32 to vector<8x128xf32>
    %27 = arith.subf %3, %26 : vector<8x128xf32>
    %cst_10 = arith.constant -2.000000e-01 : f32
    %28 = vector.broadcast %cst_10 : f32 to vector<8x128xf32>
    %29 = arith.subf %3, %28 : vector<8x128xf32>
    %cst_11 = arith.constant 2.000000e-01 : f32
    %30 = vector.broadcast %cst_11 : f32 to vector<8x128xf32>
    %31 = arith.subf %3, %30 : vector<8x128xf32>
    %cst_12 = arith.constant 6.000000e-01 : f32
    %32 = vector.broadcast %cst_12 : f32 to vector<8x128xf32>
    %33 = arith.subf %3, %32 : vector<8x128xf32>
    %cst_13 = arith.constant 1.000000e+00 : f32
    %34 = vector.broadcast %cst_13 : f32 to vector<8x128xf32>
    %35 = arith.subf %3, %34 : vector<8x128xf32>
    %cst_14 = arith.constant 1.400000e+00 : f32
    %36 = vector.broadcast %cst_14 : f32 to vector<8x128xf32>
    %37 = arith.subf %3, %36 : vector<8x128xf32>
    %cst_15 = arith.constant 1.800000e+00 : f32
    %38 = vector.broadcast %cst_15 : f32 to vector<8x128xf32>
    %39 = arith.subf %3, %38 : vector<8x128xf32>
    %cst_16 = arith.constant 2.200000e+00 : f32
    %40 = vector.broadcast %cst_16 : f32 to vector<8x128xf32>
    %41 = arith.subf %3, %40 : vector<8x128xf32>
    %cst_17 = arith.constant 0.000000e+00 : f32
    %42 = vector.broadcast %cst_17 : f32 to vector<8x128xf32>
    %43 = arith.cmpf oge, %19, %42 : vector<8x128xf32>
    %cst_18 = arith.constant 0.000000e+00 : f32
    %44 = vector.broadcast %cst_18 : f32 to vector<8x128xf32>
    %45 = arith.cmpf olt, %21, %44 : vector<8x128xf32>
    %46 = arith.andi %43, %45 : vector<8x128xi1>
    %47 = arith.extui %46 : vector<8x128xi1> to vector<8x128xi32>
    %48 = arith.sitofp %47 : vector<8x128xi32> to vector<8x128xf32>
    %cst_19 = arith.constant 0.000000e+00 : f32
    %49 = vector.broadcast %cst_19 : f32 to vector<8x128xf32>
    %50 = arith.cmpf oge, %21, %49 : vector<8x128xf32>
    %cst_20 = arith.constant 0.000000e+00 : f32
    %51 = vector.broadcast %cst_20 : f32 to vector<8x128xf32>
    %52 = arith.cmpf olt, %23, %51 : vector<8x128xf32>
    %53 = arith.andi %50, %52 : vector<8x128xi1>
    %54 = arith.extui %53 : vector<8x128xi1> to vector<8x128xi32>
    %55 = arith.sitofp %54 : vector<8x128xi32> to vector<8x128xf32>
    %cst_21 = arith.constant 0.000000e+00 : f32
    %56 = vector.broadcast %cst_21 : f32 to vector<8x128xf32>
    %57 = arith.cmpf oge, %23, %56 : vector<8x128xf32>
    %cst_22 = arith.constant 0.000000e+00 : f32
    %58 = vector.broadcast %cst_22 : f32 to vector<8x128xf32>
    %59 = arith.cmpf olt, %25, %58 : vector<8x128xf32>
    %60 = arith.andi %57, %59 : vector<8x128xi1>
    %61 = arith.extui %60 : vector<8x128xi1> to vector<8x128xi32>
    %62 = arith.sitofp %61 : vector<8x128xi32> to vector<8x128xf32>
    %cst_23 = arith.constant 0.000000e+00 : f32
    %63 = vector.broadcast %cst_23 : f32 to vector<8x128xf32>
    %64 = arith.cmpf oge, %25, %63 : vector<8x128xf32>
    %cst_24 = arith.constant 0.000000e+00 : f32
    %65 = vector.broadcast %cst_24 : f32 to vector<8x128xf32>
    %66 = arith.cmpf olt, %27, %65 : vector<8x128xf32>
    %67 = arith.andi %64, %66 : vector<8x128xi1>
    %68 = arith.extui %67 : vector<8x128xi1> to vector<8x128xi32>
    %69 = arith.sitofp %68 : vector<8x128xi32> to vector<8x128xf32>
    %cst_25 = arith.constant 0.000000e+00 : f32
    %70 = vector.broadcast %cst_25 : f32 to vector<8x128xf32>
    %71 = arith.cmpf oge, %27, %70 : vector<8x128xf32>
    %cst_26 = arith.constant 0.000000e+00 : f32
    %72 = vector.broadcast %cst_26 : f32 to vector<8x128xf32>
    %73 = arith.cmpf olt, %29, %72 : vector<8x128xf32>
    %74 = arith.andi %71, %73 : vector<8x128xi1>
    %75 = arith.extui %74 : vector<8x128xi1> to vector<8x128xi32>
    %76 = arith.sitofp %75 : vector<8x128xi32> to vector<8x128xf32>
    %cst_27 = arith.constant 0.000000e+00 : f32
    %77 = vector.broadcast %cst_27 : f32 to vector<8x128xf32>
    %78 = arith.cmpf oge, %29, %77 : vector<8x128xf32>
    %cst_28 = arith.constant 0.000000e+00 : f32
    %79 = vector.broadcast %cst_28 : f32 to vector<8x128xf32>
    %80 = arith.cmpf olt, %31, %79 : vector<8x128xf32>
    %81 = arith.andi %78, %80 : vector<8x128xi1>
    %82 = arith.extui %81 : vector<8x128xi1> to vector<8x128xi32>
    %83 = arith.sitofp %82 : vector<8x128xi32> to vector<8x128xf32>
    %cst_29 = arith.constant 0.000000e+00 : f32
    %84 = vector.broadcast %cst_29 : f32 to vector<8x128xf32>
    %85 = arith.cmpf oge, %31, %84 : vector<8x128xf32>
    %cst_30 = arith.constant 0.000000e+00 : f32
    %86 = vector.broadcast %cst_30 : f32 to vector<8x128xf32>
    %87 = arith.cmpf olt, %33, %86 : vector<8x128xf32>
    %88 = arith.andi %85, %87 : vector<8x128xi1>
    %89 = arith.extui %88 : vector<8x128xi1> to vector<8x128xi32>
    %90 = arith.sitofp %89 : vector<8x128xi32> to vector<8x128xf32>
    %cst_31 = arith.constant 0.000000e+00 : f32
    %91 = vector.broadcast %cst_31 : f32 to vector<8x128xf32>
    %92 = arith.cmpf oge, %33, %91 : vector<8x128xf32>
    %cst_32 = arith.constant 0.000000e+00 : f32
    %93 = vector.broadcast %cst_32 : f32 to vector<8x128xf32>
    %94 = arith.cmpf olt, %35, %93 : vector<8x128xf32>
    %95 = arith.andi %92, %94 : vector<8x128xi1>
    %96 = arith.extui %95 : vector<8x128xi1> to vector<8x128xi32>
    %97 = arith.sitofp %96 : vector<8x128xi32> to vector<8x128xf32>
    %cst_33 = arith.constant 0.000000e+00 : f32
    %98 = vector.broadcast %cst_33 : f32 to vector<8x128xf32>
    %99 = arith.cmpf oge, %35, %98 : vector<8x128xf32>
    %cst_34 = arith.constant 0.000000e+00 : f32
    %100 = vector.broadcast %cst_34 : f32 to vector<8x128xf32>
    %101 = arith.cmpf olt, %37, %100 : vector<8x128xf32>
    %102 = arith.andi %99, %101 : vector<8x128xi1>
    %103 = arith.extui %102 : vector<8x128xi1> to vector<8x128xi32>
    %104 = arith.sitofp %103 : vector<8x128xi32> to vector<8x128xf32>
    %cst_35 = arith.constant 0.000000e+00 : f32
    %105 = vector.broadcast %cst_35 : f32 to vector<8x128xf32>
    %106 = arith.cmpf oge, %37, %105 : vector<8x128xf32>
    %cst_36 = arith.constant 0.000000e+00 : f32
    %107 = vector.broadcast %cst_36 : f32 to vector<8x128xf32>
    %108 = arith.cmpf olt, %39, %107 : vector<8x128xf32>
    %109 = arith.andi %106, %108 : vector<8x128xi1>
    %110 = arith.extui %109 : vector<8x128xi1> to vector<8x128xi32>
    %111 = arith.sitofp %110 : vector<8x128xi32> to vector<8x128xf32>
    %cst_37 = arith.constant 0.000000e+00 : f32
    %112 = vector.broadcast %cst_37 : f32 to vector<8x128xf32>
    %113 = arith.cmpf oge, %39, %112 : vector<8x128xf32>
    %cst_38 = arith.constant 0.000000e+00 : f32
    %114 = vector.broadcast %cst_38 : f32 to vector<8x128xf32>
    %115 = arith.cmpf olt, %41, %114 : vector<8x128xf32>
    %116 = arith.andi %113, %115 : vector<8x128xi1>
    %117 = arith.extui %116 : vector<8x128xi1> to vector<8x128xi32>
    %118 = arith.sitofp %117 : vector<8x128xi32> to vector<8x128xf32>
    %cst_39 = arith.constant 2.500000e+00 : f32
    %119 = vector.broadcast %cst_39 : f32 to vector<8x128xf32>
    %120 = arith.mulf %19, %119 : vector<8x128xf32>
    %121 = arith.mulf %120, %48 : vector<8x128xf32>
    %cst_40 = arith.constant -2.500000e+00 : f32
    %122 = vector.broadcast %cst_40 : f32 to vector<8x128xf32>
    %123 = arith.mulf %23, %122 : vector<8x128xf32>
    %124 = arith.mulf %123, %55 : vector<8x128xf32>
    %125 = arith.addf %121, %124 : vector<8x128xf32>
    %cst_41 = arith.constant 2.500000e+00 : f32
    %126 = vector.broadcast %cst_41 : f32 to vector<8x128xf32>
    %127 = arith.mulf %21, %126 : vector<8x128xf32>
    %128 = arith.mulf %127, %55 : vector<8x128xf32>
    %cst_42 = arith.constant -2.500000e+00 : f32
    %129 = vector.broadcast %cst_42 : f32 to vector<8x128xf32>
    %130 = arith.mulf %25, %129 : vector<8x128xf32>
    %131 = arith.mulf %130, %62 : vector<8x128xf32>
    %132 = arith.addf %128, %131 : vector<8x128xf32>
    %cst_43 = arith.constant 2.500000e+00 : f32
    %133 = vector.broadcast %cst_43 : f32 to vector<8x128xf32>
    %134 = arith.mulf %23, %133 : vector<8x128xf32>
    %135 = arith.mulf %134, %62 : vector<8x128xf32>
    %cst_44 = arith.constant -2.500000e+00 : f32
    %136 = vector.broadcast %cst_44 : f32 to vector<8x128xf32>
    %137 = arith.mulf %27, %136 : vector<8x128xf32>
    %138 = arith.mulf %137, %69 : vector<8x128xf32>
    %139 = arith.addf %135, %138 : vector<8x128xf32>
    %cst_45 = arith.constant 2.500000e+00 : f32
    %140 = vector.broadcast %cst_45 : f32 to vector<8x128xf32>
    %141 = arith.mulf %25, %140 : vector<8x128xf32>
    %142 = arith.mulf %141, %69 : vector<8x128xf32>
    %cst_46 = arith.constant -2.500000e+00 : f32
    %143 = vector.broadcast %cst_46 : f32 to vector<8x128xf32>
    %144 = arith.mulf %29, %143 : vector<8x128xf32>
    %145 = arith.mulf %144, %76 : vector<8x128xf32>
    %146 = arith.addf %142, %145 : vector<8x128xf32>
    %cst_47 = arith.constant 2.500000e+00 : f32
    %147 = vector.broadcast %cst_47 : f32 to vector<8x128xf32>
    %148 = arith.mulf %27, %147 : vector<8x128xf32>
    %149 = arith.mulf %148, %76 : vector<8x128xf32>
    %cst_48 = arith.constant -2.500000e+00 : f32
    %150 = vector.broadcast %cst_48 : f32 to vector<8x128xf32>
    %151 = arith.mulf %31, %150 : vector<8x128xf32>
    %152 = arith.mulf %151, %83 : vector<8x128xf32>
    %153 = arith.addf %149, %152 : vector<8x128xf32>
    %cst_49 = arith.constant 2.500000e+00 : f32
    %154 = vector.broadcast %cst_49 : f32 to vector<8x128xf32>
    %155 = arith.mulf %29, %154 : vector<8x128xf32>
    %156 = arith.mulf %155, %83 : vector<8x128xf32>
    %cst_50 = arith.constant -2.500000e+00 : f32
    %157 = vector.broadcast %cst_50 : f32 to vector<8x128xf32>
    %158 = arith.mulf %33, %157 : vector<8x128xf32>
    %159 = arith.mulf %158, %90 : vector<8x128xf32>
    %160 = arith.addf %156, %159 : vector<8x128xf32>
    %cst_51 = arith.constant 2.500000e+00 : f32
    %161 = vector.broadcast %cst_51 : f32 to vector<8x128xf32>
    %162 = arith.mulf %31, %161 : vector<8x128xf32>
    %163 = arith.mulf %162, %90 : vector<8x128xf32>
    %cst_52 = arith.constant -2.500000e+00 : f32
    %164 = vector.broadcast %cst_52 : f32 to vector<8x128xf32>
    %165 = arith.mulf %35, %164 : vector<8x128xf32>
    %166 = arith.mulf %165, %97 : vector<8x128xf32>
    %167 = arith.addf %163, %166 : vector<8x128xf32>
    %cst_53 = arith.constant 2.500000e+00 : f32
    %168 = vector.broadcast %cst_53 : f32 to vector<8x128xf32>
    %169 = arith.mulf %33, %168 : vector<8x128xf32>
    %170 = arith.mulf %169, %97 : vector<8x128xf32>
    %cst_54 = arith.constant -2.500000e+00 : f32
    %171 = vector.broadcast %cst_54 : f32 to vector<8x128xf32>
    %172 = arith.mulf %37, %171 : vector<8x128xf32>
    %173 = arith.mulf %172, %104 : vector<8x128xf32>
    %174 = arith.addf %170, %173 : vector<8x128xf32>
    %cst_55 = arith.constant 2.500000e+00 : f32
    %175 = vector.broadcast %cst_55 : f32 to vector<8x128xf32>
    %176 = arith.mulf %35, %175 : vector<8x128xf32>
    %177 = arith.mulf %176, %104 : vector<8x128xf32>
    %cst_56 = arith.constant -2.500000e+00 : f32
    %178 = vector.broadcast %cst_56 : f32 to vector<8x128xf32>
    %179 = arith.mulf %39, %178 : vector<8x128xf32>
    %180 = arith.mulf %179, %111 : vector<8x128xf32>
    %181 = arith.addf %177, %180 : vector<8x128xf32>
    %cst_57 = arith.constant 2.500000e+00 : f32
    %182 = vector.broadcast %cst_57 : f32 to vector<8x128xf32>
    %183 = arith.mulf %37, %182 : vector<8x128xf32>
    %184 = arith.mulf %183, %111 : vector<8x128xf32>
    %cst_58 = arith.constant -2.500000e+00 : f32
    %185 = vector.broadcast %cst_58 : f32 to vector<8x128xf32>
    %186 = arith.mulf %41, %185 : vector<8x128xf32>
    %187 = arith.mulf %186, %118 : vector<8x128xf32>
    %188 = arith.addf %184, %187 : vector<8x128xf32>
    %cst_59 = arith.constant 1.250000e+00 : f32
    %189 = vector.broadcast %cst_59 : f32 to vector<8x128xf32>
    %190 = arith.mulf %19, %189 : vector<8x128xf32>
    %191 = arith.mulf %190, %125 : vector<8x128xf32>
    %cst_60 = arith.constant -1.250000e+00 : f32
    %192 = vector.broadcast %cst_60 : f32 to vector<8x128xf32>
    %193 = arith.mulf %25, %192 : vector<8x128xf32>
    %194 = arith.mulf %193, %132 : vector<8x128xf32>
    %195 = arith.addf %191, %194 : vector<8x128xf32>
    %cst_61 = arith.constant 1.250000e+00 : f32
    %196 = vector.broadcast %cst_61 : f32 to vector<8x128xf32>
    %197 = arith.mulf %21, %196 : vector<8x128xf32>
    %198 = arith.mulf %197, %132 : vector<8x128xf32>
    %cst_62 = arith.constant -1.250000e+00 : f32
    %199 = vector.broadcast %cst_62 : f32 to vector<8x128xf32>
    %200 = arith.mulf %27, %199 : vector<8x128xf32>
    %201 = arith.mulf %200, %139 : vector<8x128xf32>
    %202 = arith.addf %198, %201 : vector<8x128xf32>
    %cst_63 = arith.constant 1.250000e+00 : f32
    %203 = vector.broadcast %cst_63 : f32 to vector<8x128xf32>
    %204 = arith.mulf %23, %203 : vector<8x128xf32>
    %205 = arith.mulf %204, %139 : vector<8x128xf32>
    %cst_64 = arith.constant -1.250000e+00 : f32
    %206 = vector.broadcast %cst_64 : f32 to vector<8x128xf32>
    %207 = arith.mulf %29, %206 : vector<8x128xf32>
    %208 = arith.mulf %207, %146 : vector<8x128xf32>
    %209 = arith.addf %205, %208 : vector<8x128xf32>
    %cst_65 = arith.constant 1.250000e+00 : f32
    %210 = vector.broadcast %cst_65 : f32 to vector<8x128xf32>
    %211 = arith.mulf %25, %210 : vector<8x128xf32>
    %212 = arith.mulf %211, %146 : vector<8x128xf32>
    %cst_66 = arith.constant -1.250000e+00 : f32
    %213 = vector.broadcast %cst_66 : f32 to vector<8x128xf32>
    %214 = arith.mulf %31, %213 : vector<8x128xf32>
    %215 = arith.mulf %214, %153 : vector<8x128xf32>
    %216 = arith.addf %212, %215 : vector<8x128xf32>
    %cst_67 = arith.constant 1.250000e+00 : f32
    %217 = vector.broadcast %cst_67 : f32 to vector<8x128xf32>
    %218 = arith.mulf %27, %217 : vector<8x128xf32>
    %219 = arith.mulf %218, %153 : vector<8x128xf32>
    %cst_68 = arith.constant -1.250000e+00 : f32
    %220 = vector.broadcast %cst_68 : f32 to vector<8x128xf32>
    %221 = arith.mulf %33, %220 : vector<8x128xf32>
    %222 = arith.mulf %221, %160 : vector<8x128xf32>
    %223 = arith.addf %219, %222 : vector<8x128xf32>
    %cst_69 = arith.constant 1.250000e+00 : f32
    %224 = vector.broadcast %cst_69 : f32 to vector<8x128xf32>
    %225 = arith.mulf %29, %224 : vector<8x128xf32>
    %226 = arith.mulf %225, %160 : vector<8x128xf32>
    %cst_70 = arith.constant -1.250000e+00 : f32
    %227 = vector.broadcast %cst_70 : f32 to vector<8x128xf32>
    %228 = arith.mulf %35, %227 : vector<8x128xf32>
    %229 = arith.mulf %228, %167 : vector<8x128xf32>
    %230 = arith.addf %226, %229 : vector<8x128xf32>
    %cst_71 = arith.constant 1.250000e+00 : f32
    %231 = vector.broadcast %cst_71 : f32 to vector<8x128xf32>
    %232 = arith.mulf %31, %231 : vector<8x128xf32>
    %233 = arith.mulf %232, %167 : vector<8x128xf32>
    %cst_72 = arith.constant -1.250000e+00 : f32
    %234 = vector.broadcast %cst_72 : f32 to vector<8x128xf32>
    %235 = arith.mulf %37, %234 : vector<8x128xf32>
    %236 = arith.mulf %235, %174 : vector<8x128xf32>
    %237 = arith.addf %233, %236 : vector<8x128xf32>
    %cst_73 = arith.constant 1.250000e+00 : f32
    %238 = vector.broadcast %cst_73 : f32 to vector<8x128xf32>
    %239 = arith.mulf %33, %238 : vector<8x128xf32>
    %240 = arith.mulf %239, %174 : vector<8x128xf32>
    %cst_74 = arith.constant -1.250000e+00 : f32
    %241 = vector.broadcast %cst_74 : f32 to vector<8x128xf32>
    %242 = arith.mulf %39, %241 : vector<8x128xf32>
    %243 = arith.mulf %242, %181 : vector<8x128xf32>
    %244 = arith.addf %240, %243 : vector<8x128xf32>
    %cst_75 = arith.constant 1.250000e+00 : f32
    %245 = vector.broadcast %cst_75 : f32 to vector<8x128xf32>
    %246 = arith.mulf %35, %245 : vector<8x128xf32>
    %247 = arith.mulf %246, %181 : vector<8x128xf32>
    %cst_76 = arith.constant -1.250000e+00 : f32
    %248 = vector.broadcast %cst_76 : f32 to vector<8x128xf32>
    %249 = arith.mulf %41, %248 : vector<8x128xf32>
    %250 = arith.mulf %249, %188 : vector<8x128xf32>
    %251 = arith.addf %247, %250 : vector<8x128xf32>
    %cst_77 = arith.constant 0.833333313 : f32
    %252 = vector.broadcast %cst_77 : f32 to vector<8x128xf32>
    %253 = arith.mulf %19, %252 : vector<8x128xf32>
    %254 = arith.mulf %253, %195 : vector<8x128xf32>
    %cst_78 = arith.constant -0.833333313 : f32
    %255 = vector.broadcast %cst_78 : f32 to vector<8x128xf32>
    %256 = arith.mulf %27, %255 : vector<8x128xf32>
    %257 = arith.mulf %256, %202 : vector<8x128xf32>
    %258 = arith.addf %254, %257 : vector<8x128xf32>
    %cst_79 = arith.constant 0.833333313 : f32
    %259 = vector.broadcast %cst_79 : f32 to vector<8x128xf32>
    %260 = arith.mulf %21, %259 : vector<8x128xf32>
    %261 = arith.mulf %260, %202 : vector<8x128xf32>
    %cst_80 = arith.constant -0.833333313 : f32
    %262 = vector.broadcast %cst_80 : f32 to vector<8x128xf32>
    %263 = arith.mulf %29, %262 : vector<8x128xf32>
    %264 = arith.mulf %263, %209 : vector<8x128xf32>
    %265 = arith.addf %261, %264 : vector<8x128xf32>
    %cst_81 = arith.constant 0.833333313 : f32
    %266 = vector.broadcast %cst_81 : f32 to vector<8x128xf32>
    %267 = arith.mulf %23, %266 : vector<8x128xf32>
    %268 = arith.mulf %267, %209 : vector<8x128xf32>
    %cst_82 = arith.constant -0.833333313 : f32
    %269 = vector.broadcast %cst_82 : f32 to vector<8x128xf32>
    %270 = arith.mulf %31, %269 : vector<8x128xf32>
    %271 = arith.mulf %270, %216 : vector<8x128xf32>
    %272 = arith.addf %268, %271 : vector<8x128xf32>
    %cst_83 = arith.constant 0.833333313 : f32
    %273 = vector.broadcast %cst_83 : f32 to vector<8x128xf32>
    %274 = arith.mulf %25, %273 : vector<8x128xf32>
    %275 = arith.mulf %274, %216 : vector<8x128xf32>
    %cst_84 = arith.constant -0.833333313 : f32
    %276 = vector.broadcast %cst_84 : f32 to vector<8x128xf32>
    %277 = arith.mulf %33, %276 : vector<8x128xf32>
    %278 = arith.mulf %277, %223 : vector<8x128xf32>
    %279 = arith.addf %275, %278 : vector<8x128xf32>
    %cst_85 = arith.constant 0.833333313 : f32
    %280 = vector.broadcast %cst_85 : f32 to vector<8x128xf32>
    %281 = arith.mulf %27, %280 : vector<8x128xf32>
    %282 = arith.mulf %281, %223 : vector<8x128xf32>
    %cst_86 = arith.constant -0.833333313 : f32
    %283 = vector.broadcast %cst_86 : f32 to vector<8x128xf32>
    %284 = arith.mulf %35, %283 : vector<8x128xf32>
    %285 = arith.mulf %284, %230 : vector<8x128xf32>
    %286 = arith.addf %282, %285 : vector<8x128xf32>
    %cst_87 = arith.constant 0.833333313 : f32
    %287 = vector.broadcast %cst_87 : f32 to vector<8x128xf32>
    %288 = arith.mulf %29, %287 : vector<8x128xf32>
    %289 = arith.mulf %288, %230 : vector<8x128xf32>
    %cst_88 = arith.constant -0.833333313 : f32
    %290 = vector.broadcast %cst_88 : f32 to vector<8x128xf32>
    %291 = arith.mulf %37, %290 : vector<8x128xf32>
    %292 = arith.mulf %291, %237 : vector<8x128xf32>
    %293 = arith.addf %289, %292 : vector<8x128xf32>
    %cst_89 = arith.constant 0.833333313 : f32
    %294 = vector.broadcast %cst_89 : f32 to vector<8x128xf32>
    %295 = arith.mulf %31, %294 : vector<8x128xf32>
    %296 = arith.mulf %295, %237 : vector<8x128xf32>
    %cst_90 = arith.constant -0.833333313 : f32
    %297 = vector.broadcast %cst_90 : f32 to vector<8x128xf32>
    %298 = arith.mulf %39, %297 : vector<8x128xf32>
    %299 = arith.mulf %298, %244 : vector<8x128xf32>
    %300 = arith.addf %296, %299 : vector<8x128xf32>
    %cst_91 = arith.constant 0.833333313 : f32
    %301 = vector.broadcast %cst_91 : f32 to vector<8x128xf32>
    %302 = arith.mulf %33, %301 : vector<8x128xf32>
    %303 = arith.mulf %302, %244 : vector<8x128xf32>
    %cst_92 = arith.constant -0.833333313 : f32
    %304 = vector.broadcast %cst_92 : f32 to vector<8x128xf32>
    %305 = arith.mulf %41, %304 : vector<8x128xf32>
    %306 = arith.mulf %305, %251 : vector<8x128xf32>
    %307 = arith.addf %303, %306 : vector<8x128xf32>
    %c1 = arith.constant 1 : index
    %308 = memref.load %arg2[%c1] : memref<162xf32, #tpu.memory_space<smem>>
    %309 = vector.broadcast %308 : f32 to vector<8x128xf32>
    %310 = arith.mulf %309, %258 : vector<8x128xf32>
    %311 = arith.addf %13, %310 : vector<8x128xf32>
    %c82 = arith.constant 82 : index
    %312 = memref.load %arg2[%c82] : memref<162xf32, #tpu.memory_space<smem>>
    %313 = vector.broadcast %312 : f32 to vector<8x128xf32>
    %314 = arith.mulf %313, %258 : vector<8x128xf32>
    %315 = arith.addf %17, %314 : vector<8x128xf32>
    %c2 = arith.constant 2 : index
    %316 = memref.load %arg2[%c2] : memref<162xf32, #tpu.memory_space<smem>>
    %317 = vector.broadcast %316 : f32 to vector<8x128xf32>
    %318 = arith.mulf %317, %265 : vector<8x128xf32>
    %319 = arith.addf %311, %318 : vector<8x128xf32>
    %c83 = arith.constant 83 : index
    %320 = memref.load %arg2[%c83] : memref<162xf32, #tpu.memory_space<smem>>
    %321 = vector.broadcast %320 : f32 to vector<8x128xf32>
    %322 = arith.mulf %321, %265 : vector<8x128xf32>
    %323 = arith.addf %315, %322 : vector<8x128xf32>
    %c3 = arith.constant 3 : index
    %324 = memref.load %arg2[%c3] : memref<162xf32, #tpu.memory_space<smem>>
    %325 = vector.broadcast %324 : f32 to vector<8x128xf32>
    %326 = arith.mulf %325, %272 : vector<8x128xf32>
    %327 = arith.addf %319, %326 : vector<8x128xf32>
    %c84 = arith.constant 84 : index
    %328 = memref.load %arg2[%c84] : memref<162xf32, #tpu.memory_space<smem>>
    %329 = vector.broadcast %328 : f32 to vector<8x128xf32>
    %330 = arith.mulf %329, %272 : vector<8x128xf32>
    %331 = arith.addf %323, %330 : vector<8x128xf32>
    %c4 = arith.constant 4 : index
    %332 = memref.load %arg2[%c4] : memref<162xf32, #tpu.memory_space<smem>>
    %333 = vector.broadcast %332 : f32 to vector<8x128xf32>
    %334 = arith.mulf %333, %279 : vector<8x128xf32>
    %335 = arith.addf %327, %334 : vector<8x128xf32>
    %c85 = arith.constant 85 : index
    %336 = memref.load %arg2[%c85] : memref<162xf32, #tpu.memory_space<smem>>
    %337 = vector.broadcast %336 : f32 to vector<8x128xf32>
    %338 = arith.mulf %337, %279 : vector<8x128xf32>
    %339 = arith.addf %331, %338 : vector<8x128xf32>
    %c5 = arith.constant 5 : index
    %340 = memref.load %arg2[%c5] : memref<162xf32, #tpu.memory_space<smem>>
    %341 = vector.broadcast %340 : f32 to vector<8x128xf32>
    %342 = arith.mulf %341, %286 : vector<8x128xf32>
    %343 = arith.addf %335, %342 : vector<8x128xf32>
    %c86 = arith.constant 86 : index
    %344 = memref.load %arg2[%c86] : memref<162xf32, #tpu.memory_space<smem>>
    %345 = vector.broadcast %344 : f32 to vector<8x128xf32>
    %346 = arith.mulf %345, %286 : vector<8x128xf32>
    %347 = arith.addf %339, %346 : vector<8x128xf32>
    %c6 = arith.constant 6 : index
    %348 = memref.load %arg2[%c6] : memref<162xf32, #tpu.memory_space<smem>>
    %349 = vector.broadcast %348 : f32 to vector<8x128xf32>
    %350 = arith.mulf %349, %293 : vector<8x128xf32>
    %351 = arith.addf %343, %350 : vector<8x128xf32>
    %c87 = arith.constant 87 : index
    %352 = memref.load %arg2[%c87] : memref<162xf32, #tpu.memory_space<smem>>
    %353 = vector.broadcast %352 : f32 to vector<8x128xf32>
    %354 = arith.mulf %353, %293 : vector<8x128xf32>
    %355 = arith.addf %347, %354 : vector<8x128xf32>
    %c7 = arith.constant 7 : index
    %356 = memref.load %arg2[%c7] : memref<162xf32, #tpu.memory_space<smem>>
    %357 = vector.broadcast %356 : f32 to vector<8x128xf32>
    %358 = arith.mulf %357, %300 : vector<8x128xf32>
    %359 = arith.addf %351, %358 : vector<8x128xf32>
    %c88 = arith.constant 88 : index
    %360 = memref.load %arg2[%c88] : memref<162xf32, #tpu.memory_space<smem>>
    %361 = vector.broadcast %360 : f32 to vector<8x128xf32>
    %362 = arith.mulf %361, %300 : vector<8x128xf32>
    %363 = arith.addf %355, %362 : vector<8x128xf32>
    %c8 = arith.constant 8 : index
    %364 = memref.load %arg2[%c8] : memref<162xf32, #tpu.memory_space<smem>>
    %365 = vector.broadcast %364 : f32 to vector<8x128xf32>
    %366 = arith.mulf %365, %307 : vector<8x128xf32>
    %367 = arith.addf %359, %366 : vector<8x128xf32>
    %c89 = arith.constant 89 : index
    %368 = memref.load %arg2[%c89] : memref<162xf32, #tpu.memory_space<smem>>
    %369 = vector.broadcast %368 : f32 to vector<8x128xf32>
    %370 = arith.mulf %369, %307 : vector<8x128xf32>
    %371 = arith.addf %363, %370 : vector<8x128xf32>
    %c1_93 = arith.constant 1 : index
    %c0_94 = arith.constant 0 : index
    %c0_95 = arith.constant 0 : index
    %372 = vector.load %arg3[%c1_93, %c0_94, %c0_95] : memref<9x8x128xf32, #tpu.memory_space<vmem>>, vector<1x8x128xf32>
    %373 = vector.shape_cast %372 : vector<1x8x128xf32> to vector<8x128xf32>
    %374 = arith.negf %373 : vector<8x128xf32>
    %375 = math.exp %374 : vector<8x128xf32>
    %cst_96 = arith.constant 1.000000e+00 : f32
    %376 = vector.broadcast %cst_96 : f32 to vector<8x128xf32>
    %377 = arith.addf %376, %375 : vector<8x128xf32>
    %378 = arith.divf %376, %377 : vector<8x128xf32>
    %379 = arith.mulf %373, %378 : vector<8x128xf32>
    %c9 = arith.constant 9 : index
    %380 = memref.load %arg2[%c9] : memref<162xf32, #tpu.memory_space<smem>>
    %381 = vector.broadcast %380 : f32 to vector<8x128xf32>
    %382 = arith.mulf %381, %379 : vector<8x128xf32>
    %383 = arith.addf %367, %382 : vector<8x128xf32>
    %c90 = arith.constant 90 : index
    %384 = memref.load %arg2[%c90] : memref<162xf32, #tpu.memory_space<smem>>
    %385 = vector.broadcast %384 : f32 to vector<8x128xf32>
    %386 = arith.mulf %385, %379 : vector<8x128xf32>
    %387 = arith.addf %371, %386 : vector<8x128xf32>
    %cst_97 = arith.constant -2.200000e+00 : f32
    %388 = vector.broadcast %cst_97 : f32 to vector<8x128xf32>
    %389 = arith.subf %373, %388 : vector<8x128xf32>
    %cst_98 = arith.constant -1.800000e+00 : f32
    %390 = vector.broadcast %cst_98 : f32 to vector<8x128xf32>
    %391 = arith.subf %373, %390 : vector<8x128xf32>
    %cst_99 = arith.constant -1.400000e+00 : f32
    %392 = vector.broadcast %cst_99 : f32 to vector<8x128xf32>
    %393 = arith.subf %373, %392 : vector<8x128xf32>
    %cst_100 = arith.constant -1.000000e+00 : f32
    %394 = vector.broadcast %cst_100 : f32 to vector<8x128xf32>
    %395 = arith.subf %373, %394 : vector<8x128xf32>
    %cst_101 = arith.constant -6.000000e-01 : f32
    %396 = vector.broadcast %cst_101 : f32 to vector<8x128xf32>
    %397 = arith.subf %373, %396 : vector<8x128xf32>
    %cst_102 = arith.constant -2.000000e-01 : f32
    %398 = vector.broadcast %cst_102 : f32 to vector<8x128xf32>
    %399 = arith.subf %373, %398 : vector<8x128xf32>
    %cst_103 = arith.constant 2.000000e-01 : f32
    %400 = vector.broadcast %cst_103 : f32 to vector<8x128xf32>
    %401 = arith.subf %373, %400 : vector<8x128xf32>
    %cst_104 = arith.constant 6.000000e-01 : f32
    %402 = vector.broadcast %cst_104 : f32 to vector<8x128xf32>
    %403 = arith.subf %373, %402 : vector<8x128xf32>
    %cst_105 = arith.constant 1.000000e+00 : f32
    %404 = vector.broadcast %cst_105 : f32 to vector<8x128xf32>
    %405 = arith.subf %373, %404 : vector<8x128xf32>
    %cst_106 = arith.constant 1.400000e+00 : f32
    %406 = vector.broadcast %cst_106 : f32 to vector<8x128xf32>
    %407 = arith.subf %373, %406 : vector<8x128xf32>
    %cst_107 = arith.constant 1.800000e+00 : f32
    %408 = vector.broadcast %cst_107 : f32 to vector<8x128xf32>
    %409 = arith.subf %373, %408 : vector<8x128xf32>
    %cst_108 = arith.constant 2.200000e+00 : f32
    %410 = vector.broadcast %cst_108 : f32 to vector<8x128xf32>
    %411 = arith.subf %373, %410 : vector<8x128xf32>
    %cst_109 = arith.constant 0.000000e+00 : f32
    %412 = vector.broadcast %cst_109 : f32 to vector<8x128xf32>
    %413 = arith.cmpf oge, %389, %412 : vector<8x128xf32>
    %cst_110 = arith.constant 0.000000e+00 : f32
    %414 = vector.broadcast %cst_110 : f32 to vector<8x128xf32>
    %415 = arith.cmpf olt, %391, %414 : vector<8x128xf32>
    %416 = arith.andi %413, %415 : vector<8x128xi1>
    %417 = arith.extui %416 : vector<8x128xi1> to vector<8x128xi32>
    %418 = arith.sitofp %417 : vector<8x128xi32> to vector<8x128xf32>
    %cst_111 = arith.constant 0.000000e+00 : f32
    %419 = vector.broadcast %cst_111 : f32 to vector<8x128xf32>
    %420 = arith.cmpf oge, %391, %419 : vector<8x128xf32>
    %cst_112 = arith.constant 0.000000e+00 : f32
    %421 = vector.broadcast %cst_112 : f32 to vector<8x128xf32>
    %422 = arith.cmpf olt, %393, %421 : vector<8x128xf32>
    %423 = arith.andi %420, %422 : vector<8x128xi1>
    %424 = arith.extui %423 : vector<8x128xi1> to vector<8x128xi32>
    %425 = arith.sitofp %424 : vector<8x128xi32> to vector<8x128xf32>
    %cst_113 = arith.constant 0.000000e+00 : f32
    %426 = vector.broadcast %cst_113 : f32 to vector<8x128xf32>
    %427 = arith.cmpf oge, %393, %426 : vector<8x128xf32>
    %cst_114 = arith.constant 0.000000e+00 : f32
    %428 = vector.broadcast %cst_114 : f32 to vector<8x128xf32>
    %429 = arith.cmpf olt, %395, %428 : vector<8x128xf32>
    %430 = arith.andi %427, %429 : vector<8x128xi1>
    %431 = arith.extui %430 : vector<8x128xi1> to vector<8x128xi32>
    %432 = arith.sitofp %431 : vector<8x128xi32> to vector<8x128xf32>
    %cst_115 = arith.constant 0.000000e+00 : f32
    %433 = vector.broadcast %cst_115 : f32 to vector<8x128xf32>
    %434 = arith.cmpf oge, %395, %433 : vector<8x128xf32>
    %cst_116 = arith.constant 0.000000e+00 : f32
    %435 = vector.broadcast %cst_116 : f32 to vector<8x128xf32>
    %436 = arith.cmpf olt, %397, %435 : vector<8x128xf32>
    %437 = arith.andi %434, %436 : vector<8x128xi1>
    %438 = arith.extui %437 : vector<8x128xi1> to vector<8x128xi32>
    %439 = arith.sitofp %438 : vector<8x128xi32> to vector<8x128xf32>
    %cst_117 = arith.constant 0.000000e+00 : f32
    %440 = vector.broadcast %cst_117 : f32 to vector<8x128xf32>
    %441 = arith.cmpf oge, %397, %440 : vector<8x128xf32>
    %cst_118 = arith.constant 0.000000e+00 : f32
    %442 = vector.broadcast %cst_118 : f32 to vector<8x128xf32>
    %443 = arith.cmpf olt, %399, %442 : vector<8x128xf32>
    %444 = arith.andi %441, %443 : vector<8x128xi1>
    %445 = arith.extui %444 : vector<8x128xi1> to vector<8x128xi32>
    %446 = arith.sitofp %445 : vector<8x128xi32> to vector<8x128xf32>
    %cst_119 = arith.constant 0.000000e+00 : f32
    %447 = vector.broadcast %cst_119 : f32 to vector<8x128xf32>
    %448 = arith.cmpf oge, %399, %447 : vector<8x128xf32>
    %cst_120 = arith.constant 0.000000e+00 : f32
    %449 = vector.broadcast %cst_120 : f32 to vector<8x128xf32>
    %450 = arith.cmpf olt, %401, %449 : vector<8x128xf32>
    %451 = arith.andi %448, %450 : vector<8x128xi1>
    %452 = arith.extui %451 : vector<8x128xi1> to vector<8x128xi32>
    %453 = arith.sitofp %452 : vector<8x128xi32> to vector<8x128xf32>
    %cst_121 = arith.constant 0.000000e+00 : f32
    %454 = vector.broadcast %cst_121 : f32 to vector<8x128xf32>
    %455 = arith.cmpf oge, %401, %454 : vector<8x128xf32>
    %cst_122 = arith.constant 0.000000e+00 : f32
    %456 = vector.broadcast %cst_122 : f32 to vector<8x128xf32>
    %457 = arith.cmpf olt, %403, %456 : vector<8x128xf32>
    %458 = arith.andi %455, %457 : vector<8x128xi1>
    %459 = arith.extui %458 : vector<8x128xi1> to vector<8x128xi32>
    %460 = arith.sitofp %459 : vector<8x128xi32> to vector<8x128xf32>
    %cst_123 = arith.constant 0.000000e+00 : f32
    %461 = vector.broadcast %cst_123 : f32 to vector<8x128xf32>
    %462 = arith.cmpf oge, %403, %461 : vector<8x128xf32>
    %cst_124 = arith.constant 0.000000e+00 : f32
    %463 = vector.broadcast %cst_124 : f32 to vector<8x128xf32>
    %464 = arith.cmpf olt, %405, %463 : vector<8x128xf32>
    %465 = arith.andi %462, %464 : vector<8x128xi1>
    %466 = arith.extui %465 : vector<8x128xi1> to vector<8x128xi32>
    %467 = arith.sitofp %466 : vector<8x128xi32> to vector<8x128xf32>
    %cst_125 = arith.constant 0.000000e+00 : f32
    %468 = vector.broadcast %cst_125 : f32 to vector<8x128xf32>
    %469 = arith.cmpf oge, %405, %468 : vector<8x128xf32>
    %cst_126 = arith.constant 0.000000e+00 : f32
    %470 = vector.broadcast %cst_126 : f32 to vector<8x128xf32>
    %471 = arith.cmpf olt, %407, %470 : vector<8x128xf32>
    %472 = arith.andi %469, %471 : vector<8x128xi1>
    %473 = arith.extui %472 : vector<8x128xi1> to vector<8x128xi32>
    %474 = arith.sitofp %473 : vector<8x128xi32> to vector<8x128xf32>
    %cst_127 = arith.constant 0.000000e+00 : f32
    %475 = vector.broadcast %cst_127 : f32 to vector<8x128xf32>
    %476 = arith.cmpf oge, %407, %475 : vector<8x128xf32>
    %cst_128 = arith.constant 0.000000e+00 : f32
    %477 = vector.broadcast %cst_128 : f32 to vector<8x128xf32>
    %478 = arith.cmpf olt, %409, %477 : vector<8x128xf32>
    %479 = arith.andi %476, %478 : vector<8x128xi1>
    %480 = arith.extui %479 : vector<8x128xi1> to vector<8x128xi32>
    %481 = arith.sitofp %480 : vector<8x128xi32> to vector<8x128xf32>
    %cst_129 = arith.constant 0.000000e+00 : f32
    %482 = vector.broadcast %cst_129 : f32 to vector<8x128xf32>
    %483 = arith.cmpf oge, %409, %482 : vector<8x128xf32>
    %cst_130 = arith.constant 0.000000e+00 : f32
    %484 = vector.broadcast %cst_130 : f32 to vector<8x128xf32>
    %485 = arith.cmpf olt, %411, %484 : vector<8x128xf32>
    %486 = arith.andi %483, %485 : vector<8x128xi1>
    %487 = arith.extui %486 : vector<8x128xi1> to vector<8x128xi32>
    %488 = arith.sitofp %487 : vector<8x128xi32> to vector<8x128xf32>
    %cst_131 = arith.constant 2.500000e+00 : f32
    %489 = vector.broadcast %cst_131 : f32 to vector<8x128xf32>
    %490 = arith.mulf %389, %489 : vector<8x128xf32>
    %491 = arith.mulf %490, %418 : vector<8x128xf32>
    %cst_132 = arith.constant -2.500000e+00 : f32
    %492 = vector.broadcast %cst_132 : f32 to vector<8x128xf32>
    %493 = arith.mulf %393, %492 : vector<8x128xf32>
    %494 = arith.mulf %493, %425 : vector<8x128xf32>
    %495 = arith.addf %491, %494 : vector<8x128xf32>
    %cst_133 = arith.constant 2.500000e+00 : f32
    %496 = vector.broadcast %cst_133 : f32 to vector<8x128xf32>
    %497 = arith.mulf %391, %496 : vector<8x128xf32>
    %498 = arith.mulf %497, %425 : vector<8x128xf32>
    %cst_134 = arith.constant -2.500000e+00 : f32
    %499 = vector.broadcast %cst_134 : f32 to vector<8x128xf32>
    %500 = arith.mulf %395, %499 : vector<8x128xf32>
    %501 = arith.mulf %500, %432 : vector<8x128xf32>
    %502 = arith.addf %498, %501 : vector<8x128xf32>
    %cst_135 = arith.constant 2.500000e+00 : f32
    %503 = vector.broadcast %cst_135 : f32 to vector<8x128xf32>
    %504 = arith.mulf %393, %503 : vector<8x128xf32>
    %505 = arith.mulf %504, %432 : vector<8x128xf32>
    %cst_136 = arith.constant -2.500000e+00 : f32
    %506 = vector.broadcast %cst_136 : f32 to vector<8x128xf32>
    %507 = arith.mulf %397, %506 : vector<8x128xf32>
    %508 = arith.mulf %507, %439 : vector<8x128xf32>
    %509 = arith.addf %505, %508 : vector<8x128xf32>
    %cst_137 = arith.constant 2.500000e+00 : f32
    %510 = vector.broadcast %cst_137 : f32 to vector<8x128xf32>
    %511 = arith.mulf %395, %510 : vector<8x128xf32>
    %512 = arith.mulf %511, %439 : vector<8x128xf32>
    %cst_138 = arith.constant -2.500000e+00 : f32
    %513 = vector.broadcast %cst_138 : f32 to vector<8x128xf32>
    %514 = arith.mulf %399, %513 : vector<8x128xf32>
    %515 = arith.mulf %514, %446 : vector<8x128xf32>
    %516 = arith.addf %512, %515 : vector<8x128xf32>
    %cst_139 = arith.constant 2.500000e+00 : f32
    %517 = vector.broadcast %cst_139 : f32 to vector<8x128xf32>
    %518 = arith.mulf %397, %517 : vector<8x128xf32>
    %519 = arith.mulf %518, %446 : vector<8x128xf32>
    %cst_140 = arith.constant -2.500000e+00 : f32
    %520 = vector.broadcast %cst_140 : f32 to vector<8x128xf32>
    %521 = arith.mulf %401, %520 : vector<8x128xf32>
    %522 = arith.mulf %521, %453 : vector<8x128xf32>
    %523 = arith.addf %519, %522 : vector<8x128xf32>
    %cst_141 = arith.constant 2.500000e+00 : f32
    %524 = vector.broadcast %cst_141 : f32 to vector<8x128xf32>
    %525 = arith.mulf %399, %524 : vector<8x128xf32>
    %526 = arith.mulf %525, %453 : vector<8x128xf32>
    %cst_142 = arith.constant -2.500000e+00 : f32
    %527 = vector.broadcast %cst_142 : f32 to vector<8x128xf32>
    %528 = arith.mulf %403, %527 : vector<8x128xf32>
    %529 = arith.mulf %528, %460 : vector<8x128xf32>
    %530 = arith.addf %526, %529 : vector<8x128xf32>
    %cst_143 = arith.constant 2.500000e+00 : f32
    %531 = vector.broadcast %cst_143 : f32 to vector<8x128xf32>
    %532 = arith.mulf %401, %531 : vector<8x128xf32>
    %533 = arith.mulf %532, %460 : vector<8x128xf32>
    %cst_144 = arith.constant -2.500000e+00 : f32
    %534 = vector.broadcast %cst_144 : f32 to vector<8x128xf32>
    %535 = arith.mulf %405, %534 : vector<8x128xf32>
    %536 = arith.mulf %535, %467 : vector<8x128xf32>
    %537 = arith.addf %533, %536 : vector<8x128xf32>
    %cst_145 = arith.constant 2.500000e+00 : f32
    %538 = vector.broadcast %cst_145 : f32 to vector<8x128xf32>
    %539 = arith.mulf %403, %538 : vector<8x128xf32>
    %540 = arith.mulf %539, %467 : vector<8x128xf32>
    %cst_146 = arith.constant -2.500000e+00 : f32
    %541 = vector.broadcast %cst_146 : f32 to vector<8x128xf32>
    %542 = arith.mulf %407, %541 : vector<8x128xf32>
    %543 = arith.mulf %542, %474 : vector<8x128xf32>
    %544 = arith.addf %540, %543 : vector<8x128xf32>
    %cst_147 = arith.constant 2.500000e+00 : f32
    %545 = vector.broadcast %cst_147 : f32 to vector<8x128xf32>
    %546 = arith.mulf %405, %545 : vector<8x128xf32>
    %547 = arith.mulf %546, %474 : vector<8x128xf32>
    %cst_148 = arith.constant -2.500000e+00 : f32
    %548 = vector.broadcast %cst_148 : f32 to vector<8x128xf32>
    %549 = arith.mulf %409, %548 : vector<8x128xf32>
    %550 = arith.mulf %549, %481 : vector<8x128xf32>
    %551 = arith.addf %547, %550 : vector<8x128xf32>
    %cst_149 = arith.constant 2.500000e+00 : f32
    %552 = vector.broadcast %cst_149 : f32 to vector<8x128xf32>
    %553 = arith.mulf %407, %552 : vector<8x128xf32>
    %554 = arith.mulf %553, %481 : vector<8x128xf32>
    %cst_150 = arith.constant -2.500000e+00 : f32
    %555 = vector.broadcast %cst_150 : f32 to vector<8x128xf32>
    %556 = arith.mulf %411, %555 : vector<8x128xf32>
    %557 = arith.mulf %556, %488 : vector<8x128xf32>
    %558 = arith.addf %554, %557 : vector<8x128xf32>
    %cst_151 = arith.constant 1.250000e+00 : f32
    %559 = vector.broadcast %cst_151 : f32 to vector<8x128xf32>
    %560 = arith.mulf %389, %559 : vector<8x128xf32>
    %561 = arith.mulf %560, %495 : vector<8x128xf32>
    %cst_152 = arith.constant -1.250000e+00 : f32
    %562 = vector.broadcast %cst_152 : f32 to vector<8x128xf32>
    %563 = arith.mulf %395, %562 : vector<8x128xf32>
    %564 = arith.mulf %563, %502 : vector<8x128xf32>
    %565 = arith.addf %561, %564 : vector<8x128xf32>
    %cst_153 = arith.constant 1.250000e+00 : f32
    %566 = vector.broadcast %cst_153 : f32 to vector<8x128xf32>
    %567 = arith.mulf %391, %566 : vector<8x128xf32>
    %568 = arith.mulf %567, %502 : vector<8x128xf32>
    %cst_154 = arith.constant -1.250000e+00 : f32
    %569 = vector.broadcast %cst_154 : f32 to vector<8x128xf32>
    %570 = arith.mulf %397, %569 : vector<8x128xf32>
    %571 = arith.mulf %570, %509 : vector<8x128xf32>
    %572 = arith.addf %568, %571 : vector<8x128xf32>
    %cst_155 = arith.constant 1.250000e+00 : f32
    %573 = vector.broadcast %cst_155 : f32 to vector<8x128xf32>
    %574 = arith.mulf %393, %573 : vector<8x128xf32>
    %575 = arith.mulf %574, %509 : vector<8x128xf32>
    %cst_156 = arith.constant -1.250000e+00 : f32
    %576 = vector.broadcast %cst_156 : f32 to vector<8x128xf32>
    %577 = arith.mulf %399, %576 : vector<8x128xf32>
    %578 = arith.mulf %577, %516 : vector<8x128xf32>
    %579 = arith.addf %575, %578 : vector<8x128xf32>
    %cst_157 = arith.constant 1.250000e+00 : f32
    %580 = vector.broadcast %cst_157 : f32 to vector<8x128xf32>
    %581 = arith.mulf %395, %580 : vector<8x128xf32>
    %582 = arith.mulf %581, %516 : vector<8x128xf32>
    %cst_158 = arith.constant -1.250000e+00 : f32
    %583 = vector.broadcast %cst_158 : f32 to vector<8x128xf32>
    %584 = arith.mulf %401, %583 : vector<8x128xf32>
    %585 = arith.mulf %584, %523 : vector<8x128xf32>
    %586 = arith.addf %582, %585 : vector<8x128xf32>
    %cst_159 = arith.constant 1.250000e+00 : f32
    %587 = vector.broadcast %cst_159 : f32 to vector<8x128xf32>
    %588 = arith.mulf %397, %587 : vector<8x128xf32>
    %589 = arith.mulf %588, %523 : vector<8x128xf32>
    %cst_160 = arith.constant -1.250000e+00 : f32
    %590 = vector.broadcast %cst_160 : f32 to vector<8x128xf32>
    %591 = arith.mulf %403, %590 : vector<8x128xf32>
    %592 = arith.mulf %591, %530 : vector<8x128xf32>
    %593 = arith.addf %589, %592 : vector<8x128xf32>
    %cst_161 = arith.constant 1.250000e+00 : f32
    %594 = vector.broadcast %cst_161 : f32 to vector<8x128xf32>
    %595 = arith.mulf %399, %594 : vector<8x128xf32>
    %596 = arith.mulf %595, %530 : vector<8x128xf32>
    %cst_162 = arith.constant -1.250000e+00 : f32
    %597 = vector.broadcast %cst_162 : f32 to vector<8x128xf32>
    %598 = arith.mulf %405, %597 : vector<8x128xf32>
    %599 = arith.mulf %598, %537 : vector<8x128xf32>
    %600 = arith.addf %596, %599 : vector<8x128xf32>
    %cst_163 = arith.constant 1.250000e+00 : f32
    %601 = vector.broadcast %cst_163 : f32 to vector<8x128xf32>
    %602 = arith.mulf %401, %601 : vector<8x128xf32>
    %603 = arith.mulf %602, %537 : vector<8x128xf32>
    %cst_164 = arith.constant -1.250000e+00 : f32
    %604 = vector.broadcast %cst_164 : f32 to vector<8x128xf32>
    %605 = arith.mulf %407, %604 : vector<8x128xf32>
    %606 = arith.mulf %605, %544 : vector<8x128xf32>
    %607 = arith.addf %603, %606 : vector<8x128xf32>
    %cst_165 = arith.constant 1.250000e+00 : f32
    %608 = vector.broadcast %cst_165 : f32 to vector<8x128xf32>
    %609 = arith.mulf %403, %608 : vector<8x128xf32>
    %610 = arith.mulf %609, %544 : vector<8x128xf32>
    %cst_166 = arith.constant -1.250000e+00 : f32
    %611 = vector.broadcast %cst_166 : f32 to vector<8x128xf32>
    %612 = arith.mulf %409, %611 : vector<8x128xf32>
    %613 = arith.mulf %612, %551 : vector<8x128xf32>
    %614 = arith.addf %610, %613 : vector<8x128xf32>
    %cst_167 = arith.constant 1.250000e+00 : f32
    %615 = vector.broadcast %cst_167 : f32 to vector<8x128xf32>
    %616 = arith.mulf %405, %615 : vector<8x128xf32>
    %617 = arith.mulf %616, %551 : vector<8x128xf32>
    %cst_168 = arith.constant -1.250000e+00 : f32
    %618 = vector.broadcast %cst_168 : f32 to vector<8x128xf32>
    %619 = arith.mulf %411, %618 : vector<8x128xf32>
    %620 = arith.mulf %619, %558 : vector<8x128xf32>
    %621 = arith.addf %617, %620 : vector<8x128xf32>
    %cst_169 = arith.constant 0.833333313 : f32
    %622 = vector.broadcast %cst_169 : f32 to vector<8x128xf32>
    %623 = arith.mulf %389, %622 : vector<8x128xf32>
    %624 = arith.mulf %623, %565 : vector<8x128xf32>
    %cst_170 = arith.constant -0.833333313 : f32
    %625 = vector.broadcast %cst_170 : f32 to vector<8x128xf32>
    %626 = arith.mulf %397, %625 : vector<8x128xf32>
    %627 = arith.mulf %626, %572 : vector<8x128xf32>
    %628 = arith.addf %624, %627 : vector<8x128xf32>
    %cst_171 = arith.constant 0.833333313 : f32
    %629 = vector.broadcast %cst_171 : f32 to vector<8x128xf32>
    %630 = arith.mulf %391, %629 : vector<8x128xf32>
    %631 = arith.mulf %630, %572 : vector<8x128xf32>
    %cst_172 = arith.constant -0.833333313 : f32
    %632 = vector.broadcast %cst_172 : f32 to vector<8x128xf32>
    %633 = arith.mulf %399, %632 : vector<8x128xf32>
    %634 = arith.mulf %633, %579 : vector<8x128xf32>
    %635 = arith.addf %631, %634 : vector<8x128xf32>
    %cst_173 = arith.constant 0.833333313 : f32
    %636 = vector.broadcast %cst_173 : f32 to vector<8x128xf32>
    %637 = arith.mulf %393, %636 : vector<8x128xf32>
    %638 = arith.mulf %637, %579 : vector<8x128xf32>
    %cst_174 = arith.constant -0.833333313 : f32
    %639 = vector.broadcast %cst_174 : f32 to vector<8x128xf32>
    %640 = arith.mulf %401, %639 : vector<8x128xf32>
    %641 = arith.mulf %640, %586 : vector<8x128xf32>
    %642 = arith.addf %638, %641 : vector<8x128xf32>
    %cst_175 = arith.constant 0.833333313 : f32
    %643 = vector.broadcast %cst_175 : f32 to vector<8x128xf32>
    %644 = arith.mulf %395, %643 : vector<8x128xf32>
    %645 = arith.mulf %644, %586 : vector<8x128xf32>
    %cst_176 = arith.constant -0.833333313 : f32
    %646 = vector.broadcast %cst_176 : f32 to vector<8x128xf32>
    %647 = arith.mulf %403, %646 : vector<8x128xf32>
    %648 = arith.mulf %647, %593 : vector<8x128xf32>
    %649 = arith.addf %645, %648 : vector<8x128xf32>
    %cst_177 = arith.constant 0.833333313 : f32
    %650 = vector.broadcast %cst_177 : f32 to vector<8x128xf32>
    %651 = arith.mulf %397, %650 : vector<8x128xf32>
    %652 = arith.mulf %651, %593 : vector<8x128xf32>
    %cst_178 = arith.constant -0.833333313 : f32
    %653 = vector.broadcast %cst_178 : f32 to vector<8x128xf32>
    %654 = arith.mulf %405, %653 : vector<8x128xf32>
    %655 = arith.mulf %654, %600 : vector<8x128xf32>
    %656 = arith.addf %652, %655 : vector<8x128xf32>
    %cst_179 = arith.constant 0.833333313 : f32
    %657 = vector.broadcast %cst_179 : f32 to vector<8x128xf32>
    %658 = arith.mulf %399, %657 : vector<8x128xf32>
    %659 = arith.mulf %658, %600 : vector<8x128xf32>
    %cst_180 = arith.constant -0.833333313 : f32
    %660 = vector.broadcast %cst_180 : f32 to vector<8x128xf32>
    %661 = arith.mulf %407, %660 : vector<8x128xf32>
    %662 = arith.mulf %661, %607 : vector<8x128xf32>
    %663 = arith.addf %659, %662 : vector<8x128xf32>
    %cst_181 = arith.constant 0.833333313 : f32
    %664 = vector.broadcast %cst_181 : f32 to vector<8x128xf32>
    %665 = arith.mulf %401, %664 : vector<8x128xf32>
    %666 = arith.mulf %665, %607 : vector<8x128xf32>
    %cst_182 = arith.constant -0.833333313 : f32
    %667 = vector.broadcast %cst_182 : f32 to vector<8x128xf32>
    %668 = arith.mulf %409, %667 : vector<8x128xf32>
    %669 = arith.mulf %668, %614 : vector<8x128xf32>
    %670 = arith.addf %666, %669 : vector<8x128xf32>
    %cst_183 = arith.constant 0.833333313 : f32
    %671 = vector.broadcast %cst_183 : f32 to vector<8x128xf32>
    %672 = arith.mulf %403, %671 : vector<8x128xf32>
    %673 = arith.mulf %672, %614 : vector<8x128xf32>
    %cst_184 = arith.constant -0.833333313 : f32
    %674 = vector.broadcast %cst_184 : f32 to vector<8x128xf32>
    %675 = arith.mulf %411, %674 : vector<8x128xf32>
    %676 = arith.mulf %675, %621 : vector<8x128xf32>
    %677 = arith.addf %673, %676 : vector<8x128xf32>
    %c10 = arith.constant 10 : index
    %678 = memref.load %arg2[%c10] : memref<162xf32, #tpu.memory_space<smem>>
    %679 = vector.broadcast %678 : f32 to vector<8x128xf32>
    %680 = arith.mulf %679, %628 : vector<8x128xf32>
    %681 = arith.addf %383, %680 : vector<8x128xf32>
    %c91 = arith.constant 91 : index
    %682 = memref.load %arg2[%c91] : memref<162xf32, #tpu.memory_space<smem>>
    %683 = vector.broadcast %682 : f32 to vector<8x128xf32>
    %684 = arith.mulf %683, %628 : vector<8x128xf32>
    %685 = arith.addf %387, %684 : vector<8x128xf32>
    %c11 = arith.constant 11 : index
    %686 = memref.load %arg2[%c11] : memref<162xf32, #tpu.memory_space<smem>>
    %687 = vector.broadcast %686 : f32 to vector<8x128xf32>
    %688 = arith.mulf %687, %635 : vector<8x128xf32>
    %689 = arith.addf %681, %688 : vector<8x128xf32>
    %c92 = arith.constant 92 : index
    %690 = memref.load %arg2[%c92] : memref<162xf32, #tpu.memory_space<smem>>
    %691 = vector.broadcast %690 : f32 to vector<8x128xf32>
    %692 = arith.mulf %691, %635 : vector<8x128xf32>
    %693 = arith.addf %685, %692 : vector<8x128xf32>
    %c12 = arith.constant 12 : index
    %694 = memref.load %arg2[%c12] : memref<162xf32, #tpu.memory_space<smem>>
    %695 = vector.broadcast %694 : f32 to vector<8x128xf32>
    %696 = arith.mulf %695, %642 : vector<8x128xf32>
    %697 = arith.addf %689, %696 : vector<8x128xf32>
    %c93 = arith.constant 93 : index
    %698 = memref.load %arg2[%c93] : memref<162xf32, #tpu.memory_space<smem>>
    %699 = vector.broadcast %698 : f32 to vector<8x128xf32>
    %700 = arith.mulf %699, %642 : vector<8x128xf32>
    %701 = arith.addf %693, %700 : vector<8x128xf32>
    %c13 = arith.constant 13 : index
    %702 = memref.load %arg2[%c13] : memref<162xf32, #tpu.memory_space<smem>>
    %703 = vector.broadcast %702 : f32 to vector<8x128xf32>
    %704 = arith.mulf %703, %649 : vector<8x128xf32>
    %705 = arith.addf %697, %704 : vector<8x128xf32>
    %c94 = arith.constant 94 : index
    %706 = memref.load %arg2[%c94] : memref<162xf32, #tpu.memory_space<smem>>
    %707 = vector.broadcast %706 : f32 to vector<8x128xf32>
    %708 = arith.mulf %707, %649 : vector<8x128xf32>
    %709 = arith.addf %701, %708 : vector<8x128xf32>
    %c14 = arith.constant 14 : index
    %710 = memref.load %arg2[%c14] : memref<162xf32, #tpu.memory_space<smem>>
    %711 = vector.broadcast %710 : f32 to vector<8x128xf32>
    %712 = arith.mulf %711, %656 : vector<8x128xf32>
    %713 = arith.addf %705, %712 : vector<8x128xf32>
    %c95 = arith.constant 95 : index
    %714 = memref.load %arg2[%c95] : memref<162xf32, #tpu.memory_space<smem>>
    %715 = vector.broadcast %714 : f32 to vector<8x128xf32>
    %716 = arith.mulf %715, %656 : vector<8x128xf32>
    %717 = arith.addf %709, %716 : vector<8x128xf32>
    %c15 = arith.constant 15 : index
    %718 = memref.load %arg2[%c15] : memref<162xf32, #tpu.memory_space<smem>>
    %719 = vector.broadcast %718 : f32 to vector<8x128xf32>
    %720 = arith.mulf %719, %663 : vector<8x128xf32>
    %721 = arith.addf %713, %720 : vector<8x128xf32>
    %c96 = arith.constant 96 : index
    %722 = memref.load %arg2[%c96] : memref<162xf32, #tpu.memory_space<smem>>
    %723 = vector.broadcast %722 : f32 to vector<8x128xf32>
    %724 = arith.mulf %723, %663 : vector<8x128xf32>
    %725 = arith.addf %717, %724 : vector<8x128xf32>
    %c16 = arith.constant 16 : index
    %726 = memref.load %arg2[%c16] : memref<162xf32, #tpu.memory_space<smem>>
    %727 = vector.broadcast %726 : f32 to vector<8x128xf32>
    %728 = arith.mulf %727, %670 : vector<8x128xf32>
    %729 = arith.addf %721, %728 : vector<8x128xf32>
    %c97 = arith.constant 97 : index
    %730 = memref.load %arg2[%c97] : memref<162xf32, #tpu.memory_space<smem>>
    %731 = vector.broadcast %730 : f32 to vector<8x128xf32>
    %732 = arith.mulf %731, %670 : vector<8x128xf32>
    %733 = arith.addf %725, %732 : vector<8x128xf32>
    %c17 = arith.constant 17 : index
    %734 = memref.load %arg2[%c17] : memref<162xf32, #tpu.memory_space<smem>>
    %735 = vector.broadcast %734 : f32 to vector<8x128xf32>
    %736 = arith.mulf %735, %677 : vector<8x128xf32>
    %737 = arith.addf %729, %736 : vector<8x128xf32>
    %c98 = arith.constant 98 : index
    %738 = memref.load %arg2[%c98] : memref<162xf32, #tpu.memory_space<smem>>
    %739 = vector.broadcast %738 : f32 to vector<8x128xf32>
    %740 = arith.mulf %739, %677 : vector<8x128xf32>
    %741 = arith.addf %733, %740 : vector<8x128xf32>
    %c2_185 = arith.constant 2 : index
    %c0_186 = arith.constant 0 : index
    %c0_187 = arith.constant 0 : index
    %742 = vector.load %arg3[%c2_185, %c0_186, %c0_187] : memref<9x8x128xf32, #tpu.memory_space<vmem>>, vector<1x8x128xf32>
    %743 = vector.shape_cast %742 : vector<1x8x128xf32> to vector<8x128xf32>
    %744 = arith.negf %743 : vector<8x128xf32>
    %745 = math.exp %744 : vector<8x128xf32>
    %cst_188 = arith.constant 1.000000e+00 : f32
    %746 = vector.broadcast %cst_188 : f32 to vector<8x128xf32>
    %747 = arith.addf %746, %745 : vector<8x128xf32>
    %748 = arith.divf %746, %747 : vector<8x128xf32>
    %749 = arith.mulf %743, %748 : vector<8x128xf32>
    %c18 = arith.constant 18 : index
    %750 = memref.load %arg2[%c18] : memref<162xf32, #tpu.memory_space<smem>>
    %751 = vector.broadcast %750 : f32 to vector<8x128xf32>
    %752 = arith.mulf %751, %749 : vector<8x128xf32>
    %753 = arith.addf %737, %752 : vector<8x128xf32>
    %c99 = arith.constant 99 : index
    %754 = memref.load %arg2[%c99] : memref<162xf32, #tpu.memory_space<smem>>
    %755 = vector.broadcast %754 : f32 to vector<8x128xf32>
    %756 = arith.mulf %755, %749 : vector<8x128xf32>
    %757 = arith.addf %741, %756 : vector<8x128xf32>
    %cst_189 = arith.constant -2.200000e+00 : f32
    %758 = vector.broadcast %cst_189 : f32 to vector<8x128xf32>
    %759 = arith.subf %743, %758 : vector<8x128xf32>
    %cst_190 = arith.constant -1.800000e+00 : f32
    %760 = vector.broadcast %cst_190 : f32 to vector<8x128xf32>
    %761 = arith.subf %743, %760 : vector<8x128xf32>
    %cst_191 = arith.constant -1.400000e+00 : f32
    %762 = vector.broadcast %cst_191 : f32 to vector<8x128xf32>
    %763 = arith.subf %743, %762 : vector<8x128xf32>
    %cst_192 = arith.constant -1.000000e+00 : f32
    %764 = vector.broadcast %cst_192 : f32 to vector<8x128xf32>
    %765 = arith.subf %743, %764 : vector<8x128xf32>
    %cst_193 = arith.constant -6.000000e-01 : f32
    %766 = vector.broadcast %cst_193 : f32 to vector<8x128xf32>
    %767 = arith.subf %743, %766 : vector<8x128xf32>
    %cst_194 = arith.constant -2.000000e-01 : f32
    %768 = vector.broadcast %cst_194 : f32 to vector<8x128xf32>
    %769 = arith.subf %743, %768 : vector<8x128xf32>
    %cst_195 = arith.constant 2.000000e-01 : f32
    %770 = vector.broadcast %cst_195 : f32 to vector<8x128xf32>
    %771 = arith.subf %743, %770 : vector<8x128xf32>
    %cst_196 = arith.constant 6.000000e-01 : f32
    %772 = vector.broadcast %cst_196 : f32 to vector<8x128xf32>
    %773 = arith.subf %743, %772 : vector<8x128xf32>
    %cst_197 = arith.constant 1.000000e+00 : f32
    %774 = vector.broadcast %cst_197 : f32 to vector<8x128xf32>
    %775 = arith.subf %743, %774 : vector<8x128xf32>
    %cst_198 = arith.constant 1.400000e+00 : f32
    %776 = vector.broadcast %cst_198 : f32 to vector<8x128xf32>
    %777 = arith.subf %743, %776 : vector<8x128xf32>
    %cst_199 = arith.constant 1.800000e+00 : f32
    %778 = vector.broadcast %cst_199 : f32 to vector<8x128xf32>
    %779 = arith.subf %743, %778 : vector<8x128xf32>
    %cst_200 = arith.constant 2.200000e+00 : f32
    %780 = vector.broadcast %cst_200 : f32 to vector<8x128xf32>
    %781 = arith.subf %743, %780 : vector<8x128xf32>
    %cst_201 = arith.constant 0.000000e+00 : f32
    %782 = vector.broadcast %cst_201 : f32 to vector<8x128xf32>
    %783 = arith.cmpf oge, %759, %782 : vector<8x128xf32>
    %cst_202 = arith.constant 0.000000e+00 : f32
    %784 = vector.broadcast %cst_202 : f32 to vector<8x128xf32>
    %785 = arith.cmpf olt, %761, %784 : vector<8x128xf32>
    %786 = arith.andi %783, %785 : vector<8x128xi1>
    %787 = arith.extui %786 : vector<8x128xi1> to vector<8x128xi32>
    %788 = arith.sitofp %787 : vector<8x128xi32> to vector<8x128xf32>
    %cst_203 = arith.constant 0.000000e+00 : f32
    %789 = vector.broadcast %cst_203 : f32 to vector<8x128xf32>
    %790 = arith.cmpf oge, %761, %789 : vector<8x128xf32>
    %cst_204 = arith.constant 0.000000e+00 : f32
    %791 = vector.broadcast %cst_204 : f32 to vector<8x128xf32>
    %792 = arith.cmpf olt, %763, %791 : vector<8x128xf32>
    %793 = arith.andi %790, %792 : vector<8x128xi1>
    %794 = arith.extui %793 : vector<8x128xi1> to vector<8x128xi32>
    %795 = arith.sitofp %794 : vector<8x128xi32> to vector<8x128xf32>
    %cst_205 = arith.constant 0.000000e+00 : f32
    %796 = vector.broadcast %cst_205 : f32 to vector<8x128xf32>
    %797 = arith.cmpf oge, %763, %796 : vector<8x128xf32>
    %cst_206 = arith.constant 0.000000e+00 : f32
    %798 = vector.broadcast %cst_206 : f32 to vector<8x128xf32>
    %799 = arith.cmpf olt, %765, %798 : vector<8x128xf32>
    %800 = arith.andi %797, %799 : vector<8x128xi1>
    %801 = arith.extui %800 : vector<8x128xi1> to vector<8x128xi32>
    %802 = arith.sitofp %801 : vector<8x128xi32> to vector<8x128xf32>
    %cst_207 = arith.constant 0.000000e+00 : f32
    %803 = vector.broadcast %cst_207 : f32 to vector<8x128xf32>
    %804 = arith.cmpf oge, %765, %803 : vector<8x128xf32>
    %cst_208 = arith.constant 0.000000e+00 : f32
    %805 = vector.broadcast %cst_208 : f32 to vector<8x128xf32>
    %806 = arith.cmpf olt, %767, %805 : vector<8x128xf32>
    %807 = arith.andi %804, %806 : vector<8x128xi1>
    %808 = arith.extui %807 : vector<8x128xi1> to vector<8x128xi32>
    %809 = arith.sitofp %808 : vector<8x128xi32> to vector<8x128xf32>
    %cst_209 = arith.constant 0.000000e+00 : f32
    %810 = vector.broadcast %cst_209 : f32 to vector<8x128xf32>
    %811 = arith.cmpf oge, %767, %810 : vector<8x128xf32>
    %cst_210 = arith.constant 0.000000e+00 : f32
    %812 = vector.broadcast %cst_210 : f32 to vector<8x128xf32>
    %813 = arith.cmpf olt, %769, %812 : vector<8x128xf32>
    %814 = arith.andi %811, %813 : vector<8x128xi1>
    %815 = arith.extui %814 : vector<8x128xi1> to vector<8x128xi32>
    %816 = arith.sitofp %815 : vector<8x128xi32> to vector<8x128xf32>
    %cst_211 = arith.constant 0.000000e+00 : f32
    %817 = vector.broadcast %cst_211 : f32 to vector<8x128xf32>
    %818 = arith.cmpf oge, %769, %817 : vector<8x128xf32>
    %cst_212 = arith.constant 0.000000e+00 : f32
    %819 = vector.broadcast %cst_212 : f32 to vector<8x128xf32>
    %820 = arith.cmpf olt, %771, %819 : vector<8x128xf32>
    %821 = arith.andi %818, %820 : vector<8x128xi1>
    %822 = arith.extui %821 : vector<8x128xi1> to vector<8x128xi32>
    %823 = arith.sitofp %822 : vector<8x128xi32> to vector<8x128xf32>
    %cst_213 = arith.constant 0.000000e+00 : f32
    %824 = vector.broadcast %cst_213 : f32 to vector<8x128xf32>
    %825 = arith.cmpf oge, %771, %824 : vector<8x128xf32>
    %cst_214 = arith.constant 0.000000e+00 : f32
    %826 = vector.broadcast %cst_214 : f32 to vector<8x128xf32>
    %827 = arith.cmpf olt, %773, %826 : vector<8x128xf32>
    %828 = arith.andi %825, %827 : vector<8x128xi1>
    %829 = arith.extui %828 : vector<8x128xi1> to vector<8x128xi32>
    %830 = arith.sitofp %829 : vector<8x128xi32> to vector<8x128xf32>
    %cst_215 = arith.constant 0.000000e+00 : f32
    %831 = vector.broadcast %cst_215 : f32 to vector<8x128xf32>
    %832 = arith.cmpf oge, %773, %831 : vector<8x128xf32>
    %cst_216 = arith.constant 0.000000e+00 : f32
    %833 = vector.broadcast %cst_216 : f32 to vector<8x128xf32>
    %834 = arith.cmpf olt, %775, %833 : vector<8x128xf32>
    %835 = arith.andi %832, %834 : vector<8x128xi1>
    %836 = arith.extui %835 : vector<8x128xi1> to vector<8x128xi32>
    %837 = arith.sitofp %836 : vector<8x128xi32> to vector<8x128xf32>
    %cst_217 = arith.constant 0.000000e+00 : f32
    %838 = vector.broadcast %cst_217 : f32 to vector<8x128xf32>
    %839 = arith.cmpf oge, %775, %838 : vector<8x128xf32>
    %cst_218 = arith.constant 0.000000e+00 : f32
    %840 = vector.broadcast %cst_218 : f32 to vector<8x128xf32>
    %841 = arith.cmpf olt, %777, %840 : vector<8x128xf32>
    %842 = arith.andi %839, %841 : vector<8x128xi1>
    %843 = arith.extui %842 : vector<8x128xi1> to vector<8x128xi32>
    %844 = arith.sitofp %843 : vector<8x128xi32> to vector<8x128xf32>
    %cst_219 = arith.constant 0.000000e+00 : f32
    %845 = vector.broadcast %cst_219 : f32 to vector<8x128xf32>
    %846 = arith.cmpf oge, %777, %845 : vector<8x128xf32>
    %cst_220 = arith.constant 0.000000e+00 : f32
    %847 = vector.broadcast %cst_220 : f32 to vector<8x128xf32>
    %848 = arith.cmpf olt, %779, %847 : vector<8x128xf32>
    %849 = arith.andi %846, %848 : vector<8x128xi1>
    %850 = arith.extui %849 : vector<8x128xi1> to vector<8x128xi32>
    %851 = arith.sitofp %850 : vector<8x128xi32> to vector<8x128xf32>
    %cst_221 = arith.constant 0.000000e+00 : f32
    %852 = vector.broadcast %cst_221 : f32 to vector<8x128xf32>
    %853 = arith.cmpf oge, %779, %852 : vector<8x128xf32>
    %cst_222 = arith.constant 0.000000e+00 : f32
    %854 = vector.broadcast %cst_222 : f32 to vector<8x128xf32>
    %855 = arith.cmpf olt, %781, %854 : vector<8x128xf32>
    %856 = arith.andi %853, %855 : vector<8x128xi1>
    %857 = arith.extui %856 : vector<8x128xi1> to vector<8x128xi32>
    %858 = arith.sitofp %857 : vector<8x128xi32> to vector<8x128xf32>
    %cst_223 = arith.constant 2.500000e+00 : f32
    %859 = vector.broadcast %cst_223 : f32 to vector<8x128xf32>
    %860 = arith.mulf %759, %859 : vector<8x128xf32>
    %861 = arith.mulf %860, %788 : vector<8x128xf32>
    %cst_224 = arith.constant -2.500000e+00 : f32
    %862 = vector.broadcast %cst_224 : f32 to vector<8x128xf32>
    %863 = arith.mulf %763, %862 : vector<8x128xf32>
    %864 = arith.mulf %863, %795 : vector<8x128xf32>
    %865 = arith.addf %861, %864 : vector<8x128xf32>
    %cst_225 = arith.constant 2.500000e+00 : f32
    %866 = vector.broadcast %cst_225 : f32 to vector<8x128xf32>
    %867 = arith.mulf %761, %866 : vector<8x128xf32>
    %868 = arith.mulf %867, %795 : vector<8x128xf32>
    %cst_226 = arith.constant -2.500000e+00 : f32
    %869 = vector.broadcast %cst_226 : f32 to vector<8x128xf32>
    %870 = arith.mulf %765, %869 : vector<8x128xf32>
    %871 = arith.mulf %870, %802 : vector<8x128xf32>
    %872 = arith.addf %868, %871 : vector<8x128xf32>
    %cst_227 = arith.constant 2.500000e+00 : f32
    %873 = vector.broadcast %cst_227 : f32 to vector<8x128xf32>
    %874 = arith.mulf %763, %873 : vector<8x128xf32>
    %875 = arith.mulf %874, %802 : vector<8x128xf32>
    %cst_228 = arith.constant -2.500000e+00 : f32
    %876 = vector.broadcast %cst_228 : f32 to vector<8x128xf32>
    %877 = arith.mulf %767, %876 : vector<8x128xf32>
    %878 = arith.mulf %877, %809 : vector<8x128xf32>
    %879 = arith.addf %875, %878 : vector<8x128xf32>
    %cst_229 = arith.constant 2.500000e+00 : f32
    %880 = vector.broadcast %cst_229 : f32 to vector<8x128xf32>
    %881 = arith.mulf %765, %880 : vector<8x128xf32>
    %882 = arith.mulf %881, %809 : vector<8x128xf32>
    %cst_230 = arith.constant -2.500000e+00 : f32
    %883 = vector.broadcast %cst_230 : f32 to vector<8x128xf32>
    %884 = arith.mulf %769, %883 : vector<8x128xf32>
    %885 = arith.mulf %884, %816 : vector<8x128xf32>
    %886 = arith.addf %882, %885 : vector<8x128xf32>
    %cst_231 = arith.constant 2.500000e+00 : f32
    %887 = vector.broadcast %cst_231 : f32 to vector<8x128xf32>
    %888 = arith.mulf %767, %887 : vector<8x128xf32>
    %889 = arith.mulf %888, %816 : vector<8x128xf32>
    %cst_232 = arith.constant -2.500000e+00 : f32
    %890 = vector.broadcast %cst_232 : f32 to vector<8x128xf32>
    %891 = arith.mulf %771, %890 : vector<8x128xf32>
    %892 = arith.mulf %891, %823 : vector<8x128xf32>
    %893 = arith.addf %889, %892 : vector<8x128xf32>
    %cst_233 = arith.constant 2.500000e+00 : f32
    %894 = vector.broadcast %cst_233 : f32 to vector<8x128xf32>
    %895 = arith.mulf %769, %894 : vector<8x128xf32>
    %896 = arith.mulf %895, %823 : vector<8x128xf32>
    %cst_234 = arith.constant -2.500000e+00 : f32
    %897 = vector.broadcast %cst_234 : f32 to vector<8x128xf32>
    %898 = arith.mulf %773, %897 : vector<8x128xf32>
    %899 = arith.mulf %898, %830 : vector<8x128xf32>
    %900 = arith.addf %896, %899 : vector<8x128xf32>
    %cst_235 = arith.constant 2.500000e+00 : f32
    %901 = vector.broadcast %cst_235 : f32 to vector<8x128xf32>
    %902 = arith.mulf %771, %901 : vector<8x128xf32>
    %903 = arith.mulf %902, %830 : vector<8x128xf32>
    %cst_236 = arith.constant -2.500000e+00 : f32
    %904 = vector.broadcast %cst_236 : f32 to vector<8x128xf32>
    %905 = arith.mulf %775, %904 : vector<8x128xf32>
    %906 = arith.mulf %905, %837 : vector<8x128xf32>
    %907 = arith.addf %903, %906 : vector<8x128xf32>
    %cst_237 = arith.constant 2.500000e+00 : f32
    %908 = vector.broadcast %cst_237 : f32 to vector<8x128xf32>
    %909 = arith.mulf %773, %908 : vector<8x128xf32>
    %910 = arith.mulf %909, %837 : vector<8x128xf32>
    %cst_238 = arith.constant -2.500000e+00 : f32
    %911 = vector.broadcast %cst_238 : f32 to vector<8x128xf32>
    %912 = arith.mulf %777, %911 : vector<8x128xf32>
    %913 = arith.mulf %912, %844 : vector<8x128xf32>
    %914 = arith.addf %910, %913 : vector<8x128xf32>
    %cst_239 = arith.constant 2.500000e+00 : f32
    %915 = vector.broadcast %cst_239 : f32 to vector<8x128xf32>
    %916 = arith.mulf %775, %915 : vector<8x128xf32>
    %917 = arith.mulf %916, %844 : vector<8x128xf32>
    %cst_240 = arith.constant -2.500000e+00 : f32
    %918 = vector.broadcast %cst_240 : f32 to vector<8x128xf32>
    %919 = arith.mulf %779, %918 : vector<8x128xf32>
    %920 = arith.mulf %919, %851 : vector<8x128xf32>
    %921 = arith.addf %917, %920 : vector<8x128xf32>
    %cst_241 = arith.constant 2.500000e+00 : f32
    %922 = vector.broadcast %cst_241 : f32 to vector<8x128xf32>
    %923 = arith.mulf %777, %922 : vector<8x128xf32>
    %924 = arith.mulf %923, %851 : vector<8x128xf32>
    %cst_242 = arith.constant -2.500000e+00 : f32
    %925 = vector.broadcast %cst_242 : f32 to vector<8x128xf32>
    %926 = arith.mulf %781, %925 : vector<8x128xf32>
    %927 = arith.mulf %926, %858 : vector<8x128xf32>
    %928 = arith.addf %924, %927 : vector<8x128xf32>
    %cst_243 = arith.constant 1.250000e+00 : f32
    %929 = vector.broadcast %cst_243 : f32 to vector<8x128xf32>
    %930 = arith.mulf %759, %929 : vector<8x128xf32>
    %931 = arith.mulf %930, %865 : vector<8x128xf32>
    %cst_244 = arith.constant -1.250000e+00 : f32
    %932 = vector.broadcast %cst_244 : f32 to vector<8x128xf32>
    %933 = arith.mulf %765, %932 : vector<8x128xf32>
    %934 = arith.mulf %933, %872 : vector<8x128xf32>
    %935 = arith.addf %931, %934 : vector<8x128xf32>
    %cst_245 = arith.constant 1.250000e+00 : f32
    %936 = vector.broadcast %cst_245 : f32 to vector<8x128xf32>
    %937 = arith.mulf %761, %936 : vector<8x128xf32>
    %938 = arith.mulf %937, %872 : vector<8x128xf32>
    %cst_246 = arith.constant -1.250000e+00 : f32
    %939 = vector.broadcast %cst_246 : f32 to vector<8x128xf32>
    %940 = arith.mulf %767, %939 : vector<8x128xf32>
    %941 = arith.mulf %940, %879 : vector<8x128xf32>
    %942 = arith.addf %938, %941 : vector<8x128xf32>
    %cst_247 = arith.constant 1.250000e+00 : f32
    %943 = vector.broadcast %cst_247 : f32 to vector<8x128xf32>
    %944 = arith.mulf %763, %943 : vector<8x128xf32>
    %945 = arith.mulf %944, %879 : vector<8x128xf32>
    %cst_248 = arith.constant -1.250000e+00 : f32
    %946 = vector.broadcast %cst_248 : f32 to vector<8x128xf32>
    %947 = arith.mulf %769, %946 : vector<8x128xf32>
    %948 = arith.mulf %947, %886 : vector<8x128xf32>
    %949 = arith.addf %945, %948 : vector<8x128xf32>
    %cst_249 = arith.constant 1.250000e+00 : f32
    %950 = vector.broadcast %cst_249 : f32 to vector<8x128xf32>
    %951 = arith.mulf %765, %950 : vector<8x128xf32>
    %952 = arith.mulf %951, %886 : vector<8x128xf32>
    %cst_250 = arith.constant -1.250000e+00 : f32
    %953 = vector.broadcast %cst_250 : f32 to vector<8x128xf32>
    %954 = arith.mulf %771, %953 : vector<8x128xf32>
    %955 = arith.mulf %954, %893 : vector<8x128xf32>
    %956 = arith.addf %952, %955 : vector<8x128xf32>
    %cst_251 = arith.constant 1.250000e+00 : f32
    %957 = vector.broadcast %cst_251 : f32 to vector<8x128xf32>
    %958 = arith.mulf %767, %957 : vector<8x128xf32>
    %959 = arith.mulf %958, %893 : vector<8x128xf32>
    %cst_252 = arith.constant -1.250000e+00 : f32
    %960 = vector.broadcast %cst_252 : f32 to vector<8x128xf32>
    %961 = arith.mulf %773, %960 : vector<8x128xf32>
    %962 = arith.mulf %961, %900 : vector<8x128xf32>
    %963 = arith.addf %959, %962 : vector<8x128xf32>
    %cst_253 = arith.constant 1.250000e+00 : f32
    %964 = vector.broadcast %cst_253 : f32 to vector<8x128xf32>
    %965 = arith.mulf %769, %964 : vector<8x128xf32>
    %966 = arith.mulf %965, %900 : vector<8x128xf32>
    %cst_254 = arith.constant -1.250000e+00 : f32
    %967 = vector.broadcast %cst_254 : f32 to vector<8x128xf32>
    %968 = arith.mulf %775, %967 : vector<8x128xf32>
    %969 = arith.mulf %968, %907 : vector<8x128xf32>
    %970 = arith.addf %966, %969 : vector<8x128xf32>
    %cst_255 = arith.constant 1.250000e+00 : f32
    %971 = vector.broadcast %cst_255 : f32 to vector<8x128xf32>
    %972 = arith.mulf %771, %971 : vector<8x128xf32>
    %973 = arith.mulf %972, %907 : vector<8x128xf32>
    %cst_256 = arith.constant -1.250000e+00 : f32
    %974 = vector.broadcast %cst_256 : f32 to vector<8x128xf32>
    %975 = arith.mulf %777, %974 : vector<8x128xf32>
    %976 = arith.mulf %975, %914 : vector<8x128xf32>
    %977 = arith.addf %973, %976 : vector<8x128xf32>
    %cst_257 = arith.constant 1.250000e+00 : f32
    %978 = vector.broadcast %cst_257 : f32 to vector<8x128xf32>
    %979 = arith.mulf %773, %978 : vector<8x128xf32>
    %980 = arith.mulf %979, %914 : vector<8x128xf32>
    %cst_258 = arith.constant -1.250000e+00 : f32
    %981 = vector.broadcast %cst_258 : f32 to vector<8x128xf32>
    %982 = arith.mulf %779, %981 : vector<8x128xf32>
    %983 = arith.mulf %982, %921 : vector<8x128xf32>
    %984 = arith.addf %980, %983 : vector<8x128xf32>
    %cst_259 = arith.constant 1.250000e+00 : f32
    %985 = vector.broadcast %cst_259 : f32 to vector<8x128xf32>
    %986 = arith.mulf %775, %985 : vector<8x128xf32>
    %987 = arith.mulf %986, %921 : vector<8x128xf32>
    %cst_260 = arith.constant -1.250000e+00 : f32
    %988 = vector.broadcast %cst_260 : f32 to vector<8x128xf32>
    %989 = arith.mulf %781, %988 : vector<8x128xf32>
    %990 = arith.mulf %989, %928 : vector<8x128xf32>
    %991 = arith.addf %987, %990 : vector<8x128xf32>
    %cst_261 = arith.constant 0.833333313 : f32
    %992 = vector.broadcast %cst_261 : f32 to vector<8x128xf32>
    %993 = arith.mulf %759, %992 : vector<8x128xf32>
    %994 = arith.mulf %993, %935 : vector<8x128xf32>
    %cst_262 = arith.constant -0.833333313 : f32
    %995 = vector.broadcast %cst_262 : f32 to vector<8x128xf32>
    %996 = arith.mulf %767, %995 : vector<8x128xf32>
    %997 = arith.mulf %996, %942 : vector<8x128xf32>
    %998 = arith.addf %994, %997 : vector<8x128xf32>
    %cst_263 = arith.constant 0.833333313 : f32
    %999 = vector.broadcast %cst_263 : f32 to vector<8x128xf32>
    %1000 = arith.mulf %761, %999 : vector<8x128xf32>
    %1001 = arith.mulf %1000, %942 : vector<8x128xf32>
    %cst_264 = arith.constant -0.833333313 : f32
    %1002 = vector.broadcast %cst_264 : f32 to vector<8x128xf32>
    %1003 = arith.mulf %769, %1002 : vector<8x128xf32>
    %1004 = arith.mulf %1003, %949 : vector<8x128xf32>
    %1005 = arith.addf %1001, %1004 : vector<8x128xf32>
    %cst_265 = arith.constant 0.833333313 : f32
    %1006 = vector.broadcast %cst_265 : f32 to vector<8x128xf32>
    %1007 = arith.mulf %763, %1006 : vector<8x128xf32>
    %1008 = arith.mulf %1007, %949 : vector<8x128xf32>
    %cst_266 = arith.constant -0.833333313 : f32
    %1009 = vector.broadcast %cst_266 : f32 to vector<8x128xf32>
    %1010 = arith.mulf %771, %1009 : vector<8x128xf32>
    %1011 = arith.mulf %1010, %956 : vector<8x128xf32>
    %1012 = arith.addf %1008, %1011 : vector<8x128xf32>
    %cst_267 = arith.constant 0.833333313 : f32
    %1013 = vector.broadcast %cst_267 : f32 to vector<8x128xf32>
    %1014 = arith.mulf %765, %1013 : vector<8x128xf32>
    %1015 = arith.mulf %1014, %956 : vector<8x128xf32>
    %cst_268 = arith.constant -0.833333313 : f32
    %1016 = vector.broadcast %cst_268 : f32 to vector<8x128xf32>
    %1017 = arith.mulf %773, %1016 : vector<8x128xf32>
    %1018 = arith.mulf %1017, %963 : vector<8x128xf32>
    %1019 = arith.addf %1015, %1018 : vector<8x128xf32>
    %cst_269 = arith.constant 0.833333313 : f32
    %1020 = vector.broadcast %cst_269 : f32 to vector<8x128xf32>
    %1021 = arith.mulf %767, %1020 : vector<8x128xf32>
    %1022 = arith.mulf %1021, %963 : vector<8x128xf32>
    %cst_270 = arith.constant -0.833333313 : f32
    %1023 = vector.broadcast %cst_270 : f32 to vector<8x128xf32>
    %1024 = arith.mulf %775, %1023 : vector<8x128xf32>
    %1025 = arith.mulf %1024, %970 : vector<8x128xf32>
    %1026 = arith.addf %1022, %1025 : vector<8x128xf32>
    %cst_271 = arith.constant 0.833333313 : f32
    %1027 = vector.broadcast %cst_271 : f32 to vector<8x128xf32>
    %1028 = arith.mulf %769, %1027 : vector<8x128xf32>
    %1029 = arith.mulf %1028, %970 : vector<8x128xf32>
    %cst_272 = arith.constant -0.833333313 : f32
    %1030 = vector.broadcast %cst_272 : f32 to vector<8x128xf32>
    %1031 = arith.mulf %777, %1030 : vector<8x128xf32>
    %1032 = arith.mulf %1031, %977 : vector<8x128xf32>
    %1033 = arith.addf %1029, %1032 : vector<8x128xf32>
    %cst_273 = arith.constant 0.833333313 : f32
    %1034 = vector.broadcast %cst_273 : f32 to vector<8x128xf32>
    %1035 = arith.mulf %771, %1034 : vector<8x128xf32>
    %1036 = arith.mulf %1035, %977 : vector<8x128xf32>
    %cst_274 = arith.constant -0.833333313 : f32
    %1037 = vector.broadcast %cst_274 : f32 to vector<8x128xf32>
    %1038 = arith.mulf %779, %1037 : vector<8x128xf32>
    %1039 = arith.mulf %1038, %984 : vector<8x128xf32>
    %1040 = arith.addf %1036, %1039 : vector<8x128xf32>
    %cst_275 = arith.constant 0.833333313 : f32
    %1041 = vector.broadcast %cst_275 : f32 to vector<8x128xf32>
    %1042 = arith.mulf %773, %1041 : vector<8x128xf32>
    %1043 = arith.mulf %1042, %984 : vector<8x128xf32>
    %cst_276 = arith.constant -0.833333313 : f32
    %1044 = vector.broadcast %cst_276 : f32 to vector<8x128xf32>
    %1045 = arith.mulf %781, %1044 : vector<8x128xf32>
    %1046 = arith.mulf %1045, %991 : vector<8x128xf32>
    %1047 = arith.addf %1043, %1046 : vector<8x128xf32>
    %c19 = arith.constant 19 : index
    %1048 = memref.load %arg2[%c19] : memref<162xf32, #tpu.memory_space<smem>>
    %1049 = vector.broadcast %1048 : f32 to vector<8x128xf32>
    %1050 = arith.mulf %1049, %998 : vector<8x128xf32>
    %1051 = arith.addf %753, %1050 : vector<8x128xf32>
    %c100 = arith.constant 100 : index
    %1052 = memref.load %arg2[%c100] : memref<162xf32, #tpu.memory_space<smem>>
    %1053 = vector.broadcast %1052 : f32 to vector<8x128xf32>
    %1054 = arith.mulf %1053, %998 : vector<8x128xf32>
    %1055 = arith.addf %757, %1054 : vector<8x128xf32>
    %c20 = arith.constant 20 : index
    %1056 = memref.load %arg2[%c20] : memref<162xf32, #tpu.memory_space<smem>>
    %1057 = vector.broadcast %1056 : f32 to vector<8x128xf32>
    %1058 = arith.mulf %1057, %1005 : vector<8x128xf32>
    %1059 = arith.addf %1051, %1058 : vector<8x128xf32>
    %c101 = arith.constant 101 : index
    %1060 = memref.load %arg2[%c101] : memref<162xf32, #tpu.memory_space<smem>>
    %1061 = vector.broadcast %1060 : f32 to vector<8x128xf32>
    %1062 = arith.mulf %1061, %1005 : vector<8x128xf32>
    %1063 = arith.addf %1055, %1062 : vector<8x128xf32>
    %c21 = arith.constant 21 : index
    %1064 = memref.load %arg2[%c21] : memref<162xf32, #tpu.memory_space<smem>>
    %1065 = vector.broadcast %1064 : f32 to vector<8x128xf32>
    %1066 = arith.mulf %1065, %1012 : vector<8x128xf32>
    %1067 = arith.addf %1059, %1066 : vector<8x128xf32>
    %c102 = arith.constant 102 : index
    %1068 = memref.load %arg2[%c102] : memref<162xf32, #tpu.memory_space<smem>>
    %1069 = vector.broadcast %1068 : f32 to vector<8x128xf32>
    %1070 = arith.mulf %1069, %1012 : vector<8x128xf32>
    %1071 = arith.addf %1063, %1070 : vector<8x128xf32>
    %c22 = arith.constant 22 : index
    %1072 = memref.load %arg2[%c22] : memref<162xf32, #tpu.memory_space<smem>>
    %1073 = vector.broadcast %1072 : f32 to vector<8x128xf32>
    %1074 = arith.mulf %1073, %1019 : vector<8x128xf32>
    %1075 = arith.addf %1067, %1074 : vector<8x128xf32>
    %c103 = arith.constant 103 : index
    %1076 = memref.load %arg2[%c103] : memref<162xf32, #tpu.memory_space<smem>>
    %1077 = vector.broadcast %1076 : f32 to vector<8x128xf32>
    %1078 = arith.mulf %1077, %1019 : vector<8x128xf32>
    %1079 = arith.addf %1071, %1078 : vector<8x128xf32>
    %c23 = arith.constant 23 : index
    %1080 = memref.load %arg2[%c23] : memref<162xf32, #tpu.memory_space<smem>>
    %1081 = vector.broadcast %1080 : f32 to vector<8x128xf32>
    %1082 = arith.mulf %1081, %1026 : vector<8x128xf32>
    %1083 = arith.addf %1075, %1082 : vector<8x128xf32>
    %c104 = arith.constant 104 : index
    %1084 = memref.load %arg2[%c104] : memref<162xf32, #tpu.memory_space<smem>>
    %1085 = vector.broadcast %1084 : f32 to vector<8x128xf32>
    %1086 = arith.mulf %1085, %1026 : vector<8x128xf32>
    %1087 = arith.addf %1079, %1086 : vector<8x128xf32>
    %c24 = arith.constant 24 : index
    %1088 = memref.load %arg2[%c24] : memref<162xf32, #tpu.memory_space<smem>>
    %1089 = vector.broadcast %1088 : f32 to vector<8x128xf32>
    %1090 = arith.mulf %1089, %1033 : vector<8x128xf32>
    %1091 = arith.addf %1083, %1090 : vector<8x128xf32>
    %c105 = arith.constant 105 : index
    %1092 = memref.load %arg2[%c105] : memref<162xf32, #tpu.memory_space<smem>>
    %1093 = vector.broadcast %1092 : f32 to vector<8x128xf32>
    %1094 = arith.mulf %1093, %1033 : vector<8x128xf32>
    %1095 = arith.addf %1087, %1094 : vector<8x128xf32>
    %c25 = arith.constant 25 : index
    %1096 = memref.load %arg2[%c25] : memref<162xf32, #tpu.memory_space<smem>>
    %1097 = vector.broadcast %1096 : f32 to vector<8x128xf32>
    %1098 = arith.mulf %1097, %1040 : vector<8x128xf32>
    %1099 = arith.addf %1091, %1098 : vector<8x128xf32>
    %c106 = arith.constant 106 : index
    %1100 = memref.load %arg2[%c106] : memref<162xf32, #tpu.memory_space<smem>>
    %1101 = vector.broadcast %1100 : f32 to vector<8x128xf32>
    %1102 = arith.mulf %1101, %1040 : vector<8x128xf32>
    %1103 = arith.addf %1095, %1102 : vector<8x128xf32>
    %c26 = arith.constant 26 : index
    %1104 = memref.load %arg2[%c26] : memref<162xf32, #tpu.memory_space<smem>>
    %1105 = vector.broadcast %1104 : f32 to vector<8x128xf32>
    %1106 = arith.mulf %1105, %1047 : vector<8x128xf32>
    %1107 = arith.addf %1099, %1106 : vector<8x128xf32>
    %c107 = arith.constant 107 : index
    %1108 = memref.load %arg2[%c107] : memref<162xf32, #tpu.memory_space<smem>>
    %1109 = vector.broadcast %1108 : f32 to vector<8x128xf32>
    %1110 = arith.mulf %1109, %1047 : vector<8x128xf32>
    %1111 = arith.addf %1103, %1110 : vector<8x128xf32>
    %c3_277 = arith.constant 3 : index
    %c0_278 = arith.constant 0 : index
    %c0_279 = arith.constant 0 : index
    %1112 = vector.load %arg3[%c3_277, %c0_278, %c0_279] : memref<9x8x128xf32, #tpu.memory_space<vmem>>, vector<1x8x128xf32>
    %1113 = vector.shape_cast %1112 : vector<1x8x128xf32> to vector<8x128xf32>
    %1114 = arith.negf %1113 : vector<8x128xf32>
    %1115 = math.exp %1114 : vector<8x128xf32>
    %cst_280 = arith.constant 1.000000e+00 : f32
    %1116 = vector.broadcast %cst_280 : f32 to vector<8x128xf32>
    %1117 = arith.addf %1116, %1115 : vector<8x128xf32>
    %1118 = arith.divf %1116, %1117 : vector<8x128xf32>
    %1119 = arith.mulf %1113, %1118 : vector<8x128xf32>
    %c27 = arith.constant 27 : index
    %1120 = memref.load %arg2[%c27] : memref<162xf32, #tpu.memory_space<smem>>
    %1121 = vector.broadcast %1120 : f32 to vector<8x128xf32>
    %1122 = arith.mulf %1121, %1119 : vector<8x128xf32>
    %1123 = arith.addf %1107, %1122 : vector<8x128xf32>
    %c108 = arith.constant 108 : index
    %1124 = memref.load %arg2[%c108] : memref<162xf32, #tpu.memory_space<smem>>
    %1125 = vector.broadcast %1124 : f32 to vector<8x128xf32>
    %1126 = arith.mulf %1125, %1119 : vector<8x128xf32>
    %1127 = arith.addf %1111, %1126 : vector<8x128xf32>
    %cst_281 = arith.constant -2.200000e+00 : f32
    %1128 = vector.broadcast %cst_281 : f32 to vector<8x128xf32>
    %1129 = arith.subf %1113, %1128 : vector<8x128xf32>
    %cst_282 = arith.constant -1.800000e+00 : f32
    %1130 = vector.broadcast %cst_282 : f32 to vector<8x128xf32>
    %1131 = arith.subf %1113, %1130 : vector<8x128xf32>
    %cst_283 = arith.constant -1.400000e+00 : f32
    %1132 = vector.broadcast %cst_283 : f32 to vector<8x128xf32>
    %1133 = arith.subf %1113, %1132 : vector<8x128xf32>
    %cst_284 = arith.constant -1.000000e+00 : f32
    %1134 = vector.broadcast %cst_284 : f32 to vector<8x128xf32>
    %1135 = arith.subf %1113, %1134 : vector<8x128xf32>
    %cst_285 = arith.constant -6.000000e-01 : f32
    %1136 = vector.broadcast %cst_285 : f32 to vector<8x128xf32>
    %1137 = arith.subf %1113, %1136 : vector<8x128xf32>
    %cst_286 = arith.constant -2.000000e-01 : f32
    %1138 = vector.broadcast %cst_286 : f32 to vector<8x128xf32>
    %1139 = arith.subf %1113, %1138 : vector<8x128xf32>
    %cst_287 = arith.constant 2.000000e-01 : f32
    %1140 = vector.broadcast %cst_287 : f32 to vector<8x128xf32>
    %1141 = arith.subf %1113, %1140 : vector<8x128xf32>
    %cst_288 = arith.constant 6.000000e-01 : f32
    %1142 = vector.broadcast %cst_288 : f32 to vector<8x128xf32>
    %1143 = arith.subf %1113, %1142 : vector<8x128xf32>
    %cst_289 = arith.constant 1.000000e+00 : f32
    %1144 = vector.broadcast %cst_289 : f32 to vector<8x128xf32>
    %1145 = arith.subf %1113, %1144 : vector<8x128xf32>
    %cst_290 = arith.constant 1.400000e+00 : f32
    %1146 = vector.broadcast %cst_290 : f32 to vector<8x128xf32>
    %1147 = arith.subf %1113, %1146 : vector<8x128xf32>
    %cst_291 = arith.constant 1.800000e+00 : f32
    %1148 = vector.broadcast %cst_291 : f32 to vector<8x128xf32>
    %1149 = arith.subf %1113, %1148 : vector<8x128xf32>
    %cst_292 = arith.constant 2.200000e+00 : f32
    %1150 = vector.broadcast %cst_292 : f32 to vector<8x128xf32>
    %1151 = arith.subf %1113, %1150 : vector<8x128xf32>
    %cst_293 = arith.constant 0.000000e+00 : f32
    %1152 = vector.broadcast %cst_293 : f32 to vector<8x128xf32>
    %1153 = arith.cmpf oge, %1129, %1152 : vector<8x128xf32>
    %cst_294 = arith.constant 0.000000e+00 : f32
    %1154 = vector.broadcast %cst_294 : f32 to vector<8x128xf32>
    %1155 = arith.cmpf olt, %1131, %1154 : vector<8x128xf32>
    %1156 = arith.andi %1153, %1155 : vector<8x128xi1>
    %1157 = arith.extui %1156 : vector<8x128xi1> to vector<8x128xi32>
    %1158 = arith.sitofp %1157 : vector<8x128xi32> to vector<8x128xf32>
    %cst_295 = arith.constant 0.000000e+00 : f32
    %1159 = vector.broadcast %cst_295 : f32 to vector<8x128xf32>
    %1160 = arith.cmpf oge, %1131, %1159 : vector<8x128xf32>
    %cst_296 = arith.constant 0.000000e+00 : f32
    %1161 = vector.broadcast %cst_296 : f32 to vector<8x128xf32>
    %1162 = arith.cmpf olt, %1133, %1161 : vector<8x128xf32>
    %1163 = arith.andi %1160, %1162 : vector<8x128xi1>
    %1164 = arith.extui %1163 : vector<8x128xi1> to vector<8x128xi32>
    %1165 = arith.sitofp %1164 : vector<8x128xi32> to vector<8x128xf32>
    %cst_297 = arith.constant 0.000000e+00 : f32
    %1166 = vector.broadcast %cst_297 : f32 to vector<8x128xf32>
    %1167 = arith.cmpf oge, %1133, %1166 : vector<8x128xf32>
    %cst_298 = arith.constant 0.000000e+00 : f32
    %1168 = vector.broadcast %cst_298 : f32 to vector<8x128xf32>
    %1169 = arith.cmpf olt, %1135, %1168 : vector<8x128xf32>
    %1170 = arith.andi %1167, %1169 : vector<8x128xi1>
    %1171 = arith.extui %1170 : vector<8x128xi1> to vector<8x128xi32>
    %1172 = arith.sitofp %1171 : vector<8x128xi32> to vector<8x128xf32>
    %cst_299 = arith.constant 0.000000e+00 : f32
    %1173 = vector.broadcast %cst_299 : f32 to vector<8x128xf32>
    %1174 = arith.cmpf oge, %1135, %1173 : vector<8x128xf32>
    %cst_300 = arith.constant 0.000000e+00 : f32
    %1175 = vector.broadcast %cst_300 : f32 to vector<8x128xf32>
    %1176 = arith.cmpf olt, %1137, %1175 : vector<8x128xf32>
    %1177 = arith.andi %1174, %1176 : vector<8x128xi1>
    %1178 = arith.extui %1177 : vector<8x128xi1> to vector<8x128xi32>
    %1179 = arith.sitofp %1178 : vector<8x128xi32> to vector<8x128xf32>
    %cst_301 = arith.constant 0.000000e+00 : f32
    %1180 = vector.broadcast %cst_301 : f32 to vector<8x128xf32>
    %1181 = arith.cmpf oge, %1137, %1180 : vector<8x128xf32>
    %cst_302 = arith.constant 0.000000e+00 : f32
    %1182 = vector.broadcast %cst_302 : f32 to vector<8x128xf32>
    %1183 = arith.cmpf olt, %1139, %1182 : vector<8x128xf32>
    %1184 = arith.andi %1181, %1183 : vector<8x128xi1>
    %1185 = arith.extui %1184 : vector<8x128xi1> to vector<8x128xi32>
    %1186 = arith.sitofp %1185 : vector<8x128xi32> to vector<8x128xf32>
    %cst_303 = arith.constant 0.000000e+00 : f32
    %1187 = vector.broadcast %cst_303 : f32 to vector<8x128xf32>
    %1188 = arith.cmpf oge, %1139, %1187 : vector<8x128xf32>
    %cst_304 = arith.constant 0.000000e+00 : f32
    %1189 = vector.broadcast %cst_304 : f32 to vector<8x128xf32>
    %1190 = arith.cmpf olt, %1141, %1189 : vector<8x128xf32>
    %1191 = arith.andi %1188, %1190 : vector<8x128xi1>
    %1192 = arith.extui %1191 : vector<8x128xi1> to vector<8x128xi32>
    %1193 = arith.sitofp %1192 : vector<8x128xi32> to vector<8x128xf32>
    %cst_305 = arith.constant 0.000000e+00 : f32
    %1194 = vector.broadcast %cst_305 : f32 to vector<8x128xf32>
    %1195 = arith.cmpf oge, %1141, %1194 : vector<8x128xf32>
    %cst_306 = arith.constant 0.000000e+00 : f32
    %1196 = vector.broadcast %cst_306 : f32 to vector<8x128xf32>
    %1197 = arith.cmpf olt, %1143, %1196 : vector<8x128xf32>
    %1198 = arith.andi %1195, %1197 : vector<8x128xi1>
    %1199 = arith.extui %1198 : vector<8x128xi1> to vector<8x128xi32>
    %1200 = arith.sitofp %1199 : vector<8x128xi32> to vector<8x128xf32>
    %cst_307 = arith.constant 0.000000e+00 : f32
    %1201 = vector.broadcast %cst_307 : f32 to vector<8x128xf32>
    %1202 = arith.cmpf oge, %1143, %1201 : vector<8x128xf32>
    %cst_308 = arith.constant 0.000000e+00 : f32
    %1203 = vector.broadcast %cst_308 : f32 to vector<8x128xf32>
    %1204 = arith.cmpf olt, %1145, %1203 : vector<8x128xf32>
    %1205 = arith.andi %1202, %1204 : vector<8x128xi1>
    %1206 = arith.extui %1205 : vector<8x128xi1> to vector<8x128xi32>
    %1207 = arith.sitofp %1206 : vector<8x128xi32> to vector<8x128xf32>
    %cst_309 = arith.constant 0.000000e+00 : f32
    %1208 = vector.broadcast %cst_309 : f32 to vector<8x128xf32>
    %1209 = arith.cmpf oge, %1145, %1208 : vector<8x128xf32>
    %cst_310 = arith.constant 0.000000e+00 : f32
    %1210 = vector.broadcast %cst_310 : f32 to vector<8x128xf32>
    %1211 = arith.cmpf olt, %1147, %1210 : vector<8x128xf32>
    %1212 = arith.andi %1209, %1211 : vector<8x128xi1>
    %1213 = arith.extui %1212 : vector<8x128xi1> to vector<8x128xi32>
    %1214 = arith.sitofp %1213 : vector<8x128xi32> to vector<8x128xf32>
    %cst_311 = arith.constant 0.000000e+00 : f32
    %1215 = vector.broadcast %cst_311 : f32 to vector<8x128xf32>
    %1216 = arith.cmpf oge, %1147, %1215 : vector<8x128xf32>
    %cst_312 = arith.constant 0.000000e+00 : f32
    %1217 = vector.broadcast %cst_312 : f32 to vector<8x128xf32>
    %1218 = arith.cmpf olt, %1149, %1217 : vector<8x128xf32>
    %1219 = arith.andi %1216, %1218 : vector<8x128xi1>
    %1220 = arith.extui %1219 : vector<8x128xi1> to vector<8x128xi32>
    %1221 = arith.sitofp %1220 : vector<8x128xi32> to vector<8x128xf32>
    %cst_313 = arith.constant 0.000000e+00 : f32
    %1222 = vector.broadcast %cst_313 : f32 to vector<8x128xf32>
    %1223 = arith.cmpf oge, %1149, %1222 : vector<8x128xf32>
    %cst_314 = arith.constant 0.000000e+00 : f32
    %1224 = vector.broadcast %cst_314 : f32 to vector<8x128xf32>
    %1225 = arith.cmpf olt, %1151, %1224 : vector<8x128xf32>
    %1226 = arith.andi %1223, %1225 : vector<8x128xi1>
    %1227 = arith.extui %1226 : vector<8x128xi1> to vector<8x128xi32>
    %1228 = arith.sitofp %1227 : vector<8x128xi32> to vector<8x128xf32>
    %cst_315 = arith.constant 2.500000e+00 : f32
    %1229 = vector.broadcast %cst_315 : f32 to vector<8x128xf32>
    %1230 = arith.mulf %1129, %1229 : vector<8x128xf32>
    %1231 = arith.mulf %1230, %1158 : vector<8x128xf32>
    %cst_316 = arith.constant -2.500000e+00 : f32
    %1232 = vector.broadcast %cst_316 : f32 to vector<8x128xf32>
    %1233 = arith.mulf %1133, %1232 : vector<8x128xf32>
    %1234 = arith.mulf %1233, %1165 : vector<8x128xf32>
    %1235 = arith.addf %1231, %1234 : vector<8x128xf32>
    %cst_317 = arith.constant 2.500000e+00 : f32
    %1236 = vector.broadcast %cst_317 : f32 to vector<8x128xf32>
    %1237 = arith.mulf %1131, %1236 : vector<8x128xf32>
    %1238 = arith.mulf %1237, %1165 : vector<8x128xf32>
    %cst_318 = arith.constant -2.500000e+00 : f32
    %1239 = vector.broadcast %cst_318 : f32 to vector<8x128xf32>
    %1240 = arith.mulf %1135, %1239 : vector<8x128xf32>
    %1241 = arith.mulf %1240, %1172 : vector<8x128xf32>
    %1242 = arith.addf %1238, %1241 : vector<8x128xf32>
    %cst_319 = arith.constant 2.500000e+00 : f32
    %1243 = vector.broadcast %cst_319 : f32 to vector<8x128xf32>
    %1244 = arith.mulf %1133, %1243 : vector<8x128xf32>
    %1245 = arith.mulf %1244, %1172 : vector<8x128xf32>
    %cst_320 = arith.constant -2.500000e+00 : f32
    %1246 = vector.broadcast %cst_320 : f32 to vector<8x128xf32>
    %1247 = arith.mulf %1137, %1246 : vector<8x128xf32>
    %1248 = arith.mulf %1247, %1179 : vector<8x128xf32>
    %1249 = arith.addf %1245, %1248 : vector<8x128xf32>
    %cst_321 = arith.constant 2.500000e+00 : f32
    %1250 = vector.broadcast %cst_321 : f32 to vector<8x128xf32>
    %1251 = arith.mulf %1135, %1250 : vector<8x128xf32>
    %1252 = arith.mulf %1251, %1179 : vector<8x128xf32>
    %cst_322 = arith.constant -2.500000e+00 : f32
    %1253 = vector.broadcast %cst_322 : f32 to vector<8x128xf32>
    %1254 = arith.mulf %1139, %1253 : vector<8x128xf32>
    %1255 = arith.mulf %1254, %1186 : vector<8x128xf32>
    %1256 = arith.addf %1252, %1255 : vector<8x128xf32>
    %cst_323 = arith.constant 2.500000e+00 : f32
    %1257 = vector.broadcast %cst_323 : f32 to vector<8x128xf32>
    %1258 = arith.mulf %1137, %1257 : vector<8x128xf32>
    %1259 = arith.mulf %1258, %1186 : vector<8x128xf32>
    %cst_324 = arith.constant -2.500000e+00 : f32
    %1260 = vector.broadcast %cst_324 : f32 to vector<8x128xf32>
    %1261 = arith.mulf %1141, %1260 : vector<8x128xf32>
    %1262 = arith.mulf %1261, %1193 : vector<8x128xf32>
    %1263 = arith.addf %1259, %1262 : vector<8x128xf32>
    %cst_325 = arith.constant 2.500000e+00 : f32
    %1264 = vector.broadcast %cst_325 : f32 to vector<8x128xf32>
    %1265 = arith.mulf %1139, %1264 : vector<8x128xf32>
    %1266 = arith.mulf %1265, %1193 : vector<8x128xf32>
    %cst_326 = arith.constant -2.500000e+00 : f32
    %1267 = vector.broadcast %cst_326 : f32 to vector<8x128xf32>
    %1268 = arith.mulf %1143, %1267 : vector<8x128xf32>
    %1269 = arith.mulf %1268, %1200 : vector<8x128xf32>
    %1270 = arith.addf %1266, %1269 : vector<8x128xf32>
    %cst_327 = arith.constant 2.500000e+00 : f32
    %1271 = vector.broadcast %cst_327 : f32 to vector<8x128xf32>
    %1272 = arith.mulf %1141, %1271 : vector<8x128xf32>
    %1273 = arith.mulf %1272, %1200 : vector<8x128xf32>
    %cst_328 = arith.constant -2.500000e+00 : f32
    %1274 = vector.broadcast %cst_328 : f32 to vector<8x128xf32>
    %1275 = arith.mulf %1145, %1274 : vector<8x128xf32>
    %1276 = arith.mulf %1275, %1207 : vector<8x128xf32>
    %1277 = arith.addf %1273, %1276 : vector<8x128xf32>
    %cst_329 = arith.constant 2.500000e+00 : f32
    %1278 = vector.broadcast %cst_329 : f32 to vector<8x128xf32>
    %1279 = arith.mulf %1143, %1278 : vector<8x128xf32>
    %1280 = arith.mulf %1279, %1207 : vector<8x128xf32>
    %cst_330 = arith.constant -2.500000e+00 : f32
    %1281 = vector.broadcast %cst_330 : f32 to vector<8x128xf32>
    %1282 = arith.mulf %1147, %1281 : vector<8x128xf32>
    %1283 = arith.mulf %1282, %1214 : vector<8x128xf32>
    %1284 = arith.addf %1280, %1283 : vector<8x128xf32>
    %cst_331 = arith.constant 2.500000e+00 : f32
    %1285 = vector.broadcast %cst_331 : f32 to vector<8x128xf32>
    %1286 = arith.mulf %1145, %1285 : vector<8x128xf32>
    %1287 = arith.mulf %1286, %1214 : vector<8x128xf32>
    %cst_332 = arith.constant -2.500000e+00 : f32
    %1288 = vector.broadcast %cst_332 : f32 to vector<8x128xf32>
    %1289 = arith.mulf %1149, %1288 : vector<8x128xf32>
    %1290 = arith.mulf %1289, %1221 : vector<8x128xf32>
    %1291 = arith.addf %1287, %1290 : vector<8x128xf32>
    %cst_333 = arith.constant 2.500000e+00 : f32
    %1292 = vector.broadcast %cst_333 : f32 to vector<8x128xf32>
    %1293 = arith.mulf %1147, %1292 : vector<8x128xf32>
    %1294 = arith.mulf %1293, %1221 : vector<8x128xf32>
    %cst_334 = arith.constant -2.500000e+00 : f32
    %1295 = vector.broadcast %cst_334 : f32 to vector<8x128xf32>
    %1296 = arith.mulf %1151, %1295 : vector<8x128xf32>
    %1297 = arith.mulf %1296, %1228 : vector<8x128xf32>
    %1298 = arith.addf %1294, %1297 : vector<8x128xf32>
    %cst_335 = arith.constant 1.250000e+00 : f32
    %1299 = vector.broadcast %cst_335 : f32 to vector<8x128xf32>
    %1300 = arith.mulf %1129, %1299 : vector<8x128xf32>
    %1301 = arith.mulf %1300, %1235 : vector<8x128xf32>
    %cst_336 = arith.constant -1.250000e+00 : f32
    %1302 = vector.broadcast %cst_336 : f32 to vector<8x128xf32>
    %1303 = arith.mulf %1135, %1302 : vector<8x128xf32>
    %1304 = arith.mulf %1303, %1242 : vector<8x128xf32>
    %1305 = arith.addf %1301, %1304 : vector<8x128xf32>
    %cst_337 = arith.constant 1.250000e+00 : f32
    %1306 = vector.broadcast %cst_337 : f32 to vector<8x128xf32>
    %1307 = arith.mulf %1131, %1306 : vector<8x128xf32>
    %1308 = arith.mulf %1307, %1242 : vector<8x128xf32>
    %cst_338 = arith.constant -1.250000e+00 : f32
    %1309 = vector.broadcast %cst_338 : f32 to vector<8x128xf32>
    %1310 = arith.mulf %1137, %1309 : vector<8x128xf32>
    %1311 = arith.mulf %1310, %1249 : vector<8x128xf32>
    %1312 = arith.addf %1308, %1311 : vector<8x128xf32>
    %cst_339 = arith.constant 1.250000e+00 : f32
    %1313 = vector.broadcast %cst_339 : f32 to vector<8x128xf32>
    %1314 = arith.mulf %1133, %1313 : vector<8x128xf32>
    %1315 = arith.mulf %1314, %1249 : vector<8x128xf32>
    %cst_340 = arith.constant -1.250000e+00 : f32
    %1316 = vector.broadcast %cst_340 : f32 to vector<8x128xf32>
    %1317 = arith.mulf %1139, %1316 : vector<8x128xf32>
    %1318 = arith.mulf %1317, %1256 : vector<8x128xf32>
    %1319 = arith.addf %1315, %1318 : vector<8x128xf32>
    %cst_341 = arith.constant 1.250000e+00 : f32
    %1320 = vector.broadcast %cst_341 : f32 to vector<8x128xf32>
    %1321 = arith.mulf %1135, %1320 : vector<8x128xf32>
    %1322 = arith.mulf %1321, %1256 : vector<8x128xf32>
    %cst_342 = arith.constant -1.250000e+00 : f32
    %1323 = vector.broadcast %cst_342 : f32 to vector<8x128xf32>
    %1324 = arith.mulf %1141, %1323 : vector<8x128xf32>
    %1325 = arith.mulf %1324, %1263 : vector<8x128xf32>
    %1326 = arith.addf %1322, %1325 : vector<8x128xf32>
    %cst_343 = arith.constant 1.250000e+00 : f32
    %1327 = vector.broadcast %cst_343 : f32 to vector<8x128xf32>
    %1328 = arith.mulf %1137, %1327 : vector<8x128xf32>
    %1329 = arith.mulf %1328, %1263 : vector<8x128xf32>
    %cst_344 = arith.constant -1.250000e+00 : f32
    %1330 = vector.broadcast %cst_344 : f32 to vector<8x128xf32>
    %1331 = arith.mulf %1143, %1330 : vector<8x128xf32>
    %1332 = arith.mulf %1331, %1270 : vector<8x128xf32>
    %1333 = arith.addf %1329, %1332 : vector<8x128xf32>
    %cst_345 = arith.constant 1.250000e+00 : f32
    %1334 = vector.broadcast %cst_345 : f32 to vector<8x128xf32>
    %1335 = arith.mulf %1139, %1334 : vector<8x128xf32>
    %1336 = arith.mulf %1335, %1270 : vector<8x128xf32>
    %cst_346 = arith.constant -1.250000e+00 : f32
    %1337 = vector.broadcast %cst_346 : f32 to vector<8x128xf32>
    %1338 = arith.mulf %1145, %1337 : vector<8x128xf32>
    %1339 = arith.mulf %1338, %1277 : vector<8x128xf32>
    %1340 = arith.addf %1336, %1339 : vector<8x128xf32>
    %cst_347 = arith.constant 1.250000e+00 : f32
    %1341 = vector.broadcast %cst_347 : f32 to vector<8x128xf32>
    %1342 = arith.mulf %1141, %1341 : vector<8x128xf32>
    %1343 = arith.mulf %1342, %1277 : vector<8x128xf32>
    %cst_348 = arith.constant -1.250000e+00 : f32
    %1344 = vector.broadcast %cst_348 : f32 to vector<8x128xf32>
    %1345 = arith.mulf %1147, %1344 : vector<8x128xf32>
    %1346 = arith.mulf %1345, %1284 : vector<8x128xf32>
    %1347 = arith.addf %1343, %1346 : vector<8x128xf32>
    %cst_349 = arith.constant 1.250000e+00 : f32
    %1348 = vector.broadcast %cst_349 : f32 to vector<8x128xf32>
    %1349 = arith.mulf %1143, %1348 : vector<8x128xf32>
    %1350 = arith.mulf %1349, %1284 : vector<8x128xf32>
    %cst_350 = arith.constant -1.250000e+00 : f32
    %1351 = vector.broadcast %cst_350 : f32 to vector<8x128xf32>
    %1352 = arith.mulf %1149, %1351 : vector<8x128xf32>
    %1353 = arith.mulf %1352, %1291 : vector<8x128xf32>
    %1354 = arith.addf %1350, %1353 : vector<8x128xf32>
    %cst_351 = arith.constant 1.250000e+00 : f32
    %1355 = vector.broadcast %cst_351 : f32 to vector<8x128xf32>
    %1356 = arith.mulf %1145, %1355 : vector<8x128xf32>
    %1357 = arith.mulf %1356, %1291 : vector<8x128xf32>
    %cst_352 = arith.constant -1.250000e+00 : f32
    %1358 = vector.broadcast %cst_352 : f32 to vector<8x128xf32>
    %1359 = arith.mulf %1151, %1358 : vector<8x128xf32>
    %1360 = arith.mulf %1359, %1298 : vector<8x128xf32>
    %1361 = arith.addf %1357, %1360 : vector<8x128xf32>
    %cst_353 = arith.constant 0.833333313 : f32
    %1362 = vector.broadcast %cst_353 : f32 to vector<8x128xf32>
    %1363 = arith.mulf %1129, %1362 : vector<8x128xf32>
    %1364 = arith.mulf %1363, %1305 : vector<8x128xf32>
    %cst_354 = arith.constant -0.833333313 : f32
    %1365 = vector.broadcast %cst_354 : f32 to vector<8x128xf32>
    %1366 = arith.mulf %1137, %1365 : vector<8x128xf32>
    %1367 = arith.mulf %1366, %1312 : vector<8x128xf32>
    %1368 = arith.addf %1364, %1367 : vector<8x128xf32>
    %cst_355 = arith.constant 0.833333313 : f32
    %1369 = vector.broadcast %cst_355 : f32 to vector<8x128xf32>
    %1370 = arith.mulf %1131, %1369 : vector<8x128xf32>
    %1371 = arith.mulf %1370, %1312 : vector<8x128xf32>
    %cst_356 = arith.constant -0.833333313 : f32
    %1372 = vector.broadcast %cst_356 : f32 to vector<8x128xf32>
    %1373 = arith.mulf %1139, %1372 : vector<8x128xf32>
    %1374 = arith.mulf %1373, %1319 : vector<8x128xf32>
    %1375 = arith.addf %1371, %1374 : vector<8x128xf32>
    %cst_357 = arith.constant 0.833333313 : f32
    %1376 = vector.broadcast %cst_357 : f32 to vector<8x128xf32>
    %1377 = arith.mulf %1133, %1376 : vector<8x128xf32>
    %1378 = arith.mulf %1377, %1319 : vector<8x128xf32>
    %cst_358 = arith.constant -0.833333313 : f32
    %1379 = vector.broadcast %cst_358 : f32 to vector<8x128xf32>
    %1380 = arith.mulf %1141, %1379 : vector<8x128xf32>
    %1381 = arith.mulf %1380, %1326 : vector<8x128xf32>
    %1382 = arith.addf %1378, %1381 : vector<8x128xf32>
    %cst_359 = arith.constant 0.833333313 : f32
    %1383 = vector.broadcast %cst_359 : f32 to vector<8x128xf32>
    %1384 = arith.mulf %1135, %1383 : vector<8x128xf32>
    %1385 = arith.mulf %1384, %1326 : vector<8x128xf32>
    %cst_360 = arith.constant -0.833333313 : f32
    %1386 = vector.broadcast %cst_360 : f32 to vector<8x128xf32>
    %1387 = arith.mulf %1143, %1386 : vector<8x128xf32>
    %1388 = arith.mulf %1387, %1333 : vector<8x128xf32>
    %1389 = arith.addf %1385, %1388 : vector<8x128xf32>
    %cst_361 = arith.constant 0.833333313 : f32
    %1390 = vector.broadcast %cst_361 : f32 to vector<8x128xf32>
    %1391 = arith.mulf %1137, %1390 : vector<8x128xf32>
    %1392 = arith.mulf %1391, %1333 : vector<8x128xf32>
    %cst_362 = arith.constant -0.833333313 : f32
    %1393 = vector.broadcast %cst_362 : f32 to vector<8x128xf32>
    %1394 = arith.mulf %1145, %1393 : vector<8x128xf32>
    %1395 = arith.mulf %1394, %1340 : vector<8x128xf32>
    %1396 = arith.addf %1392, %1395 : vector<8x128xf32>
    %cst_363 = arith.constant 0.833333313 : f32
    %1397 = vector.broadcast %cst_363 : f32 to vector<8x128xf32>
    %1398 = arith.mulf %1139, %1397 : vector<8x128xf32>
    %1399 = arith.mulf %1398, %1340 : vector<8x128xf32>
    %cst_364 = arith.constant -0.833333313 : f32
    %1400 = vector.broadcast %cst_364 : f32 to vector<8x128xf32>
    %1401 = arith.mulf %1147, %1400 : vector<8x128xf32>
    %1402 = arith.mulf %1401, %1347 : vector<8x128xf32>
    %1403 = arith.addf %1399, %1402 : vector<8x128xf32>
    %cst_365 = arith.constant 0.833333313 : f32
    %1404 = vector.broadcast %cst_365 : f32 to vector<8x128xf32>
    %1405 = arith.mulf %1141, %1404 : vector<8x128xf32>
    %1406 = arith.mulf %1405, %1347 : vector<8x128xf32>
    %cst_366 = arith.constant -0.833333313 : f32
    %1407 = vector.broadcast %cst_366 : f32 to vector<8x128xf32>
    %1408 = arith.mulf %1149, %1407 : vector<8x128xf32>
    %1409 = arith.mulf %1408, %1354 : vector<8x128xf32>
    %1410 = arith.addf %1406, %1409 : vector<8x128xf32>
    %cst_367 = arith.constant 0.833333313 : f32
    %1411 = vector.broadcast %cst_367 : f32 to vector<8x128xf32>
    %1412 = arith.mulf %1143, %1411 : vector<8x128xf32>
    %1413 = arith.mulf %1412, %1354 : vector<8x128xf32>
    %cst_368 = arith.constant -0.833333313 : f32
    %1414 = vector.broadcast %cst_368 : f32 to vector<8x128xf32>
    %1415 = arith.mulf %1151, %1414 : vector<8x128xf32>
    %1416 = arith.mulf %1415, %1361 : vector<8x128xf32>
    %1417 = arith.addf %1413, %1416 : vector<8x128xf32>
    %c28 = arith.constant 28 : index
    %1418 = memref.load %arg2[%c28] : memref<162xf32, #tpu.memory_space<smem>>
    %1419 = vector.broadcast %1418 : f32 to vector<8x128xf32>
    %1420 = arith.mulf %1419, %1368 : vector<8x128xf32>
    %1421 = arith.addf %1123, %1420 : vector<8x128xf32>
    %c109 = arith.constant 109 : index
    %1422 = memref.load %arg2[%c109] : memref<162xf32, #tpu.memory_space<smem>>
    %1423 = vector.broadcast %1422 : f32 to vector<8x128xf32>
    %1424 = arith.mulf %1423, %1368 : vector<8x128xf32>
    %1425 = arith.addf %1127, %1424 : vector<8x128xf32>
    %c29 = arith.constant 29 : index
    %1426 = memref.load %arg2[%c29] : memref<162xf32, #tpu.memory_space<smem>>
    %1427 = vector.broadcast %1426 : f32 to vector<8x128xf32>
    %1428 = arith.mulf %1427, %1375 : vector<8x128xf32>
    %1429 = arith.addf %1421, %1428 : vector<8x128xf32>
    %c110 = arith.constant 110 : index
    %1430 = memref.load %arg2[%c110] : memref<162xf32, #tpu.memory_space<smem>>
    %1431 = vector.broadcast %1430 : f32 to vector<8x128xf32>
    %1432 = arith.mulf %1431, %1375 : vector<8x128xf32>
    %1433 = arith.addf %1425, %1432 : vector<8x128xf32>
    %c30 = arith.constant 30 : index
    %1434 = memref.load %arg2[%c30] : memref<162xf32, #tpu.memory_space<smem>>
    %1435 = vector.broadcast %1434 : f32 to vector<8x128xf32>
    %1436 = arith.mulf %1435, %1382 : vector<8x128xf32>
    %1437 = arith.addf %1429, %1436 : vector<8x128xf32>
    %c111 = arith.constant 111 : index
    %1438 = memref.load %arg2[%c111] : memref<162xf32, #tpu.memory_space<smem>>
    %1439 = vector.broadcast %1438 : f32 to vector<8x128xf32>
    %1440 = arith.mulf %1439, %1382 : vector<8x128xf32>
    %1441 = arith.addf %1433, %1440 : vector<8x128xf32>
    %c31 = arith.constant 31 : index
    %1442 = memref.load %arg2[%c31] : memref<162xf32, #tpu.memory_space<smem>>
    %1443 = vector.broadcast %1442 : f32 to vector<8x128xf32>
    %1444 = arith.mulf %1443, %1389 : vector<8x128xf32>
    %1445 = arith.addf %1437, %1444 : vector<8x128xf32>
    %c112 = arith.constant 112 : index
    %1446 = memref.load %arg2[%c112] : memref<162xf32, #tpu.memory_space<smem>>
    %1447 = vector.broadcast %1446 : f32 to vector<8x128xf32>
    %1448 = arith.mulf %1447, %1389 : vector<8x128xf32>
    %1449 = arith.addf %1441, %1448 : vector<8x128xf32>
    %c32 = arith.constant 32 : index
    %1450 = memref.load %arg2[%c32] : memref<162xf32, #tpu.memory_space<smem>>
    %1451 = vector.broadcast %1450 : f32 to vector<8x128xf32>
    %1452 = arith.mulf %1451, %1396 : vector<8x128xf32>
    %1453 = arith.addf %1445, %1452 : vector<8x128xf32>
    %c113 = arith.constant 113 : index
    %1454 = memref.load %arg2[%c113] : memref<162xf32, #tpu.memory_space<smem>>
    %1455 = vector.broadcast %1454 : f32 to vector<8x128xf32>
    %1456 = arith.mulf %1455, %1396 : vector<8x128xf32>
    %1457 = arith.addf %1449, %1456 : vector<8x128xf32>
    %c33 = arith.constant 33 : index
    %1458 = memref.load %arg2[%c33] : memref<162xf32, #tpu.memory_space<smem>>
    %1459 = vector.broadcast %1458 : f32 to vector<8x128xf32>
    %1460 = arith.mulf %1459, %1403 : vector<8x128xf32>
    %1461 = arith.addf %1453, %1460 : vector<8x128xf32>
    %c114 = arith.constant 114 : index
    %1462 = memref.load %arg2[%c114] : memref<162xf32, #tpu.memory_space<smem>>
    %1463 = vector.broadcast %1462 : f32 to vector<8x128xf32>
    %1464 = arith.mulf %1463, %1403 : vector<8x128xf32>
    %1465 = arith.addf %1457, %1464 : vector<8x128xf32>
    %c34 = arith.constant 34 : index
    %1466 = memref.load %arg2[%c34] : memref<162xf32, #tpu.memory_space<smem>>
    %1467 = vector.broadcast %1466 : f32 to vector<8x128xf32>
    %1468 = arith.mulf %1467, %1410 : vector<8x128xf32>
    %1469 = arith.addf %1461, %1468 : vector<8x128xf32>
    %c115 = arith.constant 115 : index
    %1470 = memref.load %arg2[%c115] : memref<162xf32, #tpu.memory_space<smem>>
    %1471 = vector.broadcast %1470 : f32 to vector<8x128xf32>
    %1472 = arith.mulf %1471, %1410 : vector<8x128xf32>
    %1473 = arith.addf %1465, %1472 : vector<8x128xf32>
    %c35 = arith.constant 35 : index
    %1474 = memref.load %arg2[%c35] : memref<162xf32, #tpu.memory_space<smem>>
    %1475 = vector.broadcast %1474 : f32 to vector<8x128xf32>
    %1476 = arith.mulf %1475, %1417 : vector<8x128xf32>
    %1477 = arith.addf %1469, %1476 : vector<8x128xf32>
    %c116 = arith.constant 116 : index
    %1478 = memref.load %arg2[%c116] : memref<162xf32, #tpu.memory_space<smem>>
    %1479 = vector.broadcast %1478 : f32 to vector<8x128xf32>
    %1480 = arith.mulf %1479, %1417 : vector<8x128xf32>
    %1481 = arith.addf %1473, %1480 : vector<8x128xf32>
    %c4_369 = arith.constant 4 : index
    %c0_370 = arith.constant 0 : index
    %c0_371 = arith.constant 0 : index
    %1482 = vector.load %arg3[%c4_369, %c0_370, %c0_371] : memref<9x8x128xf32, #tpu.memory_space<vmem>>, vector<1x8x128xf32>
    %1483 = vector.shape_cast %1482 : vector<1x8x128xf32> to vector<8x128xf32>
    %1484 = arith.negf %1483 : vector<8x128xf32>
    %1485 = math.exp %1484 : vector<8x128xf32>
    %cst_372 = arith.constant 1.000000e+00 : f32
    %1486 = vector.broadcast %cst_372 : f32 to vector<8x128xf32>
    %1487 = arith.addf %1486, %1485 : vector<8x128xf32>
    %1488 = arith.divf %1486, %1487 : vector<8x128xf32>
    %1489 = arith.mulf %1483, %1488 : vector<8x128xf32>
    %c36 = arith.constant 36 : index
    %1490 = memref.load %arg2[%c36] : memref<162xf32, #tpu.memory_space<smem>>
    %1491 = vector.broadcast %1490 : f32 to vector<8x128xf32>
    %1492 = arith.mulf %1491, %1489 : vector<8x128xf32>
    %1493 = arith.addf %1477, %1492 : vector<8x128xf32>
    %c117 = arith.constant 117 : index
    %1494 = memref.load %arg2[%c117] : memref<162xf32, #tpu.memory_space<smem>>
    %1495 = vector.broadcast %1494 : f32 to vector<8x128xf32>
    %1496 = arith.mulf %1495, %1489 : vector<8x128xf32>
    %1497 = arith.addf %1481, %1496 : vector<8x128xf32>
    %cst_373 = arith.constant -2.200000e+00 : f32
    %1498 = vector.broadcast %cst_373 : f32 to vector<8x128xf32>
    %1499 = arith.subf %1483, %1498 : vector<8x128xf32>
    %cst_374 = arith.constant -1.800000e+00 : f32
    %1500 = vector.broadcast %cst_374 : f32 to vector<8x128xf32>
    %1501 = arith.subf %1483, %1500 : vector<8x128xf32>
    %cst_375 = arith.constant -1.400000e+00 : f32
    %1502 = vector.broadcast %cst_375 : f32 to vector<8x128xf32>
    %1503 = arith.subf %1483, %1502 : vector<8x128xf32>
    %cst_376 = arith.constant -1.000000e+00 : f32
    %1504 = vector.broadcast %cst_376 : f32 to vector<8x128xf32>
    %1505 = arith.subf %1483, %1504 : vector<8x128xf32>
    %cst_377 = arith.constant -6.000000e-01 : f32
    %1506 = vector.broadcast %cst_377 : f32 to vector<8x128xf32>
    %1507 = arith.subf %1483, %1506 : vector<8x128xf32>
    %cst_378 = arith.constant -2.000000e-01 : f32
    %1508 = vector.broadcast %cst_378 : f32 to vector<8x128xf32>
    %1509 = arith.subf %1483, %1508 : vector<8x128xf32>
    %cst_379 = arith.constant 2.000000e-01 : f32
    %1510 = vector.broadcast %cst_379 : f32 to vector<8x128xf32>
    %1511 = arith.subf %1483, %1510 : vector<8x128xf32>
    %cst_380 = arith.constant 6.000000e-01 : f32
    %1512 = vector.broadcast %cst_380 : f32 to vector<8x128xf32>
    %1513 = arith.subf %1483, %1512 : vector<8x128xf32>
    %cst_381 = arith.constant 1.000000e+00 : f32
    %1514 = vector.broadcast %cst_381 : f32 to vector<8x128xf32>
    %1515 = arith.subf %1483, %1514 : vector<8x128xf32>
    %cst_382 = arith.constant 1.400000e+00 : f32
    %1516 = vector.broadcast %cst_382 : f32 to vector<8x128xf32>
    %1517 = arith.subf %1483, %1516 : vector<8x128xf32>
    %cst_383 = arith.constant 1.800000e+00 : f32
    %1518 = vector.broadcast %cst_383 : f32 to vector<8x128xf32>
    %1519 = arith.subf %1483, %1518 : vector<8x128xf32>
    %cst_384 = arith.constant 2.200000e+00 : f32
    %1520 = vector.broadcast %cst_384 : f32 to vector<8x128xf32>
    %1521 = arith.subf %1483, %1520 : vector<8x128xf32>
    %cst_385 = arith.constant 0.000000e+00 : f32
    %1522 = vector.broadcast %cst_385 : f32 to vector<8x128xf32>
    %1523 = arith.cmpf oge, %1499, %1522 : vector<8x128xf32>
    %cst_386 = arith.constant 0.000000e+00 : f32
    %1524 = vector.broadcast %cst_386 : f32 to vector<8x128xf32>
    %1525 = arith.cmpf olt, %1501, %1524 : vector<8x128xf32>
    %1526 = arith.andi %1523, %1525 : vector<8x128xi1>
    %1527 = arith.extui %1526 : vector<8x128xi1> to vector<8x128xi32>
    %1528 = arith.sitofp %1527 : vector<8x128xi32> to vector<8x128xf32>
    %cst_387 = arith.constant 0.000000e+00 : f32
    %1529 = vector.broadcast %cst_387 : f32 to vector<8x128xf32>
    %1530 = arith.cmpf oge, %1501, %1529 : vector<8x128xf32>
    %cst_388 = arith.constant 0.000000e+00 : f32
    %1531 = vector.broadcast %cst_388 : f32 to vector<8x128xf32>
    %1532 = arith.cmpf olt, %1503, %1531 : vector<8x128xf32>
    %1533 = arith.andi %1530, %1532 : vector<8x128xi1>
    %1534 = arith.extui %1533 : vector<8x128xi1> to vector<8x128xi32>
    %1535 = arith.sitofp %1534 : vector<8x128xi32> to vector<8x128xf32>
    %cst_389 = arith.constant 0.000000e+00 : f32
    %1536 = vector.broadcast %cst_389 : f32 to vector<8x128xf32>
    %1537 = arith.cmpf oge, %1503, %1536 : vector<8x128xf32>
    %cst_390 = arith.constant 0.000000e+00 : f32
    %1538 = vector.broadcast %cst_390 : f32 to vector<8x128xf32>
    %1539 = arith.cmpf olt, %1505, %1538 : vector<8x128xf32>
    %1540 = arith.andi %1537, %1539 : vector<8x128xi1>
    %1541 = arith.extui %1540 : vector<8x128xi1> to vector<8x128xi32>
    %1542 = arith.sitofp %1541 : vector<8x128xi32> to vector<8x128xf32>
    %cst_391 = arith.constant 0.000000e+00 : f32
    %1543 = vector.broadcast %cst_391 : f32 to vector<8x128xf32>
    %1544 = arith.cmpf oge, %1505, %1543 : vector<8x128xf32>
    %cst_392 = arith.constant 0.000000e+00 : f32
    %1545 = vector.broadcast %cst_392 : f32 to vector<8x128xf32>
    %1546 = arith.cmpf olt, %1507, %1545 : vector<8x128xf32>
    %1547 = arith.andi %1544, %1546 : vector<8x128xi1>
    %1548 = arith.extui %1547 : vector<8x128xi1> to vector<8x128xi32>
    %1549 = arith.sitofp %1548 : vector<8x128xi32> to vector<8x128xf32>
    %cst_393 = arith.constant 0.000000e+00 : f32
    %1550 = vector.broadcast %cst_393 : f32 to vector<8x128xf32>
    %1551 = arith.cmpf oge, %1507, %1550 : vector<8x128xf32>
    %cst_394 = arith.constant 0.000000e+00 : f32
    %1552 = vector.broadcast %cst_394 : f32 to vector<8x128xf32>
    %1553 = arith.cmpf olt, %1509, %1552 : vector<8x128xf32>
    %1554 = arith.andi %1551, %1553 : vector<8x128xi1>
    %1555 = arith.extui %1554 : vector<8x128xi1> to vector<8x128xi32>
    %1556 = arith.sitofp %1555 : vector<8x128xi32> to vector<8x128xf32>
    %cst_395 = arith.constant 0.000000e+00 : f32
    %1557 = vector.broadcast %cst_395 : f32 to vector<8x128xf32>
    %1558 = arith.cmpf oge, %1509, %1557 : vector<8x128xf32>
    %cst_396 = arith.constant 0.000000e+00 : f32
    %1559 = vector.broadcast %cst_396 : f32 to vector<8x128xf32>
    %1560 = arith.cmpf olt, %1511, %1559 : vector<8x128xf32>
    %1561 = arith.andi %1558, %1560 : vector<8x128xi1>
    %1562 = arith.extui %1561 : vector<8x128xi1> to vector<8x128xi32>
    %1563 = arith.sitofp %1562 : vector<8x128xi32> to vector<8x128xf32>
    %cst_397 = arith.constant 0.000000e+00 : f32
    %1564 = vector.broadcast %cst_397 : f32 to vector<8x128xf32>
    %1565 = arith.cmpf oge, %1511, %1564 : vector<8x128xf32>
    %cst_398 = arith.constant 0.000000e+00 : f32
    %1566 = vector.broadcast %cst_398 : f32 to vector<8x128xf32>
    %1567 = arith.cmpf olt, %1513, %1566 : vector<8x128xf32>
    %1568 = arith.andi %1565, %1567 : vector<8x128xi1>
    %1569 = arith.extui %1568 : vector<8x128xi1> to vector<8x128xi32>
    %1570 = arith.sitofp %1569 : vector<8x128xi32> to vector<8x128xf32>
    %cst_399 = arith.constant 0.000000e+00 : f32
    %1571 = vector.broadcast %cst_399 : f32 to vector<8x128xf32>
    %1572 = arith.cmpf oge, %1513, %1571 : vector<8x128xf32>
    %cst_400 = arith.constant 0.000000e+00 : f32
    %1573 = vector.broadcast %cst_400 : f32 to vector<8x128xf32>
    %1574 = arith.cmpf olt, %1515, %1573 : vector<8x128xf32>
    %1575 = arith.andi %1572, %1574 : vector<8x128xi1>
    %1576 = arith.extui %1575 : vector<8x128xi1> to vector<8x128xi32>
    %1577 = arith.sitofp %1576 : vector<8x128xi32> to vector<8x128xf32>
    %cst_401 = arith.constant 0.000000e+00 : f32
    %1578 = vector.broadcast %cst_401 : f32 to vector<8x128xf32>
    %1579 = arith.cmpf oge, %1515, %1578 : vector<8x128xf32>
    %cst_402 = arith.constant 0.000000e+00 : f32
    %1580 = vector.broadcast %cst_402 : f32 to vector<8x128xf32>
    %1581 = arith.cmpf olt, %1517, %1580 : vector<8x128xf32>
    %1582 = arith.andi %1579, %1581 : vector<8x128xi1>
    %1583 = arith.extui %1582 : vector<8x128xi1> to vector<8x128xi32>
    %1584 = arith.sitofp %1583 : vector<8x128xi32> to vector<8x128xf32>
    %cst_403 = arith.constant 0.000000e+00 : f32
    %1585 = vector.broadcast %cst_403 : f32 to vector<8x128xf32>
    %1586 = arith.cmpf oge, %1517, %1585 : vector<8x128xf32>
    %cst_404 = arith.constant 0.000000e+00 : f32
    %1587 = vector.broadcast %cst_404 : f32 to vector<8x128xf32>
    %1588 = arith.cmpf olt, %1519, %1587 : vector<8x128xf32>
    %1589 = arith.andi %1586, %1588 : vector<8x128xi1>
    %1590 = arith.extui %1589 : vector<8x128xi1> to vector<8x128xi32>
    %1591 = arith.sitofp %1590 : vector<8x128xi32> to vector<8x128xf32>
    %cst_405 = arith.constant 0.000000e+00 : f32
    %1592 = vector.broadcast %cst_405 : f32 to vector<8x128xf32>
    %1593 = arith.cmpf oge, %1519, %1592 : vector<8x128xf32>
    %cst_406 = arith.constant 0.000000e+00 : f32
    %1594 = vector.broadcast %cst_406 : f32 to vector<8x128xf32>
    %1595 = arith.cmpf olt, %1521, %1594 : vector<8x128xf32>
    %1596 = arith.andi %1593, %1595 : vector<8x128xi1>
    %1597 = arith.extui %1596 : vector<8x128xi1> to vector<8x128xi32>
    %1598 = arith.sitofp %1597 : vector<8x128xi32> to vector<8x128xf32>
    %cst_407 = arith.constant 2.500000e+00 : f32
    %1599 = vector.broadcast %cst_407 : f32 to vector<8x128xf32>
    %1600 = arith.mulf %1499, %1599 : vector<8x128xf32>
    %1601 = arith.mulf %1600, %1528 : vector<8x128xf32>
    %cst_408 = arith.constant -2.500000e+00 : f32
    %1602 = vector.broadcast %cst_408 : f32 to vector<8x128xf32>
    %1603 = arith.mulf %1503, %1602 : vector<8x128xf32>
    %1604 = arith.mulf %1603, %1535 : vector<8x128xf32>
    %1605 = arith.addf %1601, %1604 : vector<8x128xf32>
    %cst_409 = arith.constant 2.500000e+00 : f32
    %1606 = vector.broadcast %cst_409 : f32 to vector<8x128xf32>
    %1607 = arith.mulf %1501, %1606 : vector<8x128xf32>
    %1608 = arith.mulf %1607, %1535 : vector<8x128xf32>
    %cst_410 = arith.constant -2.500000e+00 : f32
    %1609 = vector.broadcast %cst_410 : f32 to vector<8x128xf32>
    %1610 = arith.mulf %1505, %1609 : vector<8x128xf32>
    %1611 = arith.mulf %1610, %1542 : vector<8x128xf32>
    %1612 = arith.addf %1608, %1611 : vector<8x128xf32>
    %cst_411 = arith.constant 2.500000e+00 : f32
    %1613 = vector.broadcast %cst_411 : f32 to vector<8x128xf32>
    %1614 = arith.mulf %1503, %1613 : vector<8x128xf32>
    %1615 = arith.mulf %1614, %1542 : vector<8x128xf32>
    %cst_412 = arith.constant -2.500000e+00 : f32
    %1616 = vector.broadcast %cst_412 : f32 to vector<8x128xf32>
    %1617 = arith.mulf %1507, %1616 : vector<8x128xf32>
    %1618 = arith.mulf %1617, %1549 : vector<8x128xf32>
    %1619 = arith.addf %1615, %1618 : vector<8x128xf32>
    %cst_413 = arith.constant 2.500000e+00 : f32
    %1620 = vector.broadcast %cst_413 : f32 to vector<8x128xf32>
    %1621 = arith.mulf %1505, %1620 : vector<8x128xf32>
    %1622 = arith.mulf %1621, %1549 : vector<8x128xf32>
    %cst_414 = arith.constant -2.500000e+00 : f32
    %1623 = vector.broadcast %cst_414 : f32 to vector<8x128xf32>
    %1624 = arith.mulf %1509, %1623 : vector<8x128xf32>
    %1625 = arith.mulf %1624, %1556 : vector<8x128xf32>
    %1626 = arith.addf %1622, %1625 : vector<8x128xf32>
    %cst_415 = arith.constant 2.500000e+00 : f32
    %1627 = vector.broadcast %cst_415 : f32 to vector<8x128xf32>
    %1628 = arith.mulf %1507, %1627 : vector<8x128xf32>
    %1629 = arith.mulf %1628, %1556 : vector<8x128xf32>
    %cst_416 = arith.constant -2.500000e+00 : f32
    %1630 = vector.broadcast %cst_416 : f32 to vector<8x128xf32>
    %1631 = arith.mulf %1511, %1630 : vector<8x128xf32>
    %1632 = arith.mulf %1631, %1563 : vector<8x128xf32>
    %1633 = arith.addf %1629, %1632 : vector<8x128xf32>
    %cst_417 = arith.constant 2.500000e+00 : f32
    %1634 = vector.broadcast %cst_417 : f32 to vector<8x128xf32>
    %1635 = arith.mulf %1509, %1634 : vector<8x128xf32>
    %1636 = arith.mulf %1635, %1563 : vector<8x128xf32>
    %cst_418 = arith.constant -2.500000e+00 : f32
    %1637 = vector.broadcast %cst_418 : f32 to vector<8x128xf32>
    %1638 = arith.mulf %1513, %1637 : vector<8x128xf32>
    %1639 = arith.mulf %1638, %1570 : vector<8x128xf32>
    %1640 = arith.addf %1636, %1639 : vector<8x128xf32>
    %cst_419 = arith.constant 2.500000e+00 : f32
    %1641 = vector.broadcast %cst_419 : f32 to vector<8x128xf32>
    %1642 = arith.mulf %1511, %1641 : vector<8x128xf32>
    %1643 = arith.mulf %1642, %1570 : vector<8x128xf32>
    %cst_420 = arith.constant -2.500000e+00 : f32
    %1644 = vector.broadcast %cst_420 : f32 to vector<8x128xf32>
    %1645 = arith.mulf %1515, %1644 : vector<8x128xf32>
    %1646 = arith.mulf %1645, %1577 : vector<8x128xf32>
    %1647 = arith.addf %1643, %1646 : vector<8x128xf32>
    %cst_421 = arith.constant 2.500000e+00 : f32
    %1648 = vector.broadcast %cst_421 : f32 to vector<8x128xf32>
    %1649 = arith.mulf %1513, %1648 : vector<8x128xf32>
    %1650 = arith.mulf %1649, %1577 : vector<8x128xf32>
    %cst_422 = arith.constant -2.500000e+00 : f32
    %1651 = vector.broadcast %cst_422 : f32 to vector<8x128xf32>
    %1652 = arith.mulf %1517, %1651 : vector<8x128xf32>
    %1653 = arith.mulf %1652, %1584 : vector<8x128xf32>
    %1654 = arith.addf %1650, %1653 : vector<8x128xf32>
    %cst_423 = arith.constant 2.500000e+00 : f32
    %1655 = vector.broadcast %cst_423 : f32 to vector<8x128xf32>
    %1656 = arith.mulf %1515, %1655 : vector<8x128xf32>
    %1657 = arith.mulf %1656, %1584 : vector<8x128xf32>
    %cst_424 = arith.constant -2.500000e+00 : f32
    %1658 = vector.broadcast %cst_424 : f32 to vector<8x128xf32>
    %1659 = arith.mulf %1519, %1658 : vector<8x128xf32>
    %1660 = arith.mulf %1659, %1591 : vector<8x128xf32>
    %1661 = arith.addf %1657, %1660 : vector<8x128xf32>
    %cst_425 = arith.constant 2.500000e+00 : f32
    %1662 = vector.broadcast %cst_425 : f32 to vector<8x128xf32>
    %1663 = arith.mulf %1517, %1662 : vector<8x128xf32>
    %1664 = arith.mulf %1663, %1591 : vector<8x128xf32>
    %cst_426 = arith.constant -2.500000e+00 : f32
    %1665 = vector.broadcast %cst_426 : f32 to vector<8x128xf32>
    %1666 = arith.mulf %1521, %1665 : vector<8x128xf32>
    %1667 = arith.mulf %1666, %1598 : vector<8x128xf32>
    %1668 = arith.addf %1664, %1667 : vector<8x128xf32>
    %cst_427 = arith.constant 1.250000e+00 : f32
    %1669 = vector.broadcast %cst_427 : f32 to vector<8x128xf32>
    %1670 = arith.mulf %1499, %1669 : vector<8x128xf32>
    %1671 = arith.mulf %1670, %1605 : vector<8x128xf32>
    %cst_428 = arith.constant -1.250000e+00 : f32
    %1672 = vector.broadcast %cst_428 : f32 to vector<8x128xf32>
    %1673 = arith.mulf %1505, %1672 : vector<8x128xf32>
    %1674 = arith.mulf %1673, %1612 : vector<8x128xf32>
    %1675 = arith.addf %1671, %1674 : vector<8x128xf32>
    %cst_429 = arith.constant 1.250000e+00 : f32
    %1676 = vector.broadcast %cst_429 : f32 to vector<8x128xf32>
    %1677 = arith.mulf %1501, %1676 : vector<8x128xf32>
    %1678 = arith.mulf %1677, %1612 : vector<8x128xf32>
    %cst_430 = arith.constant -1.250000e+00 : f32
    %1679 = vector.broadcast %cst_430 : f32 to vector<8x128xf32>
    %1680 = arith.mulf %1507, %1679 : vector<8x128xf32>
    %1681 = arith.mulf %1680, %1619 : vector<8x128xf32>
    %1682 = arith.addf %1678, %1681 : vector<8x128xf32>
    %cst_431 = arith.constant 1.250000e+00 : f32
    %1683 = vector.broadcast %cst_431 : f32 to vector<8x128xf32>
    %1684 = arith.mulf %1503, %1683 : vector<8x128xf32>
    %1685 = arith.mulf %1684, %1619 : vector<8x128xf32>
    %cst_432 = arith.constant -1.250000e+00 : f32
    %1686 = vector.broadcast %cst_432 : f32 to vector<8x128xf32>
    %1687 = arith.mulf %1509, %1686 : vector<8x128xf32>
    %1688 = arith.mulf %1687, %1626 : vector<8x128xf32>
    %1689 = arith.addf %1685, %1688 : vector<8x128xf32>
    %cst_433 = arith.constant 1.250000e+00 : f32
    %1690 = vector.broadcast %cst_433 : f32 to vector<8x128xf32>
    %1691 = arith.mulf %1505, %1690 : vector<8x128xf32>
    %1692 = arith.mulf %1691, %1626 : vector<8x128xf32>
    %cst_434 = arith.constant -1.250000e+00 : f32
    %1693 = vector.broadcast %cst_434 : f32 to vector<8x128xf32>
    %1694 = arith.mulf %1511, %1693 : vector<8x128xf32>
    %1695 = arith.mulf %1694, %1633 : vector<8x128xf32>
    %1696 = arith.addf %1692, %1695 : vector<8x128xf32>
    %cst_435 = arith.constant 1.250000e+00 : f32
    %1697 = vector.broadcast %cst_435 : f32 to vector<8x128xf32>
    %1698 = arith.mulf %1507, %1697 : vector<8x128xf32>
    %1699 = arith.mulf %1698, %1633 : vector<8x128xf32>
    %cst_436 = arith.constant -1.250000e+00 : f32
    %1700 = vector.broadcast %cst_436 : f32 to vector<8x128xf32>
    %1701 = arith.mulf %1513, %1700 : vector<8x128xf32>
    %1702 = arith.mulf %1701, %1640 : vector<8x128xf32>
    %1703 = arith.addf %1699, %1702 : vector<8x128xf32>
    %cst_437 = arith.constant 1.250000e+00 : f32
    %1704 = vector.broadcast %cst_437 : f32 to vector<8x128xf32>
    %1705 = arith.mulf %1509, %1704 : vector<8x128xf32>
    %1706 = arith.mulf %1705, %1640 : vector<8x128xf32>
    %cst_438 = arith.constant -1.250000e+00 : f32
    %1707 = vector.broadcast %cst_438 : f32 to vector<8x128xf32>
    %1708 = arith.mulf %1515, %1707 : vector<8x128xf32>
    %1709 = arith.mulf %1708, %1647 : vector<8x128xf32>
    %1710 = arith.addf %1706, %1709 : vector<8x128xf32>
    %cst_439 = arith.constant 1.250000e+00 : f32
    %1711 = vector.broadcast %cst_439 : f32 to vector<8x128xf32>
    %1712 = arith.mulf %1511, %1711 : vector<8x128xf32>
    %1713 = arith.mulf %1712, %1647 : vector<8x128xf32>
    %cst_440 = arith.constant -1.250000e+00 : f32
    %1714 = vector.broadcast %cst_440 : f32 to vector<8x128xf32>
    %1715 = arith.mulf %1517, %1714 : vector<8x128xf32>
    %1716 = arith.mulf %1715, %1654 : vector<8x128xf32>
    %1717 = arith.addf %1713, %1716 : vector<8x128xf32>
    %cst_441 = arith.constant 1.250000e+00 : f32
    %1718 = vector.broadcast %cst_441 : f32 to vector<8x128xf32>
    %1719 = arith.mulf %1513, %1718 : vector<8x128xf32>
    %1720 = arith.mulf %1719, %1654 : vector<8x128xf32>
    %cst_442 = arith.constant -1.250000e+00 : f32
    %1721 = vector.broadcast %cst_442 : f32 to vector<8x128xf32>
    %1722 = arith.mulf %1519, %1721 : vector<8x128xf32>
    %1723 = arith.mulf %1722, %1661 : vector<8x128xf32>
    %1724 = arith.addf %1720, %1723 : vector<8x128xf32>
    %cst_443 = arith.constant 1.250000e+00 : f32
    %1725 = vector.broadcast %cst_443 : f32 to vector<8x128xf32>
    %1726 = arith.mulf %1515, %1725 : vector<8x128xf32>
    %1727 = arith.mulf %1726, %1661 : vector<8x128xf32>
    %cst_444 = arith.constant -1.250000e+00 : f32
    %1728 = vector.broadcast %cst_444 : f32 to vector<8x128xf32>
    %1729 = arith.mulf %1521, %1728 : vector<8x128xf32>
    %1730 = arith.mulf %1729, %1668 : vector<8x128xf32>
    %1731 = arith.addf %1727, %1730 : vector<8x128xf32>
    %cst_445 = arith.constant 0.833333313 : f32
    %1732 = vector.broadcast %cst_445 : f32 to vector<8x128xf32>
    %1733 = arith.mulf %1499, %1732 : vector<8x128xf32>
    %1734 = arith.mulf %1733, %1675 : vector<8x128xf32>
    %cst_446 = arith.constant -0.833333313 : f32
    %1735 = vector.broadcast %cst_446 : f32 to vector<8x128xf32>
    %1736 = arith.mulf %1507, %1735 : vector<8x128xf32>
    %1737 = arith.mulf %1736, %1682 : vector<8x128xf32>
    %1738 = arith.addf %1734, %1737 : vector<8x128xf32>
    %cst_447 = arith.constant 0.833333313 : f32
    %1739 = vector.broadcast %cst_447 : f32 to vector<8x128xf32>
    %1740 = arith.mulf %1501, %1739 : vector<8x128xf32>
    %1741 = arith.mulf %1740, %1682 : vector<8x128xf32>
    %cst_448 = arith.constant -0.833333313 : f32
    %1742 = vector.broadcast %cst_448 : f32 to vector<8x128xf32>
    %1743 = arith.mulf %1509, %1742 : vector<8x128xf32>
    %1744 = arith.mulf %1743, %1689 : vector<8x128xf32>
    %1745 = arith.addf %1741, %1744 : vector<8x128xf32>
    %cst_449 = arith.constant 0.833333313 : f32
    %1746 = vector.broadcast %cst_449 : f32 to vector<8x128xf32>
    %1747 = arith.mulf %1503, %1746 : vector<8x128xf32>
    %1748 = arith.mulf %1747, %1689 : vector<8x128xf32>
    %cst_450 = arith.constant -0.833333313 : f32
    %1749 = vector.broadcast %cst_450 : f32 to vector<8x128xf32>
    %1750 = arith.mulf %1511, %1749 : vector<8x128xf32>
    %1751 = arith.mulf %1750, %1696 : vector<8x128xf32>
    %1752 = arith.addf %1748, %1751 : vector<8x128xf32>
    %cst_451 = arith.constant 0.833333313 : f32
    %1753 = vector.broadcast %cst_451 : f32 to vector<8x128xf32>
    %1754 = arith.mulf %1505, %1753 : vector<8x128xf32>
    %1755 = arith.mulf %1754, %1696 : vector<8x128xf32>
    %cst_452 = arith.constant -0.833333313 : f32
    %1756 = vector.broadcast %cst_452 : f32 to vector<8x128xf32>
    %1757 = arith.mulf %1513, %1756 : vector<8x128xf32>
    %1758 = arith.mulf %1757, %1703 : vector<8x128xf32>
    %1759 = arith.addf %1755, %1758 : vector<8x128xf32>
    %cst_453 = arith.constant 0.833333313 : f32
    %1760 = vector.broadcast %cst_453 : f32 to vector<8x128xf32>
    %1761 = arith.mulf %1507, %1760 : vector<8x128xf32>
    %1762 = arith.mulf %1761, %1703 : vector<8x128xf32>
    %cst_454 = arith.constant -0.833333313 : f32
    %1763 = vector.broadcast %cst_454 : f32 to vector<8x128xf32>
    %1764 = arith.mulf %1515, %1763 : vector<8x128xf32>
    %1765 = arith.mulf %1764, %1710 : vector<8x128xf32>
    %1766 = arith.addf %1762, %1765 : vector<8x128xf32>
    %cst_455 = arith.constant 0.833333313 : f32
    %1767 = vector.broadcast %cst_455 : f32 to vector<8x128xf32>
    %1768 = arith.mulf %1509, %1767 : vector<8x128xf32>
    %1769 = arith.mulf %1768, %1710 : vector<8x128xf32>
    %cst_456 = arith.constant -0.833333313 : f32
    %1770 = vector.broadcast %cst_456 : f32 to vector<8x128xf32>
    %1771 = arith.mulf %1517, %1770 : vector<8x128xf32>
    %1772 = arith.mulf %1771, %1717 : vector<8x128xf32>
    %1773 = arith.addf %1769, %1772 : vector<8x128xf32>
    %cst_457 = arith.constant 0.833333313 : f32
    %1774 = vector.broadcast %cst_457 : f32 to vector<8x128xf32>
    %1775 = arith.mulf %1511, %1774 : vector<8x128xf32>
    %1776 = arith.mulf %1775, %1717 : vector<8x128xf32>
    %cst_458 = arith.constant -0.833333313 : f32
    %1777 = vector.broadcast %cst_458 : f32 to vector<8x128xf32>
    %1778 = arith.mulf %1519, %1777 : vector<8x128xf32>
    %1779 = arith.mulf %1778, %1724 : vector<8x128xf32>
    %1780 = arith.addf %1776, %1779 : vector<8x128xf32>
    %cst_459 = arith.constant 0.833333313 : f32
    %1781 = vector.broadcast %cst_459 : f32 to vector<8x128xf32>
    %1782 = arith.mulf %1513, %1781 : vector<8x128xf32>
    %1783 = arith.mulf %1782, %1724 : vector<8x128xf32>
    %cst_460 = arith.constant -0.833333313 : f32
    %1784 = vector.broadcast %cst_460 : f32 to vector<8x128xf32>
    %1785 = arith.mulf %1521, %1784 : vector<8x128xf32>
    %1786 = arith.mulf %1785, %1731 : vector<8x128xf32>
    %1787 = arith.addf %1783, %1786 : vector<8x128xf32>
    %c37 = arith.constant 37 : index
    %1788 = memref.load %arg2[%c37] : memref<162xf32, #tpu.memory_space<smem>>
    %1789 = vector.broadcast %1788 : f32 to vector<8x128xf32>
    %1790 = arith.mulf %1789, %1738 : vector<8x128xf32>
    %1791 = arith.addf %1493, %1790 : vector<8x128xf32>
    %c118 = arith.constant 118 : index
    %1792 = memref.load %arg2[%c118] : memref<162xf32, #tpu.memory_space<smem>>
    %1793 = vector.broadcast %1792 : f32 to vector<8x128xf32>
    %1794 = arith.mulf %1793, %1738 : vector<8x128xf32>
    %1795 = arith.addf %1497, %1794 : vector<8x128xf32>
    %c38 = arith.constant 38 : index
    %1796 = memref.load %arg2[%c38] : memref<162xf32, #tpu.memory_space<smem>>
    %1797 = vector.broadcast %1796 : f32 to vector<8x128xf32>
    %1798 = arith.mulf %1797, %1745 : vector<8x128xf32>
    %1799 = arith.addf %1791, %1798 : vector<8x128xf32>
    %c119 = arith.constant 119 : index
    %1800 = memref.load %arg2[%c119] : memref<162xf32, #tpu.memory_space<smem>>
    %1801 = vector.broadcast %1800 : f32 to vector<8x128xf32>
    %1802 = arith.mulf %1801, %1745 : vector<8x128xf32>
    %1803 = arith.addf %1795, %1802 : vector<8x128xf32>
    %c39 = arith.constant 39 : index
    %1804 = memref.load %arg2[%c39] : memref<162xf32, #tpu.memory_space<smem>>
    %1805 = vector.broadcast %1804 : f32 to vector<8x128xf32>
    %1806 = arith.mulf %1805, %1752 : vector<8x128xf32>
    %1807 = arith.addf %1799, %1806 : vector<8x128xf32>
    %c120 = arith.constant 120 : index
    %1808 = memref.load %arg2[%c120] : memref<162xf32, #tpu.memory_space<smem>>
    %1809 = vector.broadcast %1808 : f32 to vector<8x128xf32>
    %1810 = arith.mulf %1809, %1752 : vector<8x128xf32>
    %1811 = arith.addf %1803, %1810 : vector<8x128xf32>
    %c40 = arith.constant 40 : index
    %1812 = memref.load %arg2[%c40] : memref<162xf32, #tpu.memory_space<smem>>
    %1813 = vector.broadcast %1812 : f32 to vector<8x128xf32>
    %1814 = arith.mulf %1813, %1759 : vector<8x128xf32>
    %1815 = arith.addf %1807, %1814 : vector<8x128xf32>
    %c121 = arith.constant 121 : index
    %1816 = memref.load %arg2[%c121] : memref<162xf32, #tpu.memory_space<smem>>
    %1817 = vector.broadcast %1816 : f32 to vector<8x128xf32>
    %1818 = arith.mulf %1817, %1759 : vector<8x128xf32>
    %1819 = arith.addf %1811, %1818 : vector<8x128xf32>
    %c41 = arith.constant 41 : index
    %1820 = memref.load %arg2[%c41] : memref<162xf32, #tpu.memory_space<smem>>
    %1821 = vector.broadcast %1820 : f32 to vector<8x128xf32>
    %1822 = arith.mulf %1821, %1766 : vector<8x128xf32>
    %1823 = arith.addf %1815, %1822 : vector<8x128xf32>
    %c122 = arith.constant 122 : index
    %1824 = memref.load %arg2[%c122] : memref<162xf32, #tpu.memory_space<smem>>
    %1825 = vector.broadcast %1824 : f32 to vector<8x128xf32>
    %1826 = arith.mulf %1825, %1766 : vector<8x128xf32>
    %1827 = arith.addf %1819, %1826 : vector<8x128xf32>
    %c42 = arith.constant 42 : index
    %1828 = memref.load %arg2[%c42] : memref<162xf32, #tpu.memory_space<smem>>
    %1829 = vector.broadcast %1828 : f32 to vector<8x128xf32>
    %1830 = arith.mulf %1829, %1773 : vector<8x128xf32>
    %1831 = arith.addf %1823, %1830 : vector<8x128xf32>
    %c123 = arith.constant 123 : index
    %1832 = memref.load %arg2[%c123] : memref<162xf32, #tpu.memory_space<smem>>
    %1833 = vector.broadcast %1832 : f32 to vector<8x128xf32>
    %1834 = arith.mulf %1833, %1773 : vector<8x128xf32>
    %1835 = arith.addf %1827, %1834 : vector<8x128xf32>
    %c43 = arith.constant 43 : index
    %1836 = memref.load %arg2[%c43] : memref<162xf32, #tpu.memory_space<smem>>
    %1837 = vector.broadcast %1836 : f32 to vector<8x128xf32>
    %1838 = arith.mulf %1837, %1780 : vector<8x128xf32>
    %1839 = arith.addf %1831, %1838 : vector<8x128xf32>
    %c124 = arith.constant 124 : index
    %1840 = memref.load %arg2[%c124] : memref<162xf32, #tpu.memory_space<smem>>
    %1841 = vector.broadcast %1840 : f32 to vector<8x128xf32>
    %1842 = arith.mulf %1841, %1780 : vector<8x128xf32>
    %1843 = arith.addf %1835, %1842 : vector<8x128xf32>
    %c44 = arith.constant 44 : index
    %1844 = memref.load %arg2[%c44] : memref<162xf32, #tpu.memory_space<smem>>
    %1845 = vector.broadcast %1844 : f32 to vector<8x128xf32>
    %1846 = arith.mulf %1845, %1787 : vector<8x128xf32>
    %1847 = arith.addf %1839, %1846 : vector<8x128xf32>
    %c125 = arith.constant 125 : index
    %1848 = memref.load %arg2[%c125] : memref<162xf32, #tpu.memory_space<smem>>
    %1849 = vector.broadcast %1848 : f32 to vector<8x128xf32>
    %1850 = arith.mulf %1849, %1787 : vector<8x128xf32>
    %1851 = arith.addf %1843, %1850 : vector<8x128xf32>
    %c5_461 = arith.constant 5 : index
    %c0_462 = arith.constant 0 : index
    %c0_463 = arith.constant 0 : index
    %1852 = vector.load %arg3[%c5_461, %c0_462, %c0_463] : memref<9x8x128xf32, #tpu.memory_space<vmem>>, vector<1x8x128xf32>
    %1853 = vector.shape_cast %1852 : vector<1x8x128xf32> to vector<8x128xf32>
    %1854 = arith.negf %1853 : vector<8x128xf32>
    %1855 = math.exp %1854 : vector<8x128xf32>
    %cst_464 = arith.constant 1.000000e+00 : f32
    %1856 = vector.broadcast %cst_464 : f32 to vector<8x128xf32>
    %1857 = arith.addf %1856, %1855 : vector<8x128xf32>
    %1858 = arith.divf %1856, %1857 : vector<8x128xf32>
    %1859 = arith.mulf %1853, %1858 : vector<8x128xf32>
    %c45 = arith.constant 45 : index
    %1860 = memref.load %arg2[%c45] : memref<162xf32, #tpu.memory_space<smem>>
    %1861 = vector.broadcast %1860 : f32 to vector<8x128xf32>
    %1862 = arith.mulf %1861, %1859 : vector<8x128xf32>
    %1863 = arith.addf %1847, %1862 : vector<8x128xf32>
    %c126 = arith.constant 126 : index
    %1864 = memref.load %arg2[%c126] : memref<162xf32, #tpu.memory_space<smem>>
    %1865 = vector.broadcast %1864 : f32 to vector<8x128xf32>
    %1866 = arith.mulf %1865, %1859 : vector<8x128xf32>
    %1867 = arith.addf %1851, %1866 : vector<8x128xf32>
    %cst_465 = arith.constant -2.200000e+00 : f32
    %1868 = vector.broadcast %cst_465 : f32 to vector<8x128xf32>
    %1869 = arith.subf %1853, %1868 : vector<8x128xf32>
    %cst_466 = arith.constant -1.800000e+00 : f32
    %1870 = vector.broadcast %cst_466 : f32 to vector<8x128xf32>
    %1871 = arith.subf %1853, %1870 : vector<8x128xf32>
    %cst_467 = arith.constant -1.400000e+00 : f32
    %1872 = vector.broadcast %cst_467 : f32 to vector<8x128xf32>
    %1873 = arith.subf %1853, %1872 : vector<8x128xf32>
    %cst_468 = arith.constant -1.000000e+00 : f32
    %1874 = vector.broadcast %cst_468 : f32 to vector<8x128xf32>
    %1875 = arith.subf %1853, %1874 : vector<8x128xf32>
    %cst_469 = arith.constant -6.000000e-01 : f32
    %1876 = vector.broadcast %cst_469 : f32 to vector<8x128xf32>
    %1877 = arith.subf %1853, %1876 : vector<8x128xf32>
    %cst_470 = arith.constant -2.000000e-01 : f32
    %1878 = vector.broadcast %cst_470 : f32 to vector<8x128xf32>
    %1879 = arith.subf %1853, %1878 : vector<8x128xf32>
    %cst_471 = arith.constant 2.000000e-01 : f32
    %1880 = vector.broadcast %cst_471 : f32 to vector<8x128xf32>
    %1881 = arith.subf %1853, %1880 : vector<8x128xf32>
    %cst_472 = arith.constant 6.000000e-01 : f32
    %1882 = vector.broadcast %cst_472 : f32 to vector<8x128xf32>
    %1883 = arith.subf %1853, %1882 : vector<8x128xf32>
    %cst_473 = arith.constant 1.000000e+00 : f32
    %1884 = vector.broadcast %cst_473 : f32 to vector<8x128xf32>
    %1885 = arith.subf %1853, %1884 : vector<8x128xf32>
    %cst_474 = arith.constant 1.400000e+00 : f32
    %1886 = vector.broadcast %cst_474 : f32 to vector<8x128xf32>
    %1887 = arith.subf %1853, %1886 : vector<8x128xf32>
    %cst_475 = arith.constant 1.800000e+00 : f32
    %1888 = vector.broadcast %cst_475 : f32 to vector<8x128xf32>
    %1889 = arith.subf %1853, %1888 : vector<8x128xf32>
    %cst_476 = arith.constant 2.200000e+00 : f32
    %1890 = vector.broadcast %cst_476 : f32 to vector<8x128xf32>
    %1891 = arith.subf %1853, %1890 : vector<8x128xf32>
    %cst_477 = arith.constant 0.000000e+00 : f32
    %1892 = vector.broadcast %cst_477 : f32 to vector<8x128xf32>
    %1893 = arith.cmpf oge, %1869, %1892 : vector<8x128xf32>
    %cst_478 = arith.constant 0.000000e+00 : f32
    %1894 = vector.broadcast %cst_478 : f32 to vector<8x128xf32>
    %1895 = arith.cmpf olt, %1871, %1894 : vector<8x128xf32>
    %1896 = arith.andi %1893, %1895 : vector<8x128xi1>
    %1897 = arith.extui %1896 : vector<8x128xi1> to vector<8x128xi32>
    %1898 = arith.sitofp %1897 : vector<8x128xi32> to vector<8x128xf32>
    %cst_479 = arith.constant 0.000000e+00 : f32
    %1899 = vector.broadcast %cst_479 : f32 to vector<8x128xf32>
    %1900 = arith.cmpf oge, %1871, %1899 : vector<8x128xf32>
    %cst_480 = arith.constant 0.000000e+00 : f32
    %1901 = vector.broadcast %cst_480 : f32 to vector<8x128xf32>
    %1902 = arith.cmpf olt, %1873, %1901 : vector<8x128xf32>
    %1903 = arith.andi %1900, %1902 : vector<8x128xi1>
    %1904 = arith.extui %1903 : vector<8x128xi1> to vector<8x128xi32>
    %1905 = arith.sitofp %1904 : vector<8x128xi32> to vector<8x128xf32>
    %cst_481 = arith.constant 0.000000e+00 : f32
    %1906 = vector.broadcast %cst_481 : f32 to vector<8x128xf32>
    %1907 = arith.cmpf oge, %1873, %1906 : vector<8x128xf32>
    %cst_482 = arith.constant 0.000000e+00 : f32
    %1908 = vector.broadcast %cst_482 : f32 to vector<8x128xf32>
    %1909 = arith.cmpf olt, %1875, %1908 : vector<8x128xf32>
    %1910 = arith.andi %1907, %1909 : vector<8x128xi1>
    %1911 = arith.extui %1910 : vector<8x128xi1> to vector<8x128xi32>
    %1912 = arith.sitofp %1911 : vector<8x128xi32> to vector<8x128xf32>
    %cst_483 = arith.constant 0.000000e+00 : f32
    %1913 = vector.broadcast %cst_483 : f32 to vector<8x128xf32>
    %1914 = arith.cmpf oge, %1875, %1913 : vector<8x128xf32>
    %cst_484 = arith.constant 0.000000e+00 : f32
    %1915 = vector.broadcast %cst_484 : f32 to vector<8x128xf32>
    %1916 = arith.cmpf olt, %1877, %1915 : vector<8x128xf32>
    %1917 = arith.andi %1914, %1916 : vector<8x128xi1>
    %1918 = arith.extui %1917 : vector<8x128xi1> to vector<8x128xi32>
    %1919 = arith.sitofp %1918 : vector<8x128xi32> to vector<8x128xf32>
    %cst_485 = arith.constant 0.000000e+00 : f32
    %1920 = vector.broadcast %cst_485 : f32 to vector<8x128xf32>
    %1921 = arith.cmpf oge, %1877, %1920 : vector<8x128xf32>
    %cst_486 = arith.constant 0.000000e+00 : f32
    %1922 = vector.broadcast %cst_486 : f32 to vector<8x128xf32>
    %1923 = arith.cmpf olt, %1879, %1922 : vector<8x128xf32>
    %1924 = arith.andi %1921, %1923 : vector<8x128xi1>
    %1925 = arith.extui %1924 : vector<8x128xi1> to vector<8x128xi32>
    %1926 = arith.sitofp %1925 : vector<8x128xi32> to vector<8x128xf32>
    %cst_487 = arith.constant 0.000000e+00 : f32
    %1927 = vector.broadcast %cst_487 : f32 to vector<8x128xf32>
    %1928 = arith.cmpf oge, %1879, %1927 : vector<8x128xf32>
    %cst_488 = arith.constant 0.000000e+00 : f32
    %1929 = vector.broadcast %cst_488 : f32 to vector<8x128xf32>
    %1930 = arith.cmpf olt, %1881, %1929 : vector<8x128xf32>
    %1931 = arith.andi %1928, %1930 : vector<8x128xi1>
    %1932 = arith.extui %1931 : vector<8x128xi1> to vector<8x128xi32>
    %1933 = arith.sitofp %1932 : vector<8x128xi32> to vector<8x128xf32>
    %cst_489 = arith.constant 0.000000e+00 : f32
    %1934 = vector.broadcast %cst_489 : f32 to vector<8x128xf32>
    %1935 = arith.cmpf oge, %1881, %1934 : vector<8x128xf32>
    %cst_490 = arith.constant 0.000000e+00 : f32
    %1936 = vector.broadcast %cst_490 : f32 to vector<8x128xf32>
    %1937 = arith.cmpf olt, %1883, %1936 : vector<8x128xf32>
    %1938 = arith.andi %1935, %1937 : vector<8x128xi1>
    %1939 = arith.extui %1938 : vector<8x128xi1> to vector<8x128xi32>
    %1940 = arith.sitofp %1939 : vector<8x128xi32> to vector<8x128xf32>
    %cst_491 = arith.constant 0.000000e+00 : f32
    %1941 = vector.broadcast %cst_491 : f32 to vector<8x128xf32>
    %1942 = arith.cmpf oge, %1883, %1941 : vector<8x128xf32>
    %cst_492 = arith.constant 0.000000e+00 : f32
    %1943 = vector.broadcast %cst_492 : f32 to vector<8x128xf32>
    %1944 = arith.cmpf olt, %1885, %1943 : vector<8x128xf32>
    %1945 = arith.andi %1942, %1944 : vector<8x128xi1>
    %1946 = arith.extui %1945 : vector<8x128xi1> to vector<8x128xi32>
    %1947 = arith.sitofp %1946 : vector<8x128xi32> to vector<8x128xf32>
    %cst_493 = arith.constant 0.000000e+00 : f32
    %1948 = vector.broadcast %cst_493 : f32 to vector<8x128xf32>
    %1949 = arith.cmpf oge, %1885, %1948 : vector<8x128xf32>
    %cst_494 = arith.constant 0.000000e+00 : f32
    %1950 = vector.broadcast %cst_494 : f32 to vector<8x128xf32>
    %1951 = arith.cmpf olt, %1887, %1950 : vector<8x128xf32>
    %1952 = arith.andi %1949, %1951 : vector<8x128xi1>
    %1953 = arith.extui %1952 : vector<8x128xi1> to vector<8x128xi32>
    %1954 = arith.sitofp %1953 : vector<8x128xi32> to vector<8x128xf32>
    %cst_495 = arith.constant 0.000000e+00 : f32
    %1955 = vector.broadcast %cst_495 : f32 to vector<8x128xf32>
    %1956 = arith.cmpf oge, %1887, %1955 : vector<8x128xf32>
    %cst_496 = arith.constant 0.000000e+00 : f32
    %1957 = vector.broadcast %cst_496 : f32 to vector<8x128xf32>
    %1958 = arith.cmpf olt, %1889, %1957 : vector<8x128xf32>
    %1959 = arith.andi %1956, %1958 : vector<8x128xi1>
    %1960 = arith.extui %1959 : vector<8x128xi1> to vector<8x128xi32>
    %1961 = arith.sitofp %1960 : vector<8x128xi32> to vector<8x128xf32>
    %cst_497 = arith.constant 0.000000e+00 : f32
    %1962 = vector.broadcast %cst_497 : f32 to vector<8x128xf32>
    %1963 = arith.cmpf oge, %1889, %1962 : vector<8x128xf32>
    %cst_498 = arith.constant 0.000000e+00 : f32
    %1964 = vector.broadcast %cst_498 : f32 to vector<8x128xf32>
    %1965 = arith.cmpf olt, %1891, %1964 : vector<8x128xf32>
    %1966 = arith.andi %1963, %1965 : vector<8x128xi1>
    %1967 = arith.extui %1966 : vector<8x128xi1> to vector<8x128xi32>
    %1968 = arith.sitofp %1967 : vector<8x128xi32> to vector<8x128xf32>
    %cst_499 = arith.constant 2.500000e+00 : f32
    %1969 = vector.broadcast %cst_499 : f32 to vector<8x128xf32>
    %1970 = arith.mulf %1869, %1969 : vector<8x128xf32>
    %1971 = arith.mulf %1970, %1898 : vector<8x128xf32>
    %cst_500 = arith.constant -2.500000e+00 : f32
    %1972 = vector.broadcast %cst_500 : f32 to vector<8x128xf32>
    %1973 = arith.mulf %1873, %1972 : vector<8x128xf32>
    %1974 = arith.mulf %1973, %1905 : vector<8x128xf32>
    %1975 = arith.addf %1971, %1974 : vector<8x128xf32>
    %cst_501 = arith.constant 2.500000e+00 : f32
    %1976 = vector.broadcast %cst_501 : f32 to vector<8x128xf32>
    %1977 = arith.mulf %1871, %1976 : vector<8x128xf32>
    %1978 = arith.mulf %1977, %1905 : vector<8x128xf32>
    %cst_502 = arith.constant -2.500000e+00 : f32
    %1979 = vector.broadcast %cst_502 : f32 to vector<8x128xf32>
    %1980 = arith.mulf %1875, %1979 : vector<8x128xf32>
    %1981 = arith.mulf %1980, %1912 : vector<8x128xf32>
    %1982 = arith.addf %1978, %1981 : vector<8x128xf32>
    %cst_503 = arith.constant 2.500000e+00 : f32
    %1983 = vector.broadcast %cst_503 : f32 to vector<8x128xf32>
    %1984 = arith.mulf %1873, %1983 : vector<8x128xf32>
    %1985 = arith.mulf %1984, %1912 : vector<8x128xf32>
    %cst_504 = arith.constant -2.500000e+00 : f32
    %1986 = vector.broadcast %cst_504 : f32 to vector<8x128xf32>
    %1987 = arith.mulf %1877, %1986 : vector<8x128xf32>
    %1988 = arith.mulf %1987, %1919 : vector<8x128xf32>
    %1989 = arith.addf %1985, %1988 : vector<8x128xf32>
    %cst_505 = arith.constant 2.500000e+00 : f32
    %1990 = vector.broadcast %cst_505 : f32 to vector<8x128xf32>
    %1991 = arith.mulf %1875, %1990 : vector<8x128xf32>
    %1992 = arith.mulf %1991, %1919 : vector<8x128xf32>
    %cst_506 = arith.constant -2.500000e+00 : f32
    %1993 = vector.broadcast %cst_506 : f32 to vector<8x128xf32>
    %1994 = arith.mulf %1879, %1993 : vector<8x128xf32>
    %1995 = arith.mulf %1994, %1926 : vector<8x128xf32>
    %1996 = arith.addf %1992, %1995 : vector<8x128xf32>
    %cst_507 = arith.constant 2.500000e+00 : f32
    %1997 = vector.broadcast %cst_507 : f32 to vector<8x128xf32>
    %1998 = arith.mulf %1877, %1997 : vector<8x128xf32>
    %1999 = arith.mulf %1998, %1926 : vector<8x128xf32>
    %cst_508 = arith.constant -2.500000e+00 : f32
    %2000 = vector.broadcast %cst_508 : f32 to vector<8x128xf32>
    %2001 = arith.mulf %1881, %2000 : vector<8x128xf32>
    %2002 = arith.mulf %2001, %1933 : vector<8x128xf32>
    %2003 = arith.addf %1999, %2002 : vector<8x128xf32>
    %cst_509 = arith.constant 2.500000e+00 : f32
    %2004 = vector.broadcast %cst_509 : f32 to vector<8x128xf32>
    %2005 = arith.mulf %1879, %2004 : vector<8x128xf32>
    %2006 = arith.mulf %2005, %1933 : vector<8x128xf32>
    %cst_510 = arith.constant -2.500000e+00 : f32
    %2007 = vector.broadcast %cst_510 : f32 to vector<8x128xf32>
    %2008 = arith.mulf %1883, %2007 : vector<8x128xf32>
    %2009 = arith.mulf %2008, %1940 : vector<8x128xf32>
    %2010 = arith.addf %2006, %2009 : vector<8x128xf32>
    %cst_511 = arith.constant 2.500000e+00 : f32
    %2011 = vector.broadcast %cst_511 : f32 to vector<8x128xf32>
    %2012 = arith.mulf %1881, %2011 : vector<8x128xf32>
    %2013 = arith.mulf %2012, %1940 : vector<8x128xf32>
    %cst_512 = arith.constant -2.500000e+00 : f32
    %2014 = vector.broadcast %cst_512 : f32 to vector<8x128xf32>
    %2015 = arith.mulf %1885, %2014 : vector<8x128xf32>
    %2016 = arith.mulf %2015, %1947 : vector<8x128xf32>
    %2017 = arith.addf %2013, %2016 : vector<8x128xf32>
    %cst_513 = arith.constant 2.500000e+00 : f32
    %2018 = vector.broadcast %cst_513 : f32 to vector<8x128xf32>
    %2019 = arith.mulf %1883, %2018 : vector<8x128xf32>
    %2020 = arith.mulf %2019, %1947 : vector<8x128xf32>
    %cst_514 = arith.constant -2.500000e+00 : f32
    %2021 = vector.broadcast %cst_514 : f32 to vector<8x128xf32>
    %2022 = arith.mulf %1887, %2021 : vector<8x128xf32>
    %2023 = arith.mulf %2022, %1954 : vector<8x128xf32>
    %2024 = arith.addf %2020, %2023 : vector<8x128xf32>
    %cst_515 = arith.constant 2.500000e+00 : f32
    %2025 = vector.broadcast %cst_515 : f32 to vector<8x128xf32>
    %2026 = arith.mulf %1885, %2025 : vector<8x128xf32>
    %2027 = arith.mulf %2026, %1954 : vector<8x128xf32>
    %cst_516 = arith.constant -2.500000e+00 : f32
    %2028 = vector.broadcast %cst_516 : f32 to vector<8x128xf32>
    %2029 = arith.mulf %1889, %2028 : vector<8x128xf32>
    %2030 = arith.mulf %2029, %1961 : vector<8x128xf32>
    %2031 = arith.addf %2027, %2030 : vector<8x128xf32>
    %cst_517 = arith.constant 2.500000e+00 : f32
    %2032 = vector.broadcast %cst_517 : f32 to vector<8x128xf32>
    %2033 = arith.mulf %1887, %2032 : vector<8x128xf32>
    %2034 = arith.mulf %2033, %1961 : vector<8x128xf32>
    %cst_518 = arith.constant -2.500000e+00 : f32
    %2035 = vector.broadcast %cst_518 : f32 to vector<8x128xf32>
    %2036 = arith.mulf %1891, %2035 : vector<8x128xf32>
    %2037 = arith.mulf %2036, %1968 : vector<8x128xf32>
    %2038 = arith.addf %2034, %2037 : vector<8x128xf32>
    %cst_519 = arith.constant 1.250000e+00 : f32
    %2039 = vector.broadcast %cst_519 : f32 to vector<8x128xf32>
    %2040 = arith.mulf %1869, %2039 : vector<8x128xf32>
    %2041 = arith.mulf %2040, %1975 : vector<8x128xf32>
    %cst_520 = arith.constant -1.250000e+00 : f32
    %2042 = vector.broadcast %cst_520 : f32 to vector<8x128xf32>
    %2043 = arith.mulf %1875, %2042 : vector<8x128xf32>
    %2044 = arith.mulf %2043, %1982 : vector<8x128xf32>
    %2045 = arith.addf %2041, %2044 : vector<8x128xf32>
    %cst_521 = arith.constant 1.250000e+00 : f32
    %2046 = vector.broadcast %cst_521 : f32 to vector<8x128xf32>
    %2047 = arith.mulf %1871, %2046 : vector<8x128xf32>
    %2048 = arith.mulf %2047, %1982 : vector<8x128xf32>
    %cst_522 = arith.constant -1.250000e+00 : f32
    %2049 = vector.broadcast %cst_522 : f32 to vector<8x128xf32>
    %2050 = arith.mulf %1877, %2049 : vector<8x128xf32>
    %2051 = arith.mulf %2050, %1989 : vector<8x128xf32>
    %2052 = arith.addf %2048, %2051 : vector<8x128xf32>
    %cst_523 = arith.constant 1.250000e+00 : f32
    %2053 = vector.broadcast %cst_523 : f32 to vector<8x128xf32>
    %2054 = arith.mulf %1873, %2053 : vector<8x128xf32>
    %2055 = arith.mulf %2054, %1989 : vector<8x128xf32>
    %cst_524 = arith.constant -1.250000e+00 : f32
    %2056 = vector.broadcast %cst_524 : f32 to vector<8x128xf32>
    %2057 = arith.mulf %1879, %2056 : vector<8x128xf32>
    %2058 = arith.mulf %2057, %1996 : vector<8x128xf32>
    %2059 = arith.addf %2055, %2058 : vector<8x128xf32>
    %cst_525 = arith.constant 1.250000e+00 : f32
    %2060 = vector.broadcast %cst_525 : f32 to vector<8x128xf32>
    %2061 = arith.mulf %1875, %2060 : vector<8x128xf32>
    %2062 = arith.mulf %2061, %1996 : vector<8x128xf32>
    %cst_526 = arith.constant -1.250000e+00 : f32
    %2063 = vector.broadcast %cst_526 : f32 to vector<8x128xf32>
    %2064 = arith.mulf %1881, %2063 : vector<8x128xf32>
    %2065 = arith.mulf %2064, %2003 : vector<8x128xf32>
    %2066 = arith.addf %2062, %2065 : vector<8x128xf32>
    %cst_527 = arith.constant 1.250000e+00 : f32
    %2067 = vector.broadcast %cst_527 : f32 to vector<8x128xf32>
    %2068 = arith.mulf %1877, %2067 : vector<8x128xf32>
    %2069 = arith.mulf %2068, %2003 : vector<8x128xf32>
    %cst_528 = arith.constant -1.250000e+00 : f32
    %2070 = vector.broadcast %cst_528 : f32 to vector<8x128xf32>
    %2071 = arith.mulf %1883, %2070 : vector<8x128xf32>
    %2072 = arith.mulf %2071, %2010 : vector<8x128xf32>
    %2073 = arith.addf %2069, %2072 : vector<8x128xf32>
    %cst_529 = arith.constant 1.250000e+00 : f32
    %2074 = vector.broadcast %cst_529 : f32 to vector<8x128xf32>
    %2075 = arith.mulf %1879, %2074 : vector<8x128xf32>
    %2076 = arith.mulf %2075, %2010 : vector<8x128xf32>
    %cst_530 = arith.constant -1.250000e+00 : f32
    %2077 = vector.broadcast %cst_530 : f32 to vector<8x128xf32>
    %2078 = arith.mulf %1885, %2077 : vector<8x128xf32>
    %2079 = arith.mulf %2078, %2017 : vector<8x128xf32>
    %2080 = arith.addf %2076, %2079 : vector<8x128xf32>
    %cst_531 = arith.constant 1.250000e+00 : f32
    %2081 = vector.broadcast %cst_531 : f32 to vector<8x128xf32>
    %2082 = arith.mulf %1881, %2081 : vector<8x128xf32>
    %2083 = arith.mulf %2082, %2017 : vector<8x128xf32>
    %cst_532 = arith.constant -1.250000e+00 : f32
    %2084 = vector.broadcast %cst_532 : f32 to vector<8x128xf32>
    %2085 = arith.mulf %1887, %2084 : vector<8x128xf32>
    %2086 = arith.mulf %2085, %2024 : vector<8x128xf32>
    %2087 = arith.addf %2083, %2086 : vector<8x128xf32>
    %cst_533 = arith.constant 1.250000e+00 : f32
    %2088 = vector.broadcast %cst_533 : f32 to vector<8x128xf32>
    %2089 = arith.mulf %1883, %2088 : vector<8x128xf32>
    %2090 = arith.mulf %2089, %2024 : vector<8x128xf32>
    %cst_534 = arith.constant -1.250000e+00 : f32
    %2091 = vector.broadcast %cst_534 : f32 to vector<8x128xf32>
    %2092 = arith.mulf %1889, %2091 : vector<8x128xf32>
    %2093 = arith.mulf %2092, %2031 : vector<8x128xf32>
    %2094 = arith.addf %2090, %2093 : vector<8x128xf32>
    %cst_535 = arith.constant 1.250000e+00 : f32
    %2095 = vector.broadcast %cst_535 : f32 to vector<8x128xf32>
    %2096 = arith.mulf %1885, %2095 : vector<8x128xf32>
    %2097 = arith.mulf %2096, %2031 : vector<8x128xf32>
    %cst_536 = arith.constant -1.250000e+00 : f32
    %2098 = vector.broadcast %cst_536 : f32 to vector<8x128xf32>
    %2099 = arith.mulf %1891, %2098 : vector<8x128xf32>
    %2100 = arith.mulf %2099, %2038 : vector<8x128xf32>
    %2101 = arith.addf %2097, %2100 : vector<8x128xf32>
    %cst_537 = arith.constant 0.833333313 : f32
    %2102 = vector.broadcast %cst_537 : f32 to vector<8x128xf32>
    %2103 = arith.mulf %1869, %2102 : vector<8x128xf32>
    %2104 = arith.mulf %2103, %2045 : vector<8x128xf32>
    %cst_538 = arith.constant -0.833333313 : f32
    %2105 = vector.broadcast %cst_538 : f32 to vector<8x128xf32>
    %2106 = arith.mulf %1877, %2105 : vector<8x128xf32>
    %2107 = arith.mulf %2106, %2052 : vector<8x128xf32>
    %2108 = arith.addf %2104, %2107 : vector<8x128xf32>
    %cst_539 = arith.constant 0.833333313 : f32
    %2109 = vector.broadcast %cst_539 : f32 to vector<8x128xf32>
    %2110 = arith.mulf %1871, %2109 : vector<8x128xf32>
    %2111 = arith.mulf %2110, %2052 : vector<8x128xf32>
    %cst_540 = arith.constant -0.833333313 : f32
    %2112 = vector.broadcast %cst_540 : f32 to vector<8x128xf32>
    %2113 = arith.mulf %1879, %2112 : vector<8x128xf32>
    %2114 = arith.mulf %2113, %2059 : vector<8x128xf32>
    %2115 = arith.addf %2111, %2114 : vector<8x128xf32>
    %cst_541 = arith.constant 0.833333313 : f32
    %2116 = vector.broadcast %cst_541 : f32 to vector<8x128xf32>
    %2117 = arith.mulf %1873, %2116 : vector<8x128xf32>
    %2118 = arith.mulf %2117, %2059 : vector<8x128xf32>
    %cst_542 = arith.constant -0.833333313 : f32
    %2119 = vector.broadcast %cst_542 : f32 to vector<8x128xf32>
    %2120 = arith.mulf %1881, %2119 : vector<8x128xf32>
    %2121 = arith.mulf %2120, %2066 : vector<8x128xf32>
    %2122 = arith.addf %2118, %2121 : vector<8x128xf32>
    %cst_543 = arith.constant 0.833333313 : f32
    %2123 = vector.broadcast %cst_543 : f32 to vector<8x128xf32>
    %2124 = arith.mulf %1875, %2123 : vector<8x128xf32>
    %2125 = arith.mulf %2124, %2066 : vector<8x128xf32>
    %cst_544 = arith.constant -0.833333313 : f32
    %2126 = vector.broadcast %cst_544 : f32 to vector<8x128xf32>
    %2127 = arith.mulf %1883, %2126 : vector<8x128xf32>
    %2128 = arith.mulf %2127, %2073 : vector<8x128xf32>
    %2129 = arith.addf %2125, %2128 : vector<8x128xf32>
    %cst_545 = arith.constant 0.833333313 : f32
    %2130 = vector.broadcast %cst_545 : f32 to vector<8x128xf32>
    %2131 = arith.mulf %1877, %2130 : vector<8x128xf32>
    %2132 = arith.mulf %2131, %2073 : vector<8x128xf32>
    %cst_546 = arith.constant -0.833333313 : f32
    %2133 = vector.broadcast %cst_546 : f32 to vector<8x128xf32>
    %2134 = arith.mulf %1885, %2133 : vector<8x128xf32>
    %2135 = arith.mulf %2134, %2080 : vector<8x128xf32>
    %2136 = arith.addf %2132, %2135 : vector<8x128xf32>
    %cst_547 = arith.constant 0.833333313 : f32
    %2137 = vector.broadcast %cst_547 : f32 to vector<8x128xf32>
    %2138 = arith.mulf %1879, %2137 : vector<8x128xf32>
    %2139 = arith.mulf %2138, %2080 : vector<8x128xf32>
    %cst_548 = arith.constant -0.833333313 : f32
    %2140 = vector.broadcast %cst_548 : f32 to vector<8x128xf32>
    %2141 = arith.mulf %1887, %2140 : vector<8x128xf32>
    %2142 = arith.mulf %2141, %2087 : vector<8x128xf32>
    %2143 = arith.addf %2139, %2142 : vector<8x128xf32>
    %cst_549 = arith.constant 0.833333313 : f32
    %2144 = vector.broadcast %cst_549 : f32 to vector<8x128xf32>
    %2145 = arith.mulf %1881, %2144 : vector<8x128xf32>
    %2146 = arith.mulf %2145, %2087 : vector<8x128xf32>
    %cst_550 = arith.constant -0.833333313 : f32
    %2147 = vector.broadcast %cst_550 : f32 to vector<8x128xf32>
    %2148 = arith.mulf %1889, %2147 : vector<8x128xf32>
    %2149 = arith.mulf %2148, %2094 : vector<8x128xf32>
    %2150 = arith.addf %2146, %2149 : vector<8x128xf32>
    %cst_551 = arith.constant 0.833333313 : f32
    %2151 = vector.broadcast %cst_551 : f32 to vector<8x128xf32>
    %2152 = arith.mulf %1883, %2151 : vector<8x128xf32>
    %2153 = arith.mulf %2152, %2094 : vector<8x128xf32>
    %cst_552 = arith.constant -0.833333313 : f32
    %2154 = vector.broadcast %cst_552 : f32 to vector<8x128xf32>
    %2155 = arith.mulf %1891, %2154 : vector<8x128xf32>
    %2156 = arith.mulf %2155, %2101 : vector<8x128xf32>
    %2157 = arith.addf %2153, %2156 : vector<8x128xf32>
    %c46 = arith.constant 46 : index
    %2158 = memref.load %arg2[%c46] : memref<162xf32, #tpu.memory_space<smem>>
    %2159 = vector.broadcast %2158 : f32 to vector<8x128xf32>
    %2160 = arith.mulf %2159, %2108 : vector<8x128xf32>
    %2161 = arith.addf %1863, %2160 : vector<8x128xf32>
    %c127 = arith.constant 127 : index
    %2162 = memref.load %arg2[%c127] : memref<162xf32, #tpu.memory_space<smem>>
    %2163 = vector.broadcast %2162 : f32 to vector<8x128xf32>
    %2164 = arith.mulf %2163, %2108 : vector<8x128xf32>
    %2165 = arith.addf %1867, %2164 : vector<8x128xf32>
    %c47 = arith.constant 47 : index
    %2166 = memref.load %arg2[%c47] : memref<162xf32, #tpu.memory_space<smem>>
    %2167 = vector.broadcast %2166 : f32 to vector<8x128xf32>
    %2168 = arith.mulf %2167, %2115 : vector<8x128xf32>
    %2169 = arith.addf %2161, %2168 : vector<8x128xf32>
    %c128 = arith.constant 128 : index
    %2170 = memref.load %arg2[%c128] : memref<162xf32, #tpu.memory_space<smem>>
    %2171 = vector.broadcast %2170 : f32 to vector<8x128xf32>
    %2172 = arith.mulf %2171, %2115 : vector<8x128xf32>
    %2173 = arith.addf %2165, %2172 : vector<8x128xf32>
    %c48 = arith.constant 48 : index
    %2174 = memref.load %arg2[%c48] : memref<162xf32, #tpu.memory_space<smem>>
    %2175 = vector.broadcast %2174 : f32 to vector<8x128xf32>
    %2176 = arith.mulf %2175, %2122 : vector<8x128xf32>
    %2177 = arith.addf %2169, %2176 : vector<8x128xf32>
    %c129 = arith.constant 129 : index
    %2178 = memref.load %arg2[%c129] : memref<162xf32, #tpu.memory_space<smem>>
    %2179 = vector.broadcast %2178 : f32 to vector<8x128xf32>
    %2180 = arith.mulf %2179, %2122 : vector<8x128xf32>
    %2181 = arith.addf %2173, %2180 : vector<8x128xf32>
    %c49 = arith.constant 49 : index
    %2182 = memref.load %arg2[%c49] : memref<162xf32, #tpu.memory_space<smem>>
    %2183 = vector.broadcast %2182 : f32 to vector<8x128xf32>
    %2184 = arith.mulf %2183, %2129 : vector<8x128xf32>
    %2185 = arith.addf %2177, %2184 : vector<8x128xf32>
    %c130 = arith.constant 130 : index
    %2186 = memref.load %arg2[%c130] : memref<162xf32, #tpu.memory_space<smem>>
    %2187 = vector.broadcast %2186 : f32 to vector<8x128xf32>
    %2188 = arith.mulf %2187, %2129 : vector<8x128xf32>
    %2189 = arith.addf %2181, %2188 : vector<8x128xf32>
    %c50 = arith.constant 50 : index
    %2190 = memref.load %arg2[%c50] : memref<162xf32, #tpu.memory_space<smem>>
    %2191 = vector.broadcast %2190 : f32 to vector<8x128xf32>
    %2192 = arith.mulf %2191, %2136 : vector<8x128xf32>
    %2193 = arith.addf %2185, %2192 : vector<8x128xf32>
    %c131 = arith.constant 131 : index
    %2194 = memref.load %arg2[%c131] : memref<162xf32, #tpu.memory_space<smem>>
    %2195 = vector.broadcast %2194 : f32 to vector<8x128xf32>
    %2196 = arith.mulf %2195, %2136 : vector<8x128xf32>
    %2197 = arith.addf %2189, %2196 : vector<8x128xf32>
    %c51 = arith.constant 51 : index
    %2198 = memref.load %arg2[%c51] : memref<162xf32, #tpu.memory_space<smem>>
    %2199 = vector.broadcast %2198 : f32 to vector<8x128xf32>
    %2200 = arith.mulf %2199, %2143 : vector<8x128xf32>
    %2201 = arith.addf %2193, %2200 : vector<8x128xf32>
    %c132 = arith.constant 132 : index
    %2202 = memref.load %arg2[%c132] : memref<162xf32, #tpu.memory_space<smem>>
    %2203 = vector.broadcast %2202 : f32 to vector<8x128xf32>
    %2204 = arith.mulf %2203, %2143 : vector<8x128xf32>
    %2205 = arith.addf %2197, %2204 : vector<8x128xf32>
    %c52 = arith.constant 52 : index
    %2206 = memref.load %arg2[%c52] : memref<162xf32, #tpu.memory_space<smem>>
    %2207 = vector.broadcast %2206 : f32 to vector<8x128xf32>
    %2208 = arith.mulf %2207, %2150 : vector<8x128xf32>
    %2209 = arith.addf %2201, %2208 : vector<8x128xf32>
    %c133 = arith.constant 133 : index
    %2210 = memref.load %arg2[%c133] : memref<162xf32, #tpu.memory_space<smem>>
    %2211 = vector.broadcast %2210 : f32 to vector<8x128xf32>
    %2212 = arith.mulf %2211, %2150 : vector<8x128xf32>
    %2213 = arith.addf %2205, %2212 : vector<8x128xf32>
    %c53 = arith.constant 53 : index
    %2214 = memref.load %arg2[%c53] : memref<162xf32, #tpu.memory_space<smem>>
    %2215 = vector.broadcast %2214 : f32 to vector<8x128xf32>
    %2216 = arith.mulf %2215, %2157 : vector<8x128xf32>
    %2217 = arith.addf %2209, %2216 : vector<8x128xf32>
    %c134 = arith.constant 134 : index
    %2218 = memref.load %arg2[%c134] : memref<162xf32, #tpu.memory_space<smem>>
    %2219 = vector.broadcast %2218 : f32 to vector<8x128xf32>
    %2220 = arith.mulf %2219, %2157 : vector<8x128xf32>
    %2221 = arith.addf %2213, %2220 : vector<8x128xf32>
    %c6_553 = arith.constant 6 : index
    %c0_554 = arith.constant 0 : index
    %c0_555 = arith.constant 0 : index
    %2222 = vector.load %arg3[%c6_553, %c0_554, %c0_555] : memref<9x8x128xf32, #tpu.memory_space<vmem>>, vector<1x8x128xf32>
    %2223 = vector.shape_cast %2222 : vector<1x8x128xf32> to vector<8x128xf32>
    %2224 = arith.negf %2223 : vector<8x128xf32>
    %2225 = math.exp %2224 : vector<8x128xf32>
    %cst_556 = arith.constant 1.000000e+00 : f32
    %2226 = vector.broadcast %cst_556 : f32 to vector<8x128xf32>
    %2227 = arith.addf %2226, %2225 : vector<8x128xf32>
    %2228 = arith.divf %2226, %2227 : vector<8x128xf32>
    %2229 = arith.mulf %2223, %2228 : vector<8x128xf32>
    %c54 = arith.constant 54 : index
    %2230 = memref.load %arg2[%c54] : memref<162xf32, #tpu.memory_space<smem>>
    %2231 = vector.broadcast %2230 : f32 to vector<8x128xf32>
    %2232 = arith.mulf %2231, %2229 : vector<8x128xf32>
    %2233 = arith.addf %2217, %2232 : vector<8x128xf32>
    %c135 = arith.constant 135 : index
    %2234 = memref.load %arg2[%c135] : memref<162xf32, #tpu.memory_space<smem>>
    %2235 = vector.broadcast %2234 : f32 to vector<8x128xf32>
    %2236 = arith.mulf %2235, %2229 : vector<8x128xf32>
    %2237 = arith.addf %2221, %2236 : vector<8x128xf32>
    %cst_557 = arith.constant -2.200000e+00 : f32
    %2238 = vector.broadcast %cst_557 : f32 to vector<8x128xf32>
    %2239 = arith.subf %2223, %2238 : vector<8x128xf32>
    %cst_558 = arith.constant -1.800000e+00 : f32
    %2240 = vector.broadcast %cst_558 : f32 to vector<8x128xf32>
    %2241 = arith.subf %2223, %2240 : vector<8x128xf32>
    %cst_559 = arith.constant -1.400000e+00 : f32
    %2242 = vector.broadcast %cst_559 : f32 to vector<8x128xf32>
    %2243 = arith.subf %2223, %2242 : vector<8x128xf32>
    %cst_560 = arith.constant -1.000000e+00 : f32
    %2244 = vector.broadcast %cst_560 : f32 to vector<8x128xf32>
    %2245 = arith.subf %2223, %2244 : vector<8x128xf32>
    %cst_561 = arith.constant -6.000000e-01 : f32
    %2246 = vector.broadcast %cst_561 : f32 to vector<8x128xf32>
    %2247 = arith.subf %2223, %2246 : vector<8x128xf32>
    %cst_562 = arith.constant -2.000000e-01 : f32
    %2248 = vector.broadcast %cst_562 : f32 to vector<8x128xf32>
    %2249 = arith.subf %2223, %2248 : vector<8x128xf32>
    %cst_563 = arith.constant 2.000000e-01 : f32
    %2250 = vector.broadcast %cst_563 : f32 to vector<8x128xf32>
    %2251 = arith.subf %2223, %2250 : vector<8x128xf32>
    %cst_564 = arith.constant 6.000000e-01 : f32
    %2252 = vector.broadcast %cst_564 : f32 to vector<8x128xf32>
    %2253 = arith.subf %2223, %2252 : vector<8x128xf32>
    %cst_565 = arith.constant 1.000000e+00 : f32
    %2254 = vector.broadcast %cst_565 : f32 to vector<8x128xf32>
    %2255 = arith.subf %2223, %2254 : vector<8x128xf32>
    %cst_566 = arith.constant 1.400000e+00 : f32
    %2256 = vector.broadcast %cst_566 : f32 to vector<8x128xf32>
    %2257 = arith.subf %2223, %2256 : vector<8x128xf32>
    %cst_567 = arith.constant 1.800000e+00 : f32
    %2258 = vector.broadcast %cst_567 : f32 to vector<8x128xf32>
    %2259 = arith.subf %2223, %2258 : vector<8x128xf32>
    %cst_568 = arith.constant 2.200000e+00 : f32
    %2260 = vector.broadcast %cst_568 : f32 to vector<8x128xf32>
    %2261 = arith.subf %2223, %2260 : vector<8x128xf32>
    %cst_569 = arith.constant 0.000000e+00 : f32
    %2262 = vector.broadcast %cst_569 : f32 to vector<8x128xf32>
    %2263 = arith.cmpf oge, %2239, %2262 : vector<8x128xf32>
    %cst_570 = arith.constant 0.000000e+00 : f32
    %2264 = vector.broadcast %cst_570 : f32 to vector<8x128xf32>
    %2265 = arith.cmpf olt, %2241, %2264 : vector<8x128xf32>
    %2266 = arith.andi %2263, %2265 : vector<8x128xi1>
    %2267 = arith.extui %2266 : vector<8x128xi1> to vector<8x128xi32>
    %2268 = arith.sitofp %2267 : vector<8x128xi32> to vector<8x128xf32>
    %cst_571 = arith.constant 0.000000e+00 : f32
    %2269 = vector.broadcast %cst_571 : f32 to vector<8x128xf32>
    %2270 = arith.cmpf oge, %2241, %2269 : vector<8x128xf32>
    %cst_572 = arith.constant 0.000000e+00 : f32
    %2271 = vector.broadcast %cst_572 : f32 to vector<8x128xf32>
    %2272 = arith.cmpf olt, %2243, %2271 : vector<8x128xf32>
    %2273 = arith.andi %2270, %2272 : vector<8x128xi1>
    %2274 = arith.extui %2273 : vector<8x128xi1> to vector<8x128xi32>
    %2275 = arith.sitofp %2274 : vector<8x128xi32> to vector<8x128xf32>
    %cst_573 = arith.constant 0.000000e+00 : f32
    %2276 = vector.broadcast %cst_573 : f32 to vector<8x128xf32>
    %2277 = arith.cmpf oge, %2243, %2276 : vector<8x128xf32>
    %cst_574 = arith.constant 0.000000e+00 : f32
    %2278 = vector.broadcast %cst_574 : f32 to vector<8x128xf32>
    %2279 = arith.cmpf olt, %2245, %2278 : vector<8x128xf32>
    %2280 = arith.andi %2277, %2279 : vector<8x128xi1>
    %2281 = arith.extui %2280 : vector<8x128xi1> to vector<8x128xi32>
    %2282 = arith.sitofp %2281 : vector<8x128xi32> to vector<8x128xf32>
    %cst_575 = arith.constant 0.000000e+00 : f32
    %2283 = vector.broadcast %cst_575 : f32 to vector<8x128xf32>
    %2284 = arith.cmpf oge, %2245, %2283 : vector<8x128xf32>
    %cst_576 = arith.constant 0.000000e+00 : f32
    %2285 = vector.broadcast %cst_576 : f32 to vector<8x128xf32>
    %2286 = arith.cmpf olt, %2247, %2285 : vector<8x128xf32>
    %2287 = arith.andi %2284, %2286 : vector<8x128xi1>
    %2288 = arith.extui %2287 : vector<8x128xi1> to vector<8x128xi32>
    %2289 = arith.sitofp %2288 : vector<8x128xi32> to vector<8x128xf32>
    %cst_577 = arith.constant 0.000000e+00 : f32
    %2290 = vector.broadcast %cst_577 : f32 to vector<8x128xf32>
    %2291 = arith.cmpf oge, %2247, %2290 : vector<8x128xf32>
    %cst_578 = arith.constant 0.000000e+00 : f32
    %2292 = vector.broadcast %cst_578 : f32 to vector<8x128xf32>
    %2293 = arith.cmpf olt, %2249, %2292 : vector<8x128xf32>
    %2294 = arith.andi %2291, %2293 : vector<8x128xi1>
    %2295 = arith.extui %2294 : vector<8x128xi1> to vector<8x128xi32>
    %2296 = arith.sitofp %2295 : vector<8x128xi32> to vector<8x128xf32>
    %cst_579 = arith.constant 0.000000e+00 : f32
    %2297 = vector.broadcast %cst_579 : f32 to vector<8x128xf32>
    %2298 = arith.cmpf oge, %2249, %2297 : vector<8x128xf32>
    %cst_580 = arith.constant 0.000000e+00 : f32
    %2299 = vector.broadcast %cst_580 : f32 to vector<8x128xf32>
    %2300 = arith.cmpf olt, %2251, %2299 : vector<8x128xf32>
    %2301 = arith.andi %2298, %2300 : vector<8x128xi1>
    %2302 = arith.extui %2301 : vector<8x128xi1> to vector<8x128xi32>
    %2303 = arith.sitofp %2302 : vector<8x128xi32> to vector<8x128xf32>
    %cst_581 = arith.constant 0.000000e+00 : f32
    %2304 = vector.broadcast %cst_581 : f32 to vector<8x128xf32>
    %2305 = arith.cmpf oge, %2251, %2304 : vector<8x128xf32>
    %cst_582 = arith.constant 0.000000e+00 : f32
    %2306 = vector.broadcast %cst_582 : f32 to vector<8x128xf32>
    %2307 = arith.cmpf olt, %2253, %2306 : vector<8x128xf32>
    %2308 = arith.andi %2305, %2307 : vector<8x128xi1>
    %2309 = arith.extui %2308 : vector<8x128xi1> to vector<8x128xi32>
    %2310 = arith.sitofp %2309 : vector<8x128xi32> to vector<8x128xf32>
    %cst_583 = arith.constant 0.000000e+00 : f32
    %2311 = vector.broadcast %cst_583 : f32 to vector<8x128xf32>
    %2312 = arith.cmpf oge, %2253, %2311 : vector<8x128xf32>
    %cst_584 = arith.constant 0.000000e+00 : f32
    %2313 = vector.broadcast %cst_584 : f32 to vector<8x128xf32>
    %2314 = arith.cmpf olt, %2255, %2313 : vector<8x128xf32>
    %2315 = arith.andi %2312, %2314 : vector<8x128xi1>
    %2316 = arith.extui %2315 : vector<8x128xi1> to vector<8x128xi32>
    %2317 = arith.sitofp %2316 : vector<8x128xi32> to vector<8x128xf32>
    %cst_585 = arith.constant 0.000000e+00 : f32
    %2318 = vector.broadcast %cst_585 : f32 to vector<8x128xf32>
    %2319 = arith.cmpf oge, %2255, %2318 : vector<8x128xf32>
    %cst_586 = arith.constant 0.000000e+00 : f32
    %2320 = vector.broadcast %cst_586 : f32 to vector<8x128xf32>
    %2321 = arith.cmpf olt, %2257, %2320 : vector<8x128xf32>
    %2322 = arith.andi %2319, %2321 : vector<8x128xi1>
    %2323 = arith.extui %2322 : vector<8x128xi1> to vector<8x128xi32>
    %2324 = arith.sitofp %2323 : vector<8x128xi32> to vector<8x128xf32>
    %cst_587 = arith.constant 0.000000e+00 : f32
    %2325 = vector.broadcast %cst_587 : f32 to vector<8x128xf32>
    %2326 = arith.cmpf oge, %2257, %2325 : vector<8x128xf32>
    %cst_588 = arith.constant 0.000000e+00 : f32
    %2327 = vector.broadcast %cst_588 : f32 to vector<8x128xf32>
    %2328 = arith.cmpf olt, %2259, %2327 : vector<8x128xf32>
    %2329 = arith.andi %2326, %2328 : vector<8x128xi1>
    %2330 = arith.extui %2329 : vector<8x128xi1> to vector<8x128xi32>
    %2331 = arith.sitofp %2330 : vector<8x128xi32> to vector<8x128xf32>
    %cst_589 = arith.constant 0.000000e+00 : f32
    %2332 = vector.broadcast %cst_589 : f32 to vector<8x128xf32>
    %2333 = arith.cmpf oge, %2259, %2332 : vector<8x128xf32>
    %cst_590 = arith.constant 0.000000e+00 : f32
    %2334 = vector.broadcast %cst_590 : f32 to vector<8x128xf32>
    %2335 = arith.cmpf olt, %2261, %2334 : vector<8x128xf32>
    %2336 = arith.andi %2333, %2335 : vector<8x128xi1>
    %2337 = arith.extui %2336 : vector<8x128xi1> to vector<8x128xi32>
    %2338 = arith.sitofp %2337 : vector<8x128xi32> to vector<8x128xf32>
    %cst_591 = arith.constant 2.500000e+00 : f32
    %2339 = vector.broadcast %cst_591 : f32 to vector<8x128xf32>
    %2340 = arith.mulf %2239, %2339 : vector<8x128xf32>
    %2341 = arith.mulf %2340, %2268 : vector<8x128xf32>
    %cst_592 = arith.constant -2.500000e+00 : f32
    %2342 = vector.broadcast %cst_592 : f32 to vector<8x128xf32>
    %2343 = arith.mulf %2243, %2342 : vector<8x128xf32>
    %2344 = arith.mulf %2343, %2275 : vector<8x128xf32>
    %2345 = arith.addf %2341, %2344 : vector<8x128xf32>
    %cst_593 = arith.constant 2.500000e+00 : f32
    %2346 = vector.broadcast %cst_593 : f32 to vector<8x128xf32>
    %2347 = arith.mulf %2241, %2346 : vector<8x128xf32>
    %2348 = arith.mulf %2347, %2275 : vector<8x128xf32>
    %cst_594 = arith.constant -2.500000e+00 : f32
    %2349 = vector.broadcast %cst_594 : f32 to vector<8x128xf32>
    %2350 = arith.mulf %2245, %2349 : vector<8x128xf32>
    %2351 = arith.mulf %2350, %2282 : vector<8x128xf32>
    %2352 = arith.addf %2348, %2351 : vector<8x128xf32>
    %cst_595 = arith.constant 2.500000e+00 : f32
    %2353 = vector.broadcast %cst_595 : f32 to vector<8x128xf32>
    %2354 = arith.mulf %2243, %2353 : vector<8x128xf32>
    %2355 = arith.mulf %2354, %2282 : vector<8x128xf32>
    %cst_596 = arith.constant -2.500000e+00 : f32
    %2356 = vector.broadcast %cst_596 : f32 to vector<8x128xf32>
    %2357 = arith.mulf %2247, %2356 : vector<8x128xf32>
    %2358 = arith.mulf %2357, %2289 : vector<8x128xf32>
    %2359 = arith.addf %2355, %2358 : vector<8x128xf32>
    %cst_597 = arith.constant 2.500000e+00 : f32
    %2360 = vector.broadcast %cst_597 : f32 to vector<8x128xf32>
    %2361 = arith.mulf %2245, %2360 : vector<8x128xf32>
    %2362 = arith.mulf %2361, %2289 : vector<8x128xf32>
    %cst_598 = arith.constant -2.500000e+00 : f32
    %2363 = vector.broadcast %cst_598 : f32 to vector<8x128xf32>
    %2364 = arith.mulf %2249, %2363 : vector<8x128xf32>
    %2365 = arith.mulf %2364, %2296 : vector<8x128xf32>
    %2366 = arith.addf %2362, %2365 : vector<8x128xf32>
    %cst_599 = arith.constant 2.500000e+00 : f32
    %2367 = vector.broadcast %cst_599 : f32 to vector<8x128xf32>
    %2368 = arith.mulf %2247, %2367 : vector<8x128xf32>
    %2369 = arith.mulf %2368, %2296 : vector<8x128xf32>
    %cst_600 = arith.constant -2.500000e+00 : f32
    %2370 = vector.broadcast %cst_600 : f32 to vector<8x128xf32>
    %2371 = arith.mulf %2251, %2370 : vector<8x128xf32>
    %2372 = arith.mulf %2371, %2303 : vector<8x128xf32>
    %2373 = arith.addf %2369, %2372 : vector<8x128xf32>
    %cst_601 = arith.constant 2.500000e+00 : f32
    %2374 = vector.broadcast %cst_601 : f32 to vector<8x128xf32>
    %2375 = arith.mulf %2249, %2374 : vector<8x128xf32>
    %2376 = arith.mulf %2375, %2303 : vector<8x128xf32>
    %cst_602 = arith.constant -2.500000e+00 : f32
    %2377 = vector.broadcast %cst_602 : f32 to vector<8x128xf32>
    %2378 = arith.mulf %2253, %2377 : vector<8x128xf32>
    %2379 = arith.mulf %2378, %2310 : vector<8x128xf32>
    %2380 = arith.addf %2376, %2379 : vector<8x128xf32>
    %cst_603 = arith.constant 2.500000e+00 : f32
    %2381 = vector.broadcast %cst_603 : f32 to vector<8x128xf32>
    %2382 = arith.mulf %2251, %2381 : vector<8x128xf32>
    %2383 = arith.mulf %2382, %2310 : vector<8x128xf32>
    %cst_604 = arith.constant -2.500000e+00 : f32
    %2384 = vector.broadcast %cst_604 : f32 to vector<8x128xf32>
    %2385 = arith.mulf %2255, %2384 : vector<8x128xf32>
    %2386 = arith.mulf %2385, %2317 : vector<8x128xf32>
    %2387 = arith.addf %2383, %2386 : vector<8x128xf32>
    %cst_605 = arith.constant 2.500000e+00 : f32
    %2388 = vector.broadcast %cst_605 : f32 to vector<8x128xf32>
    %2389 = arith.mulf %2253, %2388 : vector<8x128xf32>
    %2390 = arith.mulf %2389, %2317 : vector<8x128xf32>
    %cst_606 = arith.constant -2.500000e+00 : f32
    %2391 = vector.broadcast %cst_606 : f32 to vector<8x128xf32>
    %2392 = arith.mulf %2257, %2391 : vector<8x128xf32>
    %2393 = arith.mulf %2392, %2324 : vector<8x128xf32>
    %2394 = arith.addf %2390, %2393 : vector<8x128xf32>
    %cst_607 = arith.constant 2.500000e+00 : f32
    %2395 = vector.broadcast %cst_607 : f32 to vector<8x128xf32>
    %2396 = arith.mulf %2255, %2395 : vector<8x128xf32>
    %2397 = arith.mulf %2396, %2324 : vector<8x128xf32>
    %cst_608 = arith.constant -2.500000e+00 : f32
    %2398 = vector.broadcast %cst_608 : f32 to vector<8x128xf32>
    %2399 = arith.mulf %2259, %2398 : vector<8x128xf32>
    %2400 = arith.mulf %2399, %2331 : vector<8x128xf32>
    %2401 = arith.addf %2397, %2400 : vector<8x128xf32>
    %cst_609 = arith.constant 2.500000e+00 : f32
    %2402 = vector.broadcast %cst_609 : f32 to vector<8x128xf32>
    %2403 = arith.mulf %2257, %2402 : vector<8x128xf32>
    %2404 = arith.mulf %2403, %2331 : vector<8x128xf32>
    %cst_610 = arith.constant -2.500000e+00 : f32
    %2405 = vector.broadcast %cst_610 : f32 to vector<8x128xf32>
    %2406 = arith.mulf %2261, %2405 : vector<8x128xf32>
    %2407 = arith.mulf %2406, %2338 : vector<8x128xf32>
    %2408 = arith.addf %2404, %2407 : vector<8x128xf32>
    %cst_611 = arith.constant 1.250000e+00 : f32
    %2409 = vector.broadcast %cst_611 : f32 to vector<8x128xf32>
    %2410 = arith.mulf %2239, %2409 : vector<8x128xf32>
    %2411 = arith.mulf %2410, %2345 : vector<8x128xf32>
    %cst_612 = arith.constant -1.250000e+00 : f32
    %2412 = vector.broadcast %cst_612 : f32 to vector<8x128xf32>
    %2413 = arith.mulf %2245, %2412 : vector<8x128xf32>
    %2414 = arith.mulf %2413, %2352 : vector<8x128xf32>
    %2415 = arith.addf %2411, %2414 : vector<8x128xf32>
    %cst_613 = arith.constant 1.250000e+00 : f32
    %2416 = vector.broadcast %cst_613 : f32 to vector<8x128xf32>
    %2417 = arith.mulf %2241, %2416 : vector<8x128xf32>
    %2418 = arith.mulf %2417, %2352 : vector<8x128xf32>
    %cst_614 = arith.constant -1.250000e+00 : f32
    %2419 = vector.broadcast %cst_614 : f32 to vector<8x128xf32>
    %2420 = arith.mulf %2247, %2419 : vector<8x128xf32>
    %2421 = arith.mulf %2420, %2359 : vector<8x128xf32>
    %2422 = arith.addf %2418, %2421 : vector<8x128xf32>
    %cst_615 = arith.constant 1.250000e+00 : f32
    %2423 = vector.broadcast %cst_615 : f32 to vector<8x128xf32>
    %2424 = arith.mulf %2243, %2423 : vector<8x128xf32>
    %2425 = arith.mulf %2424, %2359 : vector<8x128xf32>
    %cst_616 = arith.constant -1.250000e+00 : f32
    %2426 = vector.broadcast %cst_616 : f32 to vector<8x128xf32>
    %2427 = arith.mulf %2249, %2426 : vector<8x128xf32>
    %2428 = arith.mulf %2427, %2366 : vector<8x128xf32>
    %2429 = arith.addf %2425, %2428 : vector<8x128xf32>
    %cst_617 = arith.constant 1.250000e+00 : f32
    %2430 = vector.broadcast %cst_617 : f32 to vector<8x128xf32>
    %2431 = arith.mulf %2245, %2430 : vector<8x128xf32>
    %2432 = arith.mulf %2431, %2366 : vector<8x128xf32>
    %cst_618 = arith.constant -1.250000e+00 : f32
    %2433 = vector.broadcast %cst_618 : f32 to vector<8x128xf32>
    %2434 = arith.mulf %2251, %2433 : vector<8x128xf32>
    %2435 = arith.mulf %2434, %2373 : vector<8x128xf32>
    %2436 = arith.addf %2432, %2435 : vector<8x128xf32>
    %cst_619 = arith.constant 1.250000e+00 : f32
    %2437 = vector.broadcast %cst_619 : f32 to vector<8x128xf32>
    %2438 = arith.mulf %2247, %2437 : vector<8x128xf32>
    %2439 = arith.mulf %2438, %2373 : vector<8x128xf32>
    %cst_620 = arith.constant -1.250000e+00 : f32
    %2440 = vector.broadcast %cst_620 : f32 to vector<8x128xf32>
    %2441 = arith.mulf %2253, %2440 : vector<8x128xf32>
    %2442 = arith.mulf %2441, %2380 : vector<8x128xf32>
    %2443 = arith.addf %2439, %2442 : vector<8x128xf32>
    %cst_621 = arith.constant 1.250000e+00 : f32
    %2444 = vector.broadcast %cst_621 : f32 to vector<8x128xf32>
    %2445 = arith.mulf %2249, %2444 : vector<8x128xf32>
    %2446 = arith.mulf %2445, %2380 : vector<8x128xf32>
    %cst_622 = arith.constant -1.250000e+00 : f32
    %2447 = vector.broadcast %cst_622 : f32 to vector<8x128xf32>
    %2448 = arith.mulf %2255, %2447 : vector<8x128xf32>
    %2449 = arith.mulf %2448, %2387 : vector<8x128xf32>
    %2450 = arith.addf %2446, %2449 : vector<8x128xf32>
    %cst_623 = arith.constant 1.250000e+00 : f32
    %2451 = vector.broadcast %cst_623 : f32 to vector<8x128xf32>
    %2452 = arith.mulf %2251, %2451 : vector<8x128xf32>
    %2453 = arith.mulf %2452, %2387 : vector<8x128xf32>
    %cst_624 = arith.constant -1.250000e+00 : f32
    %2454 = vector.broadcast %cst_624 : f32 to vector<8x128xf32>
    %2455 = arith.mulf %2257, %2454 : vector<8x128xf32>
    %2456 = arith.mulf %2455, %2394 : vector<8x128xf32>
    %2457 = arith.addf %2453, %2456 : vector<8x128xf32>
    %cst_625 = arith.constant 1.250000e+00 : f32
    %2458 = vector.broadcast %cst_625 : f32 to vector<8x128xf32>
    %2459 = arith.mulf %2253, %2458 : vector<8x128xf32>
    %2460 = arith.mulf %2459, %2394 : vector<8x128xf32>
    %cst_626 = arith.constant -1.250000e+00 : f32
    %2461 = vector.broadcast %cst_626 : f32 to vector<8x128xf32>
    %2462 = arith.mulf %2259, %2461 : vector<8x128xf32>
    %2463 = arith.mulf %2462, %2401 : vector<8x128xf32>
    %2464 = arith.addf %2460, %2463 : vector<8x128xf32>
    %cst_627 = arith.constant 1.250000e+00 : f32
    %2465 = vector.broadcast %cst_627 : f32 to vector<8x128xf32>
    %2466 = arith.mulf %2255, %2465 : vector<8x128xf32>
    %2467 = arith.mulf %2466, %2401 : vector<8x128xf32>
    %cst_628 = arith.constant -1.250000e+00 : f32
    %2468 = vector.broadcast %cst_628 : f32 to vector<8x128xf32>
    %2469 = arith.mulf %2261, %2468 : vector<8x128xf32>
    %2470 = arith.mulf %2469, %2408 : vector<8x128xf32>
    %2471 = arith.addf %2467, %2470 : vector<8x128xf32>
    %cst_629 = arith.constant 0.833333313 : f32
    %2472 = vector.broadcast %cst_629 : f32 to vector<8x128xf32>
    %2473 = arith.mulf %2239, %2472 : vector<8x128xf32>
    %2474 = arith.mulf %2473, %2415 : vector<8x128xf32>
    %cst_630 = arith.constant -0.833333313 : f32
    %2475 = vector.broadcast %cst_630 : f32 to vector<8x128xf32>
    %2476 = arith.mulf %2247, %2475 : vector<8x128xf32>
    %2477 = arith.mulf %2476, %2422 : vector<8x128xf32>
    %2478 = arith.addf %2474, %2477 : vector<8x128xf32>
    %cst_631 = arith.constant 0.833333313 : f32
    %2479 = vector.broadcast %cst_631 : f32 to vector<8x128xf32>
    %2480 = arith.mulf %2241, %2479 : vector<8x128xf32>
    %2481 = arith.mulf %2480, %2422 : vector<8x128xf32>
    %cst_632 = arith.constant -0.833333313 : f32
    %2482 = vector.broadcast %cst_632 : f32 to vector<8x128xf32>
    %2483 = arith.mulf %2249, %2482 : vector<8x128xf32>
    %2484 = arith.mulf %2483, %2429 : vector<8x128xf32>
    %2485 = arith.addf %2481, %2484 : vector<8x128xf32>
    %cst_633 = arith.constant 0.833333313 : f32
    %2486 = vector.broadcast %cst_633 : f32 to vector<8x128xf32>
    %2487 = arith.mulf %2243, %2486 : vector<8x128xf32>
    %2488 = arith.mulf %2487, %2429 : vector<8x128xf32>
    %cst_634 = arith.constant -0.833333313 : f32
    %2489 = vector.broadcast %cst_634 : f32 to vector<8x128xf32>
    %2490 = arith.mulf %2251, %2489 : vector<8x128xf32>
    %2491 = arith.mulf %2490, %2436 : vector<8x128xf32>
    %2492 = arith.addf %2488, %2491 : vector<8x128xf32>
    %cst_635 = arith.constant 0.833333313 : f32
    %2493 = vector.broadcast %cst_635 : f32 to vector<8x128xf32>
    %2494 = arith.mulf %2245, %2493 : vector<8x128xf32>
    %2495 = arith.mulf %2494, %2436 : vector<8x128xf32>
    %cst_636 = arith.constant -0.833333313 : f32
    %2496 = vector.broadcast %cst_636 : f32 to vector<8x128xf32>
    %2497 = arith.mulf %2253, %2496 : vector<8x128xf32>
    %2498 = arith.mulf %2497, %2443 : vector<8x128xf32>
    %2499 = arith.addf %2495, %2498 : vector<8x128xf32>
    %cst_637 = arith.constant 0.833333313 : f32
    %2500 = vector.broadcast %cst_637 : f32 to vector<8x128xf32>
    %2501 = arith.mulf %2247, %2500 : vector<8x128xf32>
    %2502 = arith.mulf %2501, %2443 : vector<8x128xf32>
    %cst_638 = arith.constant -0.833333313 : f32
    %2503 = vector.broadcast %cst_638 : f32 to vector<8x128xf32>
    %2504 = arith.mulf %2255, %2503 : vector<8x128xf32>
    %2505 = arith.mulf %2504, %2450 : vector<8x128xf32>
    %2506 = arith.addf %2502, %2505 : vector<8x128xf32>
    %cst_639 = arith.constant 0.833333313 : f32
    %2507 = vector.broadcast %cst_639 : f32 to vector<8x128xf32>
    %2508 = arith.mulf %2249, %2507 : vector<8x128xf32>
    %2509 = arith.mulf %2508, %2450 : vector<8x128xf32>
    %cst_640 = arith.constant -0.833333313 : f32
    %2510 = vector.broadcast %cst_640 : f32 to vector<8x128xf32>
    %2511 = arith.mulf %2257, %2510 : vector<8x128xf32>
    %2512 = arith.mulf %2511, %2457 : vector<8x128xf32>
    %2513 = arith.addf %2509, %2512 : vector<8x128xf32>
    %cst_641 = arith.constant 0.833333313 : f32
    %2514 = vector.broadcast %cst_641 : f32 to vector<8x128xf32>
    %2515 = arith.mulf %2251, %2514 : vector<8x128xf32>
    %2516 = arith.mulf %2515, %2457 : vector<8x128xf32>
    %cst_642 = arith.constant -0.833333313 : f32
    %2517 = vector.broadcast %cst_642 : f32 to vector<8x128xf32>
    %2518 = arith.mulf %2259, %2517 : vector<8x128xf32>
    %2519 = arith.mulf %2518, %2464 : vector<8x128xf32>
    %2520 = arith.addf %2516, %2519 : vector<8x128xf32>
    %cst_643 = arith.constant 0.833333313 : f32
    %2521 = vector.broadcast %cst_643 : f32 to vector<8x128xf32>
    %2522 = arith.mulf %2253, %2521 : vector<8x128xf32>
    %2523 = arith.mulf %2522, %2464 : vector<8x128xf32>
    %cst_644 = arith.constant -0.833333313 : f32
    %2524 = vector.broadcast %cst_644 : f32 to vector<8x128xf32>
    %2525 = arith.mulf %2261, %2524 : vector<8x128xf32>
    %2526 = arith.mulf %2525, %2471 : vector<8x128xf32>
    %2527 = arith.addf %2523, %2526 : vector<8x128xf32>
    %c55 = arith.constant 55 : index
    %2528 = memref.load %arg2[%c55] : memref<162xf32, #tpu.memory_space<smem>>
    %2529 = vector.broadcast %2528 : f32 to vector<8x128xf32>
    %2530 = arith.mulf %2529, %2478 : vector<8x128xf32>
    %2531 = arith.addf %2233, %2530 : vector<8x128xf32>
    %c136 = arith.constant 136 : index
    %2532 = memref.load %arg2[%c136] : memref<162xf32, #tpu.memory_space<smem>>
    %2533 = vector.broadcast %2532 : f32 to vector<8x128xf32>
    %2534 = arith.mulf %2533, %2478 : vector<8x128xf32>
    %2535 = arith.addf %2237, %2534 : vector<8x128xf32>
    %c56 = arith.constant 56 : index
    %2536 = memref.load %arg2[%c56] : memref<162xf32, #tpu.memory_space<smem>>
    %2537 = vector.broadcast %2536 : f32 to vector<8x128xf32>
    %2538 = arith.mulf %2537, %2485 : vector<8x128xf32>
    %2539 = arith.addf %2531, %2538 : vector<8x128xf32>
    %c137 = arith.constant 137 : index
    %2540 = memref.load %arg2[%c137] : memref<162xf32, #tpu.memory_space<smem>>
    %2541 = vector.broadcast %2540 : f32 to vector<8x128xf32>
    %2542 = arith.mulf %2541, %2485 : vector<8x128xf32>
    %2543 = arith.addf %2535, %2542 : vector<8x128xf32>
    %c57 = arith.constant 57 : index
    %2544 = memref.load %arg2[%c57] : memref<162xf32, #tpu.memory_space<smem>>
    %2545 = vector.broadcast %2544 : f32 to vector<8x128xf32>
    %2546 = arith.mulf %2545, %2492 : vector<8x128xf32>
    %2547 = arith.addf %2539, %2546 : vector<8x128xf32>
    %c138 = arith.constant 138 : index
    %2548 = memref.load %arg2[%c138] : memref<162xf32, #tpu.memory_space<smem>>
    %2549 = vector.broadcast %2548 : f32 to vector<8x128xf32>
    %2550 = arith.mulf %2549, %2492 : vector<8x128xf32>
    %2551 = arith.addf %2543, %2550 : vector<8x128xf32>
    %c58 = arith.constant 58 : index
    %2552 = memref.load %arg2[%c58] : memref<162xf32, #tpu.memory_space<smem>>
    %2553 = vector.broadcast %2552 : f32 to vector<8x128xf32>
    %2554 = arith.mulf %2553, %2499 : vector<8x128xf32>
    %2555 = arith.addf %2547, %2554 : vector<8x128xf32>
    %c139 = arith.constant 139 : index
    %2556 = memref.load %arg2[%c139] : memref<162xf32, #tpu.memory_space<smem>>
    %2557 = vector.broadcast %2556 : f32 to vector<8x128xf32>
    %2558 = arith.mulf %2557, %2499 : vector<8x128xf32>
    %2559 = arith.addf %2551, %2558 : vector<8x128xf32>
    %c59 = arith.constant 59 : index
    %2560 = memref.load %arg2[%c59] : memref<162xf32, #tpu.memory_space<smem>>
    %2561 = vector.broadcast %2560 : f32 to vector<8x128xf32>
    %2562 = arith.mulf %2561, %2506 : vector<8x128xf32>
    %2563 = arith.addf %2555, %2562 : vector<8x128xf32>
    %c140 = arith.constant 140 : index
    %2564 = memref.load %arg2[%c140] : memref<162xf32, #tpu.memory_space<smem>>
    %2565 = vector.broadcast %2564 : f32 to vector<8x128xf32>
    %2566 = arith.mulf %2565, %2506 : vector<8x128xf32>
    %2567 = arith.addf %2559, %2566 : vector<8x128xf32>
    %c60 = arith.constant 60 : index
    %2568 = memref.load %arg2[%c60] : memref<162xf32, #tpu.memory_space<smem>>
    %2569 = vector.broadcast %2568 : f32 to vector<8x128xf32>
    %2570 = arith.mulf %2569, %2513 : vector<8x128xf32>
    %2571 = arith.addf %2563, %2570 : vector<8x128xf32>
    %c141 = arith.constant 141 : index
    %2572 = memref.load %arg2[%c141] : memref<162xf32, #tpu.memory_space<smem>>
    %2573 = vector.broadcast %2572 : f32 to vector<8x128xf32>
    %2574 = arith.mulf %2573, %2513 : vector<8x128xf32>
    %2575 = arith.addf %2567, %2574 : vector<8x128xf32>
    %c61 = arith.constant 61 : index
    %2576 = memref.load %arg2[%c61] : memref<162xf32, #tpu.memory_space<smem>>
    %2577 = vector.broadcast %2576 : f32 to vector<8x128xf32>
    %2578 = arith.mulf %2577, %2520 : vector<8x128xf32>
    %2579 = arith.addf %2571, %2578 : vector<8x128xf32>
    %c142 = arith.constant 142 : index
    %2580 = memref.load %arg2[%c142] : memref<162xf32, #tpu.memory_space<smem>>
    %2581 = vector.broadcast %2580 : f32 to vector<8x128xf32>
    %2582 = arith.mulf %2581, %2520 : vector<8x128xf32>
    %2583 = arith.addf %2575, %2582 : vector<8x128xf32>
    %c62 = arith.constant 62 : index
    %2584 = memref.load %arg2[%c62] : memref<162xf32, #tpu.memory_space<smem>>
    %2585 = vector.broadcast %2584 : f32 to vector<8x128xf32>
    %2586 = arith.mulf %2585, %2527 : vector<8x128xf32>
    %2587 = arith.addf %2579, %2586 : vector<8x128xf32>
    %c143 = arith.constant 143 : index
    %2588 = memref.load %arg2[%c143] : memref<162xf32, #tpu.memory_space<smem>>
    %2589 = vector.broadcast %2588 : f32 to vector<8x128xf32>
    %2590 = arith.mulf %2589, %2527 : vector<8x128xf32>
    %2591 = arith.addf %2583, %2590 : vector<8x128xf32>
    %c7_645 = arith.constant 7 : index
    %c0_646 = arith.constant 0 : index
    %c0_647 = arith.constant 0 : index
    %2592 = vector.load %arg3[%c7_645, %c0_646, %c0_647] : memref<9x8x128xf32, #tpu.memory_space<vmem>>, vector<1x8x128xf32>
    %2593 = vector.shape_cast %2592 : vector<1x8x128xf32> to vector<8x128xf32>
    %2594 = arith.negf %2593 : vector<8x128xf32>
    %2595 = math.exp %2594 : vector<8x128xf32>
    %cst_648 = arith.constant 1.000000e+00 : f32
    %2596 = vector.broadcast %cst_648 : f32 to vector<8x128xf32>
    %2597 = arith.addf %2596, %2595 : vector<8x128xf32>
    %2598 = arith.divf %2596, %2597 : vector<8x128xf32>
    %2599 = arith.mulf %2593, %2598 : vector<8x128xf32>
    %c63 = arith.constant 63 : index
    %2600 = memref.load %arg2[%c63] : memref<162xf32, #tpu.memory_space<smem>>
    %2601 = vector.broadcast %2600 : f32 to vector<8x128xf32>
    %2602 = arith.mulf %2601, %2599 : vector<8x128xf32>
    %2603 = arith.addf %2587, %2602 : vector<8x128xf32>
    %c144 = arith.constant 144 : index
    %2604 = memref.load %arg2[%c144] : memref<162xf32, #tpu.memory_space<smem>>
    %2605 = vector.broadcast %2604 : f32 to vector<8x128xf32>
    %2606 = arith.mulf %2605, %2599 : vector<8x128xf32>
    %2607 = arith.addf %2591, %2606 : vector<8x128xf32>
    %cst_649 = arith.constant -2.200000e+00 : f32
    %2608 = vector.broadcast %cst_649 : f32 to vector<8x128xf32>
    %2609 = arith.subf %2593, %2608 : vector<8x128xf32>
    %cst_650 = arith.constant -1.800000e+00 : f32
    %2610 = vector.broadcast %cst_650 : f32 to vector<8x128xf32>
    %2611 = arith.subf %2593, %2610 : vector<8x128xf32>
    %cst_651 = arith.constant -1.400000e+00 : f32
    %2612 = vector.broadcast %cst_651 : f32 to vector<8x128xf32>
    %2613 = arith.subf %2593, %2612 : vector<8x128xf32>
    %cst_652 = arith.constant -1.000000e+00 : f32
    %2614 = vector.broadcast %cst_652 : f32 to vector<8x128xf32>
    %2615 = arith.subf %2593, %2614 : vector<8x128xf32>
    %cst_653 = arith.constant -6.000000e-01 : f32
    %2616 = vector.broadcast %cst_653 : f32 to vector<8x128xf32>
    %2617 = arith.subf %2593, %2616 : vector<8x128xf32>
    %cst_654 = arith.constant -2.000000e-01 : f32
    %2618 = vector.broadcast %cst_654 : f32 to vector<8x128xf32>
    %2619 = arith.subf %2593, %2618 : vector<8x128xf32>
    %cst_655 = arith.constant 2.000000e-01 : f32
    %2620 = vector.broadcast %cst_655 : f32 to vector<8x128xf32>
    %2621 = arith.subf %2593, %2620 : vector<8x128xf32>
    %cst_656 = arith.constant 6.000000e-01 : f32
    %2622 = vector.broadcast %cst_656 : f32 to vector<8x128xf32>
    %2623 = arith.subf %2593, %2622 : vector<8x128xf32>
    %cst_657 = arith.constant 1.000000e+00 : f32
    %2624 = vector.broadcast %cst_657 : f32 to vector<8x128xf32>
    %2625 = arith.subf %2593, %2624 : vector<8x128xf32>
    %cst_658 = arith.constant 1.400000e+00 : f32
    %2626 = vector.broadcast %cst_658 : f32 to vector<8x128xf32>
    %2627 = arith.subf %2593, %2626 : vector<8x128xf32>
    %cst_659 = arith.constant 1.800000e+00 : f32
    %2628 = vector.broadcast %cst_659 : f32 to vector<8x128xf32>
    %2629 = arith.subf %2593, %2628 : vector<8x128xf32>
    %cst_660 = arith.constant 2.200000e+00 : f32
    %2630 = vector.broadcast %cst_660 : f32 to vector<8x128xf32>
    %2631 = arith.subf %2593, %2630 : vector<8x128xf32>
    %cst_661 = arith.constant 0.000000e+00 : f32
    %2632 = vector.broadcast %cst_661 : f32 to vector<8x128xf32>
    %2633 = arith.cmpf oge, %2609, %2632 : vector<8x128xf32>
    %cst_662 = arith.constant 0.000000e+00 : f32
    %2634 = vector.broadcast %cst_662 : f32 to vector<8x128xf32>
    %2635 = arith.cmpf olt, %2611, %2634 : vector<8x128xf32>
    %2636 = arith.andi %2633, %2635 : vector<8x128xi1>
    %2637 = arith.extui %2636 : vector<8x128xi1> to vector<8x128xi32>
    %2638 = arith.sitofp %2637 : vector<8x128xi32> to vector<8x128xf32>
    %cst_663 = arith.constant 0.000000e+00 : f32
    %2639 = vector.broadcast %cst_663 : f32 to vector<8x128xf32>
    %2640 = arith.cmpf oge, %2611, %2639 : vector<8x128xf32>
    %cst_664 = arith.constant 0.000000e+00 : f32
    %2641 = vector.broadcast %cst_664 : f32 to vector<8x128xf32>
    %2642 = arith.cmpf olt, %2613, %2641 : vector<8x128xf32>
    %2643 = arith.andi %2640, %2642 : vector<8x128xi1>
    %2644 = arith.extui %2643 : vector<8x128xi1> to vector<8x128xi32>
    %2645 = arith.sitofp %2644 : vector<8x128xi32> to vector<8x128xf32>
    %cst_665 = arith.constant 0.000000e+00 : f32
    %2646 = vector.broadcast %cst_665 : f32 to vector<8x128xf32>
    %2647 = arith.cmpf oge, %2613, %2646 : vector<8x128xf32>
    %cst_666 = arith.constant 0.000000e+00 : f32
    %2648 = vector.broadcast %cst_666 : f32 to vector<8x128xf32>
    %2649 = arith.cmpf olt, %2615, %2648 : vector<8x128xf32>
    %2650 = arith.andi %2647, %2649 : vector<8x128xi1>
    %2651 = arith.extui %2650 : vector<8x128xi1> to vector<8x128xi32>
    %2652 = arith.sitofp %2651 : vector<8x128xi32> to vector<8x128xf32>
    %cst_667 = arith.constant 0.000000e+00 : f32
    %2653 = vector.broadcast %cst_667 : f32 to vector<8x128xf32>
    %2654 = arith.cmpf oge, %2615, %2653 : vector<8x128xf32>
    %cst_668 = arith.constant 0.000000e+00 : f32
    %2655 = vector.broadcast %cst_668 : f32 to vector<8x128xf32>
    %2656 = arith.cmpf olt, %2617, %2655 : vector<8x128xf32>
    %2657 = arith.andi %2654, %2656 : vector<8x128xi1>
    %2658 = arith.extui %2657 : vector<8x128xi1> to vector<8x128xi32>
    %2659 = arith.sitofp %2658 : vector<8x128xi32> to vector<8x128xf32>
    %cst_669 = arith.constant 0.000000e+00 : f32
    %2660 = vector.broadcast %cst_669 : f32 to vector<8x128xf32>
    %2661 = arith.cmpf oge, %2617, %2660 : vector<8x128xf32>
    %cst_670 = arith.constant 0.000000e+00 : f32
    %2662 = vector.broadcast %cst_670 : f32 to vector<8x128xf32>
    %2663 = arith.cmpf olt, %2619, %2662 : vector<8x128xf32>
    %2664 = arith.andi %2661, %2663 : vector<8x128xi1>
    %2665 = arith.extui %2664 : vector<8x128xi1> to vector<8x128xi32>
    %2666 = arith.sitofp %2665 : vector<8x128xi32> to vector<8x128xf32>
    %cst_671 = arith.constant 0.000000e+00 : f32
    %2667 = vector.broadcast %cst_671 : f32 to vector<8x128xf32>
    %2668 = arith.cmpf oge, %2619, %2667 : vector<8x128xf32>
    %cst_672 = arith.constant 0.000000e+00 : f32
    %2669 = vector.broadcast %cst_672 : f32 to vector<8x128xf32>
    %2670 = arith.cmpf olt, %2621, %2669 : vector<8x128xf32>
    %2671 = arith.andi %2668, %2670 : vector<8x128xi1>
    %2672 = arith.extui %2671 : vector<8x128xi1> to vector<8x128xi32>
    %2673 = arith.sitofp %2672 : vector<8x128xi32> to vector<8x128xf32>
    %cst_673 = arith.constant 0.000000e+00 : f32
    %2674 = vector.broadcast %cst_673 : f32 to vector<8x128xf32>
    %2675 = arith.cmpf oge, %2621, %2674 : vector<8x128xf32>
    %cst_674 = arith.constant 0.000000e+00 : f32
    %2676 = vector.broadcast %cst_674 : f32 to vector<8x128xf32>
    %2677 = arith.cmpf olt, %2623, %2676 : vector<8x128xf32>
    %2678 = arith.andi %2675, %2677 : vector<8x128xi1>
    %2679 = arith.extui %2678 : vector<8x128xi1> to vector<8x128xi32>
    %2680 = arith.sitofp %2679 : vector<8x128xi32> to vector<8x128xf32>
    %cst_675 = arith.constant 0.000000e+00 : f32
    %2681 = vector.broadcast %cst_675 : f32 to vector<8x128xf32>
    %2682 = arith.cmpf oge, %2623, %2681 : vector<8x128xf32>
    %cst_676 = arith.constant 0.000000e+00 : f32
    %2683 = vector.broadcast %cst_676 : f32 to vector<8x128xf32>
    %2684 = arith.cmpf olt, %2625, %2683 : vector<8x128xf32>
    %2685 = arith.andi %2682, %2684 : vector<8x128xi1>
    %2686 = arith.extui %2685 : vector<8x128xi1> to vector<8x128xi32>
    %2687 = arith.sitofp %2686 : vector<8x128xi32> to vector<8x128xf32>
    %cst_677 = arith.constant 0.000000e+00 : f32
    %2688 = vector.broadcast %cst_677 : f32 to vector<8x128xf32>
    %2689 = arith.cmpf oge, %2625, %2688 : vector<8x128xf32>
    %cst_678 = arith.constant 0.000000e+00 : f32
    %2690 = vector.broadcast %cst_678 : f32 to vector<8x128xf32>
    %2691 = arith.cmpf olt, %2627, %2690 : vector<8x128xf32>
    %2692 = arith.andi %2689, %2691 : vector<8x128xi1>
    %2693 = arith.extui %2692 : vector<8x128xi1> to vector<8x128xi32>
    %2694 = arith.sitofp %2693 : vector<8x128xi32> to vector<8x128xf32>
    %cst_679 = arith.constant 0.000000e+00 : f32
    %2695 = vector.broadcast %cst_679 : f32 to vector<8x128xf32>
    %2696 = arith.cmpf oge, %2627, %2695 : vector<8x128xf32>
    %cst_680 = arith.constant 0.000000e+00 : f32
    %2697 = vector.broadcast %cst_680 : f32 to vector<8x128xf32>
    %2698 = arith.cmpf olt, %2629, %2697 : vector<8x128xf32>
    %2699 = arith.andi %2696, %2698 : vector<8x128xi1>
    %2700 = arith.extui %2699 : vector<8x128xi1> to vector<8x128xi32>
    %2701 = arith.sitofp %2700 : vector<8x128xi32> to vector<8x128xf32>
    %cst_681 = arith.constant 0.000000e+00 : f32
    %2702 = vector.broadcast %cst_681 : f32 to vector<8x128xf32>
    %2703 = arith.cmpf oge, %2629, %2702 : vector<8x128xf32>
    %cst_682 = arith.constant 0.000000e+00 : f32
    %2704 = vector.broadcast %cst_682 : f32 to vector<8x128xf32>
    %2705 = arith.cmpf olt, %2631, %2704 : vector<8x128xf32>
    %2706 = arith.andi %2703, %2705 : vector<8x128xi1>
    %2707 = arith.extui %2706 : vector<8x128xi1> to vector<8x128xi32>
    %2708 = arith.sitofp %2707 : vector<8x128xi32> to vector<8x128xf32>
    %cst_683 = arith.constant 2.500000e+00 : f32
    %2709 = vector.broadcast %cst_683 : f32 to vector<8x128xf32>
    %2710 = arith.mulf %2609, %2709 : vector<8x128xf32>
    %2711 = arith.mulf %2710, %2638 : vector<8x128xf32>
    %cst_684 = arith.constant -2.500000e+00 : f32
    %2712 = vector.broadcast %cst_684 : f32 to vector<8x128xf32>
    %2713 = arith.mulf %2613, %2712 : vector<8x128xf32>
    %2714 = arith.mulf %2713, %2645 : vector<8x128xf32>
    %2715 = arith.addf %2711, %2714 : vector<8x128xf32>
    %cst_685 = arith.constant 2.500000e+00 : f32
    %2716 = vector.broadcast %cst_685 : f32 to vector<8x128xf32>
    %2717 = arith.mulf %2611, %2716 : vector<8x128xf32>
    %2718 = arith.mulf %2717, %2645 : vector<8x128xf32>
    %cst_686 = arith.constant -2.500000e+00 : f32
    %2719 = vector.broadcast %cst_686 : f32 to vector<8x128xf32>
    %2720 = arith.mulf %2615, %2719 : vector<8x128xf32>
    %2721 = arith.mulf %2720, %2652 : vector<8x128xf32>
    %2722 = arith.addf %2718, %2721 : vector<8x128xf32>
    %cst_687 = arith.constant 2.500000e+00 : f32
    %2723 = vector.broadcast %cst_687 : f32 to vector<8x128xf32>
    %2724 = arith.mulf %2613, %2723 : vector<8x128xf32>
    %2725 = arith.mulf %2724, %2652 : vector<8x128xf32>
    %cst_688 = arith.constant -2.500000e+00 : f32
    %2726 = vector.broadcast %cst_688 : f32 to vector<8x128xf32>
    %2727 = arith.mulf %2617, %2726 : vector<8x128xf32>
    %2728 = arith.mulf %2727, %2659 : vector<8x128xf32>
    %2729 = arith.addf %2725, %2728 : vector<8x128xf32>
    %cst_689 = arith.constant 2.500000e+00 : f32
    %2730 = vector.broadcast %cst_689 : f32 to vector<8x128xf32>
    %2731 = arith.mulf %2615, %2730 : vector<8x128xf32>
    %2732 = arith.mulf %2731, %2659 : vector<8x128xf32>
    %cst_690 = arith.constant -2.500000e+00 : f32
    %2733 = vector.broadcast %cst_690 : f32 to vector<8x128xf32>
    %2734 = arith.mulf %2619, %2733 : vector<8x128xf32>
    %2735 = arith.mulf %2734, %2666 : vector<8x128xf32>
    %2736 = arith.addf %2732, %2735 : vector<8x128xf32>
    %cst_691 = arith.constant 2.500000e+00 : f32
    %2737 = vector.broadcast %cst_691 : f32 to vector<8x128xf32>
    %2738 = arith.mulf %2617, %2737 : vector<8x128xf32>
    %2739 = arith.mulf %2738, %2666 : vector<8x128xf32>
    %cst_692 = arith.constant -2.500000e+00 : f32
    %2740 = vector.broadcast %cst_692 : f32 to vector<8x128xf32>
    %2741 = arith.mulf %2621, %2740 : vector<8x128xf32>
    %2742 = arith.mulf %2741, %2673 : vector<8x128xf32>
    %2743 = arith.addf %2739, %2742 : vector<8x128xf32>
    %cst_693 = arith.constant 2.500000e+00 : f32
    %2744 = vector.broadcast %cst_693 : f32 to vector<8x128xf32>
    %2745 = arith.mulf %2619, %2744 : vector<8x128xf32>
    %2746 = arith.mulf %2745, %2673 : vector<8x128xf32>
    %cst_694 = arith.constant -2.500000e+00 : f32
    %2747 = vector.broadcast %cst_694 : f32 to vector<8x128xf32>
    %2748 = arith.mulf %2623, %2747 : vector<8x128xf32>
    %2749 = arith.mulf %2748, %2680 : vector<8x128xf32>
    %2750 = arith.addf %2746, %2749 : vector<8x128xf32>
    %cst_695 = arith.constant 2.500000e+00 : f32
    %2751 = vector.broadcast %cst_695 : f32 to vector<8x128xf32>
    %2752 = arith.mulf %2621, %2751 : vector<8x128xf32>
    %2753 = arith.mulf %2752, %2680 : vector<8x128xf32>
    %cst_696 = arith.constant -2.500000e+00 : f32
    %2754 = vector.broadcast %cst_696 : f32 to vector<8x128xf32>
    %2755 = arith.mulf %2625, %2754 : vector<8x128xf32>
    %2756 = arith.mulf %2755, %2687 : vector<8x128xf32>
    %2757 = arith.addf %2753, %2756 : vector<8x128xf32>
    %cst_697 = arith.constant 2.500000e+00 : f32
    %2758 = vector.broadcast %cst_697 : f32 to vector<8x128xf32>
    %2759 = arith.mulf %2623, %2758 : vector<8x128xf32>
    %2760 = arith.mulf %2759, %2687 : vector<8x128xf32>
    %cst_698 = arith.constant -2.500000e+00 : f32
    %2761 = vector.broadcast %cst_698 : f32 to vector<8x128xf32>
    %2762 = arith.mulf %2627, %2761 : vector<8x128xf32>
    %2763 = arith.mulf %2762, %2694 : vector<8x128xf32>
    %2764 = arith.addf %2760, %2763 : vector<8x128xf32>
    %cst_699 = arith.constant 2.500000e+00 : f32
    %2765 = vector.broadcast %cst_699 : f32 to vector<8x128xf32>
    %2766 = arith.mulf %2625, %2765 : vector<8x128xf32>
    %2767 = arith.mulf %2766, %2694 : vector<8x128xf32>
    %cst_700 = arith.constant -2.500000e+00 : f32
    %2768 = vector.broadcast %cst_700 : f32 to vector<8x128xf32>
    %2769 = arith.mulf %2629, %2768 : vector<8x128xf32>
    %2770 = arith.mulf %2769, %2701 : vector<8x128xf32>
    %2771 = arith.addf %2767, %2770 : vector<8x128xf32>
    %cst_701 = arith.constant 2.500000e+00 : f32
    %2772 = vector.broadcast %cst_701 : f32 to vector<8x128xf32>
    %2773 = arith.mulf %2627, %2772 : vector<8x128xf32>
    %2774 = arith.mulf %2773, %2701 : vector<8x128xf32>
    %cst_702 = arith.constant -2.500000e+00 : f32
    %2775 = vector.broadcast %cst_702 : f32 to vector<8x128xf32>
    %2776 = arith.mulf %2631, %2775 : vector<8x128xf32>
    %2777 = arith.mulf %2776, %2708 : vector<8x128xf32>
    %2778 = arith.addf %2774, %2777 : vector<8x128xf32>
    %cst_703 = arith.constant 1.250000e+00 : f32
    %2779 = vector.broadcast %cst_703 : f32 to vector<8x128xf32>
    %2780 = arith.mulf %2609, %2779 : vector<8x128xf32>
    %2781 = arith.mulf %2780, %2715 : vector<8x128xf32>
    %cst_704 = arith.constant -1.250000e+00 : f32
    %2782 = vector.broadcast %cst_704 : f32 to vector<8x128xf32>
    %2783 = arith.mulf %2615, %2782 : vector<8x128xf32>
    %2784 = arith.mulf %2783, %2722 : vector<8x128xf32>
    %2785 = arith.addf %2781, %2784 : vector<8x128xf32>
    %cst_705 = arith.constant 1.250000e+00 : f32
    %2786 = vector.broadcast %cst_705 : f32 to vector<8x128xf32>
    %2787 = arith.mulf %2611, %2786 : vector<8x128xf32>
    %2788 = arith.mulf %2787, %2722 : vector<8x128xf32>
    %cst_706 = arith.constant -1.250000e+00 : f32
    %2789 = vector.broadcast %cst_706 : f32 to vector<8x128xf32>
    %2790 = arith.mulf %2617, %2789 : vector<8x128xf32>
    %2791 = arith.mulf %2790, %2729 : vector<8x128xf32>
    %2792 = arith.addf %2788, %2791 : vector<8x128xf32>
    %cst_707 = arith.constant 1.250000e+00 : f32
    %2793 = vector.broadcast %cst_707 : f32 to vector<8x128xf32>
    %2794 = arith.mulf %2613, %2793 : vector<8x128xf32>
    %2795 = arith.mulf %2794, %2729 : vector<8x128xf32>
    %cst_708 = arith.constant -1.250000e+00 : f32
    %2796 = vector.broadcast %cst_708 : f32 to vector<8x128xf32>
    %2797 = arith.mulf %2619, %2796 : vector<8x128xf32>
    %2798 = arith.mulf %2797, %2736 : vector<8x128xf32>
    %2799 = arith.addf %2795, %2798 : vector<8x128xf32>
    %cst_709 = arith.constant 1.250000e+00 : f32
    %2800 = vector.broadcast %cst_709 : f32 to vector<8x128xf32>
    %2801 = arith.mulf %2615, %2800 : vector<8x128xf32>
    %2802 = arith.mulf %2801, %2736 : vector<8x128xf32>
    %cst_710 = arith.constant -1.250000e+00 : f32
    %2803 = vector.broadcast %cst_710 : f32 to vector<8x128xf32>
    %2804 = arith.mulf %2621, %2803 : vector<8x128xf32>
    %2805 = arith.mulf %2804, %2743 : vector<8x128xf32>
    %2806 = arith.addf %2802, %2805 : vector<8x128xf32>
    %cst_711 = arith.constant 1.250000e+00 : f32
    %2807 = vector.broadcast %cst_711 : f32 to vector<8x128xf32>
    %2808 = arith.mulf %2617, %2807 : vector<8x128xf32>
    %2809 = arith.mulf %2808, %2743 : vector<8x128xf32>
    %cst_712 = arith.constant -1.250000e+00 : f32
    %2810 = vector.broadcast %cst_712 : f32 to vector<8x128xf32>
    %2811 = arith.mulf %2623, %2810 : vector<8x128xf32>
    %2812 = arith.mulf %2811, %2750 : vector<8x128xf32>
    %2813 = arith.addf %2809, %2812 : vector<8x128xf32>
    %cst_713 = arith.constant 1.250000e+00 : f32
    %2814 = vector.broadcast %cst_713 : f32 to vector<8x128xf32>
    %2815 = arith.mulf %2619, %2814 : vector<8x128xf32>
    %2816 = arith.mulf %2815, %2750 : vector<8x128xf32>
    %cst_714 = arith.constant -1.250000e+00 : f32
    %2817 = vector.broadcast %cst_714 : f32 to vector<8x128xf32>
    %2818 = arith.mulf %2625, %2817 : vector<8x128xf32>
    %2819 = arith.mulf %2818, %2757 : vector<8x128xf32>
    %2820 = arith.addf %2816, %2819 : vector<8x128xf32>
    %cst_715 = arith.constant 1.250000e+00 : f32
    %2821 = vector.broadcast %cst_715 : f32 to vector<8x128xf32>
    %2822 = arith.mulf %2621, %2821 : vector<8x128xf32>
    %2823 = arith.mulf %2822, %2757 : vector<8x128xf32>
    %cst_716 = arith.constant -1.250000e+00 : f32
    %2824 = vector.broadcast %cst_716 : f32 to vector<8x128xf32>
    %2825 = arith.mulf %2627, %2824 : vector<8x128xf32>
    %2826 = arith.mulf %2825, %2764 : vector<8x128xf32>
    %2827 = arith.addf %2823, %2826 : vector<8x128xf32>
    %cst_717 = arith.constant 1.250000e+00 : f32
    %2828 = vector.broadcast %cst_717 : f32 to vector<8x128xf32>
    %2829 = arith.mulf %2623, %2828 : vector<8x128xf32>
    %2830 = arith.mulf %2829, %2764 : vector<8x128xf32>
    %cst_718 = arith.constant -1.250000e+00 : f32
    %2831 = vector.broadcast %cst_718 : f32 to vector<8x128xf32>
    %2832 = arith.mulf %2629, %2831 : vector<8x128xf32>
    %2833 = arith.mulf %2832, %2771 : vector<8x128xf32>
    %2834 = arith.addf %2830, %2833 : vector<8x128xf32>
    %cst_719 = arith.constant 1.250000e+00 : f32
    %2835 = vector.broadcast %cst_719 : f32 to vector<8x128xf32>
    %2836 = arith.mulf %2625, %2835 : vector<8x128xf32>
    %2837 = arith.mulf %2836, %2771 : vector<8x128xf32>
    %cst_720 = arith.constant -1.250000e+00 : f32
    %2838 = vector.broadcast %cst_720 : f32 to vector<8x128xf32>
    %2839 = arith.mulf %2631, %2838 : vector<8x128xf32>
    %2840 = arith.mulf %2839, %2778 : vector<8x128xf32>
    %2841 = arith.addf %2837, %2840 : vector<8x128xf32>
    %cst_721 = arith.constant 0.833333313 : f32
    %2842 = vector.broadcast %cst_721 : f32 to vector<8x128xf32>
    %2843 = arith.mulf %2609, %2842 : vector<8x128xf32>
    %2844 = arith.mulf %2843, %2785 : vector<8x128xf32>
    %cst_722 = arith.constant -0.833333313 : f32
    %2845 = vector.broadcast %cst_722 : f32 to vector<8x128xf32>
    %2846 = arith.mulf %2617, %2845 : vector<8x128xf32>
    %2847 = arith.mulf %2846, %2792 : vector<8x128xf32>
    %2848 = arith.addf %2844, %2847 : vector<8x128xf32>
    %cst_723 = arith.constant 0.833333313 : f32
    %2849 = vector.broadcast %cst_723 : f32 to vector<8x128xf32>
    %2850 = arith.mulf %2611, %2849 : vector<8x128xf32>
    %2851 = arith.mulf %2850, %2792 : vector<8x128xf32>
    %cst_724 = arith.constant -0.833333313 : f32
    %2852 = vector.broadcast %cst_724 : f32 to vector<8x128xf32>
    %2853 = arith.mulf %2619, %2852 : vector<8x128xf32>
    %2854 = arith.mulf %2853, %2799 : vector<8x128xf32>
    %2855 = arith.addf %2851, %2854 : vector<8x128xf32>
    %cst_725 = arith.constant 0.833333313 : f32
    %2856 = vector.broadcast %cst_725 : f32 to vector<8x128xf32>
    %2857 = arith.mulf %2613, %2856 : vector<8x128xf32>
    %2858 = arith.mulf %2857, %2799 : vector<8x128xf32>
    %cst_726 = arith.constant -0.833333313 : f32
    %2859 = vector.broadcast %cst_726 : f32 to vector<8x128xf32>
    %2860 = arith.mulf %2621, %2859 : vector<8x128xf32>
    %2861 = arith.mulf %2860, %2806 : vector<8x128xf32>
    %2862 = arith.addf %2858, %2861 : vector<8x128xf32>
    %cst_727 = arith.constant 0.833333313 : f32
    %2863 = vector.broadcast %cst_727 : f32 to vector<8x128xf32>
    %2864 = arith.mulf %2615, %2863 : vector<8x128xf32>
    %2865 = arith.mulf %2864, %2806 : vector<8x128xf32>
    %cst_728 = arith.constant -0.833333313 : f32
    %2866 = vector.broadcast %cst_728 : f32 to vector<8x128xf32>
    %2867 = arith.mulf %2623, %2866 : vector<8x128xf32>
    %2868 = arith.mulf %2867, %2813 : vector<8x128xf32>
    %2869 = arith.addf %2865, %2868 : vector<8x128xf32>
    %cst_729 = arith.constant 0.833333313 : f32
    %2870 = vector.broadcast %cst_729 : f32 to vector<8x128xf32>
    %2871 = arith.mulf %2617, %2870 : vector<8x128xf32>
    %2872 = arith.mulf %2871, %2813 : vector<8x128xf32>
    %cst_730 = arith.constant -0.833333313 : f32
    %2873 = vector.broadcast %cst_730 : f32 to vector<8x128xf32>
    %2874 = arith.mulf %2625, %2873 : vector<8x128xf32>
    %2875 = arith.mulf %2874, %2820 : vector<8x128xf32>
    %2876 = arith.addf %2872, %2875 : vector<8x128xf32>
    %cst_731 = arith.constant 0.833333313 : f32
    %2877 = vector.broadcast %cst_731 : f32 to vector<8x128xf32>
    %2878 = arith.mulf %2619, %2877 : vector<8x128xf32>
    %2879 = arith.mulf %2878, %2820 : vector<8x128xf32>
    %cst_732 = arith.constant -0.833333313 : f32
    %2880 = vector.broadcast %cst_732 : f32 to vector<8x128xf32>
    %2881 = arith.mulf %2627, %2880 : vector<8x128xf32>
    %2882 = arith.mulf %2881, %2827 : vector<8x128xf32>
    %2883 = arith.addf %2879, %2882 : vector<8x128xf32>
    %cst_733 = arith.constant 0.833333313 : f32
    %2884 = vector.broadcast %cst_733 : f32 to vector<8x128xf32>
    %2885 = arith.mulf %2621, %2884 : vector<8x128xf32>
    %2886 = arith.mulf %2885, %2827 : vector<8x128xf32>
    %cst_734 = arith.constant -0.833333313 : f32
    %2887 = vector.broadcast %cst_734 : f32 to vector<8x128xf32>
    %2888 = arith.mulf %2629, %2887 : vector<8x128xf32>
    %2889 = arith.mulf %2888, %2834 : vector<8x128xf32>
    %2890 = arith.addf %2886, %2889 : vector<8x128xf32>
    %cst_735 = arith.constant 0.833333313 : f32
    %2891 = vector.broadcast %cst_735 : f32 to vector<8x128xf32>
    %2892 = arith.mulf %2623, %2891 : vector<8x128xf32>
    %2893 = arith.mulf %2892, %2834 : vector<8x128xf32>
    %cst_736 = arith.constant -0.833333313 : f32
    %2894 = vector.broadcast %cst_736 : f32 to vector<8x128xf32>
    %2895 = arith.mulf %2631, %2894 : vector<8x128xf32>
    %2896 = arith.mulf %2895, %2841 : vector<8x128xf32>
    %2897 = arith.addf %2893, %2896 : vector<8x128xf32>
    %c64 = arith.constant 64 : index
    %2898 = memref.load %arg2[%c64] : memref<162xf32, #tpu.memory_space<smem>>
    %2899 = vector.broadcast %2898 : f32 to vector<8x128xf32>
    %2900 = arith.mulf %2899, %2848 : vector<8x128xf32>
    %2901 = arith.addf %2603, %2900 : vector<8x128xf32>
    %c145 = arith.constant 145 : index
    %2902 = memref.load %arg2[%c145] : memref<162xf32, #tpu.memory_space<smem>>
    %2903 = vector.broadcast %2902 : f32 to vector<8x128xf32>
    %2904 = arith.mulf %2903, %2848 : vector<8x128xf32>
    %2905 = arith.addf %2607, %2904 : vector<8x128xf32>
    %c65 = arith.constant 65 : index
    %2906 = memref.load %arg2[%c65] : memref<162xf32, #tpu.memory_space<smem>>
    %2907 = vector.broadcast %2906 : f32 to vector<8x128xf32>
    %2908 = arith.mulf %2907, %2855 : vector<8x128xf32>
    %2909 = arith.addf %2901, %2908 : vector<8x128xf32>
    %c146 = arith.constant 146 : index
    %2910 = memref.load %arg2[%c146] : memref<162xf32, #tpu.memory_space<smem>>
    %2911 = vector.broadcast %2910 : f32 to vector<8x128xf32>
    %2912 = arith.mulf %2911, %2855 : vector<8x128xf32>
    %2913 = arith.addf %2905, %2912 : vector<8x128xf32>
    %c66 = arith.constant 66 : index
    %2914 = memref.load %arg2[%c66] : memref<162xf32, #tpu.memory_space<smem>>
    %2915 = vector.broadcast %2914 : f32 to vector<8x128xf32>
    %2916 = arith.mulf %2915, %2862 : vector<8x128xf32>
    %2917 = arith.addf %2909, %2916 : vector<8x128xf32>
    %c147 = arith.constant 147 : index
    %2918 = memref.load %arg2[%c147] : memref<162xf32, #tpu.memory_space<smem>>
    %2919 = vector.broadcast %2918 : f32 to vector<8x128xf32>
    %2920 = arith.mulf %2919, %2862 : vector<8x128xf32>
    %2921 = arith.addf %2913, %2920 : vector<8x128xf32>
    %c67 = arith.constant 67 : index
    %2922 = memref.load %arg2[%c67] : memref<162xf32, #tpu.memory_space<smem>>
    %2923 = vector.broadcast %2922 : f32 to vector<8x128xf32>
    %2924 = arith.mulf %2923, %2869 : vector<8x128xf32>
    %2925 = arith.addf %2917, %2924 : vector<8x128xf32>
    %c148 = arith.constant 148 : index
    %2926 = memref.load %arg2[%c148] : memref<162xf32, #tpu.memory_space<smem>>
    %2927 = vector.broadcast %2926 : f32 to vector<8x128xf32>
    %2928 = arith.mulf %2927, %2869 : vector<8x128xf32>
    %2929 = arith.addf %2921, %2928 : vector<8x128xf32>
    %c68 = arith.constant 68 : index
    %2930 = memref.load %arg2[%c68] : memref<162xf32, #tpu.memory_space<smem>>
    %2931 = vector.broadcast %2930 : f32 to vector<8x128xf32>
    %2932 = arith.mulf %2931, %2876 : vector<8x128xf32>
    %2933 = arith.addf %2925, %2932 : vector<8x128xf32>
    %c149 = arith.constant 149 : index
    %2934 = memref.load %arg2[%c149] : memref<162xf32, #tpu.memory_space<smem>>
    %2935 = vector.broadcast %2934 : f32 to vector<8x128xf32>
    %2936 = arith.mulf %2935, %2876 : vector<8x128xf32>
    %2937 = arith.addf %2929, %2936 : vector<8x128xf32>
    %c69 = arith.constant 69 : index
    %2938 = memref.load %arg2[%c69] : memref<162xf32, #tpu.memory_space<smem>>
    %2939 = vector.broadcast %2938 : f32 to vector<8x128xf32>
    %2940 = arith.mulf %2939, %2883 : vector<8x128xf32>
    %2941 = arith.addf %2933, %2940 : vector<8x128xf32>
    %c150 = arith.constant 150 : index
    %2942 = memref.load %arg2[%c150] : memref<162xf32, #tpu.memory_space<smem>>
    %2943 = vector.broadcast %2942 : f32 to vector<8x128xf32>
    %2944 = arith.mulf %2943, %2883 : vector<8x128xf32>
    %2945 = arith.addf %2937, %2944 : vector<8x128xf32>
    %c70 = arith.constant 70 : index
    %2946 = memref.load %arg2[%c70] : memref<162xf32, #tpu.memory_space<smem>>
    %2947 = vector.broadcast %2946 : f32 to vector<8x128xf32>
    %2948 = arith.mulf %2947, %2890 : vector<8x128xf32>
    %2949 = arith.addf %2941, %2948 : vector<8x128xf32>
    %c151 = arith.constant 151 : index
    %2950 = memref.load %arg2[%c151] : memref<162xf32, #tpu.memory_space<smem>>
    %2951 = vector.broadcast %2950 : f32 to vector<8x128xf32>
    %2952 = arith.mulf %2951, %2890 : vector<8x128xf32>
    %2953 = arith.addf %2945, %2952 : vector<8x128xf32>
    %c71 = arith.constant 71 : index
    %2954 = memref.load %arg2[%c71] : memref<162xf32, #tpu.memory_space<smem>>
    %2955 = vector.broadcast %2954 : f32 to vector<8x128xf32>
    %2956 = arith.mulf %2955, %2897 : vector<8x128xf32>
    %2957 = arith.addf %2949, %2956 : vector<8x128xf32>
    %c152 = arith.constant 152 : index
    %2958 = memref.load %arg2[%c152] : memref<162xf32, #tpu.memory_space<smem>>
    %2959 = vector.broadcast %2958 : f32 to vector<8x128xf32>
    %2960 = arith.mulf %2959, %2897 : vector<8x128xf32>
    %2961 = arith.addf %2953, %2960 : vector<8x128xf32>
    %c8_737 = arith.constant 8 : index
    %c0_738 = arith.constant 0 : index
    %c0_739 = arith.constant 0 : index
    %2962 = vector.load %arg3[%c8_737, %c0_738, %c0_739] : memref<9x8x128xf32, #tpu.memory_space<vmem>>, vector<1x8x128xf32>
    %2963 = vector.shape_cast %2962 : vector<1x8x128xf32> to vector<8x128xf32>
    %2964 = arith.negf %2963 : vector<8x128xf32>
    %2965 = math.exp %2964 : vector<8x128xf32>
    %cst_740 = arith.constant 1.000000e+00 : f32
    %2966 = vector.broadcast %cst_740 : f32 to vector<8x128xf32>
    %2967 = arith.addf %2966, %2965 : vector<8x128xf32>
    %2968 = arith.divf %2966, %2967 : vector<8x128xf32>
    %2969 = arith.mulf %2963, %2968 : vector<8x128xf32>
    %c72 = arith.constant 72 : index
    %2970 = memref.load %arg2[%c72] : memref<162xf32, #tpu.memory_space<smem>>
    %2971 = vector.broadcast %2970 : f32 to vector<8x128xf32>
    %2972 = arith.mulf %2971, %2969 : vector<8x128xf32>
    %2973 = arith.addf %2957, %2972 : vector<8x128xf32>
    %c153 = arith.constant 153 : index
    %2974 = memref.load %arg2[%c153] : memref<162xf32, #tpu.memory_space<smem>>
    %2975 = vector.broadcast %2974 : f32 to vector<8x128xf32>
    %2976 = arith.mulf %2975, %2969 : vector<8x128xf32>
    %2977 = arith.addf %2961, %2976 : vector<8x128xf32>
    %cst_741 = arith.constant -2.200000e+00 : f32
    %2978 = vector.broadcast %cst_741 : f32 to vector<8x128xf32>
    %2979 = arith.subf %2963, %2978 : vector<8x128xf32>
    %cst_742 = arith.constant -1.800000e+00 : f32
    %2980 = vector.broadcast %cst_742 : f32 to vector<8x128xf32>
    %2981 = arith.subf %2963, %2980 : vector<8x128xf32>
    %cst_743 = arith.constant -1.400000e+00 : f32
    %2982 = vector.broadcast %cst_743 : f32 to vector<8x128xf32>
    %2983 = arith.subf %2963, %2982 : vector<8x128xf32>
    %cst_744 = arith.constant -1.000000e+00 : f32
    %2984 = vector.broadcast %cst_744 : f32 to vector<8x128xf32>
    %2985 = arith.subf %2963, %2984 : vector<8x128xf32>
    %cst_745 = arith.constant -6.000000e-01 : f32
    %2986 = vector.broadcast %cst_745 : f32 to vector<8x128xf32>
    %2987 = arith.subf %2963, %2986 : vector<8x128xf32>
    %cst_746 = arith.constant -2.000000e-01 : f32
    %2988 = vector.broadcast %cst_746 : f32 to vector<8x128xf32>
    %2989 = arith.subf %2963, %2988 : vector<8x128xf32>
    %cst_747 = arith.constant 2.000000e-01 : f32
    %2990 = vector.broadcast %cst_747 : f32 to vector<8x128xf32>
    %2991 = arith.subf %2963, %2990 : vector<8x128xf32>
    %cst_748 = arith.constant 6.000000e-01 : f32
    %2992 = vector.broadcast %cst_748 : f32 to vector<8x128xf32>
    %2993 = arith.subf %2963, %2992 : vector<8x128xf32>
    %cst_749 = arith.constant 1.000000e+00 : f32
    %2994 = vector.broadcast %cst_749 : f32 to vector<8x128xf32>
    %2995 = arith.subf %2963, %2994 : vector<8x128xf32>
    %cst_750 = arith.constant 1.400000e+00 : f32
    %2996 = vector.broadcast %cst_750 : f32 to vector<8x128xf32>
    %2997 = arith.subf %2963, %2996 : vector<8x128xf32>
    %cst_751 = arith.constant 1.800000e+00 : f32
    %2998 = vector.broadcast %cst_751 : f32 to vector<8x128xf32>
    %2999 = arith.subf %2963, %2998 : vector<8x128xf32>
    %cst_752 = arith.constant 2.200000e+00 : f32
    %3000 = vector.broadcast %cst_752 : f32 to vector<8x128xf32>
    %3001 = arith.subf %2963, %3000 : vector<8x128xf32>
    %cst_753 = arith.constant 0.000000e+00 : f32
    %3002 = vector.broadcast %cst_753 : f32 to vector<8x128xf32>
    %3003 = arith.cmpf oge, %2979, %3002 : vector<8x128xf32>
    %cst_754 = arith.constant 0.000000e+00 : f32
    %3004 = vector.broadcast %cst_754 : f32 to vector<8x128xf32>
    %3005 = arith.cmpf olt, %2981, %3004 : vector<8x128xf32>
    %3006 = arith.andi %3003, %3005 : vector<8x128xi1>
    %3007 = arith.extui %3006 : vector<8x128xi1> to vector<8x128xi32>
    %3008 = arith.sitofp %3007 : vector<8x128xi32> to vector<8x128xf32>
    %cst_755 = arith.constant 0.000000e+00 : f32
    %3009 = vector.broadcast %cst_755 : f32 to vector<8x128xf32>
    %3010 = arith.cmpf oge, %2981, %3009 : vector<8x128xf32>
    %cst_756 = arith.constant 0.000000e+00 : f32
    %3011 = vector.broadcast %cst_756 : f32 to vector<8x128xf32>
    %3012 = arith.cmpf olt, %2983, %3011 : vector<8x128xf32>
    %3013 = arith.andi %3010, %3012 : vector<8x128xi1>
    %3014 = arith.extui %3013 : vector<8x128xi1> to vector<8x128xi32>
    %3015 = arith.sitofp %3014 : vector<8x128xi32> to vector<8x128xf32>
    %cst_757 = arith.constant 0.000000e+00 : f32
    %3016 = vector.broadcast %cst_757 : f32 to vector<8x128xf32>
    %3017 = arith.cmpf oge, %2983, %3016 : vector<8x128xf32>
    %cst_758 = arith.constant 0.000000e+00 : f32
    %3018 = vector.broadcast %cst_758 : f32 to vector<8x128xf32>
    %3019 = arith.cmpf olt, %2985, %3018 : vector<8x128xf32>
    %3020 = arith.andi %3017, %3019 : vector<8x128xi1>
    %3021 = arith.extui %3020 : vector<8x128xi1> to vector<8x128xi32>
    %3022 = arith.sitofp %3021 : vector<8x128xi32> to vector<8x128xf32>
    %cst_759 = arith.constant 0.000000e+00 : f32
    %3023 = vector.broadcast %cst_759 : f32 to vector<8x128xf32>
    %3024 = arith.cmpf oge, %2985, %3023 : vector<8x128xf32>
    %cst_760 = arith.constant 0.000000e+00 : f32
    %3025 = vector.broadcast %cst_760 : f32 to vector<8x128xf32>
    %3026 = arith.cmpf olt, %2987, %3025 : vector<8x128xf32>
    %3027 = arith.andi %3024, %3026 : vector<8x128xi1>
    %3028 = arith.extui %3027 : vector<8x128xi1> to vector<8x128xi32>
    %3029 = arith.sitofp %3028 : vector<8x128xi32> to vector<8x128xf32>
    %cst_761 = arith.constant 0.000000e+00 : f32
    %3030 = vector.broadcast %cst_761 : f32 to vector<8x128xf32>
    %3031 = arith.cmpf oge, %2987, %3030 : vector<8x128xf32>
    %cst_762 = arith.constant 0.000000e+00 : f32
    %3032 = vector.broadcast %cst_762 : f32 to vector<8x128xf32>
    %3033 = arith.cmpf olt, %2989, %3032 : vector<8x128xf32>
    %3034 = arith.andi %3031, %3033 : vector<8x128xi1>
    %3035 = arith.extui %3034 : vector<8x128xi1> to vector<8x128xi32>
    %3036 = arith.sitofp %3035 : vector<8x128xi32> to vector<8x128xf32>
    %cst_763 = arith.constant 0.000000e+00 : f32
    %3037 = vector.broadcast %cst_763 : f32 to vector<8x128xf32>
    %3038 = arith.cmpf oge, %2989, %3037 : vector<8x128xf32>
    %cst_764 = arith.constant 0.000000e+00 : f32
    %3039 = vector.broadcast %cst_764 : f32 to vector<8x128xf32>
    %3040 = arith.cmpf olt, %2991, %3039 : vector<8x128xf32>
    %3041 = arith.andi %3038, %3040 : vector<8x128xi1>
    %3042 = arith.extui %3041 : vector<8x128xi1> to vector<8x128xi32>
    %3043 = arith.sitofp %3042 : vector<8x128xi32> to vector<8x128xf32>
    %cst_765 = arith.constant 0.000000e+00 : f32
    %3044 = vector.broadcast %cst_765 : f32 to vector<8x128xf32>
    %3045 = arith.cmpf oge, %2991, %3044 : vector<8x128xf32>
    %cst_766 = arith.constant 0.000000e+00 : f32
    %3046 = vector.broadcast %cst_766 : f32 to vector<8x128xf32>
    %3047 = arith.cmpf olt, %2993, %3046 : vector<8x128xf32>
    %3048 = arith.andi %3045, %3047 : vector<8x128xi1>
    %3049 = arith.extui %3048 : vector<8x128xi1> to vector<8x128xi32>
    %3050 = arith.sitofp %3049 : vector<8x128xi32> to vector<8x128xf32>
    %cst_767 = arith.constant 0.000000e+00 : f32
    %3051 = vector.broadcast %cst_767 : f32 to vector<8x128xf32>
    %3052 = arith.cmpf oge, %2993, %3051 : vector<8x128xf32>
    %cst_768 = arith.constant 0.000000e+00 : f32
    %3053 = vector.broadcast %cst_768 : f32 to vector<8x128xf32>
    %3054 = arith.cmpf olt, %2995, %3053 : vector<8x128xf32>
    %3055 = arith.andi %3052, %3054 : vector<8x128xi1>
    %3056 = arith.extui %3055 : vector<8x128xi1> to vector<8x128xi32>
    %3057 = arith.sitofp %3056 : vector<8x128xi32> to vector<8x128xf32>
    %cst_769 = arith.constant 0.000000e+00 : f32
    %3058 = vector.broadcast %cst_769 : f32 to vector<8x128xf32>
    %3059 = arith.cmpf oge, %2995, %3058 : vector<8x128xf32>
    %cst_770 = arith.constant 0.000000e+00 : f32
    %3060 = vector.broadcast %cst_770 : f32 to vector<8x128xf32>
    %3061 = arith.cmpf olt, %2997, %3060 : vector<8x128xf32>
    %3062 = arith.andi %3059, %3061 : vector<8x128xi1>
    %3063 = arith.extui %3062 : vector<8x128xi1> to vector<8x128xi32>
    %3064 = arith.sitofp %3063 : vector<8x128xi32> to vector<8x128xf32>
    %cst_771 = arith.constant 0.000000e+00 : f32
    %3065 = vector.broadcast %cst_771 : f32 to vector<8x128xf32>
    %3066 = arith.cmpf oge, %2997, %3065 : vector<8x128xf32>
    %cst_772 = arith.constant 0.000000e+00 : f32
    %3067 = vector.broadcast %cst_772 : f32 to vector<8x128xf32>
    %3068 = arith.cmpf olt, %2999, %3067 : vector<8x128xf32>
    %3069 = arith.andi %3066, %3068 : vector<8x128xi1>
    %3070 = arith.extui %3069 : vector<8x128xi1> to vector<8x128xi32>
    %3071 = arith.sitofp %3070 : vector<8x128xi32> to vector<8x128xf32>
    %cst_773 = arith.constant 0.000000e+00 : f32
    %3072 = vector.broadcast %cst_773 : f32 to vector<8x128xf32>
    %3073 = arith.cmpf oge, %2999, %3072 : vector<8x128xf32>
    %cst_774 = arith.constant 0.000000e+00 : f32
    %3074 = vector.broadcast %cst_774 : f32 to vector<8x128xf32>
    %3075 = arith.cmpf olt, %3001, %3074 : vector<8x128xf32>
    %3076 = arith.andi %3073, %3075 : vector<8x128xi1>
    %3077 = arith.extui %3076 : vector<8x128xi1> to vector<8x128xi32>
    %3078 = arith.sitofp %3077 : vector<8x128xi32> to vector<8x128xf32>
    %cst_775 = arith.constant 2.500000e+00 : f32
    %3079 = vector.broadcast %cst_775 : f32 to vector<8x128xf32>
    %3080 = arith.mulf %2979, %3079 : vector<8x128xf32>
    %3081 = arith.mulf %3080, %3008 : vector<8x128xf32>
    %cst_776 = arith.constant -2.500000e+00 : f32
    %3082 = vector.broadcast %cst_776 : f32 to vector<8x128xf32>
    %3083 = arith.mulf %2983, %3082 : vector<8x128xf32>
    %3084 = arith.mulf %3083, %3015 : vector<8x128xf32>
    %3085 = arith.addf %3081, %3084 : vector<8x128xf32>
    %cst_777 = arith.constant 2.500000e+00 : f32
    %3086 = vector.broadcast %cst_777 : f32 to vector<8x128xf32>
    %3087 = arith.mulf %2981, %3086 : vector<8x128xf32>
    %3088 = arith.mulf %3087, %3015 : vector<8x128xf32>
    %cst_778 = arith.constant -2.500000e+00 : f32
    %3089 = vector.broadcast %cst_778 : f32 to vector<8x128xf32>
    %3090 = arith.mulf %2985, %3089 : vector<8x128xf32>
    %3091 = arith.mulf %3090, %3022 : vector<8x128xf32>
    %3092 = arith.addf %3088, %3091 : vector<8x128xf32>
    %cst_779 = arith.constant 2.500000e+00 : f32
    %3093 = vector.broadcast %cst_779 : f32 to vector<8x128xf32>
    %3094 = arith.mulf %2983, %3093 : vector<8x128xf32>
    %3095 = arith.mulf %3094, %3022 : vector<8x128xf32>
    %cst_780 = arith.constant -2.500000e+00 : f32
    %3096 = vector.broadcast %cst_780 : f32 to vector<8x128xf32>
    %3097 = arith.mulf %2987, %3096 : vector<8x128xf32>
    %3098 = arith.mulf %3097, %3029 : vector<8x128xf32>
    %3099 = arith.addf %3095, %3098 : vector<8x128xf32>
    %cst_781 = arith.constant 2.500000e+00 : f32
    %3100 = vector.broadcast %cst_781 : f32 to vector<8x128xf32>
    %3101 = arith.mulf %2985, %3100 : vector<8x128xf32>
    %3102 = arith.mulf %3101, %3029 : vector<8x128xf32>
    %cst_782 = arith.constant -2.500000e+00 : f32
    %3103 = vector.broadcast %cst_782 : f32 to vector<8x128xf32>
    %3104 = arith.mulf %2989, %3103 : vector<8x128xf32>
    %3105 = arith.mulf %3104, %3036 : vector<8x128xf32>
    %3106 = arith.addf %3102, %3105 : vector<8x128xf32>
    %cst_783 = arith.constant 2.500000e+00 : f32
    %3107 = vector.broadcast %cst_783 : f32 to vector<8x128xf32>
    %3108 = arith.mulf %2987, %3107 : vector<8x128xf32>
    %3109 = arith.mulf %3108, %3036 : vector<8x128xf32>
    %cst_784 = arith.constant -2.500000e+00 : f32
    %3110 = vector.broadcast %cst_784 : f32 to vector<8x128xf32>
    %3111 = arith.mulf %2991, %3110 : vector<8x128xf32>
    %3112 = arith.mulf %3111, %3043 : vector<8x128xf32>
    %3113 = arith.addf %3109, %3112 : vector<8x128xf32>
    %cst_785 = arith.constant 2.500000e+00 : f32
    %3114 = vector.broadcast %cst_785 : f32 to vector<8x128xf32>
    %3115 = arith.mulf %2989, %3114 : vector<8x128xf32>
    %3116 = arith.mulf %3115, %3043 : vector<8x128xf32>
    %cst_786 = arith.constant -2.500000e+00 : f32
    %3117 = vector.broadcast %cst_786 : f32 to vector<8x128xf32>
    %3118 = arith.mulf %2993, %3117 : vector<8x128xf32>
    %3119 = arith.mulf %3118, %3050 : vector<8x128xf32>
    %3120 = arith.addf %3116, %3119 : vector<8x128xf32>
    %cst_787 = arith.constant 2.500000e+00 : f32
    %3121 = vector.broadcast %cst_787 : f32 to vector<8x128xf32>
    %3122 = arith.mulf %2991, %3121 : vector<8x128xf32>
    %3123 = arith.mulf %3122, %3050 : vector<8x128xf32>
    %cst_788 = arith.constant -2.500000e+00 : f32
    %3124 = vector.broadcast %cst_788 : f32 to vector<8x128xf32>
    %3125 = arith.mulf %2995, %3124 : vector<8x128xf32>
    %3126 = arith.mulf %3125, %3057 : vector<8x128xf32>
    %3127 = arith.addf %3123, %3126 : vector<8x128xf32>
    %cst_789 = arith.constant 2.500000e+00 : f32
    %3128 = vector.broadcast %cst_789 : f32 to vector<8x128xf32>
    %3129 = arith.mulf %2993, %3128 : vector<8x128xf32>
    %3130 = arith.mulf %3129, %3057 : vector<8x128xf32>
    %cst_790 = arith.constant -2.500000e+00 : f32
    %3131 = vector.broadcast %cst_790 : f32 to vector<8x128xf32>
    %3132 = arith.mulf %2997, %3131 : vector<8x128xf32>
    %3133 = arith.mulf %3132, %3064 : vector<8x128xf32>
    %3134 = arith.addf %3130, %3133 : vector<8x128xf32>
    %cst_791 = arith.constant 2.500000e+00 : f32
    %3135 = vector.broadcast %cst_791 : f32 to vector<8x128xf32>
    %3136 = arith.mulf %2995, %3135 : vector<8x128xf32>
    %3137 = arith.mulf %3136, %3064 : vector<8x128xf32>
    %cst_792 = arith.constant -2.500000e+00 : f32
    %3138 = vector.broadcast %cst_792 : f32 to vector<8x128xf32>
    %3139 = arith.mulf %2999, %3138 : vector<8x128xf32>
    %3140 = arith.mulf %3139, %3071 : vector<8x128xf32>
    %3141 = arith.addf %3137, %3140 : vector<8x128xf32>
    %cst_793 = arith.constant 2.500000e+00 : f32
    %3142 = vector.broadcast %cst_793 : f32 to vector<8x128xf32>
    %3143 = arith.mulf %2997, %3142 : vector<8x128xf32>
    %3144 = arith.mulf %3143, %3071 : vector<8x128xf32>
    %cst_794 = arith.constant -2.500000e+00 : f32
    %3145 = vector.broadcast %cst_794 : f32 to vector<8x128xf32>
    %3146 = arith.mulf %3001, %3145 : vector<8x128xf32>
    %3147 = arith.mulf %3146, %3078 : vector<8x128xf32>
    %3148 = arith.addf %3144, %3147 : vector<8x128xf32>
    %cst_795 = arith.constant 1.250000e+00 : f32
    %3149 = vector.broadcast %cst_795 : f32 to vector<8x128xf32>
    %3150 = arith.mulf %2979, %3149 : vector<8x128xf32>
    %3151 = arith.mulf %3150, %3085 : vector<8x128xf32>
    %cst_796 = arith.constant -1.250000e+00 : f32
    %3152 = vector.broadcast %cst_796 : f32 to vector<8x128xf32>
    %3153 = arith.mulf %2985, %3152 : vector<8x128xf32>
    %3154 = arith.mulf %3153, %3092 : vector<8x128xf32>
    %3155 = arith.addf %3151, %3154 : vector<8x128xf32>
    %cst_797 = arith.constant 1.250000e+00 : f32
    %3156 = vector.broadcast %cst_797 : f32 to vector<8x128xf32>
    %3157 = arith.mulf %2981, %3156 : vector<8x128xf32>
    %3158 = arith.mulf %3157, %3092 : vector<8x128xf32>
    %cst_798 = arith.constant -1.250000e+00 : f32
    %3159 = vector.broadcast %cst_798 : f32 to vector<8x128xf32>
    %3160 = arith.mulf %2987, %3159 : vector<8x128xf32>
    %3161 = arith.mulf %3160, %3099 : vector<8x128xf32>
    %3162 = arith.addf %3158, %3161 : vector<8x128xf32>
    %cst_799 = arith.constant 1.250000e+00 : f32
    %3163 = vector.broadcast %cst_799 : f32 to vector<8x128xf32>
    %3164 = arith.mulf %2983, %3163 : vector<8x128xf32>
    %3165 = arith.mulf %3164, %3099 : vector<8x128xf32>
    %cst_800 = arith.constant -1.250000e+00 : f32
    %3166 = vector.broadcast %cst_800 : f32 to vector<8x128xf32>
    %3167 = arith.mulf %2989, %3166 : vector<8x128xf32>
    %3168 = arith.mulf %3167, %3106 : vector<8x128xf32>
    %3169 = arith.addf %3165, %3168 : vector<8x128xf32>
    %cst_801 = arith.constant 1.250000e+00 : f32
    %3170 = vector.broadcast %cst_801 : f32 to vector<8x128xf32>
    %3171 = arith.mulf %2985, %3170 : vector<8x128xf32>
    %3172 = arith.mulf %3171, %3106 : vector<8x128xf32>
    %cst_802 = arith.constant -1.250000e+00 : f32
    %3173 = vector.broadcast %cst_802 : f32 to vector<8x128xf32>
    %3174 = arith.mulf %2991, %3173 : vector<8x128xf32>
    %3175 = arith.mulf %3174, %3113 : vector<8x128xf32>
    %3176 = arith.addf %3172, %3175 : vector<8x128xf32>
    %cst_803 = arith.constant 1.250000e+00 : f32
    %3177 = vector.broadcast %cst_803 : f32 to vector<8x128xf32>
    %3178 = arith.mulf %2987, %3177 : vector<8x128xf32>
    %3179 = arith.mulf %3178, %3113 : vector<8x128xf32>
    %cst_804 = arith.constant -1.250000e+00 : f32
    %3180 = vector.broadcast %cst_804 : f32 to vector<8x128xf32>
    %3181 = arith.mulf %2993, %3180 : vector<8x128xf32>
    %3182 = arith.mulf %3181, %3120 : vector<8x128xf32>
    %3183 = arith.addf %3179, %3182 : vector<8x128xf32>
    %cst_805 = arith.constant 1.250000e+00 : f32
    %3184 = vector.broadcast %cst_805 : f32 to vector<8x128xf32>
    %3185 = arith.mulf %2989, %3184 : vector<8x128xf32>
    %3186 = arith.mulf %3185, %3120 : vector<8x128xf32>
    %cst_806 = arith.constant -1.250000e+00 : f32
    %3187 = vector.broadcast %cst_806 : f32 to vector<8x128xf32>
    %3188 = arith.mulf %2995, %3187 : vector<8x128xf32>
    %3189 = arith.mulf %3188, %3127 : vector<8x128xf32>
    %3190 = arith.addf %3186, %3189 : vector<8x128xf32>
    %cst_807 = arith.constant 1.250000e+00 : f32
    %3191 = vector.broadcast %cst_807 : f32 to vector<8x128xf32>
    %3192 = arith.mulf %2991, %3191 : vector<8x128xf32>
    %3193 = arith.mulf %3192, %3127 : vector<8x128xf32>
    %cst_808 = arith.constant -1.250000e+00 : f32
    %3194 = vector.broadcast %cst_808 : f32 to vector<8x128xf32>
    %3195 = arith.mulf %2997, %3194 : vector<8x128xf32>
    %3196 = arith.mulf %3195, %3134 : vector<8x128xf32>
    %3197 = arith.addf %3193, %3196 : vector<8x128xf32>
    %cst_809 = arith.constant 1.250000e+00 : f32
    %3198 = vector.broadcast %cst_809 : f32 to vector<8x128xf32>
    %3199 = arith.mulf %2993, %3198 : vector<8x128xf32>
    %3200 = arith.mulf %3199, %3134 : vector<8x128xf32>
    %cst_810 = arith.constant -1.250000e+00 : f32
    %3201 = vector.broadcast %cst_810 : f32 to vector<8x128xf32>
    %3202 = arith.mulf %2999, %3201 : vector<8x128xf32>
    %3203 = arith.mulf %3202, %3141 : vector<8x128xf32>
    %3204 = arith.addf %3200, %3203 : vector<8x128xf32>
    %cst_811 = arith.constant 1.250000e+00 : f32
    %3205 = vector.broadcast %cst_811 : f32 to vector<8x128xf32>
    %3206 = arith.mulf %2995, %3205 : vector<8x128xf32>
    %3207 = arith.mulf %3206, %3141 : vector<8x128xf32>
    %cst_812 = arith.constant -1.250000e+00 : f32
    %3208 = vector.broadcast %cst_812 : f32 to vector<8x128xf32>
    %3209 = arith.mulf %3001, %3208 : vector<8x128xf32>
    %3210 = arith.mulf %3209, %3148 : vector<8x128xf32>
    %3211 = arith.addf %3207, %3210 : vector<8x128xf32>
    %cst_813 = arith.constant 0.833333313 : f32
    %3212 = vector.broadcast %cst_813 : f32 to vector<8x128xf32>
    %3213 = arith.mulf %2979, %3212 : vector<8x128xf32>
    %3214 = arith.mulf %3213, %3155 : vector<8x128xf32>
    %cst_814 = arith.constant -0.833333313 : f32
    %3215 = vector.broadcast %cst_814 : f32 to vector<8x128xf32>
    %3216 = arith.mulf %2987, %3215 : vector<8x128xf32>
    %3217 = arith.mulf %3216, %3162 : vector<8x128xf32>
    %3218 = arith.addf %3214, %3217 : vector<8x128xf32>
    %cst_815 = arith.constant 0.833333313 : f32
    %3219 = vector.broadcast %cst_815 : f32 to vector<8x128xf32>
    %3220 = arith.mulf %2981, %3219 : vector<8x128xf32>
    %3221 = arith.mulf %3220, %3162 : vector<8x128xf32>
    %cst_816 = arith.constant -0.833333313 : f32
    %3222 = vector.broadcast %cst_816 : f32 to vector<8x128xf32>
    %3223 = arith.mulf %2989, %3222 : vector<8x128xf32>
    %3224 = arith.mulf %3223, %3169 : vector<8x128xf32>
    %3225 = arith.addf %3221, %3224 : vector<8x128xf32>
    %cst_817 = arith.constant 0.833333313 : f32
    %3226 = vector.broadcast %cst_817 : f32 to vector<8x128xf32>
    %3227 = arith.mulf %2983, %3226 : vector<8x128xf32>
    %3228 = arith.mulf %3227, %3169 : vector<8x128xf32>
    %cst_818 = arith.constant -0.833333313 : f32
    %3229 = vector.broadcast %cst_818 : f32 to vector<8x128xf32>
    %3230 = arith.mulf %2991, %3229 : vector<8x128xf32>
    %3231 = arith.mulf %3230, %3176 : vector<8x128xf32>
    %3232 = arith.addf %3228, %3231 : vector<8x128xf32>
    %cst_819 = arith.constant 0.833333313 : f32
    %3233 = vector.broadcast %cst_819 : f32 to vector<8x128xf32>
    %3234 = arith.mulf %2985, %3233 : vector<8x128xf32>
    %3235 = arith.mulf %3234, %3176 : vector<8x128xf32>
    %cst_820 = arith.constant -0.833333313 : f32
    %3236 = vector.broadcast %cst_820 : f32 to vector<8x128xf32>
    %3237 = arith.mulf %2993, %3236 : vector<8x128xf32>
    %3238 = arith.mulf %3237, %3183 : vector<8x128xf32>
    %3239 = arith.addf %3235, %3238 : vector<8x128xf32>
    %cst_821 = arith.constant 0.833333313 : f32
    %3240 = vector.broadcast %cst_821 : f32 to vector<8x128xf32>
    %3241 = arith.mulf %2987, %3240 : vector<8x128xf32>
    %3242 = arith.mulf %3241, %3183 : vector<8x128xf32>
    %cst_822 = arith.constant -0.833333313 : f32
    %3243 = vector.broadcast %cst_822 : f32 to vector<8x128xf32>
    %3244 = arith.mulf %2995, %3243 : vector<8x128xf32>
    %3245 = arith.mulf %3244, %3190 : vector<8x128xf32>
    %3246 = arith.addf %3242, %3245 : vector<8x128xf32>
    %cst_823 = arith.constant 0.833333313 : f32
    %3247 = vector.broadcast %cst_823 : f32 to vector<8x128xf32>
    %3248 = arith.mulf %2989, %3247 : vector<8x128xf32>
    %3249 = arith.mulf %3248, %3190 : vector<8x128xf32>
    %cst_824 = arith.constant -0.833333313 : f32
    %3250 = vector.broadcast %cst_824 : f32 to vector<8x128xf32>
    %3251 = arith.mulf %2997, %3250 : vector<8x128xf32>
    %3252 = arith.mulf %3251, %3197 : vector<8x128xf32>
    %3253 = arith.addf %3249, %3252 : vector<8x128xf32>
    %cst_825 = arith.constant 0.833333313 : f32
    %3254 = vector.broadcast %cst_825 : f32 to vector<8x128xf32>
    %3255 = arith.mulf %2991, %3254 : vector<8x128xf32>
    %3256 = arith.mulf %3255, %3197 : vector<8x128xf32>
    %cst_826 = arith.constant -0.833333313 : f32
    %3257 = vector.broadcast %cst_826 : f32 to vector<8x128xf32>
    %3258 = arith.mulf %2999, %3257 : vector<8x128xf32>
    %3259 = arith.mulf %3258, %3204 : vector<8x128xf32>
    %3260 = arith.addf %3256, %3259 : vector<8x128xf32>
    %cst_827 = arith.constant 0.833333313 : f32
    %3261 = vector.broadcast %cst_827 : f32 to vector<8x128xf32>
    %3262 = arith.mulf %2993, %3261 : vector<8x128xf32>
    %3263 = arith.mulf %3262, %3204 : vector<8x128xf32>
    %cst_828 = arith.constant -0.833333313 : f32
    %3264 = vector.broadcast %cst_828 : f32 to vector<8x128xf32>
    %3265 = arith.mulf %3001, %3264 : vector<8x128xf32>
    %3266 = arith.mulf %3265, %3211 : vector<8x128xf32>
    %3267 = arith.addf %3263, %3266 : vector<8x128xf32>
    %c73 = arith.constant 73 : index
    %3268 = memref.load %arg2[%c73] : memref<162xf32, #tpu.memory_space<smem>>
    %3269 = vector.broadcast %3268 : f32 to vector<8x128xf32>
    %3270 = arith.mulf %3269, %3218 : vector<8x128xf32>
    %3271 = arith.addf %2973, %3270 : vector<8x128xf32>
    %c154 = arith.constant 154 : index
    %3272 = memref.load %arg2[%c154] : memref<162xf32, #tpu.memory_space<smem>>
    %3273 = vector.broadcast %3272 : f32 to vector<8x128xf32>
    %3274 = arith.mulf %3273, %3218 : vector<8x128xf32>
    %3275 = arith.addf %2977, %3274 : vector<8x128xf32>
    %c74 = arith.constant 74 : index
    %3276 = memref.load %arg2[%c74] : memref<162xf32, #tpu.memory_space<smem>>
    %3277 = vector.broadcast %3276 : f32 to vector<8x128xf32>
    %3278 = arith.mulf %3277, %3225 : vector<8x128xf32>
    %3279 = arith.addf %3271, %3278 : vector<8x128xf32>
    %c155 = arith.constant 155 : index
    %3280 = memref.load %arg2[%c155] : memref<162xf32, #tpu.memory_space<smem>>
    %3281 = vector.broadcast %3280 : f32 to vector<8x128xf32>
    %3282 = arith.mulf %3281, %3225 : vector<8x128xf32>
    %3283 = arith.addf %3275, %3282 : vector<8x128xf32>
    %c75 = arith.constant 75 : index
    %3284 = memref.load %arg2[%c75] : memref<162xf32, #tpu.memory_space<smem>>
    %3285 = vector.broadcast %3284 : f32 to vector<8x128xf32>
    %3286 = arith.mulf %3285, %3232 : vector<8x128xf32>
    %3287 = arith.addf %3279, %3286 : vector<8x128xf32>
    %c156 = arith.constant 156 : index
    %3288 = memref.load %arg2[%c156] : memref<162xf32, #tpu.memory_space<smem>>
    %3289 = vector.broadcast %3288 : f32 to vector<8x128xf32>
    %3290 = arith.mulf %3289, %3232 : vector<8x128xf32>
    %3291 = arith.addf %3283, %3290 : vector<8x128xf32>
    %c76 = arith.constant 76 : index
    %3292 = memref.load %arg2[%c76] : memref<162xf32, #tpu.memory_space<smem>>
    %3293 = vector.broadcast %3292 : f32 to vector<8x128xf32>
    %3294 = arith.mulf %3293, %3239 : vector<8x128xf32>
    %3295 = arith.addf %3287, %3294 : vector<8x128xf32>
    %c157 = arith.constant 157 : index
    %3296 = memref.load %arg2[%c157] : memref<162xf32, #tpu.memory_space<smem>>
    %3297 = vector.broadcast %3296 : f32 to vector<8x128xf32>
    %3298 = arith.mulf %3297, %3239 : vector<8x128xf32>
    %3299 = arith.addf %3291, %3298 : vector<8x128xf32>
    %c77 = arith.constant 77 : index
    %3300 = memref.load %arg2[%c77] : memref<162xf32, #tpu.memory_space<smem>>
    %3301 = vector.broadcast %3300 : f32 to vector<8x128xf32>
    %3302 = arith.mulf %3301, %3246 : vector<8x128xf32>
    %3303 = arith.addf %3295, %3302 : vector<8x128xf32>
    %c158 = arith.constant 158 : index
    %3304 = memref.load %arg2[%c158] : memref<162xf32, #tpu.memory_space<smem>>
    %3305 = vector.broadcast %3304 : f32 to vector<8x128xf32>
    %3306 = arith.mulf %3305, %3246 : vector<8x128xf32>
    %3307 = arith.addf %3299, %3306 : vector<8x128xf32>
    %c78 = arith.constant 78 : index
    %3308 = memref.load %arg2[%c78] : memref<162xf32, #tpu.memory_space<smem>>
    %3309 = vector.broadcast %3308 : f32 to vector<8x128xf32>
    %3310 = arith.mulf %3309, %3253 : vector<8x128xf32>
    %3311 = arith.addf %3303, %3310 : vector<8x128xf32>
    %c159 = arith.constant 159 : index
    %3312 = memref.load %arg2[%c159] : memref<162xf32, #tpu.memory_space<smem>>
    %3313 = vector.broadcast %3312 : f32 to vector<8x128xf32>
    %3314 = arith.mulf %3313, %3253 : vector<8x128xf32>
    %3315 = arith.addf %3307, %3314 : vector<8x128xf32>
    %c79 = arith.constant 79 : index
    %3316 = memref.load %arg2[%c79] : memref<162xf32, #tpu.memory_space<smem>>
    %3317 = vector.broadcast %3316 : f32 to vector<8x128xf32>
    %3318 = arith.mulf %3317, %3260 : vector<8x128xf32>
    %3319 = arith.addf %3311, %3318 : vector<8x128xf32>
    %c160 = arith.constant 160 : index
    %3320 = memref.load %arg2[%c160] : memref<162xf32, #tpu.memory_space<smem>>
    %3321 = vector.broadcast %3320 : f32 to vector<8x128xf32>
    %3322 = arith.mulf %3321, %3260 : vector<8x128xf32>
    %3323 = arith.addf %3315, %3322 : vector<8x128xf32>
    %c80 = arith.constant 80 : index
    %3324 = memref.load %arg2[%c80] : memref<162xf32, #tpu.memory_space<smem>>
    %3325 = vector.broadcast %3324 : f32 to vector<8x128xf32>
    %3326 = arith.mulf %3325, %3267 : vector<8x128xf32>
    %3327 = arith.addf %3319, %3326 : vector<8x128xf32>
    %c161 = arith.constant 161 : index
    %3328 = memref.load %arg2[%c161] : memref<162xf32, #tpu.memory_space<smem>>
    %3329 = vector.broadcast %3328 : f32 to vector<8x128xf32>
    %3330 = arith.mulf %3329, %3267 : vector<8x128xf32>
    %3331 = arith.addf %3323, %3330 : vector<8x128xf32>
    %c0_829 = arith.constant 0 : index
    %c0_830 = arith.constant 0 : index
    %c0_831 = arith.constant 0 : index
    %3332 = vector.load %arg4[%c0_829, %c0_830, %c0_831] : memref<2x8x128xf32, #tpu.memory_space<vmem>>, vector<1x8x128xf32>
    %3333 = vector.shape_cast %3332 : vector<1x8x128xf32> to vector<8x128xf32>
    %3334 = vector.shape_cast %3327 : vector<8x128xf32> to vector<1x8x128xf32>
    tpu.vector_store %arg4[%c0_829, %c0_830, %c0_831], %3334 {strides = array<i32>} : memref<2x8x128xf32, #tpu.memory_space<vmem>>, vector<1x8x128xf32>,
    %c1_832 = arith.constant 1 : index
    %c0_833 = arith.constant 0 : index
    %c0_834 = arith.constant 0 : index
    %3335 = vector.load %arg4[%c1_832, %c0_833, %c0_834] : memref<2x8x128xf32, #tpu.memory_space<vmem>>, vector<1x8x128xf32>
    %3336 = vector.shape_cast %3335 : vector<1x8x128xf32> to vector<8x128xf32>
    %3337 = vector.shape_cast %3331 : vector<8x128xf32> to vector<1x8x128xf32>
    tpu.vector_store %arg4[%c1_832, %c0_833, %c0_834], %3337 {strides = array<i32>} : memref<2x8x128xf32, #tpu.memory_space<vmem>>, vector<1x8x128xf32>,
    return
  }
  func.func @transform_0(%arg0: i32, %arg1: i32) -> i32 {
    %c0_i32 = arith.constant 0 : i32
    %c0_i32_0 = arith.constant 0 : i32
    return %c0_i32 : i32
  }
  func.func @transform_1(%arg0: i32, %arg1: i32) -> (i32, i32, i32) {
    %c0_i32 = arith.constant 0 : i32
    %c0_i32_0 = arith.constant 0 : i32
    return %c0_i32, %arg0, %arg1 : i32, i32, i32
  }
  func.func @transform_2(%arg0: i32, %arg1: i32) -> (i32, i32, i32) {
    %c0_i32 = arith.constant 0 : i32
    %c0_i32_0 = arith.constant 0 : i32
    return %c0_i32, %arg0, %arg1 : i32, i32, i32
  }
}

</mosaic_0001>

<llo_original>
// kernel: cnn_kan_forward.8
$region0: #{cnn_kan_forward.8}
  #allocation0 [shape = 'u32[]', space=smem, size = 0x4, offset = 0x4, fixed_abs, tag = 'smem constant byte address 0x4 - core index']
  #allocation1 [shape = 'u32[72,128]{1,0:T(1,128)}', space=vmem, size = 0x9000, scoped, tag = 'internal scratch']
  %s0 = inlined_call_operand.vmem [shape: bf16[512,256], index: 0, kind: input, shape index: {}]
  %s1 = inlined_call_operand.vmem [shape: bf16[256,128], index: 1, kind: input, shape index: {}]
  %s2 = inlined_call_operand.vmem [shape: f32[512,128], index: 2, kind: output, shape index: {}]
  %s3 = sld [smem:[#allocation0]]
  $region18: #{cnn_kan_forward.8} parent=0
    _
  %s5 = ssub.s32 1, %s3
  %s6 = scalar_select 0, %s5, %s3
  // Predicated region
  $region2: #{cnn_kan_forward.8} parent=0 // pred_check
    _
  $region3: #{cnn_kan_forward.8} parent=0 // pred_check_branch
    %8 = sbr.rel (0) target = $region5
  $region4: #{cnn_kan_forward.8} parent=0 // pred_region
    _
  $region5: #{cnn_kan_forward.8} parent=0 // pred_fallthru
    _
  // Predicated region
  $region6: #{cnn_kan_forward.8} parent=0 // pred_check
    _
  $region7: #{cnn_kan_forward.8} parent=0 // pred_check_branch
    %10 = sbr.rel (0) target = $region9
  $region8: #{cnn_kan_forward.8} parent=0 // pred_region
    _
  $region9: #{cnn_kan_forward.8} parent=0 // pred_fallthru
    _
  %v11 = vld [vmem:[%s0] sm:$0xff]
  %v12 = vld [vmem:[%s0 + $0x8] sm:$0xff]
  %v13 = vld [vmem:[%s0 + $0x10] sm:$0xff]
  %v14 = vld [vmem:[%s0 + $0x18] sm:$0xff]
  %v15 = vld [vmem:[%s0 + $0x20] sm:$0xff]
  %v16 = vld [vmem:[%s0 + $0x28] sm:$0xff]
  %v17 = vld [vmem:[%s0 + $0x30] sm:$0xff]
  %v18 = vld [vmem:[%s0 + $0x38] sm:$0xff]
  %v19 = vld [vmem:[%s0 + $0x40] sm:$0xff]
  %v20 = vld [vmem:[%s0 + $0x48] sm:$0xff]
  %v21 = vld [vmem:[%s0 + $0x50] sm:$0xff]
  %v22 = vld [vmem:[%s0 + $0x58] sm:$0xff]
  %v23 = vld [vmem:[%s0 + $0x60] sm:$0xff]
  %v24 = vld [vmem:[%s0 + $0x68] sm:$0xff]
  %v25 = vld [vmem:[%s0 + $0x70] sm:$0xff]
  %v26 = vld [vmem:[%s0 + $0x78] sm:$0xff]
  %v27 = vld [vmem:[%s0 + $0x80] sm:$0xff]
  %v28 = vld [vmem:[%s0 + $0x88] sm:$0xff]
  %v29 = vld [vmem:[%s0 + $0x90] sm:$0xff]
  %v30 = vld [vmem:[%s0 + $0x98] sm:$0xff]
  %v31 = vld [vmem:[%s0 + $0xa0] sm:$0xff]
  %v32 = vld [vmem:[%s0 + $0xa8] sm:$0xff]
  %v33 = vld [vmem:[%s0 + $0xb0] sm:$0xff]
  %v34 = vld [vmem:[%s0 + $0xb8] sm:$0xff]
  %v35 = vld [vmem:[%s0 + $0xc0] sm:$0xff]
  %v36 = vld [vmem:[%s0 + $0xc8] sm:$0xff]
  %v37 = vld [vmem:[%s0 + $0xd0] sm:$0xff]
  %v38 = vld [vmem:[%s0 + $0xd8] sm:$0xff]
  %v39 = vld [vmem:[%s0 + $0xe0] sm:$0xff]
  %v40 = vld [vmem:[%s0 + $0xe8] sm:$0xff]
  %v41 = vld [vmem:[%s0 + $0xf0] sm:$0xff]
  %v42 = vld [vmem:[%s0 + $0xf8] sm:$0xff]
  %v43 = vld [vmem:[%s0 + $0x100] sm:$0xff]
  %v44 = vld [vmem:[%s0 + $0x108] sm:$0xff]
  %v45 = vld [vmem:[%s0 + $0x110] sm:$0xff]
  %v46 = vld [vmem:[%s0 + $0x118] sm:$0xff]
  %v47 = vld [vmem:[%s0 + $0x120] sm:$0xff]
  %v48 = vld [vmem:[%s0 + $0x128] sm:$0xff]
  %v49 = vld [vmem:[%s0 + $0x130] sm:$0xff]
  %v50 = vld [vmem:[%s0 + $0x138] sm:$0xff]
  %v51 = vld [vmem:[%s0 + $0x140] sm:$0xff]
  %v52 = vld [vmem:[%s0 + $0x148] sm:$0xff]
  %v53 = vld [vmem:[%s0 + $0x150] sm:$0xff]
  %v54 = vld [vmem:[%s0 + $0x158] sm:$0xff]
  %v55 = vld [vmem:[%s0 + $0x160] sm:$0xff]
  %v56 = vld [vmem:[%s0 + $0x168] sm:$0xff]
  %v57 = vld [vmem:[%s0 + $0x170] sm:$0xff]
  %v58 = vld [vmem:[%s0 + $0x178] sm:$0xff]
  %v59 = vld [vmem:[%s0 + $0x180] sm:$0xff]
  %v60 = vld [vmem:[%s0 + $0x188] sm:$0xff]
  %v61 = vld [vmem:[%s0 + $0x190] sm:$0xff]
  %v62 = vld [vmem:[%s0 + $0x198] sm:$0xff]
  %v63 = vld [vmem:[%s0 + $0x1a0] sm:$0xff]
  %v64 = vld [vmem:[%s0 + $0x1a8] sm:$0xff]
  %v65 = vld [vmem:[%s0 + $0x1b0] sm:$0xff]
  %v66 = vld [vmem:[%s0 + $0x1b8] sm:$0xff]
  %v67 = vld [vmem:[%s0 + $0x1c0] sm:$0xff]
  %v68 = vld [vmem:[%s0 + $0x1c8] sm:$0xff]
  %v69 = vld [vmem:[%s0 + $0x1d0] sm:$0xff]
  %v70 = vld [vmem:[%s0 + $0x1d8] sm:$0xff]
  %v71 = vld [vmem:[%s0 + $0x1e0] sm:$0xff]
  %v72 = vld [vmem:[%s0 + $0x1e8] sm:$0xff]
  %v73 = vld [vmem:[%s0 + $0x1f0] sm:$0xff]
  %v74 = vld [vmem:[%s0 + $0x1f8] sm:$0xff]
  %v75 = vld [vmem:[%s1] sm:$0xf]
  %v76 = vld [vmem:[%s1 + $0x4] sm:$0xf]
  %v77 = vld [vmem:[%s1 + $0x8] sm:$0xf]
  %v78 = vld [vmem:[%s1 + $0xc] sm:$0xf]
  %v79 = vld [vmem:[%s1 + $0x10] sm:$0xf]
  %v80 = vld [vmem:[%s1 + $0x14] sm:$0xf]
  %v81 = vld [vmem:[%s1 + $0x18] sm:$0xf]
  %v82 = vld [vmem:[%s1 + $0x1c] sm:$0xf]
  %v83 = vld [vmem:[%s1 + $0x20] sm:$0xf]
  %v84 = vld [vmem:[%s1 + $0x24] sm:$0xf]
  %v85 = vld [vmem:[%s1 + $0x28] sm:$0xf]
  %v86 = vld [vmem:[%s1 + $0x2c] sm:$0xf]
  %v87 = vld [vmem:[%s1 + $0x30] sm:$0xf]
  %v88 = vld [vmem:[%s1 + $0x34] sm:$0xf]
  %v89 = vld [vmem:[%s1 + $0x38] sm:$0xf]
  %v90 = vld [vmem:[%s1 + $0x3c] sm:$0xf]
  %v91 = vld [vmem:[%s1 + $0x40] sm:$0xf]
  %v92 = vld [vmem:[%s1 + $0x44] sm:$0xf]
  %v93 = vld [vmem:[%s1 + $0x48] sm:$0xf]
  %v94 = vld [vmem:[%s1 + $0x4c] sm:$0xf]
  %v95 = vld [vmem:[%s1 + $0x50] sm:$0xf]
  %v96 = vld [vmem:[%s1 + $0x54] sm:$0xf]
  %v97 = vld [vmem:[%s1 + $0x58] sm:$0xf]
  %v98 = vld [vmem:[%s1 + $0x5c] sm:$0xf]
  %v99 = vld [vmem:[%s1 + $0x60] sm:$0xf]
  %v100 = vld [vmem:[%s1 + $0x64] sm:$0xf]
  %v101 = vld [vmem:[%s1 + $0x68] sm:$0xf]
  %v102 = vld [vmem:[%s1 + $0x6c] sm:$0xf]
  %v103 = vld [vmem:[%s1 + $0x70] sm:$0xf]
  %v104 = vld [vmem:[%s1 + $0x74] sm:$0xf]
  %v105 = vld [vmem:[%s1 + $0x78] sm:$0xf]
  %v106 = vld [vmem:[%s1 + $0x7c] sm:$0xf]
  %v171 = vunpack.c.l.b16 %v11
  %v172 = vunpack.c.h.b16 %v11
  %v173 = vunpack.c.l.b16 %v12
  %v174 = vunpack.c.h.b16 %v12
  %v175 = vunpack.c.l.b16 %v13
  %v176 = vunpack.c.h.b16 %v13
  %v177 = vunpack.c.l.b16 %v14
  %v178 = vunpack.c.h.b16 %v14
  %v179 = vunpack.c.l.b16 %v15
  %v180 = vunpack.c.h.b16 %v15
  %v181 = vunpack.c.l.b16 %v16
  %v182 = vunpack.c.h.b16 %v16
  %v183 = vunpack.c.l.b16 %v17
  %v184 = vunpack.c.h.b16 %v17
  %v185 = vunpack.c.l.b16 %v18
  %v186 = vunpack.c.h.b16 %v18
  %v187 = vunpack.c.l.b16 %v19
  %v188 = vunpack.c.h.b16 %v19
  %v189 = vunpack.c.l.b16 %v20
  %v190 = vunpack.c.h.b16 %v20
  %v191 = vunpack.c.l.b16 %v21
  %v192 = vunpack.c.h.b16 %v21
  %v193 = vunpack.c.l.b16 %v22
  %v194 = vunpack.c.h.b16 %v22
  %v195 = vunpack.c.l.b16 %v23
  %v196 = vunpack.c.h.b16 %v23
  %v197 = vunpack.c.l.b16 %v24
  %v198 = vunpack.c.h.b16 %v24
  %v199 = vunpack.c.l.b16 %v25
  %v200 = vunpack.c.h.b16 %v25
  %v201 = vunpack.c.l.b16 %v26
  %v202 = vunpack.c.h.b16 %v26
  %v203 = vunpack.c.l.b16 %v27
  %v204 = vunpack.c.h.b16 %v27
  %v205 = vunpack.c.l.b16 %v28
  %v206 = vunpack.c.h.b16 %v28
  %v207 = vunpack.c.l.b16 %v29
  %v208 = vunpack.c.h.b16 %v29
  %v209 = vunpack.c.l.b16 %v30
  %v210 = vunpack.c.h.b16 %v30
  %v211 = vunpack.c.l.b16 %v31
  %v212 = vunpack.c.h.b16 %v31
  %v213 = vunpack.c.l.b16 %v32
  %v214 = vunpack.c.h.b16 %v32
  %v215 = vunpack.c.l.b16 %v33
  %v216 = vunpack.c.h.b16 %v33
  %v217 = vunpack.c.l.b16 %v34
  %v218 = vunpack.c.h.b16 %v34
  %v219 = vunpack.c.l.b16 %v35
  %v220 = vunpack.c.h.b16 %v35
  %v221 = vunpack.c.l.b16 %v36
  %v222 = vunpack.c.h.b16 %v36
  %v223 = vunpack.c.l.b16 %v37
  %v224 = vunpack.c.h.b16 %v37
  %v225 = vunpack.c.l.b16 %v38
  %v226 = vunpack.c.h.b16 %v38
  %v227 = vunpack.c.l.b16 %v39
  %v228 = vunpack.c.h.b16 %v39
  %v229 = vunpack.c.l.b16 %v40
  %v230 = vunpack.c.h.b16 %v40
  %v231 = vunpack.c.l.b16 %v41
  %v232 = vunpack.c.h.b16 %v41
  %v233 = vunpack.c.l.b16 %v42
  %v234 = vunpack.c.h.b16 %v42
  %v235 = vunpack.c.l.b16 %v43
  %v236 = vunpack.c.h.b16 %v43
  %v237 = vunpack.c.l.b16 %v44
  %v238 = vunpack.c.h.b16 %v44
  %v239 = vunpack.c.l.b16 %v45
  %v240 = vunpack.c.h.b16 %v45
  %v241 = vunpack.c.l.b16 %v46
  %v242 = vunpack.c.h.b16 %v46
  %v243 = vunpack.c.l.b16 %v47
  %v244 = vunpack.c.h.b16 %v47
  %v245 = vunpack.c.l.b16 %v48
  %v246 = vunpack.c.h.b16 %v48
  %v247 = vunpack.c.l.b16 %v49
  %v248 = vunpack.c.h.b16 %v49
  %v249 = vunpack.c.l.b16 %v50
  %v250 = vunpack.c.h.b16 %v50
  %v251 = vunpack.c.l.b16 %v51
  %v252 = vunpack.c.h.b16 %v51
  %v253 = vunpack.c.l.b16 %v52
  %v254 = vunpack.c.h.b16 %v52
  %v255 = vunpack.c.l.b16 %v53
  %v256 = vunpack.c.h.b16 %v53
  %v257 = vunpack.c.l.b16 %v54
  %v258 = vunpack.c.h.b16 %v54
  %v259 = vunpack.c.l.b16 %v55
  %v260 = vunpack.c.h.b16 %v55
  %v261 = vunpack.c.l.b16 %v56
  %v262 = vunpack.c.h.b16 %v56
  %v263 = vunpack.c.l.b16 %v57
  %v264 = vunpack.c.h.b16 %v57
  %v265 = vunpack.c.l.b16 %v58
  %v266 = vunpack.c.h.b16 %v58
  %v267 = vunpack.c.l.b16 %v59
  %v268 = vunpack.c.h.b16 %v59
  %v269 = vunpack.c.l.b16 %v60
  %v270 = vunpack.c.h.b16 %v60
  %v271 = vunpack.c.l.b16 %v61
  %v272 = vunpack.c.h.b16 %v61
  %v273 = vunpack.c.l.b16 %v62
  %v274 = vunpack.c.h.b16 %v62
  %v275 = vunpack.c.l.b16 %v63
  %v276 = vunpack.c.h.b16 %v63
  %v277 = vunpack.c.l.b16 %v64
  %v278 = vunpack.c.h.b16 %v64
  %v279 = vunpack.c.l.b16 %v65
  %v280 = vunpack.c.h.b16 %v65
  %v281 = vunpack.c.l.b16 %v66
  %v282 = vunpack.c.h.b16 %v66
  %v283 = vunpack.c.l.b16 %v67
  %v284 = vunpack.c.h.b16 %v67
  %v285 = vunpack.c.l.b16 %v68
  %v286 = vunpack.c.h.b16 %v68
  %v287 = vunpack.c.l.b16 %v69
  %v288 = vunpack.c.h.b16 %v69
  %v289 = vunpack.c.l.b16 %v70
  %v290 = vunpack.c.h.b16 %v70
  %v291 = vunpack.c.l.b16 %v71
  %v292 = vunpack.c.h.b16 %v71
  %v293 = vunpack.c.l.b16 %v72
  %v294 = vunpack.c.h.b16 %v72
  %v295 = vunpack.c.l.b16 %v73
  %v296 = vunpack.c.h.b16 %v73
  %v297 = vunpack.c.l.b16 %v74
  %v298 = vunpack.c.h.b16 %v74
  %v299 = vpack.c.b16 %v173, %v171
  %v300 = vpack.c.b16 %v174, %v172
  %v301 = vpack.c.b16 %v177, %v175
  %v302 = vpack.c.b16 %v178, %v176
  %v303 = vpack.c.b16 %v181, %v179
  %v304 = vpack.c.b16 %v182, %v180
  %v305 = vpack.c.b16 %v185, %v183
  %v306 = vpack.c.b16 %v186, %v184
  %v307 = vpack.c.b16 %v189, %v187
  %v308 = vpack.c.b16 %v190, %v188
  %v309 = vpack.c.b16 %v193, %v191
  %v310 = vpack.c.b16 %v194, %v192
  %v311 = vpack.c.b16 %v197, %v195
  %v312 = vpack.c.b16 %v198, %v196
  %v313 = vpack.c.b16 %v201, %v199
  %v314 = vpack.c.b16 %v202, %v200
  %v315 = vpack.c.b16 %v205, %v203
  %v316 = vpack.c.b16 %v206, %v204
  %v317 = vpack.c.b16 %v209, %v207
  %v318 = vpack.c.b16 %v210, %v208
  %v319 = vpack.c.b16 %v213, %v211
  %v320 = vpack.c.b16 %v214, %v212
  %v321 = vpack.c.b16 %v217, %v215
  %v322 = vpack.c.b16 %v218, %v216
  %v323 = vpack.c.b16 %v221, %v219
  %v324 = vpack.c.b16 %v222, %v220
  %v325 = vpack.c.b16 %v225, %v223
  %v326 = vpack.c.b16 %v226, %v224
  %v327 = vpack.c.b16 %v229, %v227
  %v328 = vpack.c.b16 %v230, %v228
  %v329 = vpack.c.b16 %v233, %v231
  %v330 = vpack.c.b16 %v234, %v232
  %v331 = vpack.c.b16 %v237, %v235
  %v332 = vpack.c.b16 %v238, %v236
  %v333 = vpack.c.b16 %v241, %v239
  %v334 = vpack.c.b16 %v242, %v240
  %v335 = vpack.c.b16 %v245, %v243
  %v336 = vpack.c.b16 %v246, %v244
  %v337 = vpack.c.b16 %v249, %v247
  %v338 = vpack.c.b16 %v250, %v248
  %v339 = vpack.c.b16 %v253, %v251
  %v340 = vpack.c.b16 %v254, %v252
  %v341 = vpack.c.b16 %v257, %v255
  %v342 = vpack.c.b16 %v258, %v256
  %v343 = vpack.c.b16 %v261, %v259
  %v344 = vpack.c.b16 %v262, %v260
  %v345 = vpack.c.b16 %v265, %v263
  %v346 = vpack.c.b16 %v266, %v264
  %v347 = vpack.c.b16 %v269, %v267
  %v348 = vpack.c.b16 %v270, %v268
  %v349 = vpack.c.b16 %v273, %v271
  %v350 = vpack.c.b16 %v274, %v272
  %v351 = vpack.c.b16 %v277, %v275
  %v352 = vpack.c.b16 %v278, %v276
  %v353 = vpack.c.b16 %v281, %v279
  %v354 = vpack.c.b16 %v282, %v280
  %v355 = vpack.c.b16 %v285, %v283
  %v356 = vpack.c.b16 %v286, %v284
  %v357 = vpack.c.b16 %v289, %v287
  %v358 = vpack.c.b16 %v290, %v288
  %v359 = vpack.c.b16 %v293, %v291
  %v360 = vpack.c.b16 %v294, %v292
  %v361 = vpack.c.b16 %v297, %v295
  %v362 = vpack.c.b16 %v298, %v296
  %v459 = vunpack.c.l.b16 %v75
  %v460 = vunpack.c.l.b16 %v76
  %v461 = vunpack.c.l.b16 %v77
  %v462 = vunpack.c.l.b16 %v78
  %v463 = vunpack.c.l.b16 %v79
  %v464 = vunpack.c.l.b16 %v80
  %v465 = vunpack.c.l.b16 %v81
  %v466 = vunpack.c.l.b16 %v82
  %v467 = vunpack.c.l.b16 %v83
  %v468 = vunpack.c.l.b16 %v84
  %v469 = vunpack.c.l.b16 %v85
  %v470 = vunpack.c.l.b16 %v86
  %v471 = vunpack.c.l.b16 %v87
  %v472 = vunpack.c.l.b16 %v88
  %v473 = vunpack.c.l.b16 %v89
  %v474 = vunpack.c.l.b16 %v90
  %v475 = vunpack.c.l.b16 %v91
  %v476 = vunpack.c.l.b16 %v92
  %v477 = vunpack.c.l.b16 %v93
  %v478 = vunpack.c.l.b16 %v94
  %v479 = vunpack.c.l.b16 %v95
  %v480 = vunpack.c.l.b16 %v96
  %v481 = vunpack.c.l.b16 %v97
  %v482 = vunpack.c.l.b16 %v98
  %v483 = vunpack.c.l.b16 %v99
  %v484 = vunpack.c.l.b16 %v100
  %v485 = vunpack.c.l.b16 %v101
  %v486 = vunpack.c.l.b16 %v102
  %v487 = vunpack.c.l.b16 %v103
  %v488 = vunpack.c.l.b16 %v104
  %v489 = vunpack.c.l.b16 %v105
  %v490 = vunpack.c.l.b16 %v106
  %v491 = vpack.c.b16 %v460, %v459
  %v492 = vpack.c.b16 %v462, %v461
  %v493 = vpack.c.b16 %v464, %v463
  %v494 = vpack.c.b16 %v466, %v465
  %v495 = vpack.c.b16 %v468, %v467
  %v496 = vpack.c.b16 %v470, %v469
  %v497 = vpack.c.b16 %v472, %v471
  %v498 = vpack.c.b16 %v474, %v473
  %v499 = vpack.c.b16 %v476, %v475
  %v500 = vpack.c.b16 %v478, %v477
  %v501 = vpack.c.b16 %v480, %v479
  %v502 = vpack.c.b16 %v482, %v481
  %v503 = vpack.c.b16 %v484, %v483
  %v504 = vpack.c.b16 %v486, %v485
  %v505 = vpack.c.b16 %v488, %v487
  %v506 = vpack.c.b16 %v490, %v489
  %523 = vmatpush.bf16.msra.mxu0 %v498
  %524 = vmatpush.bf16.msra.mxu0 %v497
  %525 = vmatpush.bf16.msra.mxu0 %v496
  %526 = vmatpush.bf16.msra.mxu0 %v495
  %527 = vmatpush.bf16.msra.mxu0 %v494
  %528 = vmatpush.bf16.msra.mxu0 %v493
  %529 = vmatpush.bf16.msra.mxu0 %v492
  %530 = vmatpush.bf16.msra.mxu0 %v491
  %531 = vmatmul.bf16.gmra.mxu0 %v299
  %v532 = vpop.f32.mrf.mxu0
  %v533 = vadd.f32 0.0, %v532
  %v534 = vpop.f32.mrf.mxu0
  %v535 = vadd.f32 0.0, %v534
  %536 = vmatmul.bf16.gmra.mxu0 %v301
  %v537 = vpop.f32.mrf.mxu0
  %v538 = vadd.f32 0.0, %v537
  %v539 = vpop.f32.mrf.mxu0
  %v540 = vadd.f32 0.0, %v539
  %541 = vmatmul.bf16.gmra.mxu0 %v303
  %v542 = vpop.f32.mrf.mxu0
  %v543 = vadd.f32 0.0, %v542
  %v544 = vpop.f32.mrf.mxu0
  %v545 = vadd.f32 0.0, %v544
  %546 = vmatmul.bf16.gmra.mxu0 %v305
  %v547 = vpop.f32.mrf.mxu0
  %v548 = vadd.f32 0.0, %v547
  %v549 = vpop.f32.mrf.mxu0
  %v550 = vadd.f32 0.0, %v549
  %551 = vmatmul.bf16.gmra.mxu0 %v307
  %v552 = vpop.f32.mrf.mxu0
  %v553 = vadd.f32 0.0, %v552
  %v554 = vpop.f32.mrf.mxu0
  %v555 = vadd.f32 0.0, %v554
  %556 = vmatmul.bf16.gmra.mxu0 %v309
  %v557 = vpop.f32.mrf.mxu0
  %v558 = vadd.f32 0.0, %v557
  %v559 = vpop.f32.mrf.mxu0
  %v560 = vadd.f32 0.0, %v559
  %561 = vmatmul.bf16.gmra.mxu0 %v311
  %v562 = vpop.f32.mrf.mxu0
  %v563 = vadd.f32 0.0, %v562
  %v564 = vpop.f32.mrf.mxu0
  %v565 = vadd.f32 0.0, %v564
  %566 = vmatmul.bf16.gmra.mxu0 %v313
  %v567 = vpop.f32.mrf.mxu0
  %v568 = vadd.f32 0.0, %v567
  %v569 = vpop.f32.mrf.mxu0
  %v570 = vadd.f32 0.0, %v569
  %571 = vmatmul.bf16.gmra.mxu0 %v315
  %v572 = vpop.f32.mrf.mxu0
  %v573 = vadd.f32 0.0, %v572
  %v574 = vpop.f32.mrf.mxu0
  %v575 = vadd.f32 0.0, %v574
  %576 = vmatmul.bf16.gmra.mxu0 %v317
  %v577 = vpop.f32.mrf.mxu0
  %v578 = vadd.f32 0.0, %v577
  %v579 = vpop.f32.mrf.mxu0
  %v580 = vadd.f32 0.0, %v579
  %581 = vmatmul.bf16.gmra.mxu0 %v319
  %v582 = vpop.f32.mrf.mxu0
  %v583 = vadd.f32 0.0, %v582
  %v584 = vpop.f32.mrf.mxu0
  %v585 = vadd.f32 0.0, %v584
  %586 = vmatmul.bf16.gmra.mxu0 %v321
  %v587 = vpop.f32.mrf.mxu0
  %v588 = vadd.f32 0.0, %v587
  %v589 = vpop.f32.mrf.mxu0
  %v590 = vadd.f32 0.0, %v589
  %591 = vmatmul.bf16.gmra.mxu0 %v323
  %v592 = vpop.f32.mrf.mxu0
  %v593 = vadd.f32 0.0, %v592
  %v594 = vpop.f32.mrf.mxu0
  %v595 = vadd.f32 0.0, %v594
  %596 = vmatmul.bf16.gmra.mxu0 %v325
  %v597 = vpop.f32.mrf.mxu0
  %v598 = vadd.f32 0.0, %v597
  %v599 = vpop.f32.mrf.mxu0
  %v600 = vadd.f32 0.0, %v599
  %601 = vmatmul.bf16.gmra.mxu0 %v327
  %v602 = vpop.f32.mrf.mxu0
  %v603 = vadd.f32 0.0, %v602
  %v604 = vpop.f32.mrf.mxu0
  %v605 = vadd.f32 0.0, %v604
  %606 = vmatmul.bf16.gmra.mxu0 %v329
  %v607 = vpop.f32.mrf.mxu0
  %v608 = vadd.f32 0.0, %v607
  %v609 = vpop.f32.mrf.mxu0
  %v610 = vadd.f32 0.0, %v609
  %611 = vmatmul.bf16.gmra.mxu0 %v331
  %v612 = vpop.f32.mrf.mxu0
  %v613 = vadd.f32 0.0, %v612
  %v614 = vpop.f32.mrf.mxu0
  %v615 = vadd.f32 0.0, %v614
  %616 = vmatmul.bf16.gmra.mxu0 %v333
  %v617 = vpop.f32.mrf.mxu0
  %v618 = vadd.f32 0.0, %v617
  %v619 = vpop.f32.mrf.mxu0
  %v620 = vadd.f32 0.0, %v619
  %621 = vmatmul.bf16.gmra.mxu0 %v335
  %v622 = vpop.f32.mrf.mxu0
  %v623 = vadd.f32 0.0, %v622
  %v624 = vpop.f32.mrf.mxu0
  %v625 = vadd.f32 0.0, %v624
  %626 = vmatmul.bf16.gmra.mxu0 %v337
  %v627 = vpop.f32.mrf.mxu0
  %v628 = vadd.f32 0.0, %v627
  %v629 = vpop.f32.mrf.mxu0
  %v630 = vadd.f32 0.0, %v629
  %631 = vmatmul.bf16.gmra.mxu0 %v339
  %v632 = vpop.f32.mrf.mxu0
  %v633 = vadd.f32 0.0, %v632
  %v634 = vpop.f32.mrf.mxu0
  %v635 = vadd.f32 0.0, %v634
  %636 = vmatmul.bf16.gmra.mxu0 %v341
  %v637 = vpop.f32.mrf.mxu0
  %v638 = vadd.f32 0.0, %v637
  %v639 = vpop.f32.mrf.mxu0
  %v640 = vadd.f32 0.0, %v639
  %641 = vmatmul.bf16.gmra.mxu0 %v343
  %v642 = vpop.f32.mrf.mxu0
  %v643 = vadd.f32 0.0, %v642
  %v644 = vpop.f32.mrf.mxu0
  %v645 = vadd.f32 0.0, %v644
  %646 = vmatmul.bf16.gmra.mxu0 %v345
  %v647 = vpop.f32.mrf.mxu0
  %v648 = vadd.f32 0.0, %v647
  %v649 = vpop.f32.mrf.mxu0
  %v650 = vadd.f32 0.0, %v649
  %651 = vmatmul.bf16.gmra.mxu0 %v347
  %v652 = vpop.f32.mrf.mxu0
  %v653 = vadd.f32 0.0, %v652
  %v654 = vpop.f32.mrf.mxu0
  %v655 = vadd.f32 0.0, %v654
  %656 = vmatmul.bf16.gmra.mxu0 %v349
  %v657 = vpop.f32.mrf.mxu0
  %v658 = vadd.f32 0.0, %v657
  %v659 = vpop.f32.mrf.mxu0
  %v660 = vadd.f32 0.0, %v659
  %661 = vmatmul.bf16.gmra.mxu0 %v351
  %v662 = vpop.f32.mrf.mxu0
  %v663 = vadd.f32 0.0, %v662
  %v664 = vpop.f32.mrf.mxu0
  %v665 = vadd.f32 0.0, %v664
  %666 = vmatmul.bf16.gmra.mxu0 %v353
  %v667 = vpop.f32.mrf.mxu0
  %v668 = vadd.f32 0.0, %v667
  %v669 = vpop.f32.mrf.mxu0
  %v670 = vadd.f32 0.0, %v669
  %671 = vmatmul.bf16.gmra.mxu0 %v355
  %v672 = vpop.f32.mrf.mxu0
  %v673 = vadd.f32 0.0, %v672
  %v674 = vpop.f32.mrf.mxu0
  %v675 = vadd.f32 0.0, %v674
  %676 = vmatmul.bf16.gmra.mxu0 %v357
  %v677 = vpop.f32.mrf.mxu0
  %v678 = vadd.f32 0.0, %v677
  %v679 = vpop.f32.mrf.mxu0
  %v680 = vadd.f32 0.0, %v679
  %681 = vmatmul.bf16.gmra.mxu0 %v359
  %v682 = vpop.f32.mrf.mxu0
  %v683 = vadd.f32 0.0, %v682
  %v684 = vpop.f32.mrf.mxu0
  %v685 = vadd.f32 0.0, %v684
  %686 = vmatmul.bf16.gmra.mxu0 %v361
  %v687 = vpop.f32.mrf.mxu0
  %v688 = vadd.f32 0.0, %v687
  %v689 = vpop.f32.mrf.mxu0
  %v690 = vadd.f32 0.0, %v689
  %691 = vdwg.mxu0
  %692 = vmatpush.bf16.msra.mxu0 %v506
  %693 = vmatpush.bf16.msra.mxu0 %v505
  %694 = vmatpush.bf16.msra.mxu0 %v504
  %695 = vmatpush.bf16.msra.mxu0 %v503
  %696 = vmatpush.bf16.msra.mxu0 %v502
  %697 = vmatpush.bf16.msra.mxu0 %v501
  %698 = vmatpush.bf16.msra.mxu0 %v500
  %699 = vmatpush.bf16.msra.mxu0 %v499
  %700 = vmatmul.bf16.gmra.mxu0 %v300
  %v701 = vpop.f32.mrf.mxu0
  %v702 = vadd.f32 %v533, %v701
  %v703 = vpop.f32.mrf.mxu0
  %v704 = vadd.f32 %v535, %v703
  %705 = vmatmul.bf16.gmra.mxu0 %v302
  %v706 = vpop.f32.mrf.mxu0
  %v707 = vadd.f32 %v538, %v706
  %v708 = vpop.f32.mrf.mxu0
  %v709 = vadd.f32 %v540, %v708
  %710 = vmatmul.bf16.gmra.mxu0 %v304
  %v711 = vpop.f32.mrf.mxu0
  %v712 = vadd.f32 %v543, %v711
  %v713 = vpop.f32.mrf.mxu0
  %v714 = vadd.f32 %v545, %v713
  %715 = vmatmul.bf16.gmra.mxu0 %v306
  %v716 = vpop.f32.mrf.mxu0
  %v717 = vadd.f32 %v548, %v716
  %v718 = vpop.f32.mrf.mxu0
  %v719 = vadd.f32 %v550, %v718
  %720 = vmatmul.bf16.gmra.mxu0 %v308
  %v721 = vpop.f32.mrf.mxu0
  %v722 = vadd.f32 %v553, %v721
  %v723 = vpop.f32.mrf.mxu0
  %v724 = vadd.f32 %v555, %v723
  %725 = vmatmul.bf16.gmra.mxu0 %v310
  %v726 = vpop.f32.mrf.mxu0
  %v727 = vadd.f32 %v558, %v726
  %v728 = vpop.f32.mrf.mxu0
  %v729 = vadd.f32 %v560, %v728
  %730 = vmatmul.bf16.gmra.mxu0 %v312
  %v731 = vpop.f32.mrf.mxu0
  %v732 = vadd.f32 %v563, %v731
  %v733 = vpop.f32.mrf.mxu0
  %v734 = vadd.f32 %v565, %v733
  %735 = vmatmul.bf16.gmra.mxu0 %v314
  %v736 = vpop.f32.mrf.mxu0
  %v737 = vadd.f32 %v568, %v736
  %v738 = vpop.f32.mrf.mxu0
  %v739 = vadd.f32 %v570, %v738
  %740 = vmatmul.bf16.gmra.mxu0 %v316
  %v741 = vpop.f32.mrf.mxu0
  %v742 = vadd.f32 %v573, %v741
  %v743 = vpop.f32.mrf.mxu0
  %v744 = vadd.f32 %v575, %v743
  %745 = vmatmul.bf16.gmra.mxu0 %v318
  %v746 = vpop.f32.mrf.mxu0
  %v747 = vadd.f32 %v578, %v746
  %v748 = vpop.f32.mrf.mxu0
  %v749 = vadd.f32 %v580, %v748
  %750 = vmatmul.bf16.gmra.mxu0 %v320
  %v751 = vpop.f32.mrf.mxu0
  %v752 = vadd.f32 %v583, %v751
  %v753 = vpop.f32.mrf.mxu0
  %v754 = vadd.f32 %v585, %v753
  %755 = vmatmul.bf16.gmra.mxu0 %v322
  %v756 = vpop.f32.mrf.mxu0
  %v757 = vadd.f32 %v588, %v756
  %v758 = vpop.f32.mrf.mxu0
  %v759 = vadd.f32 %v590, %v758
  %760 = vmatmul.bf16.gmra.mxu0 %v324
  %v761 = vpop.f32.mrf.mxu0
  %v762 = vadd.f32 %v593, %v761
  %v763 = vpop.f32.mrf.mxu0
  %v764 = vadd.f32 %v595, %v763
  %765 = vmatmul.bf16.gmra.mxu0 %v326
  %v766 = vpop.f32.mrf.mxu0
  %v767 = vadd.f32 %v598, %v766
  %v768 = vpop.f32.mrf.mxu0
  %v769 = vadd.f32 %v600, %v768
  %770 = vmatmul.bf16.gmra.mxu0 %v328
  %v771 = vpop.f32.mrf.mxu0
  %v772 = vadd.f32 %v603, %v771
  %v773 = vpop.f32.mrf.mxu0
  %v774 = vadd.f32 %v605, %v773
  %775 = vmatmul.bf16.gmra.mxu0 %v330
  %v776 = vpop.f32.mrf.mxu0
  %v777 = vadd.f32 %v608, %v776
  %v778 = vpop.f32.mrf.mxu0
  %v779 = vadd.f32 %v610, %v778
  %780 = vmatmul.bf16.gmra.mxu0 %v332
  %v781 = vpop.f32.mrf.mxu0
  %v782 = vadd.f32 %v613, %v781
  %v783 = vpop.f32.mrf.mxu0
  %v784 = vadd.f32 %v615, %v783
  %785 = vmatmul.bf16.gmra.mxu0 %v334
  %v786 = vpop.f32.mrf.mxu0
  %v787 = vadd.f32 %v618, %v786
  %v788 = vpop.f32.mrf.mxu0
  %v789 = vadd.f32 %v620, %v788
  %790 = vmatmul.bf16.gmra.mxu0 %v336
  %v791 = vpop.f32.mrf.mxu0
  %v792 = vadd.f32 %v623, %v791
  %v793 = vpop.f32.mrf.mxu0
  %v794 = vadd.f32 %v625, %v793
  %795 = vmatmul.bf16.gmra.mxu0 %v338
  %v796 = vpop.f32.mrf.mxu0
  %v797 = vadd.f32 %v628, %v796
  %v798 = vpop.f32.mrf.mxu0
  %v799 = vadd.f32 %v630, %v798
  %800 = vmatmul.bf16.gmra.mxu0 %v340
  %v801 = vpop.f32.mrf.mxu0
  %v802 = vadd.f32 %v633, %v801
  %v803 = vpop.f32.mrf.mxu0
  %v804 = vadd.f32 %v635, %v803
  %805 = vmatmul.bf16.gmra.mxu0 %v342
  %v806 = vpop.f32.mrf.mxu0
  %v807 = vadd.f32 %v638, %v806
  %v808 = vpop.f32.mrf.mxu0
  %v809 = vadd.f32 %v640, %v808
  %810 = vmatmul.bf16.gmra.mxu0 %v344
  %v811 = vpop.f32.mrf.mxu0
  %v812 = vadd.f32 %v643, %v811
  %v813 = vpop.f32.mrf.mxu0
  %v814 = vadd.f32 %v645, %v813
  %815 = vmatmul.bf16.gmra.mxu0 %v346
  %v816 = vpop.f32.mrf.mxu0
  %v817 = vadd.f32 %v648, %v816
  %v818 = vpop.f32.mrf.mxu0
  %v819 = vadd.f32 %v650, %v818
  %820 = vmatmul.bf16.gmra.mxu0 %v348
  %v821 = vpop.f32.mrf.mxu0
  %v822 = vadd.f32 %v653, %v821
  %v823 = vpop.f32.mrf.mxu0
  %v824 = vadd.f32 %v655, %v823
  %825 = vmatmul.bf16.gmra.mxu0 %v350
  %v826 = vpop.f32.mrf.mxu0
  %v827 = vadd.f32 %v658, %v826
  %v828 = vpop.f32.mrf.mxu0
  %v829 = vadd.f32 %v660, %v828
  %830 = vmatmul.bf16.gmra.mxu0 %v352
  %v831 = vpop.f32.mrf.mxu0
  %v832 = vadd.f32 %v663, %v831
  %v833 = vpop.f32.mrf.mxu0
  %v834 = vadd.f32 %v665, %v833
  %835 = vmatmul.bf16.gmra.mxu0 %v354
  %v836 = vpop.f32.mrf.mxu0
  %v837 = vadd.f32 %v668, %v836
  %v838 = vpop.f32.mrf.mxu0
  %v839 = vadd.f32 %v670, %v838
  %840 = vmatmul.bf16.gmra.mxu0 %v356
  %v841 = vpop.f32.mrf.mxu0
  %v842 = vadd.f32 %v673, %v841
  %v843 = vpop.f32.mrf.mxu0
  %v844 = vadd.f32 %v675, %v843
  %845 = vmatmul.bf16.gmra.mxu0 %v358
  %v846 = vpop.f32.mrf.mxu0
  %v847 = vadd.f32 %v678, %v846
  %v848 = vpop.f32.mrf.mxu0
  %v849 = vadd.f32 %v680, %v848
  %850 = vmatmul.bf16.gmra.mxu0 %v360
  %v851 = vpop.f32.mrf.mxu0
  %v852 = vadd.f32 %v683, %v851
  %v853 = vpop.f32.mrf.mxu0
  %v854 = vadd.f32 %v685, %v853
  %855 = vmatmul.bf16.gmra.mxu0 %v362
  %v856 = vpop.f32.mrf.mxu0
  %v857 = vadd.f32 %v688, %v856
  %v858 = vpop.f32.mrf.mxu0
  %v859 = vadd.f32 %v690, %v858
  %860 = vdwg.mxu0
  %861 = vst [vmem:[%s2] sm:$0xff] %v702
  %862 = vst [vmem:[%s2 + $0x8] sm:$0xff] %v704
  %863 = vst [vmem:[%s2 + $0x10] sm:$0xff] %v707
  %864 = vst [vmem:[%s2 + $0x18] sm:$0xff] %v709
  %865 = vst [vmem:[%s2 + $0x20] sm:$0xff] %v712
  %866 = vst [vmem:[%s2 + $0x28] sm:$0xff] %v714
  %867 = vst [vmem:[%s2 + $0x30] sm:$0xff] %v717
  %868 = vst [vmem:[%s2 + $0x38] sm:$0xff] %v719
  %869 = vst [vmem:[%s2 + $0x40] sm:$0xff] %v722
  %870 = vst [vmem:[%s2 + $0x48] sm:$0xff] %v724
  %871 = vst [vmem:[%s2 + $0x50] sm:$0xff] %v727
  %872 = vst [vmem:[%s2 + $0x58] sm:$0xff] %v729
  %873 = vst [vmem:[%s2 + $0x60] sm:$0xff] %v732
  %874 = vst [vmem:[%s2 + $0x68] sm:$0xff] %v734
  %875 = vst [vmem:[%s2 + $0x70] sm:$0xff] %v737
  %876 = vst [vmem:[%s2 + $0x78] sm:$0xff] %v739
  %877 = vst [vmem:[%s2 + $0x80] sm:$0xff] %v742
  %878 = vst [vmem:[%s2 + $0x88] sm:$0xff] %v744
  %879 = vst [vmem:[%s2 + $0x90] sm:$0xff] %v747
  %880 = vst [vmem:[%s2 + $0x98] sm:$0xff] %v749
  %881 = vst [vmem:[%s2 + $0xa0] sm:$0xff] %v752
  %882 = vst [vmem:[%s2 + $0xa8] sm:$0xff] %v754
  %883 = vst [vmem:[%s2 + $0xb0] sm:$0xff] %v757
  %884 = vst [vmem:[%s2 + $0xb8] sm:$0xff] %v759
  %885 = vst [vmem:[%s2 + $0xc0] sm:$0xff] %v762
  %886 = vst [vmem:[%s2 + $0xc8] sm:$0xff] %v764
  %887 = vst [vmem:[%s2 + $0xd0] sm:$0xff] %v767
  %888 = vst [vmem:[%s2 + $0xd8] sm:$0xff] %v769
  %889 = vst [vmem:[%s2 + $0xe0] sm:$0xff] %v772
  %890 = vst [vmem:[%s2 + $0xe8] sm:$0xff] %v774
  %891 = vst [vmem:[%s2 + $0xf0] sm:$0xff] %v777
  %892 = vst [vmem:[%s2 + $0xf8] sm:$0xff] %v779
  %893 = vst [vmem:[%s2 + $0x100] sm:$0xff] %v782
  %894 = vst [vmem:[%s2 + $0x108] sm:$0xff] %v784
  %895 = vst [vmem:[%s2 + $0x110] sm:$0xff] %v787
  %896 = vst [vmem:[%s2 + $0x118] sm:$0xff] %v789
  %897 = vst [vmem:[%s2 + $0x120] sm:$0xff] %v792
  %898 = vst [vmem:[%s2 + $0x128] sm:$0xff] %v794
  %899 = vst [vmem:[%s2 + $0x130] sm:$0xff] %v797
  %900 = vst [vmem:[%s2 + $0x138] sm:$0xff] %v799
  %901 = vst [vmem:[%s2 + $0x140] sm:$0xff] %v802
  %902 = vst [vmem:[%s2 + $0x148] sm:$0xff] %v804
  %903 = vst [vmem:[%s2 + $0x150] sm:$0xff] %v807
  %904 = vst [vmem:[%s2 + $0x158] sm:$0xff] %v809
  %905 = vst [vmem:[%s2 + $0x160] sm:$0xff] %v812
  %906 = vst [vmem:[%s2 + $0x168] sm:$0xff] %v814
  %907 = vst [vmem:[%s2 + $0x170] sm:$0xff] %v817
  %908 = vst [vmem:[%s2 + $0x178] sm:$0xff] %v819
  %909 = vst [vmem:[%s2 + $0x180] sm:$0xff] %v822
  %910 = vst [vmem:[%s2 + $0x188] sm:$0xff] %v824
  %911 = vst [vmem:[%s2 + $0x190] sm:$0xff] %v827
  %912 = vst [vmem:[%s2 + $0x198] sm:$0xff] %v829
  %913 = vst [vmem:[%s2 + $0x1a0] sm:$0xff] %v832
  %914 = vst [vmem:[%s2 + $0x1a8] sm:$0xff] %v834
  %915 = vst [vmem:[%s2 + $0x1b0] sm:$0xff] %v837
  %916 = vst [vmem:[%s2 + $0x1b8] sm:$0xff] %v839
  %917 = vst [vmem:[%s2 + $0x1c0] sm:$0xff] %v842
  %918 = vst [vmem:[%s2 + $0x1c8] sm:$0xff] %v844
  %919 = vst [vmem:[%s2 + $0x1d0] sm:$0xff] %v847
  %920 = vst [vmem:[%s2 + $0x1d8] sm:$0xff] %v849
  %921 = vst [vmem:[%s2 + $0x1e0] sm:$0xff] %v852
  %922 = vst [vmem:[%s2 + $0x1e8] sm:$0xff] %v854
  %923 = vst [vmem:[%s2 + $0x1f0] sm:$0xff] %v857
  %924 = vst [vmem:[%s2 + $0x1f8] sm:$0xff] %v859
  // Predicated region
  $region10: #{cnn_kan_forward.8} parent=0 // pred_check
    _
  $region11: #{cnn_kan_forward.8} parent=0 // pred_check_branch
    %926 = sbr.rel (0) target = $region13
  $region12: #{cnn_kan_forward.8} parent=0 // pred_region
    _
  $region13: #{cnn_kan_forward.8} parent=0 // pred_fallthru
    _
  // Predicated region
  $region14: #{cnn_kan_forward.8} parent=0 // pred_check
    _
  $region15: #{cnn_kan_forward.8} parent=0 // pred_check_branch
    %928 = sbr.rel (0) target = $region17
  $region16: #{cnn_kan_forward.8} parent=0 // pred_region
    _
  $region17: #{cnn_kan_forward.8} parent=0 // pred_fallthru
    _

// kernel: cnn_kan_forward.9
$region0: #{cnn_kan_forward.9}
  #allocation0 [shape = 'u32[]', space=smem, size = 0x4, offset = 0x4, fixed_abs, tag = 'smem constant byte address 0x4 - core index']
  #allocation1 [shape = 'u32[72,128]{1,0:T(1,128)}', space=vmem, size = 0x9000, scoped, tag = 'internal scratch']
  %s0 = inlined_call_operand.vmem [shape: bf16[128,640], index: 0, kind: input, shape index: {}]
  %s1 = inlined_call_operand.vmem [shape: bf16[640,128], index: 1, kind: input, shape index: {}]
  %s2 = inlined_call_operand.vmem [shape: f32[128,128], index: 2, kind: output, shape index: {}]
  %s3 = sld [smem:[#allocation0]]
  $region18: #{cnn_kan_forward.9} parent=0
    _
  %s5 = ssub.s32 1, %s3
  %s6 = scalar_select 0, %s5, %s3
  // Predicated region
  $region2: #{cnn_kan_forward.9} parent=0 // pred_check
    _
  $region3: #{cnn_kan_forward.9} parent=0 // pred_check_branch
    %8 = sbr.rel (0) target = $region5
  $region4: #{cnn_kan_forward.9} parent=0 // pred_region
    _
  $region5: #{cnn_kan_forward.9} parent=0 // pred_fallthru
    _
  // Predicated region
  $region6: #{cnn_kan_forward.9} parent=0 // pred_check
    _
  $region7: #{cnn_kan_forward.9} parent=0 // pred_check_branch
    %10 = sbr.rel (0) target = $region9
  $region8: #{cnn_kan_forward.9} parent=0 // pred_region
    _
  $region9: #{cnn_kan_forward.9} parent=0 // pred_fallthru
    _
  %v11 = vld [vmem:[%s0] sm:$0xff]
  %v12 = vld [vmem:[%s0 + $0x8] sm:$0xff]
  %v13 = vld [vmem:[%s0 + $0x10] sm:$0xf]
  %v14 = vld [vmem:[%s0 + $0x14] sm:$0xff]
  %v15 = vld [vmem:[%s0 + $0x1c] sm:$0xff]
  %v16 = vld [vmem:[%s0 + $0x24] sm:$0xf]
  %v17 = vld [vmem:[%s0 + $0x28] sm:$0xff]
  %v18 = vld [vmem:[%s0 + $0x30] sm:$0xff]
  %v19 = vld [vmem:[%s0 + $0x38] sm:$0xf]
  %v20 = vld [vmem:[%s0 + $0x3c] sm:$0xff]
  %v21 = vld [vmem:[%s0 + $0x44] sm:$0xff]
  %v22 = vld [vmem:[%s0 + $0x4c] sm:$0xf]
  %v23 = vld [vmem:[%s0 + $0x50] sm:$0xff]
  %v24 = vld [vmem:[%s0 + $0x58] sm:$0xff]
  %v25 = vld [vmem:[%s0 + $0x60] sm:$0xf]
  %v26 = vld [vmem:[%s0 + $0x64] sm:$0xff]
  %v27 = vld [vmem:[%s0 + $0x6c] sm:$0xff]
  %v28 = vld [vmem:[%s0 + $0x74] sm:$0xf]
  %v29 = vld [vmem:[%s0 + $0x78] sm:$0xff]
  %v30 = vld [vmem:[%s0 + $0x80] sm:$0xff]
  %v31 = vld [vmem:[%s0 + $0x88] sm:$0xf]
  %v32 = vld [vmem:[%s0 + $0x8c] sm:$0xff]
  %v33 = vld [vmem:[%s0 + $0x94] sm:$0xff]
  %v34 = vld [vmem:[%s0 + $0x9c] sm:$0xf]
  %v35 = vld [vmem:[%s0 + $0xa0] sm:$0xff]
  %v36 = vld [vmem:[%s0 + $0xa8] sm:$0xff]
  %v37 = vld [vmem:[%s0 + $0xb0] sm:$0xf]
  %v38 = vld [vmem:[%s0 + $0xb4] sm:$0xff]
  %v39 = vld [vmem:[%s0 + $0xbc] sm:$0xff]
  %v40 = vld [vmem:[%s0 + $0xc4] sm:$0xf]
  %v41 = vld [vmem:[%s0 + $0xc8] sm:$0xff]
  %v42 = vld [vmem:[%s0 + $0xd0] sm:$0xff]
  %v43 = vld [vmem:[%s0 + $0xd8] sm:$0xf]
  %v44 = vld [vmem:[%s0 + $0xdc] sm:$0xff]
  %v45 = vld [vmem:[%s0 + $0xe4] sm:$0xff]
  %v46 = vld [vmem:[%s0 + $0xec] sm:$0xf]
  %v47 = vld [vmem:[%s0 + $0xf0] sm:$0xff]
  %v48 = vld [vmem:[%s0 + $0xf8] sm:$0xff]
  %v49 = vld [vmem:[%s0 + $0x100] sm:$0xf]
  %v50 = vld [vmem:[%s0 + $0x104] sm:$0xff]
  %v51 = vld [vmem:[%s0 + $0x10c] sm:$0xff]
  %v52 = vld [vmem:[%s0 + $0x114] sm:$0xf]
  %v53 = vld [vmem:[%s0 + $0x118] sm:$0xff]
  %v54 = vld [vmem:[%s0 + $0x120] sm:$0xff]
  %v55 = vld [vmem:[%s0 + $0x128] sm:$0xf]
  %v56 = vld [vmem:[%s0 + $0x12c] sm:$0xff]
  %v57 = vld [vmem:[%s0 + $0x134] sm:$0xff]
  %v58 = vld [vmem:[%s0 + $0x13c] sm:$0xf]
  %v59 = vld [vmem:[%s1] sm:$0xf]
  %v60 = vld [vmem:[%s1 + $0x4] sm:$0xf]
  %v61 = vld [vmem:[%s1 + $0x8] sm:$0xf]
  %v62 = vld [vmem:[%s1 + $0xc] sm:$0xf]
  %v63 = vld [vmem:[%s1 + $0x10] sm:$0xf]
  %v64 = vld [vmem:[%s1 + $0x14] sm:$0xf]
  %v65 = vld [vmem:[%s1 + $0x18] sm:$0xf]
  %v66 = vld [vmem:[%s1 + $0x1c] sm:$0xf]
  %v67 = vld [vmem:[%s1 + $0x20] sm:$0xf]
  %v68 = vld [vmem:[%s1 + $0x24] sm:$0xf]
  %v69 = vld [vmem:[%s1 + $0x28] sm:$0xf]
  %v70 = vld [vmem:[%s1 + $0x2c] sm:$0xf]
  %v71 = vld [vmem:[%s1 + $0x30] sm:$0xf]
  %v72 = vld [vmem:[%s1 + $0x34] sm:$0xf]
  %v73 = vld [vmem:[%s1 + $0x38] sm:$0xf]
  %v74 = vld [vmem:[%s1 + $0x3c] sm:$0xf]
  %v75 = vld [vmem:[%s1 + $0x40] sm:$0xf]
  %v76 = vld [vmem:[%s1 + $0x44] sm:$0xf]
  %v77 = vld [vmem:[%s1 + $0x48] sm:$0xf]
  %v78 = vld [vmem:[%s1 + $0x4c] sm:$0xf]
  %v79 = vld [vmem:[%s1 + $0x50] sm:$0xf]
  %v80 = vld [vmem:[%s1 + $0x54] sm:$0xf]
  %v81 = vld [vmem:[%s1 + $0x58] sm:$0xf]
  %v82 = vld [vmem:[%s1 + $0x5c] sm:$0xf]
  %v83 = vld [vmem:[%s1 + $0x60] sm:$0xf]
  %v84 = vld [vmem:[%s1 + $0x64] sm:$0xf]
  %v85 = vld [vmem:[%s1 + $0x68] sm:$0xf]
  %v86 = vld [vmem:[%s1 + $0x6c] sm:$0xf]
  %v87 = vld [vmem:[%s1 + $0x70] sm:$0xf]
  %v88 = vld [vmem:[%s1 + $0x74] sm:$0xf]
  %v89 = vld [vmem:[%s1 + $0x78] sm:$0xf]
  %v90 = vld [vmem:[%s1 + $0x7c] sm:$0xf]
  %v91 = vld [vmem:[%s1 + $0x80] sm:$0xf]
  %v92 = vld [vmem:[%s1 + $0x84] sm:$0xf]
  %v93 = vld [vmem:[%s1 + $0x88] sm:$0xf]
  %v94 = vld [vmem:[%s1 + $0x8c] sm:$0xf]
  %v95 = vld [vmem:[%s1 + $0x90] sm:$0xf]
  %v96 = vld [vmem:[%s1 + $0x94] sm:$0xf]
  %v97 = vld [vmem:[%s1 + $0x98] sm:$0xf]
  %v98 = vld [vmem:[%s1 + $0x9c] sm:$0xf]
  %v99 = vld [vmem:[%s1 + $0xa0] sm:$0xf]
  %v100 = vld [vmem:[%s1 + $0xa4] sm:$0xf]
  %v101 = vld [vmem:[%s1 + $0xa8] sm:$0xf]
  %v102 = vld [vmem:[%s1 + $0xac] sm:$0xf]
  %v103 = vld [vmem:[%s1 + $0xb0] sm:$0xf]
  %v104 = vld [vmem:[%s1 + $0xb4] sm:$0xf]
  %v105 = vld [vmem:[%s1 + $0xb8] sm:$0xf]
  %v106 = vld [vmem:[%s1 + $0xbc] sm:$0xf]
  %v107 = vld [vmem:[%s1 + $0xc0] sm:$0xf]
  %v108 = vld [vmem:[%s1 + $0xc4] sm:$0xf]
  %v109 = vld [vmem:[%s1 + $0xc8] sm:$0xf]
  %v110 = vld [vmem:[%s1 + $0xcc] sm:$0xf]
  %v111 = vld [vmem:[%s1 + $0xd0] sm:$0xf]
  %v112 = vld [vmem:[%s1 + $0xd4] sm:$0xf]
  %v113 = vld [vmem:[%s1 + $0xd8] sm:$0xf]
  %v114 = vld [vmem:[%s1 + $0xdc] sm:$0xf]
  %v115 = vld [vmem:[%s1 + $0xe0] sm:$0xf]
  %v116 = vld [vmem:[%s1 + $0xe4] sm:$0xf]
  %v117 = vld [vmem:[%s1 + $0xe8] sm:$0xf]
  %v118 = vld [vmem:[%s1 + $0xec] sm:$0xf]
  %v119 = vld [vmem:[%s1 + $0xf0] sm:$0xf]
  %v120 = vld [vmem:[%s1 + $0xf4] sm:$0xf]
  %v121 = vld [vmem:[%s1 + $0xf8] sm:$0xf]
  %v122 = vld [vmem:[%s1 + $0xfc] sm:$0xf]
  %v123 = vld [vmem:[%s1 + $0x100] sm:$0xf]
  %v124 = vld [vmem:[%s1 + $0x104] sm:$0xf]
  %v125 = vld [vmem:[%s1 + $0x108] sm:$0xf]
  %v126 = vld [vmem:[%s1 + $0x10c] sm:$0xf]
  %v127 = vld [vmem:[%s1 + $0x110] sm:$0xf]
  %v128 = vld [vmem:[%s1 + $0x114] sm:$0xf]
  %v129 = vld [vmem:[%s1 + $0x118] sm:$0xf]
  %v130 = vld [vmem:[%s1 + $0x11c] sm:$0xf]
  %v131 = vld [vmem:[%s1 + $0x120] sm:$0xf]
  %v132 = vld [vmem:[%s1 + $0x124] sm:$0xf]
  %v133 = vld [vmem:[%s1 + $0x128] sm:$0xf]
  %v134 = vld [vmem:[%s1 + $0x12c] sm:$0xf]
  %v135 = vld [vmem:[%s1 + $0x130] sm:$0xf]
  %v136 = vld [vmem:[%s1 + $0x134] sm:$0xf]
  %v137 = vld [vmem:[%s1 + $0x138] sm:$0xf]
  %v138 = vld [vmem:[%s1 + $0x13c] sm:$0xf]
  %v187 = vunpack.c.l.b16 %v11
  %v188 = vunpack.c.h.b16 %v11
  %v189 = vunpack.c.l.b16 %v12
  %v190 = vunpack.c.h.b16 %v12
  %v191 = vunpack.c.l.b16 %v13
  %v192 = vunpack.c.l.b16 %v14
  %v193 = vunpack.c.h.b16 %v14
  %v194 = vunpack.c.l.b16 %v15
  %v195 = vunpack.c.h.b16 %v15
  %v196 = vunpack.c.l.b16 %v16
  %v197 = vunpack.c.l.b16 %v17
  %v198 = vunpack.c.h.b16 %v17
  %v199 = vunpack.c.l.b16 %v18
  %v200 = vunpack.c.h.b16 %v18
  %v201 = vunpack.c.l.b16 %v19
  %v202 = vunpack.c.l.b16 %v20
  %v203 = vunpack.c.h.b16 %v20
  %v204 = vunpack.c.l.b16 %v21
  %v205 = vunpack.c.h.b16 %v21
  %v206 = vunpack.c.l.b16 %v22
  %v207 = vunpack.c.l.b16 %v23
  %v208 = vunpack.c.h.b16 %v23
  %v209 = vunpack.c.l.b16 %v24
  %v210 = vunpack.c.h.b16 %v24
  %v211 = vunpack.c.l.b16 %v25
  %v212 = vunpack.c.l.b16 %v26
  %v213 = vunpack.c.h.b16 %v26
  %v214 = vunpack.c.l.b16 %v27
  %v215 = vunpack.c.h.b16 %v27
  %v216 = vunpack.c.l.b16 %v28
  %v217 = vunpack.c.l.b16 %v29
  %v218 = vunpack.c.h.b16 %v29
  %v219 = vunpack.c.l.b16 %v30
  %v220 = vunpack.c.h.b16 %v30
  %v221 = vunpack.c.l.b16 %v31
  %v222 = vunpack.c.l.b16 %v32
  %v223 = vunpack.c.h.b16 %v32
  %v224 = vunpack.c.l.b16 %v33
  %v225 = vunpack.c.h.b16 %v33
  %v226 = vunpack.c.l.b16 %v34
  %v227 = vunpack.c.l.b16 %v35
  %v228 = vunpack.c.h.b16 %v35
  %v229 = vunpack.c.l.b16 %v36
  %v230 = vunpack.c.h.b16 %v36
  %v231 = vunpack.c.l.b16 %v37
  %v232 = vunpack.c.l.b16 %v38
  %v233 = vunpack.c.h.b16 %v38
  %v234 = vunpack.c.l.b16 %v39
  %v235 = vunpack.c.h.b16 %v39
  %v236 = vunpack.c.l.b16 %v40
  %v237 = vunpack.c.l.b16 %v41
  %v238 = vunpack.c.h.b16 %v41
  %v239 = vunpack.c.l.b16 %v42
  %v240 = vunpack.c.h.b16 %v42
  %v241 = vunpack.c.l.b16 %v43
  %v242 = vunpack.c.l.b16 %v44
  %v243 = vunpack.c.h.b16 %v44
  %v244 = vunpack.c.l.b16 %v45
  %v245 = vunpack.c.h.b16 %v45
  %v246 = vunpack.c.l.b16 %v46
  %v247 = vunpack.c.l.b16 %v47
  %v248 = vunpack.c.h.b16 %v47
  %v249 = vunpack.c.l.b16 %v48
  %v250 = vunpack.c.h.b16 %v48
  %v251 = vunpack.c.l.b16 %v49
  %v252 = vunpack.c.l.b16 %v50
  %v253 = vunpack.c.h.b16 %v50
  %v254 = vunpack.c.l.b16 %v51
  %v255 = vunpack.c.h.b16 %v51
  %v256 = vunpack.c.l.b16 %v52
  %v257 = vunpack.c.l.b16 %v53
  %v258 = vunpack.c.h.b16 %v53
  %v259 = vunpack.c.l.b16 %v54
  %v260 = vunpack.c.h.b16 %v54
  %v261 = vunpack.c.l.b16 %v55
  %v262 = vunpack.c.l.b16 %v56
  %v263 = vunpack.c.h.b16 %v56
  %v264 = vunpack.c.l.b16 %v57
  %v265 = vunpack.c.h.b16 %v57
  %v266 = vunpack.c.l.b16 %v58
  %v267 = vpack.c.b16 %v192, %v187
  %v268 = vpack.c.b16 %v193, %v188
  %v269 = vpack.c.b16 %v194, %v189
  %v270 = vpack.c.b16 %v195, %v190
  %v271 = vpack.c.b16 %v196, %v191
  %v272 = vpack.c.b16 %v202, %v197
  %v273 = vpack.c.b16 %v203, %v198
  %v274 = vpack.c.b16 %v204, %v199
  %v275 = vpack.c.b16 %v205, %v200
  %v276 = vpack.c.b16 %v206, %v201
  %v277 = vpack.c.b16 %v212, %v207
  %v278 = vpack.c.b16 %v213, %v208
  %v279 = vpack.c.b16 %v214, %v209
  %v280 = vpack.c.b16 %v215, %v210
  %v281 = vpack.c.b16 %v216, %v211
  %v282 = vpack.c.b16 %v222, %v217
  %v283 = vpack.c.b16 %v223, %v218
  %v284 = vpack.c.b16 %v224, %v219
  %v285 = vpack.c.b16 %v225, %v220
  %v286 = vpack.c.b16 %v226, %v221
  %v287 = vpack.c.b16 %v232, %v227
  %v288 = vpack.c.b16 %v233, %v228
  %v289 = vpack.c.b16 %v234, %v229
  %v290 = vpack.c.b16 %v235, %v230
  %v291 = vpack.c.b16 %v236, %v231
  %v292 = vpack.c.b16 %v242, %v237
  %v293 = vpack.c.b16 %v243, %v238
  %v294 = vpack.c.b16 %v244, %v239
  %v295 = vpack.c.b16 %v245, %v240
  %v296 = vpack.c.b16 %v246, %v241
  %v297 = vpack.c.b16 %v252, %v247
  %v298 = vpack.c.b16 %v253, %v248
  %v299 = vpack.c.b16 %v254, %v249
  %v300 = vpack.c.b16 %v255, %v250
  %v301 = vpack.c.b16 %v256, %v251
  %v302 = vpack.c.b16 %v262, %v257
  %v303 = vpack.c.b16 %v263, %v258
  %v304 = vpack.c.b16 %v264, %v259
  %v305 = vpack.c.b16 %v265, %v260
  %v306 = vpack.c.b16 %v266, %v261
  %v427 = vunpack.c.l.b16 %v59
  %v428 = vunpack.c.l.b16 %v60
  %v429 = vunpack.c.l.b16 %v61
  %v430 = vunpack.c.l.b16 %v62
  %v431 = vunpack.c.l.b16 %v63
  %v432 = vunpack.c.l.b16 %v64
  %v433 = vunpack.c.l.b16 %v65
  %v434 = vunpack.c.l.b16 %v66
  %v435 = vunpack.c.l.b16 %v67
  %v436 = vunpack.c.l.b16 %v68
  %v437 = vunpack.c.l.b16 %v69
  %v438 = vunpack.c.l.b16 %v70
  %v439 = vunpack.c.l.b16 %v71
  %v440 = vunpack.c.l.b16 %v72
  %v441 = vunpack.c.l.b16 %v73
  %v442 = vunpack.c.l.b16 %v74
  %v443 = vunpack.c.l.b16 %v75
  %v444 = vunpack.c.l.b16 %v76
  %v445 = vunpack.c.l.b16 %v77
  %v446 = vunpack.c.l.b16 %v78
  %v447 = vunpack.c.l.b16 %v79
  %v448 = vunpack.c.l.b16 %v80
  %v449 = vunpack.c.l.b16 %v81
  %v450 = vunpack.c.l.b16 %v82
  %v451 = vunpack.c.l.b16 %v83
  %v452 = vunpack.c.l.b16 %v84
  %v453 = vunpack.c.l.b16 %v85
  %v454 = vunpack.c.l.b16 %v86
  %v455 = vunpack.c.l.b16 %v87
  %v456 = vunpack.c.l.b16 %v88
  %v457 = vunpack.c.l.b16 %v89
  %v458 = vunpack.c.l.b16 %v90
  %v459 = vunpack.c.l.b16 %v91
  %v460 = vunpack.c.l.b16 %v92
  %v461 = vunpack.c.l.b16 %v93
  %v462 = vunpack.c.l.b16 %v94
  %v463 = vunpack.c.l.b16 %v95
  %v464 = vunpack.c.l.b16 %v96
  %v465 = vunpack.c.l.b16 %v97
  %v466 = vunpack.c.l.b16 %v98
  %v467 = vunpack.c.l.b16 %v99
  %v468 = vunpack.c.l.b16 %v100
  %v469 = vunpack.c.l.b16 %v101
  %v470 = vunpack.c.l.b16 %v102
  %v471 = vunpack.c.l.b16 %v103
  %v472 = vunpack.c.l.b16 %v104
  %v473 = vunpack.c.l.b16 %v105
  %v474 = vunpack.c.l.b16 %v106
  %v475 = vunpack.c.l.b16 %v107
  %v476 = vunpack.c.l.b16 %v108
  %v477 = vunpack.c.l.b16 %v109
  %v478 = vunpack.c.l.b16 %v110
  %v479 = vunpack.c.l.b16 %v111
  %v480 = vunpack.c.l.b16 %v112
  %v481 = vunpack.c.l.b16 %v113
  %v482 = vunpack.c.l.b16 %v114
  %v483 = vunpack.c.l.b16 %v115
  %v484 = vunpack.c.l.b16 %v116
  %v485 = vunpack.c.l.b16 %v117
  %v486 = vunpack.c.l.b16 %v118
  %v487 = vunpack.c.l.b16 %v119
  %v488 = vunpack.c.l.b16 %v120
  %v489 = vunpack.c.l.b16 %v121
  %v490 = vunpack.c.l.b16 %v122
  %v491 = vunpack.c.l.b16 %v123
  %v492 = vunpack.c.l.b16 %v124
  %v493 = vunpack.c.l.b16 %v125
  %v494 = vunpack.c.l.b16 %v126
  %v495 = vunpack.c.l.b16 %v127
  %v496 = vunpack.c.l.b16 %v128
  %v497 = vunpack.c.l.b16 %v129
  %v498 = vunpack.c.l.b16 %v130
  %v499 = vunpack.c.l.b16 %v131
  %v500 = vunpack.c.l.b16 %v132
  %v501 = vunpack.c.l.b16 %v133
  %v502 = vunpack.c.l.b16 %v134
  %v503 = vunpack.c.l.b16 %v135
  %v504 = vunpack.c.l.b16 %v136
  %v505 = vunpack.c.l.b16 %v137
  %v506 = vunpack.c.l.b16 %v138
  %v507 = vpack.c.b16 %v428, %v427
  %v508 = vpack.c.b16 %v430, %v429
  %v509 = vpack.c.b16 %v432, %v431
  %v510 = vpack.c.b16 %v434, %v433
  %v511 = vpack.c.b16 %v436, %v435
  %v512 = vpack.c.b16 %v438, %v437
  %v513 = vpack.c.b16 %v440, %v439
  %v514 = vpack.c.b16 %v442, %v441
  %v515 = vpack.c.b16 %v444, %v443
  %v516 = vpack.c.b16 %v446, %v445
  %v517 = vpack.c.b16 %v448, %v447
  %v518 = vpack.c.b16 %v450, %v449
  %v519 = vpack.c.b16 %v452, %v451
  %v520 = vpack.c.b16 %v454, %v453
  %v521 = vpack.c.b16 %v456, %v455
  %v522 = vpack.c.b16 %v458, %v457
  %v523 = vpack.c.b16 %v460, %v459
  %v524 = vpack.c.b16 %v462, %v461
  %v525 = vpack.c.b16 %v464, %v463
  %v526 = vpack.c.b16 %v466, %v465
  %v527 = vpack.c.b16 %v468, %v467
  %v528 = vpack.c.b16 %v470, %v469
  %v529 = vpack.c.b16 %v472, %v471
  %v530 = vpack.c.b16 %v474, %v473
  %v531 = vpack.c.b16 %v476, %v475
  %v532 = vpack.c.b16 %v478, %v477
  %v533 = vpack.c.b16 %v480, %v479
  %v534 = vpack.c.b16 %v482, %v481
  %v535 = vpack.c.b16 %v484, %v483
  %v536 = vpack.c.b16 %v486, %v485
  %v537 = vpack.c.b16 %v488, %v487
  %v538 = vpack.c.b16 %v490, %v489
  %v539 = vpack.c.b16 %v492, %v491
  %v540 = vpack.c.b16 %v494, %v493
  %v541 = vpack.c.b16 %v496, %v495
  %v542 = vpack.c.b16 %v498, %v497
  %v543 = vpack.c.b16 %v500, %v499
  %v544 = vpack.c.b16 %v502, %v501
  %v545 = vpack.c.b16 %v504, %v503
  %v546 = vpack.c.b16 %v506, %v505
  %587 = vmatpush.bf16.msra.mxu0 %v514
  %588 = vmatpush.bf16.msra.mxu0 %v513
  %589 = vmatpush.bf16.msra.mxu0 %v512
  %590 = vmatpush.bf16.msra.mxu0 %v511
  %591 = vmatpush.bf16.msra.mxu0 %v510
  %592 = vmatpush.bf16.msra.mxu0 %v509
  %593 = vmatpush.bf16.msra.mxu0 %v508
  %594 = vmatpush.bf16.msra.mxu0 %v507
  %595 = vmatmul.bf16.gmra.mxu0 %v267
  %v596 = vpop.f32.mrf.mxu0
  %v597 = vadd.f32 0.0, %v596
  %v598 = vpop.f32.mrf.mxu0
  %v599 = vadd.f32 0.0, %v598
  %600 = vmatmul.bf16.gmra.mxu0 %v272
  %v601 = vpop.f32.mrf.mxu0
  %v602 = vadd.f32 0.0, %v601
  %v603 = vpop.f32.mrf.mxu0
  %v604 = vadd.f32 0.0, %v603
  %605 = vmatmul.bf16.gmra.mxu0 %v277
  %v606 = vpop.f32.mrf.mxu0
  %v607 = vadd.f32 0.0, %v606
  %v608 = vpop.f32.mrf.mxu0
  %v609 = vadd.f32 0.0, %v608
  %610 = vmatmul.bf16.gmra.mxu0 %v282
  %v611 = vpop.f32.mrf.mxu0
  %v612 = vadd.f32 0.0, %v611
  %v613 = vpop.f32.mrf.mxu0
  %v614 = vadd.f32 0.0, %v613
  %615 = vmatmul.bf16.gmra.mxu0 %v287
  %v616 = vpop.f32.mrf.mxu0
  %v617 = vadd.f32 0.0, %v616
  %v618 = vpop.f32.mrf.mxu0
  %v619 = vadd.f32 0.0, %v618
  %620 = vmatmul.bf16.gmra.mxu0 %v292
  %v621 = vpop.f32.mrf.mxu0
  %v622 = vadd.f32 0.0, %v621
  %v623 = vpop.f32.mrf.mxu0
  %v624 = vadd.f32 0.0, %v623
  %625 = vmatmul.bf16.gmra.mxu0 %v297
  %v626 = vpop.f32.mrf.mxu0
  %v627 = vadd.f32 0.0, %v626
  %v628 = vpop.f32.mrf.mxu0
  %v629 = vadd.f32 0.0, %v628
  %630 = vmatmul.bf16.gmra.mxu0 %v302
  %v631 = vpop.f32.mrf.mxu0
  %v632 = vadd.f32 0.0, %v631
  %v633 = vpop.f32.mrf.mxu0
  %v634 = vadd.f32 0.0, %v633
  %635 = vdwg.mxu0
  %636 = vmatpush.bf16.msra.mxu0 %v522
  %637 = vmatpush.bf16.msra.mxu0 %v521
  %638 = vmatpush.bf16.msra.mxu0 %v520
  %639 = vmatpush.bf16.msra.mxu0 %v519
  %640 = vmatpush.bf16.msra.mxu0 %v518
  %641 = vmatpush.bf16.msra.mxu0 %v517
  %642 = vmatpush.bf16.msra.mxu0 %v516
  %643 = vmatpush.bf16.msra.mxu0 %v515
  %644 = vmatmul.bf16.gmra.mxu0 %v268
  %v645 = vpop.f32.mrf.mxu0
  %v646 = vadd.f32 %v597, %v645
  %v647 = vpop.f32.mrf.mxu0
  %v648 = vadd.f32 %v599, %v647
  %649 = vmatmul.bf16.gmra.mxu0 %v273
  %v650 = vpop.f32.mrf.mxu0
  %v651 = vadd.f32 %v602, %v650
  %v652 = vpop.f32.mrf.mxu0
  %v653 = vadd.f32 %v604, %v652
  %654 = vmatmul.bf16.gmra.mxu0 %v278
  %v655 = vpop.f32.mrf.mxu0
  %v656 = vadd.f32 %v607, %v655
  %v657 = vpop.f32.mrf.mxu0
  %v658 = vadd.f32 %v609, %v657
  %659 = vmatmul.bf16.gmra.mxu0 %v283
  %v660 = vpop.f32.mrf.mxu0
  %v661 = vadd.f32 %v612, %v660
  %v662 = vpop.f32.mrf.mxu0
  %v663 = vadd.f32 %v614, %v662
  %664 = vmatmul.bf16.gmra.mxu0 %v288
  %v665 = vpop.f32.mrf.mxu0
  %v666 = vadd.f32 %v617, %v665
  %v667 = vpop.f32.mrf.mxu0
  %v668 = vadd.f32 %v619, %v667
  %669 = vmatmul.bf16.gmra.mxu0 %v293
  %v670 = vpop.f32.mrf.mxu0
  %v671 = vadd.f32 %v622, %v670
  %v672 = vpop.f32.mrf.mxu0
  %v673 = vadd.f32 %v624, %v672
  %674 = vmatmul.bf16.gmra.mxu0 %v298
  %v675 = vpop.f32.mrf.mxu0
  %v676 = vadd.f32 %v627, %v675
  %v677 = vpop.f32.mrf.mxu0
  %v678 = vadd.f32 %v629, %v677
  %679 = vmatmul.bf16.gmra.mxu0 %v303
  %v680 = vpop.f32.mrf.mxu0
  %v681 = vadd.f32 %v632, %v680
  %v682 = vpop.f32.mrf.mxu0
  %v683 = vadd.f32 %v634, %v682
  %684 = vdwg.mxu0
  %685 = vmatpush.bf16.msra.mxu0 %v530
  %686 = vmatpush.bf16.msra.mxu0 %v529
  %687 = vmatpush.bf16.msra.mxu0 %v528
  %688 = vmatpush.bf16.msra.mxu0 %v527
  %689 = vmatpush.bf16.msra.mxu0 %v526
  %690 = vmatpush.bf16.msra.mxu0 %v525
  %691 = vmatpush.bf16.msra.mxu0 %v524
  %692 = vmatpush.bf16.msra.mxu0 %v523
  %693 = vmatmul.bf16.gmra.mxu0 %v269
  %v694 = vpop.f32.mrf.mxu0
  %v695 = vadd.f32 %v646, %v694
  %v696 = vpop.f32.mrf.mxu0
  %v697 = vadd.f32 %v648, %v696
  %698 = vmatmul.bf16.gmra.mxu0 %v274
  %v699 = vpop.f32.mrf.mxu0
  %v700 = vadd.f32 %v651, %v699
  %v701 = vpop.f32.mrf.mxu0
  %v702 = vadd.f32 %v653, %v701
  %703 = vmatmul.bf16.gmra.mxu0 %v279
  %v704 = vpop.f32.mrf.mxu0
  %v705 = vadd.f32 %v656, %v704
  %v706 = vpop.f32.mrf.mxu0
  %v707 = vadd.f32 %v658, %v706
  %708 = vmatmul.bf16.gmra.mxu0 %v284
  %v709 = vpop.f32.mrf.mxu0
  %v710 = vadd.f32 %v661, %v709
  %v711 = vpop.f32.mrf.mxu0
  %v712 = vadd.f32 %v663, %v711
  %713 = vmatmul.bf16.gmra.mxu0 %v289
  %v714 = vpop.f32.mrf.mxu0
  %v715 = vadd.f32 %v666, %v714
  %v716 = vpop.f32.mrf.mxu0
  %v717 = vadd.f32 %v668, %v716
  %718 = vmatmul.bf16.gmra.mxu0 %v294
  %v719 = vpop.f32.mrf.mxu0
  %v720 = vadd.f32 %v671, %v719
  %v721 = vpop.f32.mrf.mxu0
  %v722 = vadd.f32 %v673, %v721
  %723 = vmatmul.bf16.gmra.mxu0 %v299
  %v724 = vpop.f32.mrf.mxu0
  %v725 = vadd.f32 %v676, %v724
  %v726 = vpop.f32.mrf.mxu0
  %v727 = vadd.f32 %v678, %v726
  %728 = vmatmul.bf16.gmra.mxu0 %v304
  %v729 = vpop.f32.mrf.mxu0
  %v730 = vadd.f32 %v681, %v729
  %v731 = vpop.f32.mrf.mxu0
  %v732 = vadd.f32 %v683, %v731
  %733 = vdwg.mxu0
  %734 = vmatpush.bf16.msra.mxu0 %v538
  %735 = vmatpush.bf16.msra.mxu0 %v537
  %736 = vmatpush.bf16.msra.mxu0 %v536
  %737 = vmatpush.bf16.msra.mxu0 %v535
  %738 = vmatpush.bf16.msra.mxu0 %v534
  %739 = vmatpush.bf16.msra.mxu0 %v533
  %740 = vmatpush.bf16.msra.mxu0 %v532
  %741 = vmatpush.bf16.msra.mxu0 %v531
  %742 = vmatmul.bf16.gmra.mxu0 %v270
  %v743 = vpop.f32.mrf.mxu0
  %v744 = vadd.f32 %v695, %v743
  %v745 = vpop.f32.mrf.mxu0
  %v746 = vadd.f32 %v697, %v745
  %747 = vmatmul.bf16.gmra.mxu0 %v275
  %v748 = vpop.f32.mrf.mxu0
  %v749 = vadd.f32 %v700, %v748
  %v750 = vpop.f32.mrf.mxu0
  %v751 = vadd.f32 %v702, %v750
  %752 = vmatmul.bf16.gmra.mxu0 %v280
  %v753 = vpop.f32.mrf.mxu0
  %v754 = vadd.f32 %v705, %v753
  %v755 = vpop.f32.mrf.mxu0
  %v756 = vadd.f32 %v707, %v755
  %757 = vmatmul.bf16.gmra.mxu0 %v285
  %v758 = vpop.f32.mrf.mxu0
  %v759 = vadd.f32 %v710, %v758
  %v760 = vpop.f32.mrf.mxu0
  %v761 = vadd.f32 %v712, %v760
  %762 = vmatmul.bf16.gmra.mxu0 %v290
  %v763 = vpop.f32.mrf.mxu0
  %v764 = vadd.f32 %v715, %v763
  %v765 = vpop.f32.mrf.mxu0
  %v766 = vadd.f32 %v717, %v765
  %767 = vmatmul.bf16.gmra.mxu0 %v295
  %v768 = vpop.f32.mrf.mxu0
  %v769 = vadd.f32 %v720, %v768
  %v770 = vpop.f32.mrf.mxu0
  %v771 = vadd.f32 %v722, %v770
  %772 = vmatmul.bf16.gmra.mxu0 %v300
  %v773 = vpop.f32.mrf.mxu0
  %v774 = vadd.f32 %v725, %v773
  %v775 = vpop.f32.mrf.mxu0
  %v776 = vadd.f32 %v727, %v775
  %777 = vmatmul.bf16.gmra.mxu0 %v305
  %v778 = vpop.f32.mrf.mxu0
  %v779 = vadd.f32 %v730, %v778
  %v780 = vpop.f32.mrf.mxu0
  %v781 = vadd.f32 %v732, %v780
  %782 = vdwg.mxu0
  %783 = vmatpush.bf16.msra.mxu0 %v546
  %784 = vmatpush.bf16.msra.mxu0 %v545
  %785 = vmatpush.bf16.msra.mxu0 %v544
  %786 = vmatpush.bf16.msra.mxu0 %v543
  %787 = vmatpush.bf16.msra.mxu0 %v542
  %788 = vmatpush.bf16.msra.mxu0 %v541
  %789 = vmatpush.bf16.msra.mxu0 %v540
  %790 = vmatpush.bf16.msra.mxu0 %v539
  %791 = vmatmul.bf16.gmra.mxu0 %v271
  %v792 = vpop.f32.mrf.mxu0
  %v793 = vadd.f32 %v744, %v792
  %v794 = vpop.f32.mrf.mxu0
  %v795 = vadd.f32 %v746, %v794
  %796 = vmatmul.bf16.gmra.mxu0 %v276
  %v797 = vpop.f32.mrf.mxu0
  %v798 = vadd.f32 %v749, %v797
  %v799 = vpop.f32.mrf.mxu0
  %v800 = vadd.f32 %v751, %v799
  %801 = vmatmul.bf16.gmra.mxu0 %v281
  %v802 = vpop.f32.mrf.mxu0
  %v803 = vadd.f32 %v754, %v802
  %v804 = vpop.f32.mrf.mxu0
  %v805 = vadd.f32 %v756, %v804
  %806 = vmatmul.bf16.gmra.mxu0 %v286
  %v807 = vpop.f32.mrf.mxu0
  %v808 = vadd.f32 %v759, %v807
  %v809 = vpop.f32.mrf.mxu0
  %v810 = vadd.f32 %v761, %v809
  %811 = vmatmul.bf16.gmra.mxu0 %v291
  %v812 = vpop.f32.mrf.mxu0
  %v813 = vadd.f32 %v764, %v812
  %v814 = vpop.f32.mrf.mxu0
  %v815 = vadd.f32 %v766, %v814
  %816 = vmatmul.bf16.gmra.mxu0 %v296
  %v817 = vpop.f32.mrf.mxu0
  %v818 = vadd.f32 %v769, %v817
  %v819 = vpop.f32.mrf.mxu0
  %v820 = vadd.f32 %v771, %v819
  %821 = vmatmul.bf16.gmra.mxu0 %v301
  %v822 = vpop.f32.mrf.mxu0
  %v823 = vadd.f32 %v774, %v822
  %v824 = vpop.f32.mrf.mxu0
  %v825 = vadd.f32 %v776, %v824
  %826 = vmatmul.bf16.gmra.mxu0 %v306
  %v827 = vpop.f32.mrf.mxu0
  %v828 = vadd.f32 %v779, %v827
  %v829 = vpop.f32.mrf.mxu0
  %v830 = vadd.f32 %v781, %v829
  %831 = vdwg.mxu0
  %832 = vst [vmem:[%s2] sm:$0xff] %v793
  %833 = vst [vmem:[%s2 + $0x8] sm:$0xff] %v795
  %834 = vst [vmem:[%s2 + $0x10] sm:$0xff] %v798
  %835 = vst [vmem:[%s2 + $0x18] sm:$0xff] %v800
  %836 = vst [vmem:[%s2 + $0x20] sm:$0xff] %v803
  %837 = vst [vmem:[%s2 + $0x28] sm:$0xff] %v805
  %838 = vst [vmem:[%s2 + $0x30] sm:$0xff] %v808
  %839 = vst [vmem:[%s2 + $0x38] sm:$0xff] %v810
  %840 = vst [vmem:[%s2 + $0x40] sm:$0xff] %v813
  %841 = vst [vmem:[%s2 + $0x48] sm:$0xff] %v815
  %842 = vst [vmem:[%s2 + $0x50] sm:$0xff] %v818
  %843 = vst [vmem:[%s2 + $0x58] sm:$0xff] %v820
  %844 = vst [vmem:[%s2 + $0x60] sm:$0xff] %v823
  %845 = vst [vmem:[%s2 + $0x68] sm:$0xff] %v825
  %846 = vst [vmem:[%s2 + $0x70] sm:$0xff] %v828
  %847 = vst [vmem:[%s2 + $0x78] sm:$0xff] %v830
  // Predicated region
  $region10: #{cnn_kan_forward.9} parent=0 // pred_check
    _
  $region11: #{cnn_kan_forward.9} parent=0 // pred_check_branch
    %849 = sbr.rel (0) target = $region13
  $region12: #{cnn_kan_forward.9} parent=0 // pred_region
    _
  $region13: #{cnn_kan_forward.9} parent=0 // pred_fallthru
    _
  // Predicated region
  $region14: #{cnn_kan_forward.9} parent=0 // pred_check
    _
  $region15: #{cnn_kan_forward.9} parent=0 // pred_check_branch
    %851 = sbr.rel (0) target = $region17
  $region16: #{cnn_kan_forward.9} parent=0 // pred_region
    _
  $region17: #{cnn_kan_forward.9} parent=0 // pred_fallthru
    _

// kernel: cnn_kan_forward.11
$region0: #{cnn_kan_forward.11}
  #allocation0 [shape = 'u32[]', space=smem, size = 0x4, offset = 0x4, fixed_abs, tag = 'smem constant byte address 0x4 - core index']
  #allocation1 [shape = 'u32[72,128]{1,0:T(1,128)}', space=vmem, size = 0x9000, scoped, tag = 'internal scratch']
  %s0 = inlined_call_operand.vmem [shape: bf16[128,128], index: 0, kind: input, shape index: {}]
  %s1 = inlined_call_operand.vmem [shape: bf16[128,128], index: 1, kind: input, shape index: {}]
  %s2 = inlined_call_operand.vmem [shape: f32[128,128], index: 2, kind: output, shape index: {}]
  %s3 = sld [smem:[#allocation0]]
  $region18: #{cnn_kan_forward.11} parent=0
    _
  %s5 = ssub.s32 1, %s3
  %s6 = scalar_select 0, %s5, %s3
  // Predicated region
  $region2: #{cnn_kan_forward.11} parent=0 // pred_check
    _
  $region3: #{cnn_kan_forward.11} parent=0 // pred_check_branch
    %8 = sbr.rel (0) target = $region5
  $region4: #{cnn_kan_forward.11} parent=0 // pred_region
    _
  $region5: #{cnn_kan_forward.11} parent=0 // pred_fallthru
    _
  // Predicated region
  $region6: #{cnn_kan_forward.11} parent=0 // pred_check
    _
  $region7: #{cnn_kan_forward.11} parent=0 // pred_check_branch
    %10 = sbr.rel (0) target = $region9
  $region8: #{cnn_kan_forward.11} parent=0 // pred_region
    _
  $region9: #{cnn_kan_forward.11} parent=0 // pred_fallthru
    _
  %v11 = vld [vmem:[%s0] sm:$0xf]
  %v12 = vld [vmem:[%s0 + $0x4] sm:$0xf]
  %v13 = vld [vmem:[%s0 + $0x8] sm:$0xf]
  %v14 = vld [vmem:[%s0 + $0xc] sm:$0xf]
  %v15 = vld [vmem:[%s0 + $0x10] sm:$0xf]
  %v16 = vld [vmem:[%s0 + $0x14] sm:$0xf]
  %v17 = vld [vmem:[%s0 + $0x18] sm:$0xf]
  %v18 = vld [vmem:[%s0 + $0x1c] sm:$0xf]
  %v19 = vld [vmem:[%s0 + $0x20] sm:$0xf]
  %v20 = vld [vmem:[%s0 + $0x24] sm:$0xf]
  %v21 = vld [vmem:[%s0 + $0x28] sm:$0xf]
  %v22 = vld [vmem:[%s0 + $0x2c] sm:$0xf]
  %v23 = vld [vmem:[%s0 + $0x30] sm:$0xf]
  %v24 = vld [vmem:[%s0 + $0x34] sm:$0xf]
  %v25 = vld [vmem:[%s0 + $0x38] sm:$0xf]
  %v26 = vld [vmem:[%s0 + $0x3c] sm:$0xf]
  %v27 = vld [vmem:[%s1] sm:$0xf]
  %v28 = vld [vmem:[%s1 + $0x4] sm:$0xf]
  %v29 = vld [vmem:[%s1 + $0x8] sm:$0xf]
  %v30 = vld [vmem:[%s1 + $0xc] sm:$0xf]
  %v31 = vld [vmem:[%s1 + $0x10] sm:$0xf]
  %v32 = vld [vmem:[%s1 + $0x14] sm:$0xf]
  %v33 = vld [vmem:[%s1 + $0x18] sm:$0xf]
  %v34 = vld [vmem:[%s1 + $0x1c] sm:$0xf]
  %v35 = vld [vmem:[%s1 + $0x20] sm:$0xf]
  %v36 = vld [vmem:[%s1 + $0x24] sm:$0xf]
  %v37 = vld [vmem:[%s1 + $0x28] sm:$0xf]
  %v38 = vld [vmem:[%s1 + $0x2c] sm:$0xf]
  %v39 = vld [vmem:[%s1 + $0x30] sm:$0xf]
  %v40 = vld [vmem:[%s1 + $0x34] sm:$0xf]
  %v41 = vld [vmem:[%s1 + $0x38] sm:$0xf]
  %v42 = vld [vmem:[%s1 + $0x3c] sm:$0xf]
  %v59 = vunpack.c.l.b16 %v11
  %v60 = vunpack.c.l.b16 %v12
  %v61 = vunpack.c.l.b16 %v13
  %v62 = vunpack.c.l.b16 %v14
  %v63 = vunpack.c.l.b16 %v15
  %v64 = vunpack.c.l.b16 %v16
  %v65 = vunpack.c.l.b16 %v17
  %v66 = vunpack.c.l.b16 %v18
  %v67 = vunpack.c.l.b16 %v19
  %v68 = vunpack.c.l.b16 %v20
  %v69 = vunpack.c.l.b16 %v21
  %v70 = vunpack.c.l.b16 %v22
  %v71 = vunpack.c.l.b16 %v23
  %v72 = vunpack.c.l.b16 %v24
  %v73 = vunpack.c.l.b16 %v25
  %v74 = vunpack.c.l.b16 %v26
  %v75 = vpack.c.b16 %v60, %v59
  %v76 = vpack.c.b16 %v62, %v61
  %v77 = vpack.c.b16 %v64, %v63
  %v78 = vpack.c.b16 %v66, %v65
  %v79 = vpack.c.b16 %v68, %v67
  %v80 = vpack.c.b16 %v70, %v69
  %v81 = vpack.c.b16 %v72, %v71
  %v82 = vpack.c.b16 %v74, %v73
  %v107 = vunpack.c.l.b16 %v27
  %v108 = vunpack.c.l.b16 %v28
  %v109 = vunpack.c.l.b16 %v29
  %v110 = vunpack.c.l.b16 %v30
  %v111 = vunpack.c.l.b16 %v31
  %v112 = vunpack.c.l.b16 %v32
  %v113 = vunpack.c.l.b16 %v33
  %v114 = vunpack.c.l.b16 %v34
  %v115 = vunpack.c.l.b16 %v35
  %v116 = vunpack.c.l.b16 %v36
  %v117 = vunpack.c.l.b16 %v37
  %v118 = vunpack.c.l.b16 %v38
  %v119 = vunpack.c.l.b16 %v39
  %v120 = vunpack.c.l.b16 %v40
  %v121 = vunpack.c.l.b16 %v41
  %v122 = vunpack.c.l.b16 %v42
  %v123 = vpack.c.b16 %v108, %v107
  %v124 = vpack.c.b16 %v110, %v109
  %v125 = vpack.c.b16 %v112, %v111
  %v126 = vpack.c.b16 %v114, %v113
  %v127 = vpack.c.b16 %v116, %v115
  %v128 = vpack.c.b16 %v118, %v117
  %v129 = vpack.c.b16 %v120, %v119
  %v130 = vpack.c.b16 %v122, %v121
  %139 = vmatpush.bf16.msra.mxu0 %v130
  %140 = vmatpush.bf16.msra.mxu0 %v129
  %141 = vmatpush.bf16.msra.mxu0 %v128
  %142 = vmatpush.bf16.msra.mxu0 %v127
  %143 = vmatpush.bf16.msra.mxu0 %v126
  %144 = vmatpush.bf16.msra.mxu0 %v125
  %145 = vmatpush.bf16.msra.mxu0 %v124
  %146 = vmatpush.bf16.msra.mxu0 %v123
  %147 = vmatmul.bf16.gmra.mxu0 %v75
  %v148 = vpop.f32.mrf.mxu0
  %v149 = vadd.f32 0.0, %v148
  %v150 = vpop.f32.mrf.mxu0
  %v151 = vadd.f32 0.0, %v150
  %152 = vmatmul.bf16.gmra.mxu0 %v76
  %v153 = vpop.f32.mrf.mxu0
  %v154 = vadd.f32 0.0, %v153
  %v155 = vpop.f32.mrf.mxu0
  %v156 = vadd.f32 0.0, %v155
  %157 = vmatmul.bf16.gmra.mxu0 %v77
  %v158 = vpop.f32.mrf.mxu0
  %v159 = vadd.f32 0.0, %v158
  %v160 = vpop.f32.mrf.mxu0
  %v161 = vadd.f32 0.0, %v160
  %162 = vmatmul.bf16.gmra.mxu0 %v78
  %v163 = vpop.f32.mrf.mxu0
  %v164 = vadd.f32 0.0, %v163
  %v165 = vpop.f32.mrf.mxu0
  %v166 = vadd.f32 0.0, %v165
  %167 = vmatmul.bf16.gmra.mxu0 %v79
  %v168 = vpop.f32.mrf.mxu0
  %v169 = vadd.f32 0.0, %v168
  %v170 = vpop.f32.mrf.mxu0
  %v171 = vadd.f32 0.0, %v170
  %172 = vmatmul.bf16.gmra.mxu0 %v80
  %v173 = vpop.f32.mrf.mxu0
  %v174 = vadd.f32 0.0, %v173
  %v175 = vpop.f32.mrf.mxu0
  %v176 = vadd.f32 0.0, %v175
  %177 = vmatmul.bf16.gmra.mxu0 %v81
  %v178 = vpop.f32.mrf.mxu0
  %v179 = vadd.f32 0.0, %v178
  %v180 = vpop.f32.mrf.mxu0
  %v181 = vadd.f32 0.0, %v180
  %182 = vmatmul.bf16.gmra.mxu0 %v82
  %v183 = vpop.f32.mrf.mxu0
  %v184 = vadd.f32 0.0, %v183
  %v185 = vpop.f32.mrf.mxu0
  %v186 = vadd.f32 0.0, %v185
  %187 = vdwg.mxu0
  %188 = vst [vmem:[%s2] sm:$0xff] %v149
  %189 = vst [vmem:[%s2 + $0x8] sm:$0xff] %v151
  %190 = vst [vmem:[%s2 + $0x10] sm:$0xff] %v154
  %191 = vst [vmem:[%s2 + $0x18] sm:$0xff] %v156
  %192 = vst [vmem:[%s2 + $0x20] sm:$0xff] %v159
  %193 = vst [vmem:[%s2 + $0x28] sm:$0xff] %v161
  %194 = vst [vmem:[%s2 + $0x30] sm:$0xff] %v164
  %195 = vst [vmem:[%s2 + $0x38] sm:$0xff] %v166
  %196 = vst [vmem:[%s2 + $0x40] sm:$0xff] %v169
  %197 = vst [vmem:[%s2 + $0x48] sm:$0xff] %v171
  %198 = vst [vmem:[%s2 + $0x50] sm:$0xff] %v174
  %199 = vst [vmem:[%s2 + $0x58] sm:$0xff] %v176
  %200 = vst [vmem:[%s2 + $0x60] sm:$0xff] %v179
  %201 = vst [vmem:[%s2 + $0x68] sm:$0xff] %v181
  %202 = vst [vmem:[%s2 + $0x70] sm:$0xff] %v184
  %203 = vst [vmem:[%s2 + $0x78] sm:$0xff] %v186
  // Predicated region
  $region10: #{cnn_kan_forward.11} parent=0 // pred_check
    _
  $region11: #{cnn_kan_forward.11} parent=0 // pred_check_branch
    %205 = sbr.rel (0) target = $region13
  $region12: #{cnn_kan_forward.11} parent=0 // pred_region
    _
  $region13: #{cnn_kan_forward.11} parent=0 // pred_fallthru
    _
  // Predicated region
  $region14: #{cnn_kan_forward.11} parent=0 // pred_check
    _
  $region15: #{cnn_kan_forward.11} parent=0 // pred_check_branch
    %207 = sbr.rel (0) target = $region17
  $region16: #{cnn_kan_forward.11} parent=0 // pred_region
    _
  $region17: #{cnn_kan_forward.11} parent=0 // pred_fallthru
    _

// kernel: cnn_kan_forward.13
$region0: #{cnn_kan_forward.13}
  #allocation0 [shape = 'u32[]', space=smem, size = 0x4, offset = 0x4, fixed_abs, tag = 'smem constant byte address 0x4 - core index']
  #allocation1 [shape = 'u32[72,128]{1,0:T(1,128)}', space=vmem, size = 0x9000, scoped, tag = 'internal scratch']
  %s0 = inlined_call_operand.vmem [shape: bf16[32,128], index: 0, kind: input, shape index: {}]
  %s1 = inlined_call_operand.vmem [shape: bf16[128,256], index: 1, kind: input, shape index: {}]
  %s2 = inlined_call_operand.vmem [shape: f32[32,256], index: 2, kind: output, shape index: {}]
  %s3 = sld [smem:[#allocation0]]
  $region18: #{cnn_kan_forward.13} parent=0
    _
  %s5 = ssub.s32 1, %s3
  %s6 = scalar_select 0, %s5, %s3
  // Predicated region
  $region2: #{cnn_kan_forward.13} parent=0 // pred_check
    _
  $region3: #{cnn_kan_forward.13} parent=0 // pred_check_branch
    %8 = sbr.rel (0) target = $region5
  $region4: #{cnn_kan_forward.13} parent=0 // pred_region
    _
  $region5: #{cnn_kan_forward.13} parent=0 // pred_fallthru
    _
  // Predicated region
  $region6: #{cnn_kan_forward.13} parent=0 // pred_check
    _
  $region7: #{cnn_kan_forward.13} parent=0 // pred_check_branch
    %10 = sbr.rel (0) target = $region9
  $region8: #{cnn_kan_forward.13} parent=0 // pred_region
    _
  $region9: #{cnn_kan_forward.13} parent=0 // pred_fallthru
    _
  %v11 = vld [vmem:[%s0] sm:$0xf]
  %v12 = vld [vmem:[%s0 + $0x4] sm:$0xf]
  %v13 = vld [vmem:[%s0 + $0x8] sm:$0xf]
  %v14 = vld [vmem:[%s0 + $0xc] sm:$0xf]
  %v15 = vld [vmem:[%s1] sm:$0xff]
  %v16 = vld [vmem:[%s1 + $0x8] sm:$0xff]
  %v17 = vld [vmem:[%s1 + $0x10] sm:$0xff]
  %v18 = vld [vmem:[%s1 + $0x18] sm:$0xff]
  %v19 = vld [vmem:[%s1 + $0x20] sm:$0xff]
  %v20 = vld [vmem:[%s1 + $0x28] sm:$0xff]
  %v21 = vld [vmem:[%s1 + $0x30] sm:$0xff]
  %v22 = vld [vmem:[%s1 + $0x38] sm:$0xff]
  %v23 = vld [vmem:[%s1 + $0x40] sm:$0xff]
  %v24 = vld [vmem:[%s1 + $0x48] sm:$0xff]
  %v25 = vld [vmem:[%s1 + $0x50] sm:$0xff]
  %v26 = vld [vmem:[%s1 + $0x58] sm:$0xff]
  %v27 = vld [vmem:[%s1 + $0x60] sm:$0xff]
  %v28 = vld [vmem:[%s1 + $0x68] sm:$0xff]
  %v29 = vld [vmem:[%s1 + $0x70] sm:$0xff]
  %v30 = vld [vmem:[%s1 + $0x78] sm:$0xff]
  %v35 = vunpack.c.l.b16 %v11
  %v36 = vunpack.c.l.b16 %v12
  %v37 = vunpack.c.l.b16 %v13
  %v38 = vunpack.c.l.b16 %v14
  %v39 = vpack.c.b16 %v36, %v35
  %v40 = vpack.c.b16 %v38, %v37
  %v59 = vunpack.c.l.b16 %v15
  %v60 = vunpack.c.h.b16 %v15
  %v61 = vunpack.c.l.b16 %v16
  %v62 = vunpack.c.h.b16 %v16
  %v63 = vunpack.c.l.b16 %v17
  %v64 = vunpack.c.h.b16 %v17
  %v65 = vunpack.c.l.b16 %v18
  %v66 = vunpack.c.h.b16 %v18
  %v67 = vunpack.c.l.b16 %v19
  %v68 = vunpack.c.h.b16 %v19
  %v69 = vunpack.c.l.b16 %v20
  %v70 = vunpack.c.h.b16 %v20
  %v71 = vunpack.c.l.b16 %v21
  %v72 = vunpack.c.h.b16 %v21
  %v73 = vunpack.c.l.b16 %v22
  %v74 = vunpack.c.h.b16 %v22
  %v75 = vunpack.c.l.b16 %v23
  %v76 = vunpack.c.h.b16 %v23
  %v77 = vunpack.c.l.b16 %v24
  %v78 = vunpack.c.h.b16 %v24
  %v79 = vunpack.c.l.b16 %v25
  %v80 = vunpack.c.h.b16 %v25
  %v81 = vunpack.c.l.b16 %v26
  %v82 = vunpack.c.h.b16 %v26
  %v83 = vunpack.c.l.b16 %v27
  %v84 = vunpack.c.h.b16 %v27
  %v85 = vunpack.c.l.b16 %v28
  %v86 = vunpack.c.h.b16 %v28
  %v87 = vunpack.c.l.b16 %v29
  %v88 = vunpack.c.h.b16 %v29
  %v89 = vunpack.c.l.b16 %v30
  %v90 = vunpack.c.h.b16 %v30
  %v91 = vpack.c.b16 %v61, %v59
  %v92 = vpack.c.b16 %v62, %v60
  %v93 = vpack.c.b16 %v65, %v63
  %v94 = vpack.c.b16 %v66, %v64
  %v95 = vpack.c.b16 %v69, %v67
  %v96 = vpack.c.b16 %v70, %v68
  %v97 = vpack.c.b16 %v73, %v71
  %v98 = vpack.c.b16 %v74, %v72
  %v99 = vpack.c.b16 %v77, %v75
  %v100 = vpack.c.b16 %v78, %v76
  %v101 = vpack.c.b16 %v81, %v79
  %v102 = vpack.c.b16 %v82, %v80
  %v103 = vpack.c.b16 %v85, %v83
  %v104 = vpack.c.b16 %v86, %v84
  %v105 = vpack.c.b16 %v89, %v87
  %v106 = vpack.c.b16 %v90, %v88
  %123 = vmatpush.bf16.msra.mxu0 %v105
  %124 = vmatpush.bf16.msra.mxu0 %v103
  %125 = vmatpush.bf16.msra.mxu0 %v101
  %126 = vmatpush.bf16.msra.mxu0 %v99
  %127 = vmatpush.bf16.msra.mxu0 %v97
  %128 = vmatpush.bf16.msra.mxu0 %v95
  %129 = vmatpush.bf16.msra.mxu0 %v93
  %130 = vmatpush.bf16.msra.mxu0 %v91
  %131 = vmatmul.bf16.gmra.mxu0 %v39
  %v132 = vpop.f32.mrf.mxu0
  %v133 = vadd.f32 0.0, %v132
  %v134 = vpop.f32.mrf.mxu0
  %v135 = vadd.f32 0.0, %v134
  %136 = vmatmul.bf16.gmra.mxu0 %v40
  %v137 = vpop.f32.mrf.mxu0
  %v138 = vadd.f32 0.0, %v137
  %v139 = vpop.f32.mrf.mxu0
  %v140 = vadd.f32 0.0, %v139
  %141 = vdwg.mxu0
  %142 = vmatpush.bf16.msra.mxu0 %v106
  %143 = vmatpush.bf16.msra.mxu0 %v104
  %144 = vmatpush.bf16.msra.mxu0 %v102
  %145 = vmatpush.bf16.msra.mxu0 %v100
  %146 = vmatpush.bf16.msra.mxu0 %v98
  %147 = vmatpush.bf16.msra.mxu0 %v96
  %148 = vmatpush.bf16.msra.mxu0 %v94
  %149 = vmatpush.bf16.msra.mxu0 %v92
  %150 = vmatmul.bf16.gmra.mxu0 %v39
  %v151 = vpop.f32.mrf.mxu0
  %v152 = vadd.f32 0.0, %v151
  %v153 = vpop.f32.mrf.mxu0
  %v154 = vadd.f32 0.0, %v153
  %155 = vmatmul.bf16.gmra.mxu0 %v40
  %v156 = vpop.f32.mrf.mxu0
  %v157 = vadd.f32 0.0, %v156
  %v158 = vpop.f32.mrf.mxu0
  %v159 = vadd.f32 0.0, %v158
  %160 = vdwg.mxu0
  %161 = vst [vmem:[%s2] sm:$0xff] %v133
  %162 = vst [vmem:[%s2 + $0x8] sm:$0xff] %v152
  %163 = vst [vmem:[%s2 + $0x10] sm:$0xff] %v135
  %164 = vst [vmem:[%s2 + $0x18] sm:$0xff] %v154
  %165 = vst [vmem:[%s2 + $0x20] sm:$0xff] %v138
  %166 = vst [vmem:[%s2 + $0x28] sm:$0xff] %v157
  %167 = vst [vmem:[%s2 + $0x30] sm:$0xff] %v140
  %168 = vst [vmem:[%s2 + $0x38] sm:$0xff] %v159
  // Predicated region
  $region10: #{cnn_kan_forward.13} parent=0 // pred_check
    _
  $region11: #{cnn_kan_forward.13} parent=0 // pred_check_branch
    %170 = sbr.rel (0) target = $region13
  $region12: #{cnn_kan_forward.13} parent=0 // pred_region
    _
  $region13: #{cnn_kan_forward.13} parent=0 // pred_fallthru
    _
  // Predicated region
  $region14: #{cnn_kan_forward.13} parent=0 // pred_check
    _
  $region15: #{cnn_kan_forward.13} parent=0 // pred_check_branch
    %172 = sbr.rel (0) target = $region17
  $region16: #{cnn_kan_forward.13} parent=0 // pred_region
    _
  $region17: #{cnn_kan_forward.13} parent=0 // pred_fallthru
    _

// kernel: cnn_kan_forward.12
$region0: #{cnn_kan_forward.12}
  #allocation0 [shape = 'u32[]', space=smem, size = 0x4, offset = 0x4, fixed_abs, tag = 'smem constant byte address 0x4 - core index']
  #allocation1 [shape = 'u32[72,128]{1,0:T(1,128)}', space=vmem, size = 0x9000, scoped, tag = 'internal scratch']
  %s0 = inlined_call_operand.vmem [shape: bf16[32,1152], index: 0, kind: input, shape index: {}]
  %s1 = inlined_call_operand.vmem [shape: bf16[1152,128], index: 1, kind: input, shape index: {}]
  %s2 = inlined_call_operand.vmem [shape: f32[32,128], index: 2, kind: output, shape index: {}]
  %s3 = sld [smem:[#allocation0]]
  $region18: #{cnn_kan_forward.12} parent=0
    _
  %s5 = ssub.s32 1, %s3
  %s6 = scalar_select 0, %s5, %s3
  // Predicated region
  $region2: #{cnn_kan_forward.12} parent=0 // pred_check
    _
  $region3: #{cnn_kan_forward.12} parent=0 // pred_check_branch
    %8 = sbr.rel (0) target = $region5
  $region4: #{cnn_kan_forward.12} parent=0 // pred_region
    _
  $region5: #{cnn_kan_forward.12} parent=0 // pred_fallthru
    _
  // Predicated region
  $region6: #{cnn_kan_forward.12} parent=0 // pred_check
    _
  $region7: #{cnn_kan_forward.12} parent=0 // pred_check_branch
    %10 = sbr.rel (0) target = $region9
  $region8: #{cnn_kan_forward.12} parent=0 // pred_region
    _
  $region9: #{cnn_kan_forward.12} parent=0 // pred_fallthru
    _
  %v11 = vld [vmem:[%s0] sm:$0xff]
  %v12 = vld [vmem:[%s0 + $0x8] sm:$0xff]
  %v13 = vld [vmem:[%s0 + $0x10] sm:$0xff]
  %v14 = vld [vmem:[%s0 + $0x18] sm:$0xff]
  %v15 = vld [vmem:[%s0 + $0x20] sm:$0xf]
  %v16 = vld [vmem:[%s0 + $0x24] sm:$0xff]
  %v17 = vld [vmem:[%s0 + $0x2c] sm:$0xff]
  %v18 = vld [vmem:[%s0 + $0x34] sm:$0xff]
  %v19 = vld [vmem:[%s0 + $0x3c] sm:$0xff]
  %v20 = vld [vmem:[%s0 + $0x44] sm:$0xf]
  %v21 = vld [vmem:[%s0 + $0x48] sm:$0xff]
  %v22 = vld [vmem:[%s0 + $0x50] sm:$0xff]
  %v23 = vld [vmem:[%s0 + $0x58] sm:$0xff]
  %v24 = vld [vmem:[%s0 + $0x60] sm:$0xff]
  %v25 = vld [vmem:[%s0 + $0x68] sm:$0xf]
  %v26 = vld [vmem:[%s0 + $0x6c] sm:$0xff]
  %v27 = vld [vmem:[%s0 + $0x74] sm:$0xff]
  %v28 = vld [vmem:[%s0 + $0x7c] sm:$0xff]
  %v29 = vld [vmem:[%s0 + $0x84] sm:$0xff]
  %v30 = vld [vmem:[%s0 + $0x8c] sm:$0xf]
  %v31 = vld [vmem:[%s1] sm:$0xf]
  %v32 = vld [vmem:[%s1 + $0x4] sm:$0xf]
  %v33 = vld [vmem:[%s1 + $0x8] sm:$0xf]
  %v34 = vld [vmem:[%s1 + $0xc] sm:$0xf]
  %v35 = vld [vmem:[%s1 + $0x10] sm:$0xf]
  %v36 = vld [vmem:[%s1 + $0x14] sm:$0xf]
  %v37 = vld [vmem:[%s1 + $0x18] sm:$0xf]
  %v38 = vld [vmem:[%s1 + $0x1c] sm:$0xf]
  %v39 = vld [vmem:[%s1 + $0x20] sm:$0xf]
  %v40 = vld [vmem:[%s1 + $0x24] sm:$0xf]
  %v41 = vld [vmem:[%s1 + $0x28] sm:$0xf]
  %v42 = vld [vmem:[%s1 + $0x2c] sm:$0xf]
  %v43 = vld [vmem:[%s1 + $0x30] sm:$0xf]
  %v44 = vld [vmem:[%s1 + $0x34] sm:$0xf]
  %v45 = vld [vmem:[%s1 + $0x38] sm:$0xf]
  %v46 = vld [vmem:[%s1 + $0x3c] sm:$0xf]
  %v47 = vld [vmem:[%s1 + $0x40] sm:$0xf]
  %v48 = vld [vmem:[%s1 + $0x44] sm:$0xf]
  %v49 = vld [vmem:[%s1 + $0x48] sm:$0xf]
  %v50 = vld [vmem:[%s1 + $0x4c] sm:$0xf]
  %v51 = vld [vmem:[%s1 + $0x50] sm:$0xf]
  %v52 = vld [vmem:[%s1 + $0x54] sm:$0xf]
  %v53 = vld [vmem:[%s1 + $0x58] sm:$0xf]
  %v54 = vld [vmem:[%s1 + $0x5c] sm:$0xf]
  %v55 = vld [vmem:[%s1 + $0x60] sm:$0xf]
  %v56 = vld [vmem:[%s1 + $0x64] sm:$0xf]
  %v57 = vld [vmem:[%s1 + $0x68] sm:$0xf]
  %v58 = vld [vmem:[%s1 + $0x6c] sm:$0xf]
  %v59 = vld [vmem:[%s1 + $0x70] sm:$0xf]
  %v60 = vld [vmem:[%s1 + $0x74] sm:$0xf]
  %v61 = vld [vmem:[%s1 + $0x78] sm:$0xf]
  %v62 = vld [vmem:[%s1 + $0x7c] sm:$0xf]
  %v63 = vld [vmem:[%s1 + $0x80] sm:$0xf]
  %v64 = vld [vmem:[%s1 + $0x84] sm:$0xf]
  %v65 = vld [vmem:[%s1 + $0x88] sm:$0xf]
  %v66 = vld [vmem:[%s1 + $0x8c] sm:$0xf]
  %v67 = vld [vmem:[%s1 + $0x90] sm:$0xf]
  %v68 = vld [vmem:[%s1 + $0x94] sm:$0xf]
  %v69 = vld [vmem:[%s1 + $0x98] sm:$0xf]
  %v70 = vld [vmem:[%s1 + $0x9c] sm:$0xf]
  %v71 = vld [vmem:[%s1 + $0xa0] sm:$0xf]
  %v72 = vld [vmem:[%s1 + $0xa4] sm:$0xf]
  %v73 = vld [vmem:[%s1 + $0xa8] sm:$0xf]
  %v74 = vld [vmem:[%s1 + $0xac] sm:$0xf]
  %v75 = vld [vmem:[%s1 + $0xb0] sm:$0xf]
  %v76 = vld [vmem:[%s1 + $0xb4] sm:$0xf]
  %v77 = vld [vmem:[%s1 + $0xb8] sm:$0xf]
  %v78 = vld [vmem:[%s1 + $0xbc] sm:$0xf]
  %v79 = vld [vmem:[%s1 + $0xc0] sm:$0xf]
  %v80 = vld [vmem:[%s1 + $0xc4] sm:$0xf]
  %v81 = vld [vmem:[%s1 + $0xc8] sm:$0xf]
  %v82 = vld [vmem:[%s1 + $0xcc] sm:$0xf]
  %v83 = vld [vmem:[%s1 + $0xd0] sm:$0xf]
  %v84 = vld [vmem:[%s1 + $0xd4] sm:$0xf]
  %v85 = vld [vmem:[%s1 + $0xd8] sm:$0xf]
  %v86 = vld [vmem:[%s1 + $0xdc] sm:$0xf]
  %v87 = vld [vmem:[%s1 + $0xe0] sm:$0xf]
  %v88 = vld [vmem:[%s1 + $0xe4] sm:$0xf]
  %v89 = vld [vmem:[%s1 + $0xe8] sm:$0xf]
  %v90 = vld [vmem:[%s1 + $0xec] sm:$0xf]
  %v91 = vld [vmem:[%s1 + $0xf0] sm:$0xf]
  %v92 = vld [vmem:[%s1 + $0xf4] sm:$0xf]
  %v93 = vld [vmem:[%s1 + $0xf8] sm:$0xf]
  %v94 = vld [vmem:[%s1 + $0xfc] sm:$0xf]
  %v95 = vld [vmem:[%s1 + $0x100] sm:$0xf]
  %v96 = vld [vmem:[%s1 + $0x104] sm:$0xf]
  %v97 = vld [vmem:[%s1 + $0x108] sm:$0xf]
  %v98 = vld [vmem:[%s1 + $0x10c] sm:$0xf]
  %v99 = vld [vmem:[%s1 + $0x110] sm:$0xf]
  %v100 = vld [vmem:[%s1 + $0x114] sm:$0xf]
  %v101 = vld [vmem:[%s1 + $0x118] sm:$0xf]
  %v102 = vld [vmem:[%s1 + $0x11c] sm:$0xf]
  %v103 = vld [vmem:[%s1 + $0x120] sm:$0xf]
  %v104 = vld [vmem:[%s1 + $0x124] sm:$0xf]
  %v105 = vld [vmem:[%s1 + $0x128] sm:$0xf]
  %v106 = vld [vmem:[%s1 + $0x12c] sm:$0xf]
  %v107 = vld [vmem:[%s1 + $0x130] sm:$0xf]
  %v108 = vld [vmem:[%s1 + $0x134] sm:$0xf]
  %v109 = vld [vmem:[%s1 + $0x138] sm:$0xf]
  %v110 = vld [vmem:[%s1 + $0x13c] sm:$0xf]
  %v111 = vld [vmem:[%s1 + $0x140] sm:$0xf]
  %v112 = vld [vmem:[%s1 + $0x144] sm:$0xf]
  %v113 = vld [vmem:[%s1 + $0x148] sm:$0xf]
  %v114 = vld [vmem:[%s1 + $0x14c] sm:$0xf]
  %v115 = vld [vmem:[%s1 + $0x150] sm:$0xf]
  %v116 = vld [vmem:[%s1 + $0x154] sm:$0xf]
  %v117 = vld [vmem:[%s1 + $0x158] sm:$0xf]
  %v118 = vld [vmem:[%s1 + $0x15c] sm:$0xf]
  %v119 = vld [vmem:[%s1 + $0x160] sm:$0xf]
  %v120 = vld [vmem:[%s1 + $0x164] sm:$0xf]
  %v121 = vld [vmem:[%s1 + $0x168] sm:$0xf]
  %v122 = vld [vmem:[%s1 + $0x16c] sm:$0xf]
  %v123 = vld [vmem:[%s1 + $0x170] sm:$0xf]
  %v124 = vld [vmem:[%s1 + $0x174] sm:$0xf]
  %v125 = vld [vmem:[%s1 + $0x178] sm:$0xf]
  %v126 = vld [vmem:[%s1 + $0x17c] sm:$0xf]
  %v127 = vld [vmem:[%s1 + $0x180] sm:$0xf]
  %v128 = vld [vmem:[%s1 + $0x184] sm:$0xf]
  %v129 = vld [vmem:[%s1 + $0x188] sm:$0xf]
  %v130 = vld [vmem:[%s1 + $0x18c] sm:$0xf]
  %v131 = vld [vmem:[%s1 + $0x190] sm:$0xf]
  %v132 = vld [vmem:[%s1 + $0x194] sm:$0xf]
  %v133 = vld [vmem:[%s1 + $0x198] sm:$0xf]
  %v134 = vld [vmem:[%s1 + $0x19c] sm:$0xf]
  %v135 = vld [vmem:[%s1 + $0x1a0] sm:$0xf]
  %v136 = vld [vmem:[%s1 + $0x1a4] sm:$0xf]
  %v137 = vld [vmem:[%s1 + $0x1a8] sm:$0xf]
  %v138 = vld [vmem:[%s1 + $0x1ac] sm:$0xf]
  %v139 = vld [vmem:[%s1 + $0x1b0] sm:$0xf]
  %v140 = vld [vmem:[%s1 + $0x1b4] sm:$0xf]
  %v141 = vld [vmem:[%s1 + $0x1b8] sm:$0xf]
  %v142 = vld [vmem:[%s1 + $0x1bc] sm:$0xf]
  %v143 = vld [vmem:[%s1 + $0x1c0] sm:$0xf]
  %v144 = vld [vmem:[%s1 + $0x1c4] sm:$0xf]
  %v145 = vld [vmem:[%s1 + $0x1c8] sm:$0xf]
  %v146 = vld [vmem:[%s1 + $0x1cc] sm:$0xf]
  %v147 = vld [vmem:[%s1 + $0x1d0] sm:$0xf]
  %v148 = vld [vmem:[%s1 + $0x1d4] sm:$0xf]
  %v149 = vld [vmem:[%s1 + $0x1d8] sm:$0xf]
  %v150 = vld [vmem:[%s1 + $0x1dc] sm:$0xf]
  %v151 = vld [vmem:[%s1 + $0x1e0] sm:$0xf]
  %v152 = vld [vmem:[%s1 + $0x1e4] sm:$0xf]
  %v153 = vld [vmem:[%s1 + $0x1e8] sm:$0xf]
  %v154 = vld [vmem:[%s1 + $0x1ec] sm:$0xf]
  %v155 = vld [vmem:[%s1 + $0x1f0] sm:$0xf]
  %v156 = vld [vmem:[%s1 + $0x1f4] sm:$0xf]
  %v157 = vld [vmem:[%s1 + $0x1f8] sm:$0xf]
  %v158 = vld [vmem:[%s1 + $0x1fc] sm:$0xf]
  %v159 = vld [vmem:[%s1 + $0x200] sm:$0xf]
  %v160 = vld [vmem:[%s1 + $0x204] sm:$0xf]
  %v161 = vld [vmem:[%s1 + $0x208] sm:$0xf]
  %v162 = vld [vmem:[%s1 + $0x20c] sm:$0xf]
  %v163 = vld [vmem:[%s1 + $0x210] sm:$0xf]
  %v164 = vld [vmem:[%s1 + $0x214] sm:$0xf]
  %v165 = vld [vmem:[%s1 + $0x218] sm:$0xf]
  %v166 = vld [vmem:[%s1 + $0x21c] sm:$0xf]
  %v167 = vld [vmem:[%s1 + $0x220] sm:$0xf]
  %v168 = vld [vmem:[%s1 + $0x224] sm:$0xf]
  %v169 = vld [vmem:[%s1 + $0x228] sm:$0xf]
  %v170 = vld [vmem:[%s1 + $0x22c] sm:$0xf]
  %v171 = vld [vmem:[%s1 + $0x230] sm:$0xf]
  %v172 = vld [vmem:[%s1 + $0x234] sm:$0xf]
  %v173 = vld [vmem:[%s1 + $0x238] sm:$0xf]
  %v174 = vld [vmem:[%s1 + $0x23c] sm:$0xf]
  %v195 = vunpack.c.l.b16 %v11
  %v196 = vunpack.c.h.b16 %v11
  %v197 = vunpack.c.l.b16 %v12
  %v198 = vunpack.c.h.b16 %v12
  %v199 = vunpack.c.l.b16 %v13
  %v200 = vunpack.c.h.b16 %v13
  %v201 = vunpack.c.l.b16 %v14
  %v202 = vunpack.c.h.b16 %v14
  %v203 = vunpack.c.l.b16 %v15
  %v204 = vunpack.c.l.b16 %v16
  %v205 = vunpack.c.h.b16 %v16
  %v206 = vunpack.c.l.b16 %v17
  %v207 = vunpack.c.h.b16 %v17
  %v208 = vunpack.c.l.b16 %v18
  %v209 = vunpack.c.h.b16 %v18
  %v210 = vunpack.c.l.b16 %v19
  %v211 = vunpack.c.h.b16 %v19
  %v212 = vunpack.c.l.b16 %v20
  %v213 = vunpack.c.l.b16 %v21
  %v214 = vunpack.c.h.b16 %v21
  %v215 = vunpack.c.l.b16 %v22
  %v216 = vunpack.c.h.b16 %v22
  %v217 = vunpack.c.l.b16 %v23
  %v218 = vunpack.c.h.b16 %v23
  %v219 = vunpack.c.l.b16 %v24
  %v220 = vunpack.c.h.b16 %v24
  %v221 = vunpack.c.l.b16 %v25
  %v222 = vunpack.c.l.b16 %v26
  %v223 = vunpack.c.h.b16 %v26
  %v224 = vunpack.c.l.b16 %v27
  %v225 = vunpack.c.h.b16 %v27
  %v226 = vunpack.c.l.b16 %v28
  %v227 = vunpack.c.h.b16 %v28
  %v228 = vunpack.c.l.b16 %v29
  %v229 = vunpack.c.h.b16 %v29
  %v230 = vunpack.c.l.b16 %v30
  %v231 = vpack.c.b16 %v204, %v195
  %v232 = vpack.c.b16 %v205, %v196
  %v233 = vpack.c.b16 %v206, %v197
  %v234 = vpack.c.b16 %v207, %v198
  %v235 = vpack.c.b16 %v208, %v199
  %v236 = vpack.c.b16 %v209, %v200
  %v237 = vpack.c.b16 %v210, %v201
  %v238 = vpack.c.b16 %v211, %v202
  %v239 = vpack.c.b16 %v212, %v203
  %v240 = vpack.c.b16 %v222, %v213
  %v241 = vpack.c.b16 %v223, %v214
  %v242 = vpack.c.b16 %v224, %v215
  %v243 = vpack.c.b16 %v225, %v216
  %v244 = vpack.c.b16 %v226, %v217
  %v245 = vpack.c.b16 %v227, %v218
  %v246 = vpack.c.b16 %v228, %v219
  %v247 = vpack.c.b16 %v229, %v220
  %v248 = vpack.c.b16 %v230, %v221
  %v411 = vunpack.c.l.b16 %v31
  %v412 = vunpack.c.l.b16 %v32
  %v413 = vunpack.c.l.b16 %v33
  %v414 = vunpack.c.l.b16 %v34
  %v415 = vunpack.c.l.b16 %v35
  %v416 = vunpack.c.l.b16 %v36
  %v417 = vunpack.c.l.b16 %v37
  %v418 = vunpack.c.l.b16 %v38
  %v419 = vunpack.c.l.b16 %v39
  %v420 = vunpack.c.l.b16 %v40
  %v421 = vunpack.c.l.b16 %v41
  %v422 = vunpack.c.l.b16 %v42
  %v423 = vunpack.c.l.b16 %v43
  %v424 = vunpack.c.l.b16 %v44
  %v425 = vunpack.c.l.b16 %v45
  %v426 = vunpack.c.l.b16 %v46
  %v427 = vunpack.c.l.b16 %v47
  %v428 = vunpack.c.l.b16 %v48
  %v429 = vunpack.c.l.b16 %v49
  %v430 = vunpack.c.l.b16 %v50
  %v431 = vunpack.c.l.b16 %v51
  %v432 = vunpack.c.l.b16 %v52
  %v433 = vunpack.c.l.b16 %v53
  %v434 = vunpack.c.l.b16 %v54
  %v435 = vunpack.c.l.b16 %v55
  %v436 = vunpack.c.l.b16 %v56
  %v437 = vunpack.c.l.b16 %v57
  %v438 = vunpack.c.l.b16 %v58
  %v439 = vunpack.c.l.b16 %v59
  %v440 = vunpack.c.l.b16 %v60
  %v441 = vunpack.c.l.b16 %v61
  %v442 = vunpack.c.l.b16 %v62
  %v443 = vunpack.c.l.b16 %v63
  %v444 = vunpack.c.l.b16 %v64
  %v445 = vunpack.c.l.b16 %v65
  %v446 = vunpack.c.l.b16 %v66
  %v447 = vunpack.c.l.b16 %v67
  %v448 = vunpack.c.l.b16 %v68
  %v449 = vunpack.c.l.b16 %v69
  %v450 = vunpack.c.l.b16 %v70
  %v451 = vunpack.c.l.b16 %v71
  %v452 = vunpack.c.l.b16 %v72
  %v453 = vunpack.c.l.b16 %v73
  %v454 = vunpack.c.l.b16 %v74
  %v455 = vunpack.c.l.b16 %v75
  %v456 = vunpack.c.l.b16 %v76
  %v457 = vunpack.c.l.b16 %v77
  %v458 = vunpack.c.l.b16 %v78
  %v459 = vunpack.c.l.b16 %v79
  %v460 = vunpack.c.l.b16 %v80
  %v461 = vunpack.c.l.b16 %v81
  %v462 = vunpack.c.l.b16 %v82
  %v463 = vunpack.c.l.b16 %v83
  %v464 = vunpack.c.l.b16 %v84
  %v465 = vunpack.c.l.b16 %v85
  %v466 = vunpack.c.l.b16 %v86
  %v467 = vunpack.c.l.b16 %v87
  %v468 = vunpack.c.l.b16 %v88
  %v469 = vunpack.c.l.b16 %v89
  %v470 = vunpack.c.l.b16 %v90
  %v471 = vunpack.c.l.b16 %v91
  %v472 = vunpack.c.l.b16 %v92
  %v473 = vunpack.c.l.b16 %v93
  %v474 = vunpack.c.l.b16 %v94
  %v475 = vunpack.c.l.b16 %v95
  %v476 = vunpack.c.l.b16 %v96
  %v477 = vunpack.c.l.b16 %v97
  %v478 = vunpack.c.l.b16 %v98
  %v479 = vunpack.c.l.b16 %v99
  %v480 = vunpack.c.l.b16 %v100
  %v481 = vunpack.c.l.b16 %v101
  %v482 = vunpack.c.l.b16 %v102
  %v483 = vunpack.c.l.b16 %v103
  %v484 = vunpack.c.l.b16 %v104
  %v485 = vunpack.c.l.b16 %v105
  %v486 = vunpack.c.l.b16 %v106
  %v487 = vunpack.c.l.b16 %v107
  %v488 = vunpack.c.l.b16 %v108
  %v489 = vunpack.c.l.b16 %v109
  %v490 = vunpack.c.l.b16 %v110
  %v491 = vunpack.c.l.b16 %v111
  %v492 = vunpack.c.l.b16 %v112
  %v493 = vunpack.c.l.b16 %v113
  %v494 = vunpack.c.l.b16 %v114
  %v495 = vunpack.c.l.b16 %v115
  %v496 = vunpack.c.l.b16 %v116
  %v497 = vunpack.c.l.b16 %v117
  %v498 = vunpack.c.l.b16 %v118
  %v499 = vunpack.c.l.b16 %v119
  %v500 = vunpack.c.l.b16 %v120
  %v501 = vunpack.c.l.b16 %v121
  %v502 = vunpack.c.l.b16 %v122
  %v503 = vunpack.c.l.b16 %v123
  %v504 = vunpack.c.l.b16 %v124
  %v505 = vunpack.c.l.b16 %v125
  %v506 = vunpack.c.l.b16 %v126
  %v507 = vunpack.c.l.b16 %v127
  %v508 = vunpack.c.l.b16 %v128
  %v509 = vunpack.c.l.b16 %v129
  %v510 = vunpack.c.l.b16 %v130
  %v511 = vunpack.c.l.b16 %v131
  %v512 = vunpack.c.l.b16 %v132
  %v513 = vunpack.c.l.b16 %v133
  %v514 = vunpack.c.l.b16 %v134
  %v515 = vunpack.c.l.b16 %v135
  %v516 = vunpack.c.l.b16 %v136
  %v517 = vunpack.c.l.b16 %v137
  %v518 = vunpack.c.l.b16 %v138
  %v519 = vunpack.c.l.b16 %v139
  %v520 = vunpack.c.l.b16 %v140
  %v521 = vunpack.c.l.b16 %v141
  %v522 = vunpack.c.l.b16 %v142
  %v523 = vunpack.c.l.b16 %v143
  %v524 = vunpack.c.l.b16 %v144
  %v525 = vunpack.c.l.b16 %v145
  %v526 = vunpack.c.l.b16 %v146
  %v527 = vunpack.c.l.b16 %v147
  %v528 = vunpack.c.l.b16 %v148
  %v529 = vunpack.c.l.b16 %v149
  %v530 = vunpack.c.l.b16 %v150
  %v531 = vunpack.c.l.b16 %v151
  %v532 = vunpack.c.l.b16 %v152
  %v533 = vunpack.c.l.b16 %v153
  %v534 = vunpack.c.l.b16 %v154
  %v535 = vunpack.c.l.b16 %v155
  %v536 = vunpack.c.l.b16 %v156
  %v537 = vunpack.c.l.b16 %v157
  %v538 = vunpack.c.l.b16 %v158
  %v539 = vunpack.c.l.b16 %v159
  %v540 = vunpack.c.l.b16 %v160
  %v541 = vunpack.c.l.b16 %v161
  %v542 = vunpack.c.l.b16 %v162
  %v543 = vunpack.c.l.b16 %v163
  %v544 = vunpack.c.l.b16 %v164
  %v545 = vunpack.c.l.b16 %v165
  %v546 = vunpack.c.l.b16 %v166
  %v547 = vunpack.c.l.b16 %v167
  %v548 = vunpack.c.l.b16 %v168
  %v549 = vunpack.c.l.b16 %v169
  %v550 = vunpack.c.l.b16 %v170
  %v551 = vunpack.c.l.b16 %v171
  %v552 = vunpack.c.l.b16 %v172
  %v553 = vunpack.c.l.b16 %v173
  %v554 = vunpack.c.l.b16 %v174
  %v555 = vpack.c.b16 %v412, %v411
  %v556 = vpack.c.b16 %v414, %v413
  %v557 = vpack.c.b16 %v416, %v415
  %v558 = vpack.c.b16 %v418, %v417
  %v559 = vpack.c.b16 %v420, %v419
  %v560 = vpack.c.b16 %v422, %v421
  %v561 = vpack.c.b16 %v424, %v423
  %v562 = vpack.c.b16 %v426, %v425
  %v563 = vpack.c.b16 %v428, %v427
  %v564 = vpack.c.b16 %v430, %v429
  %v565 = vpack.c.b16 %v432, %v431
  %v566 = vpack.c.b16 %v434, %v433
  %v567 = vpack.c.b16 %v436, %v435
  %v568 = vpack.c.b16 %v438, %v437
  %v569 = vpack.c.b16 %v440, %v439
  %v570 = vpack.c.b16 %v442, %v441
  %v571 = vpack.c.b16 %v444, %v443
  %v572 = vpack.c.b16 %v446, %v445
  %v573 = vpack.c.b16 %v448, %v447
  %v574 = vpack.c.b16 %v450, %v449
  %v575 = vpack.c.b16 %v452, %v451
  %v576 = vpack.c.b16 %v454, %v453
  %v577 = vpack.c.b16 %v456, %v455
  %v578 = vpack.c.b16 %v458, %v457
  %v579 = vpack.c.b16 %v460, %v459
  %v580 = vpack.c.b16 %v462, %v461
  %v581 = vpack.c.b16 %v464, %v463
  %v582 = vpack.c.b16 %v466, %v465
  %v583 = vpack.c.b16 %v468, %v467
  %v584 = vpack.c.b16 %v470, %v469
  %v585 = vpack.c.b16 %v472, %v471
  %v586 = vpack.c.b16 %v474, %v473
  %v587 = vpack.c.b16 %v476, %v475
  %v588 = vpack.c.b16 %v478, %v477
  %v589 = vpack.c.b16 %v480, %v479
  %v590 = vpack.c.b16 %v482, %v481
  %v591 = vpack.c.b16 %v484, %v483
  %v592 = vpack.c.b16 %v486, %v485
  %v593 = vpack.c.b16 %v488, %v487
  %v594 = vpack.c.b16 %v490, %v489
  %v595 = vpack.c.b16 %v492, %v491
  %v596 = vpack.c.b16 %v494, %v493
  %v597 = vpack.c.b16 %v496, %v495
  %v598 = vpack.c.b16 %v498, %v497
  %v599 = vpack.c.b16 %v500, %v499
  %v600 = vpack.c.b16 %v502, %v501
  %v601 = vpack.c.b16 %v504, %v503
  %v602 = vpack.c.b16 %v506, %v505
  %v603 = vpack.c.b16 %v508, %v507
  %v604 = vpack.c.b16 %v510, %v509
  %v605 = vpack.c.b16 %v512, %v511
  %v606 = vpack.c.b16 %v514, %v513
  %v607 = vpack.c.b16 %v516, %v515
  %v608 = vpack.c.b16 %v518, %v517
  %v609 = vpack.c.b16 %v520, %v519
  %v610 = vpack.c.b16 %v522, %v521
  %v611 = vpack.c.b16 %v524, %v523
  %v612 = vpack.c.b16 %v526, %v525
  %v613 = vpack.c.b16 %v528, %v527
  %v614 = vpack.c.b16 %v530, %v529
  %v615 = vpack.c.b16 %v532, %v531
  %v616 = vpack.c.b16 %v534, %v533
  %v617 = vpack.c.b16 %v536, %v535
  %v618 = vpack.c.b16 %v538, %v537
  %v619 = vpack.c.b16 %v540, %v539
  %v620 = vpack.c.b16 %v542, %v541
  %v621 = vpack.c.b16 %v544, %v543
  %v622 = vpack.c.b16 %v546, %v545
  %v623 = vpack.c.b16 %v548, %v547
  %v624 = vpack.c.b16 %v550, %v549
  %v625 = vpack.c.b16 %v552, %v551
  %v626 = vpack.c.b16 %v554, %v553
  %699 = vmatpush.bf16.msra.mxu0 %v562
  %700 = vmatpush.bf16.msra.mxu0 %v561
  %701 = vmatpush.bf16.msra.mxu0 %v560
  %702 = vmatpush.bf16.msra.mxu0 %v559
  %703 = vmatpush.bf16.msra.mxu0 %v558
  %704 = vmatpush.bf16.msra.mxu0 %v557
  %705 = vmatpush.bf16.msra.mxu0 %v556
  %706 = vmatpush.bf16.msra.mxu0 %v555
  %707 = vmatmul.bf16.gmra.mxu0 %v231
  %v708 = vpop.f32.mrf.mxu0
  %v709 = vadd.f32 0.0, %v708
  %v710 = vpop.f32.mrf.mxu0
  %v711 = vadd.f32 0.0, %v710
  %712 = vmatmul.bf16.gmra.mxu0 %v240
  %v713 = vpop.f32.mrf.mxu0
  %v714 = vadd.f32 0.0, %v713
  %v715 = vpop.f32.mrf.mxu0
  %v716 = vadd.f32 0.0, %v715
  %717 = vdwg.mxu0
  %718 = vmatpush.bf16.msra.mxu0 %v570
  %719 = vmatpush.bf16.msra.mxu0 %v569
  %720 = vmatpush.bf16.msra.mxu0 %v568
  %721 = vmatpush.bf16.msra.mxu0 %v567
  %722 = vmatpush.bf16.msra.mxu0 %v566
  %723 = vmatpush.bf16.msra.mxu0 %v565
  %724 = vmatpush.bf16.msra.mxu0 %v564
  %725 = vmatpush.bf16.msra.mxu0 %v563
  %726 = vmatmul.bf16.gmra.mxu0 %v232
  %v727 = vpop.f32.mrf.mxu0
  %v728 = vadd.f32 %v709, %v727
  %v729 = vpop.f32.mrf.mxu0
  %v730 = vadd.f32 %v711, %v729
  %731 = vmatmul.bf16.gmra.mxu0 %v241
  %v732 = vpop.f32.mrf.mxu0
  %v733 = vadd.f32 %v714, %v732
  %v734 = vpop.f32.mrf.mxu0
  %v735 = vadd.f32 %v716, %v734
  %736 = vdwg.mxu0
  %737 = vmatpush.bf16.msra.mxu0 %v578
  %738 = vmatpush.bf16.msra.mxu0 %v577
  %739 = vmatpush.bf16.msra.mxu0 %v576
  %740 = vmatpush.bf16.msra.mxu0 %v575
  %741 = vmatpush.bf16.msra.mxu0 %v574
  %742 = vmatpush.bf16.msra.mxu0 %v573
  %743 = vmatpush.bf16.msra.mxu0 %v572
  %744 = vmatpush.bf16.msra.mxu0 %v571
  %745 = vmatmul.bf16.gmra.mxu0 %v233
  %v746 = vpop.f32.mrf.mxu0
  %v747 = vadd.f32 %v728, %v746
  %v748 = vpop.f32.mrf.mxu0
  %v749 = vadd.f32 %v730, %v748
  %750 = vmatmul.bf16.gmra.mxu0 %v242
  %v751 = vpop.f32.mrf.mxu0
  %v752 = vadd.f32 %v733, %v751
  %v753 = vpop.f32.mrf.mxu0
  %v754 = vadd.f32 %v735, %v753
  %755 = vdwg.mxu0
  %756 = vmatpush.bf16.msra.mxu0 %v586
  %757 = vmatpush.bf16.msra.mxu0 %v585
  %758 = vmatpush.bf16.msra.mxu0 %v584
  %759 = vmatpush.bf16.msra.mxu0 %v583
  %760 = vmatpush.bf16.msra.mxu0 %v582
  %761 = vmatpush.bf16.msra.mxu0 %v581
  %762 = vmatpush.bf16.msra.mxu0 %v580
  %763 = vmatpush.bf16.msra.mxu0 %v579
  %764 = vmatmul.bf16.gmra.mxu0 %v234
  %v765 = vpop.f32.mrf.mxu0
  %v766 = vadd.f32 %v747, %v765
  %v767 = vpop.f32.mrf.mxu0
  %v768 = vadd.f32 %v749, %v767
  %769 = vmatmul.bf16.gmra.mxu0 %v243
  %v770 = vpop.f32.mrf.mxu0
  %v771 = vadd.f32 %v752, %v770
  %v772 = vpop.f32.mrf.mxu0
  %v773 = vadd.f32 %v754, %v772
  %774 = vdwg.mxu0
  %775 = vmatpush.bf16.msra.mxu0 %v594
  %776 = vmatpush.bf16.msra.mxu0 %v593
  %777 = vmatpush.bf16.msra.mxu0 %v592
  %778 = vmatpush.bf16.msra.mxu0 %v591
  %779 = vmatpush.bf16.msra.mxu0 %v590
  %780 = vmatpush.bf16.msra.mxu0 %v589
  %781 = vmatpush.bf16.msra.mxu0 %v588
  %782 = vmatpush.bf16.msra.mxu0 %v587
  %783 = vmatmul.bf16.gmra.mxu0 %v235
  %v784 = vpop.f32.mrf.mxu0
  %v785 = vadd.f32 %v766, %v784
  %v786 = vpop.f32.mrf.mxu0
  %v787 = vadd.f32 %v768, %v786
  %788 = vmatmul.bf16.gmra.mxu0 %v244
  %v789 = vpop.f32.mrf.mxu0
  %v790 = vadd.f32 %v771, %v789
  %v791 = vpop.f32.mrf.mxu0
  %v792 = vadd.f32 %v773, %v791
  %793 = vdwg.mxu0
  %794 = vmatpush.bf16.msra.mxu0 %v602
  %795 = vmatpush.bf16.msra.mxu0 %v601
  %796 = vmatpush.bf16.msra.mxu0 %v600
  %797 = vmatpush.bf16.msra.mxu0 %v599
  %798 = vmatpush.bf16.msra.mxu0 %v598
  %799 = vmatpush.bf16.msra.mxu0 %v597
  %800 = vmatpush.bf16.msra.mxu0 %v596
  %801 = vmatpush.bf16.msra.mxu0 %v595
  %802 = vmatmul.bf16.gmra.mxu0 %v236
  %v803 = vpop.f32.mrf.mxu0
  %v804 = vadd.f32 %v785, %v803
  %v805 = vpop.f32.mrf.mxu0
  %v806 = vadd.f32 %v787, %v805
  %807 = vmatmul.bf16.gmra.mxu0 %v245
  %v808 = vpop.f32.mrf.mxu0
  %v809 = vadd.f32 %v790, %v808
  %v810 = vpop.f32.mrf.mxu0
  %v811 = vadd.f32 %v792, %v810
  %812 = vdwg.mxu0
  %813 = vmatpush.bf16.msra.mxu0 %v610
  %814 = vmatpush.bf16.msra.mxu0 %v609
  %815 = vmatpush.bf16.msra.mxu0 %v608
  %816 = vmatpush.bf16.msra.mxu0 %v607
  %817 = vmatpush.bf16.msra.mxu0 %v606
  %818 = vmatpush.bf16.msra.mxu0 %v605
  %819 = vmatpush.bf16.msra.mxu0 %v604
  %820 = vmatpush.bf16.msra.mxu0 %v603
  %821 = vmatmul.bf16.gmra.mxu0 %v237
  %v822 = vpop.f32.mrf.mxu0
  %v823 = vadd.f32 %v804, %v822
  %v824 = vpop.f32.mrf.mxu0
  %v825 = vadd.f32 %v806, %v824
  %826 = vmatmul.bf16.gmra.mxu0 %v246
  %v827 = vpop.f32.mrf.mxu0
  %v828 = vadd.f32 %v809, %v827
  %v829 = vpop.f32.mrf.mxu0
  %v830 = vadd.f32 %v811, %v829
  %831 = vdwg.mxu0
  %832 = vmatpush.bf16.msra.mxu0 %v618
  %833 = vmatpush.bf16.msra.mxu0 %v617
  %834 = vmatpush.bf16.msra.mxu0 %v616
  %835 = vmatpush.bf16.msra.mxu0 %v615
  %836 = vmatpush.bf16.msra.mxu0 %v614
  %837 = vmatpush.bf16.msra.mxu0 %v613
  %838 = vmatpush.bf16.msra.mxu0 %v612
  %839 = vmatpush.bf16.msra.mxu0 %v611
  %840 = vmatmul.bf16.gmra.mxu0 %v238
  %v841 = vpop.f32.mrf.mxu0
  %v842 = vadd.f32 %v823, %v841
  %v843 = vpop.f32.mrf.mxu0
  %v844 = vadd.f32 %v825, %v843
  %845 = vmatmul.bf16.gmra.mxu0 %v247
  %v846 = vpop.f32.mrf.mxu0
  %v847 = vadd.f32 %v828, %v846
  %v848 = vpop.f32.mrf.mxu0
  %v849 = vadd.f32 %v830, %v848
  %850 = vdwg.mxu0
  %851 = vmatpush.bf16.msra.mxu0 %v626
  %852 = vmatpush.bf16.msra.mxu0 %v625
  %853 = vmatpush.bf16.msra.mxu0 %v624
  %854 = vmatpush.bf16.msra.mxu0 %v623
  %855 = vmatpush.bf16.msra.mxu0 %v622
  %856 = vmatpush.bf16.msra.mxu0 %v621
  %857 = vmatpush.bf16.msra.mxu0 %v620
  %858 = vmatpush.bf16.msra.mxu0 %v619
  %859 = vmatmul.bf16.gmra.mxu0 %v239
  %v860 = vpop.f32.mrf.mxu0
  %v861 = vadd.f32 %v842, %v860
  %v862 = vpop.f32.mrf.mxu0
  %v863 = vadd.f32 %v844, %v862
  %864 = vmatmul.bf16.gmra.mxu0 %v248
  %v865 = vpop.f32.mrf.mxu0
  %v866 = vadd.f32 %v847, %v865
  %v867 = vpop.f32.mrf.mxu0
  %v868 = vadd.f32 %v849, %v867
  %869 = vdwg.mxu0
  %870 = vst [vmem:[%s2] sm:$0xff] %v861
  %871 = vst [vmem:[%s2 + $0x8] sm:$0xff] %v863
  %872 = vst [vmem:[%s2 + $0x10] sm:$0xff] %v866
  %873 = vst [vmem:[%s2 + $0x18] sm:$0xff] %v868
  // Predicated region
  $region10: #{cnn_kan_forward.12} parent=0 // pred_check
    _
  $region11: #{cnn_kan_forward.12} parent=0 // pred_check_branch
    %875 = sbr.rel (0) target = $region13
  $region12: #{cnn_kan_forward.12} parent=0 // pred_region
    _
  $region13: #{cnn_kan_forward.12} parent=0 // pred_fallthru
    _
  // Predicated region
  $region14: #{cnn_kan_forward.12} parent=0 // pred_check
    _
  $region15: #{cnn_kan_forward.12} parent=0 // pred_check_branch
    %877 = sbr.rel (0) target = $region17
  $region16: #{cnn_kan_forward.12} parent=0 // pred_region
    _
  $region17: #{cnn_kan_forward.12} parent=0 // pred_fallthru
    _

// kernel: cnn_kan_forward.15
$region0: #{cnn_kan_forward.15}
  #allocation0 [shape = 'u32[]', space=smem, size = 0x4, offset = 0x4, fixed_abs, tag = 'smem constant byte address 0x4 - core index']
  #allocation1 [shape = 'u32[72,128]{1,0:T(1,128)}', space=vmem, size = 0x9000, scoped, tag = 'internal scratch']
  %s0 = inlined_call_operand.vmem [shape: f32[162], index: 0, kind: input, shape index: {}]
  %s1 = inlined_call_operand.vmem [shape: f32[9,8,256], index: 1, kind: input, shape index: {}]
  %s2 = inlined_call_operand.vmem [shape: f32[2,8,256], index: 2, kind: output, shape index: {}]
  %s3 = sld [smem:[#allocation0]]
  $region117: #{cnn_kan_forward.15} parent=0
    _
  %s5 = ssub.s32 1, %s3
  %s6 = scalar_select 0, %s5, %s3
  $region1: #{cnn_kan_forward.15} parent=0
    #allocation2 [shape = 'u8[1024]{0}', space=smem, size = 0x400, scoped, tag = 'input window, operand 0, single buffered']
    #allocation3 [shape = 's32[2]{0}', space=sflag, size = 0x8, scoped, tag = 'scoped memory for cnn_kan_forward.15']
    #allocation4 [shape = 'u8[73728]{0}', space=vmem, size = 0x12000, scoped, tag = 'input window, operand 1']
    #allocation5 [shape = 'u8[16384]{0}', space=vmem, size = 0x4000, scoped, tag = 'output window, operand 0']
    %7 = vsyncpa [#allocation3], 0
    loop: start=0, step=1, limit=4
    $region2: #{cnn_kan_forward.15} parent=1 // loop_pre_header
      _
    $region3: #{cnn_kan_forward.15} parent=1 // loop_header
      %s9 = sphi 0, %s13
      %p10 = scmp.ge.s32.totalorder %s9, 4
      %s16 = sphi 0, %s28
      %s17 = sphi 0, %s24
      %s18 = sphi 0, %s16
      %s19 = sphi 0, %s17
      %s20 = sphi 0, %s18
      %s21 = sphi 0, %s19
      %s29 = sphi 0, %s29
      %s31 = sphi 0, %s29
      %s32 = sphi 0, %s31
      %s46 = sphi 0, %s32
      %s54 = sphi 0, %s56
      %s57 = sphi 0, %s54
      %s58 = sphi 0, %s57
      %s74 = sphi 0, %s58
      %s82 = sphi 0, %s84
      %s85 = sphi 0, %s82
      %s86 = sphi 0, %s85
      %s102 = sphi 0, %s86
    $region4: #{cnn_kan_forward.15} parent=1 // loop_header_branch
      %12 = sbr.rel (%p10) target = $region8
    $region5: #{cnn_kan_forward.15} parent=1 // loop_body
      %s14 = ssub.s32 %s9, 1
      %s15 = ssub.s32 %s9, 2
      %s22 = sadd.s32 1, %s17
      %p23 = scmp.ge.s32.totalorder %s22, 2
      %s24 = scalar_select %p23, 0, %s22
      %s25 = sadd.s32 1, %s16
      %s26 = scalar_select %p23, %s25, %s16
      %p27 = scmp.ge.s32.totalorder %s26, 1
      %s28 = scalar_select %p27, 0, %s26
      %s30 = sadd.s32 %s29, 1
      %p33 = scmp.eq.s32.totalorder %s9, 1
      %p34 = scmp.ne.s32.totalorder %s29, %s31
      %p35 = scmp.eq.s32.totalorder %s9, 0
      %p36 = por %p34, %p35
      %p37 = scmp.ne.s32.totalorder %s29, %s31
      %p38 = scmp.eq.s32.totalorder %s14, 1
      %p39 = por %p37, %p38
      %p40 = scmp.ne.s32.totalorder %s31, %s32
      %p41 = scmp.eq.s32.totalorder %s14, 0
      %p42 = por %p40, %p41
      %p43 = scmp.ne.s32.totalorder %s31, %s32
      %p44 = scmp.eq.s32.totalorder %s15, 1
      %p45 = por %p43, %p44
      %p47 = scmp.ne.s32.totalorder %s32, %s46
      %p48 = scmp.eq.s32.totalorder %s15, 0
      %p49 = por %p47, %p48
      %s50 = ssub.s32 %s16, %s28
      %s51 = ssub.s32 %s17, %s24
      %s52 = sor.u32 %s50, %s51
      %p53 = scmp.eq.s32.totalorder %s52, 0
      %s55 = sadd.s32 %s54, 1
      %s56 = scalar_select %p53, %s54, %s55
      %p59 = pneg %p53
      %p60 = scmp.eq.s32.totalorder %s9, 1
      %p61 = por %p59, %p60
      %p62 = scmp.ne.s32.totalorder %s54, %s57
      %p63 = scmp.eq.s32.totalorder %s9, 0
      %p64 = por %p62, %p63
      %p65 = scmp.ne.s32.totalorder %s54, %s57
      %p66 = scmp.eq.s32.totalorder %s14, 1
      %p67 = por %p65, %p66
      %p68 = scmp.ne.s32.totalorder %s57, %s58
      %p69 = scmp.eq.s32.totalorder %s14, 0
      %p70 = por %p68, %p69
      %p71 = scmp.ne.s32.totalorder %s57, %s58
      %p72 = scmp.eq.s32.totalorder %s15, 1
      %p73 = por %p71, %p72
      %p75 = scmp.ne.s32.totalorder %s58, %s74
      %p76 = scmp.eq.s32.totalorder %s15, 0
      %p77 = por %p75, %p76
      %s78 = ssub.s32 %s16, %s28
      %s79 = ssub.s32 %s17, %s24
      %s80 = sor.u32 %s78, %s79
      %p81 = scmp.eq.s32.totalorder %s80, 0
      %s83 = sadd.s32 %s82, 1
      %s84 = scalar_select %p81, %s82, %s83
      %p87 = pneg %p81
      %p88 = scmp.eq.s32.totalorder %s9, 1
      %p89 = por %p87, %p88
      %p90 = scmp.ne.s32.totalorder %s82, %s85
      %p91 = scmp.eq.s32.totalorder %s9, 0
      %p92 = por %p90, %p91
      %p93 = scmp.ne.s32.totalorder %s82, %s85
      %p94 = scmp.eq.s32.totalorder %s14, 1
      %p95 = por %p93, %p94
      %p96 = scmp.ne.s32.totalorder %s85, %s86
      %p97 = scmp.eq.s32.totalorder %s14, 0
      %p98 = por %p96, %p97
      %p99 = scmp.ne.s32.totalorder %s85, %s86
      %p100 = scmp.eq.s32.totalorder %s15, 1
      %p101 = por %p99, %p100
      %p103 = scmp.ne.s32.totalorder %s86, %s102
      %p104 = scmp.eq.s32.totalorder %s15, 0
      %p105 = por %p103, %p104
      %p106 = scmp.le.s32.totalorder 1, %s9
      %p107 = scmp.lt.s32.totalorder %s9, 3
      %p108 = pnand %p106, %p107
      %p109 = pneg %p108
      // Predicated region
      $region9: #{cnn_kan_forward.15} parent=5 // pred_check
        _
      $region10: #{cnn_kan_forward.15} parent=5 // pred_check_branch
        %111 = sbr.rel (%p108) target = $region12
      $region11: #{cnn_kan_forward.15} parent=5 // pred_region
        %s112 = ssub.s32 %s9, 1
        // Predicated region
        $region13: #{cnn_kan_forward.15} parent=11 // pred_check
          %p113 = pneg %p42
        $region14: #{cnn_kan_forward.15} parent=11 // pred_check_branch
          %115 = sbr.rel (%p113) target = $region16
        $region15: #{cnn_kan_forward.15} parent=11 // pred_region
          %117 = vsyncadd [#allocation3], 0
          %s119 = sshll.u32 %s0, 4
          %s120 = int_to_ptr.vmem [resolvable:$true] %s119
          %122 = dma.vmem_to_smem %s120, 32, [#allocation2], [#allocation3]
        $region16: #{cnn_kan_forward.15} parent=11 // pred_fallthru
          _
      $region12: #{cnn_kan_forward.15} parent=5 // pred_fallthru
        _
      %p123 = scmp.lt.s32.totalorder %s9, 2
      // Predicated region
      $region17: #{cnn_kan_forward.15} parent=5 // pred_check
        %p124 = pneg %p123
      $region18: #{cnn_kan_forward.15} parent=5 // pred_check_branch
        %126 = sbr.rel (%p124) target = $region20
      $region19: #{cnn_kan_forward.15} parent=5 // pred_region
        // Predicated region
        $region21: #{cnn_kan_forward.15} parent=19 // pred_check
          %p127 = pneg %p64
        $region22: #{cnn_kan_forward.15} parent=19 // pred_check_branch
          %129 = sbr.rel (%p127) target = $region24
        $region23: #{cnn_kan_forward.15} parent=19 // pred_region
          %s130 = sand.u32 %s54, 1
          %s131 = sand.u32 %s54, 1
          %s132 = smul.addr %s131, 72
          %s133 = scalar_lea.vmem [#allocation4], %s132
          %s134 = smul.addr %s16, 2
          %s135 = sadd.s32 %s17, %s134
          %s136 = smul.addr %s135, 8
          %s137 = scalar_lea.vmem %s1, %s136
          // Predicated region
          $region25: #{cnn_kan_forward.15} parent=23 // pred_check
            _
          $region26: #{cnn_kan_forward.15} parent=23 // pred_check_branch
            %139 = sbr.rel (0) target = $region28
          $region27: #{cnn_kan_forward.15} parent=23 // pred_region
            // Predicated region
            $region29: #{cnn_kan_forward.15} parent=27 // pred_check
              _
            $region30: #{cnn_kan_forward.15} parent=27 // pred_check_branch
              %141 = sbr.rel (0) target = $region32
            $region31: #{cnn_kan_forward.15} parent=27 // pred_region
              // Predicated region
              $region44: #{cnn_kan_forward.15} parent=31 // pred_check
                _
              $region45: #{cnn_kan_forward.15} parent=31 // pred_check_branch
                %173 = sbr.rel (0) target = $region47
              $region46: #{cnn_kan_forward.15} parent=31 // pred_region
                loop: start=0, step=1, limit=1
                $region48: #{cnn_kan_forward.15} parent=46 // loop_pre_header
                  _
                $region49: #{cnn_kan_forward.15} parent=46 // loop_header
                  %s175 = sphi 0, %s179
                  %p176 = scmp.ge.s32.totalorder %s175, 1
                  %s180 = sphi %s137, %s137
                  %s181 = sphi %s133, %s133
                $region50: #{cnn_kan_forward.15} parent=46 // loop_header_branch
                  %178 = sbr.rel (%p176) target = $region54
                $region51: #{cnn_kan_forward.15} parent=46 // loop_body
                  %v182 = vld [vmem:[%s180] sm:$0xff]
                  %183 = vst [vmem:[%s181] sm:$0xff] %v182
                  %v184 = vld [vmem:[%s180 + $0x10] sm:$0xff]
                  %185 = vst [vmem:[%s181 + $0x8] sm:$0xff] %v184
                  %v186 = vld [vmem:[%s180 + $0x20] sm:$0xff]
                  %187 = vst [vmem:[%s181 + $0x10] sm:$0xff] %v186
                  %v188 = vld [vmem:[%s180 + $0x30] sm:$0xff]
                  %189 = vst [vmem:[%s181 + $0x18] sm:$0xff] %v188
                  %v190 = vld [vmem:[%s180 + $0x40] sm:$0xff]
                  %191 = vst [vmem:[%s181 + $0x20] sm:$0xff] %v190
                  %v192 = vld [vmem:[%s180 + $0x50] sm:$0xff]
                  %193 = vst [vmem:[%s181 + $0x28] sm:$0xff] %v192
                  %v194 = vld [vmem:[%s180 + $0x60] sm:$0xff]
                  %195 = vst [vmem:[%s181 + $0x30] sm:$0xff] %v194
                  %v196 = vld [vmem:[%s180 + $0x70] sm:$0xff]
                  %197 = vst [vmem:[%s181 + $0x38] sm:$0xff] %v196
                  %v198 = vld [vmem:[%s180 + $0x80] sm:$0xff]
                  %199 = vst [vmem:[%s181 + $0x40] sm:$0xff] %v198
                $region52: #{cnn_kan_forward.15} parent=46 // loop_footer
                  %s179 = sadd.s32 1, %s175
                $region53: #{cnn_kan_forward.15} parent=46 // loop_footer_branch
                  %174 = sbr.rel target = $region49
                $region54: #{cnn_kan_forward.15} parent=46 // loop_exit
                  _
              $region47: #{cnn_kan_forward.15} parent=31 // pred_fallthru
                _
              // Predicated region
              $region55: #{cnn_kan_forward.15} parent=31 // pred_check
                _
              $region56: #{cnn_kan_forward.15} parent=31 // pred_check_branch
                %201 = sbr.rel target = $region58
              $region57: #{cnn_kan_forward.15} parent=31 // pred_region
                _
              $region58: #{cnn_kan_forward.15} parent=31 // pred_fallthru
                _
            $region32: #{cnn_kan_forward.15} parent=27 // pred_fallthru
              _
            // Predicated region
            $region33: #{cnn_kan_forward.15} parent=27 // pred_check
              _
            $region34: #{cnn_kan_forward.15} parent=27 // pred_check_branch
              %143 = sbr.rel target = $region36
            $region35: #{cnn_kan_forward.15} parent=27 // pred_region
              %s145 = ssub.s32 256, 1
              loop: start=0, step=1, limit=1
              $region37: #{cnn_kan_forward.15} parent=35 // loop_pre_header
                _
              $region38: #{cnn_kan_forward.15} parent=35 // loop_header
                %s147 = sphi 0, %s151
                %p148 = scmp.ge.s32.totalorder %s147, 1
                %s152 = sphi %s137, %s137
                %s153 = sphi %s133, %s133
              $region39: #{cnn_kan_forward.15} parent=35 // loop_header_branch
                %150 = sbr.rel (%p148) target = $region43
              $region40: #{cnn_kan_forward.15} parent=35 // loop_body
                %v154 = vld [vmem:[%s152] sm:%s145]
                %155 = vst [vmem:[%s153] sm:%s145] %v154
                %v156 = vld [vmem:[%s152 + $0x10] sm:%s145]
                %157 = vst [vmem:[%s153 + $0x8] sm:%s145] %v156
                %v158 = vld [vmem:[%s152 + $0x20] sm:%s145]
                %159 = vst [vmem:[%s153 + $0x10] sm:%s145] %v158
                %v160 = vld [vmem:[%s152 + $0x30] sm:%s145]
                %161 = vst [vmem:[%s153 + $0x18] sm:%s145] %v160
                %v162 = vld [vmem:[%s152 + $0x40] sm:%s145]
                %163 = vst [vmem:[%s153 + $0x20] sm:%s145] %v162
                %v164 = vld [vmem:[%s152 + $0x50] sm:%s145]
                %165 = vst [vmem:[%s153 + $0x28] sm:%s145] %v164
                %v166 = vld [vmem:[%s152 + $0x60] sm:%s145]
                %167 = vst [vmem:[%s153 + $0x30] sm:%s145] %v166
                %v168 = vld [vmem:[%s152 + $0x70] sm:%s145]
                %169 = vst [vmem:[%s153 + $0x38] sm:%s145] %v168
                %v170 = vld [vmem:[%s152 + $0x80] sm:%s145]
                %171 = vst [vmem:[%s153 + $0x40] sm:%s145] %v170
              $region41: #{cnn_kan_forward.15} parent=35 // loop_footer
                %s151 = sadd.s32 1, %s147
              $region42: #{cnn_kan_forward.15} parent=35 // loop_footer_branch
                %146 = sbr.rel target = $region38
              $region43: #{cnn_kan_forward.15} parent=35 // loop_exit
                _
            $region36: #{cnn_kan_forward.15} parent=27 // pred_fallthru
              _
          $region28: #{cnn_kan_forward.15} parent=23 // pred_fallthru
            _
          %202 = vnop
        $region24: #{cnn_kan_forward.15} parent=19 // pred_fallthru
          _
      $region20: #{cnn_kan_forward.15} parent=5 // pred_fallthru
        _
      %p203 = scmp.le.s32.totalorder 1, %s9
      %p204 = scmp.lt.s32.totalorder %s9, 3
      %p205 = pnand %p203, %p204
      %p206 = pneg %p205
      // Predicated region
      $region59: #{cnn_kan_forward.15} parent=5 // pred_check
        _
      $region60: #{cnn_kan_forward.15} parent=5 // pred_check_branch
        %208 = sbr.rel (%p205) target = $region62
      $region61: #{cnn_kan_forward.15} parent=5 // pred_region
        %s209 = ssub.s32 %s9, 1
        // Predicated region
        $region63: #{cnn_kan_forward.15} parent=61 // pred_check
          %p210 = pneg %p42
        $region64: #{cnn_kan_forward.15} parent=61 // pred_check_branch
          %212 = sbr.rel (%p210) target = $region66
        $region65: #{cnn_kan_forward.15} parent=61 // pred_region
          %214 = dma.done [#allocation3], 32
        $region66: #{cnn_kan_forward.15} parent=61 // pred_fallthru
          _
        %s215 = sand.u32 %s57, 1
        %s216 = sand.u32 %s57, 1
        %s217 = smul.addr %s216, 72
        %s218 = scalar_lea.vmem [#allocation4], %s217
        // Predicated region
        $region67: #{cnn_kan_forward.15} parent=61 // pred_check
          %p219 = pneg %p70
        $region68: #{cnn_kan_forward.15} parent=61 // pred_check_branch
          %221 = sbr.rel (%p219) target = $region70
        $region69: #{cnn_kan_forward.15} parent=61 // pred_region
          _
        $region70: #{cnn_kan_forward.15} parent=61 // pred_fallthru
          _
        %222 = sfence
        %p223 = pneg %p42
        %p224 = pneg %p39
        %s225 = sand.u32 %s57, 1
        %s226 = sand.u32 %s57, 1
        %s227 = smul.addr %s226, 72
        %s228 = scalar_lea.vmem [#allocation4], %s227
        %p229 = pneg %p70
        %p230 = pneg %p67
        %p231 = pneg %p98
        %p232 = pneg %p95
        %s233 = sand.u32 %s85, 1
        %s234 = sand.u32 %s85, 1
        %s235 = smul.addr %s234, 16
        %s236 = scalar_lea.vmem [#allocation5], %s235
        %v237 = vld [vmem:[%s218] sm:$0xff]
        %v238 = vxor.u32 %v237, 2147483648
        %v239 = vmul.f32 %v238, 1.442695
        %v240 = vpow.pop %v239
        %v241 = vadd.f32 %v240, 1.0
        %v242 = vrcp.pop %v241
        %v243 = vmul.f32 %v241, %v242
        %v244 = vsub.f32 1.0, %v243
        %v245 = vmul.f32 %v242, %v244
        %v246 = vadd.f32 %v242, %v245
        %vm247 = vweird.f32 %v241
        %vm248 = vweird.f32 %v242
        %vm249 = vmor %vm247, %vm248
        %v250 = vsel %vm249, %v242, %v246
        %v251 = vand.u32 2147483647, %v241
        %vm252 = vcmp.eq.f32.partialorder %v251, 8.507059e+37
        %v253 = vand.u32 %v241, 2147483648
        %v254 = vor.u32 1.1754944e-38, %v253
        %v255 = vsel %vm252, %v254, %v250
        %v256 = vmul.f32 1.0, %v255
        %v257 = vmul.f32 %v237, %v256
        %s258 = sld [smem:[#allocation2]]
        %v259 = vstv %s258
        %v260 = vmul.f32 %v259, %v257
        %v261 = vadd.f32 %v260, 0.0
        %s262 = sld [smem:[#allocation2 + $0x51]]
        %v263 = vstv %s262
        %v264 = vmul.f32 %v263, %v257
        %v265 = vadd.f32 %v264, 0.0
        %v266 = vsub.f32 %v237, -2.2
        %v267 = vsub.f32 %v237, -1.8
        %v268 = vsub.f32 %v237, -1.4
        %v269 = vsub.f32 %v237, -1.0
        %v270 = vsub.f32 %v237, -0.6
        %v271 = vsub.f32 %v237, -0.2
        %v272 = vsub.f32 %v237, 0.2
        %v273 = vsub.f32 %v237, 0.6
        %v274 = vsub.f32 %v237, 1.0
        %v275 = vsub.f32 %v237, 1.4
        %v276 = vsub.f32 %v237, 1.8
        %v277 = vsub.f32 %v237, 2.2
        %vm278 = vcmp.ge.f32.partialorder %v266, 0.0
        %vm279 = vcmp.lt.f32.partialorder %v267, 0.0
        %vm280 = vmand %vm278, %vm279
        %v281 = vsel %vm280, 1, 0
        %v282 = vcvt.s32.f32 %v281
        %vm283 = vcmp.ge.f32.partialorder %v267, 0.0
        %vm284 = vcmp.lt.f32.partialorder %v268, 0.0
        %vm285 = vmand %vm283, %vm284
        %v286 = vsel %vm285, 1, 0
        %v287 = vcvt.s32.f32 %v286
        %vm288 = vcmp.ge.f32.partialorder %v268, 0.0
        %vm289 = vcmp.lt.f32.partialorder %v269, 0.0
        %vm290 = vmand %vm288, %vm289
        %v291 = vsel %vm290, 1, 0
        %v292 = vcvt.s32.f32 %v291
        %vm293 = vcmp.ge.f32.partialorder %v269, 0.0
        %vm294 = vcmp.lt.f32.partialorder %v270, 0.0
        %vm295 = vmand %vm293, %vm294
        %v296 = vsel %vm295, 1, 0
        %v297 = vcvt.s32.f32 %v296
        %vm298 = vcmp.ge.f32.partialorder %v270, 0.0
        %vm299 = vcmp.lt.f32.partialorder %v271, 0.0
        %vm300 = vmand %vm298, %vm299
        %v301 = vsel %vm300, 1, 0
        %v302 = vcvt.s32.f32 %v301
        %vm303 = vcmp.ge.f32.partialorder %v271, 0.0
        %vm304 = vcmp.lt.f32.partialorder %v272, 0.0
        %vm305 = vmand %vm303, %vm304
        %v306 = vsel %vm305, 1, 0
        %v307 = vcvt.s32.f32 %v306
        %vm308 = vcmp.ge.f32.partialorder %v272, 0.0
        %vm309 = vcmp.lt.f32.partialorder %v273, 0.0
        %vm310 = vmand %vm308, %vm309
        %v311 = vsel %vm310, 1, 0
        %v312 = vcvt.s32.f32 %v311
        %vm313 = vcmp.ge.f32.partialorder %v273, 0.0
        %vm314 = vcmp.lt.f32.partialorder %v274, 0.0
        %vm315 = vmand %vm313, %vm314
        %v316 = vsel %vm315, 1, 0
        %v317 = vcvt.s32.f32 %v316
        %vm318 = vcmp.ge.f32.partialorder %v274, 0.0
        %vm319 = vcmp.lt.f32.partialorder %v275, 0.0
        %vm320 = vmand %vm318, %vm319
        %v321 = vsel %vm320, 1, 0
        %v322 = vcvt.s32.f32 %v321
        %vm323 = vcmp.ge.f32.partialorder %v275, 0.0
        %vm324 = vcmp.lt.f32.partialorder %v276, 0.0
        %vm325 = vmand %vm323, %vm324
        %v326 = vsel %vm325, 1, 0
        %v327 = vcvt.s32.f32 %v326
        %vm328 = vcmp.ge.f32.partialorder %v276, 0.0
        %vm329 = vcmp.lt.f32.partialorder %v277, 0.0
        %vm330 = vmand %vm328, %vm329
        %v331 = vsel %vm330, 1, 0
        %v332 = vcvt.s32.f32 %v331
        %v333 = vmul.f32 %v266, 2.5
        %v334 = vmul.f32 %v333, %v282
        %v335 = vmul.f32 %v268, -2.5
        %v336 = vmul.f32 %v335, %v287
        %v337 = vadd.f32 %v334, %v336
        %v338 = vmul.f32 %v267, 2.5
        %v339 = vmul.f32 %v338, %v287
        %v340 = vmul.f32 %v269, -2.5
        %v341 = vmul.f32 %v340, %v292
        %v342 = vadd.f32 %v339, %v341
        %v343 = vmul.f32 %v268, 2.5
        %v344 = vmul.f32 %v343, %v292
        %v345 = vmul.f32 %v270, -2.5
        %v346 = vmul.f32 %v345, %v297
        %v347 = vadd.f32 %v344, %v346
        %v348 = vmul.f32 %v269, 2.5
        %v349 = vmul.f32 %v348, %v297
        %v350 = vmul.f32 %v271, -2.5
        %v351 = vmul.f32 %v350, %v302
        %v352 = vadd.f32 %v349, %v351
        %v353 = vmul.f32 %v270, 2.5
        %v354 = vmul.f32 %v353, %v302
        %v355 = vmul.f32 %v272, -2.5
        %v356 = vmul.f32 %v355, %v307
        %v357 = vadd.f32 %v354, %v356
        %v358 = vmul.f32 %v271, 2.5
        %v359 = vmul.f32 %v358, %v307
        %v360 = vmul.f32 %v273, -2.5
        %v361 = vmul.f32 %v360, %v312
        %v362 = vadd.f32 %v359, %v361
        %v363 = vmul.f32 %v272, 2.5
        %v364 = vmul.f32 %v363, %v312
        %v365 = vmul.f32 %v274, -2.5
        %v366 = vmul.f32 %v365, %v317
        %v367 = vadd.f32 %v364, %v366
        %v368 = vmul.f32 %v273, 2.5
        %v369 = vmul.f32 %v368, %v317
        %v370 = vmul.f32 %v275, -2.5
        %v371 = vmul.f32 %v370, %v322
        %v372 = vadd.f32 %v369, %v371
        %v373 = vmul.f32 %v274, 2.5
        %v374 = vmul.f32 %v373, %v322
        %v375 = vmul.f32 %v276, -2.5
        %v376 = vmul.f32 %v375, %v327
        %v377 = vadd.f32 %v374, %v376
        %v378 = vmul.f32 %v275, 2.5
        %v379 = vmul.f32 %v378, %v327
        %v380 = vmul.f32 %v277, -2.5
        %v381 = vmul.f32 %v380, %v332
        %v382 = vadd.f32 %v379, %v381
        %v383 = vmul.f32 %v266, 1.25
        %v384 = vmul.f32 %v383, %v337
        %v385 = vmul.f32 %v269, -1.25
        %v386 = vmul.f32 %v385, %v342
        %v387 = vadd.f32 %v384, %v386
        %v388 = vmul.f32 %v267, 1.25
        %v389 = vmul.f32 %v388, %v342
        %v390 = vmul.f32 %v270, -1.25
        %v391 = vmul.f32 %v390, %v347
        %v392 = vadd.f32 %v389, %v391
        %v393 = vmul.f32 %v268, 1.25
        %v394 = vmul.f32 %v393, %v347
        %v395 = vmul.f32 %v271, -1.25
        %v396 = vmul.f32 %v395, %v352
        %v397 = vadd.f32 %v394, %v396
        %v398 = vmul.f32 %v269, 1.25
        %v399 = vmul.f32 %v398, %v352
        %v400 = vmul.f32 %v272, -1.25
        %v401 = vmul.f32 %v400, %v357
        %v402 = vadd.f32 %v399, %v401
        %v403 = vmul.f32 %v270, 1.25
        %v404 = vmul.f32 %v403, %v357
        %v405 = vmul.f32 %v273, -1.25
        %v406 = vmul.f32 %v405, %v362
        %v407 = vadd.f32 %v404, %v406
        %v408 = vmul.f32 %v271, 1.25
        %v409 = vmul.f32 %v408, %v362
        %v410 = vmul.f32 %v274, -1.25
        %v411 = vmul.f32 %v410, %v367
        %v412 = vadd.f32 %v409, %v411
        %v413 = vmul.f32 %v272, 1.25
        %v414 = vmul.f32 %v413, %v367
        %v415 = vmul.f32 %v275, -1.25
        %v416 = vmul.f32 %v415, %v372
        %v417 = vadd.f32 %v414, %v416
        %v418 = vmul.f32 %v273, 1.25
        %v419 = vmul.f32 %v418, %v372
        %v420 = vmul.f32 %v276, -1.25
        %v421 = vmul.f32 %v420, %v377
        %v422 = vadd.f32 %v419, %v421
        %v423 = vmul.f32 %v274, 1.25
        %v424 = vmul.f32 %v423, %v377
        %v425 = vmul.f32 %v277, -1.25
        %v426 = vmul.f32 %v425, %v382
        %v427 = vadd.f32 %v424, %v426
        %v428 = vmul.f32 %v266, 0.8333333
        %v429 = vmul.f32 %v428, %v387
        %v430 = vmul.f32 %v270, -0.8333333
        %v431 = vmul.f32 %v430, %v392
        %v432 = vadd.f32 %v429, %v431
        %v433 = vmul.f32 %v267, 0.8333333
        %v434 = vmul.f32 %v433, %v392
        %v435 = vmul.f32 %v271, -0.8333333
        %v436 = vmul.f32 %v435, %v397
        %v437 = vadd.f32 %v434, %v436
        %v438 = vmul.f32 %v268, 0.8333333
        %v439 = vmul.f32 %v438, %v397
        %v440 = vmul.f32 %v272, -0.8333333
        %v441 = vmul.f32 %v440, %v402
        %v442 = vadd.f32 %v439, %v441
        %v443 = vmul.f32 %v269, 0.8333333
        %v444 = vmul.f32 %v443, %v402
        %v445 = vmul.f32 %v273, -0.8333333
        %v446 = vmul.f32 %v445, %v407
        %v447 = vadd.f32 %v444, %v446
        %v448 = vmul.f32 %v270, 0.8333333
        %v449 = vmul.f32 %v448, %v407
        %v450 = vmul.f32 %v274, -0.8333333
        %v451 = vmul.f32 %v450, %v412
        %v452 = vadd.f32 %v449, %v451
        %v453 = vmul.f32 %v271, 0.8333333
        %v454 = vmul.f32 %v453, %v412
        %v455 = vmul.f32 %v275, -0.8333333
        %v456 = vmul.f32 %v455, %v417
        %v457 = vadd.f32 %v454, %v456
        %v458 = vmul.f32 %v272, 0.8333333
        %v459 = vmul.f32 %v458, %v417
        %v460 = vmul.f32 %v276, -0.8333333
        %v461 = vmul.f32 %v460, %v422
        %v462 = vadd.f32 %v459, %v461
        %v463 = vmul.f32 %v273, 0.8333333
        %v464 = vmul.f32 %v463, %v422
        %v465 = vmul.f32 %v277, -0.8333333
        %v466 = vmul.f32 %v465, %v427
        %v467 = vadd.f32 %v464, %v466
        %s468 = sld [smem:[#allocation2 + $0x1]]
        %v469 = vstv %s468
        %v470 = vmul.f32 %v469, %v432
        %v471 = vadd.f32 %v261, %v470
        %s472 = sld [smem:[#allocation2 + $0x52]]
        %v473 = vstv %s472
        %v474 = vmul.f32 %v473, %v432
        %v475 = vadd.f32 %v265, %v474
        %s476 = sld [smem:[#allocation2 + $0x2]]
        %v477 = vstv %s476
        %v478 = vmul.f32 %v477, %v437
        %v479 = vadd.f32 %v471, %v478
        %s480 = sld [smem:[#allocation2 + $0x53]]
        %v481 = vstv %s480
        %v482 = vmul.f32 %v481, %v437
        %v483 = vadd.f32 %v475, %v482
        %s484 = sld [smem:[#allocation2 + $0x3]]
        %v485 = vstv %s484
        %v486 = vmul.f32 %v485, %v442
        %v487 = vadd.f32 %v479, %v486
        %s488 = sld [smem:[#allocation2 + $0x54]]
        %v489 = vstv %s488
        %v490 = vmul.f32 %v489, %v442
        %v491 = vadd.f32 %v483, %v490
        %s492 = sld [smem:[#allocation2 + $0x4]]
        %v493 = vstv %s492
        %v494 = vmul.f32 %v493, %v447
        %v495 = vadd.f32 %v487, %v494
        %s496 = sld [smem:[#allocation2 + $0x55]]
        %v497 = vstv %s496
        %v498 = vmul.f32 %v497, %v447
        %v499 = vadd.f32 %v491, %v498
        %s500 = sld [smem:[#allocation2 + $0x5]]
        %v501 = vstv %s500
        %v502 = vmul.f32 %v501, %v452
        %v503 = vadd.f32 %v495, %v502
        %s504 = sld [smem:[#allocation2 + $0x56]]
        %v505 = vstv %s504
        %v506 = vmul.f32 %v505, %v452
        %v507 = vadd.f32 %v499, %v506
        %s508 = sld [smem:[#allocation2 + $0x6]]
        %v509 = vstv %s508
        %v510 = vmul.f32 %v509, %v457
        %v511 = vadd.f32 %v503, %v510
        %s512 = sld [smem:[#allocation2 + $0x57]]
        %v513 = vstv %s512
        %v514 = vmul.f32 %v513, %v457
        %v515 = vadd.f32 %v507, %v514
        %s516 = sld [smem:[#allocation2 + $0x7]]
        %v517 = vstv %s516
        %v518 = vmul.f32 %v517, %v462
        %v519 = vadd.f32 %v511, %v518
        %s520 = sld [smem:[#allocation2 + $0x58]]
        %v521 = vstv %s520
        %v522 = vmul.f32 %v521, %v462
        %v523 = vadd.f32 %v515, %v522
        %s524 = sld [smem:[#allocation2 + $0x8]]
        %v525 = vstv %s524
        %v526 = vmul.f32 %v525, %v467
        %v527 = vadd.f32 %v519, %v526
        %s528 = sld [smem:[#allocation2 + $0x59]]
        %v529 = vstv %s528
        %v530 = vmul.f32 %v529, %v467
        %v531 = vadd.f32 %v523, %v530
        %s532 = scalar_lea.vmem %s218, 8 [#allocation4]
        %v533 = vld [vmem:[%s532] sm:$0xff]
        %v534 = vxor.u32 %v533, 2147483648
        %v535 = vmul.f32 %v534, 1.442695
        %v536 = vpow.pop %v535
        %v537 = vadd.f32 %v536, 1.0
        %v538 = vrcp.pop %v537
        %v539 = vmul.f32 %v537, %v538
        %v540 = vsub.f32 1.0, %v539
        %v541 = vmul.f32 %v538, %v540
        %v542 = vadd.f32 %v538, %v541
        %vm543 = vweird.f32 %v537
        %vm544 = vweird.f32 %v538
        %vm545 = vmor %vm543, %vm544
        %v546 = vsel %vm545, %v538, %v542
        %v547 = vand.u32 2147483647, %v537
        %vm548 = vcmp.eq.f32.partialorder %v547, 8.507059e+37
        %v549 = vand.u32 %v537, 2147483648
        %v550 = vor.u32 1.1754944e-38, %v549
        %v551 = vsel %vm548, %v550, %v546
        %v552 = vmul.f32 1.0, %v551
        %v553 = vmul.f32 %v533, %v552
        %s554 = sld [smem:[#allocation2 + $0x9]]
        %v555 = vstv %s554
        %v556 = vmul.f32 %v555, %v553
        %v557 = vadd.f32 %v527, %v556
        %s558 = sld [smem:[#allocation2 + $0x5a]]
        %v559 = vstv %s558
        %v560 = vmul.f32 %v559, %v553
        %v561 = vadd.f32 %v531, %v560
        %v562 = vsub.f32 %v533, -2.2
        %v563 = vsub.f32 %v533, -1.8
        %v564 = vsub.f32 %v533, -1.4
        %v565 = vsub.f32 %v533, -1.0
        %v566 = vsub.f32 %v533, -0.6
        %v567 = vsub.f32 %v533, -0.2
        %v568 = vsub.f32 %v533, 0.2
        %v569 = vsub.f32 %v533, 0.6
        %v570 = vsub.f32 %v533, 1.0
        %v571 = vsub.f32 %v533, 1.4
        %v572 = vsub.f32 %v533, 1.8
        %v573 = vsub.f32 %v533, 2.2
        %vm574 = vcmp.ge.f32.partialorder %v562, 0.0
        %vm575 = vcmp.lt.f32.partialorder %v563, 0.0
        %vm576 = vmand %vm574, %vm575
        %v577 = vsel %vm576, 1, 0
        %v578 = vcvt.s32.f32 %v577
        %vm579 = vcmp.ge.f32.partialorder %v563, 0.0
        %vm580 = vcmp.lt.f32.partialorder %v564, 0.0
        %vm581 = vmand %vm579, %vm580
        %v582 = vsel %vm581, 1, 0
        %v583 = vcvt.s32.f32 %v582
        %vm584 = vcmp.ge.f32.partialorder %v564, 0.0
        %vm585 = vcmp.lt.f32.partialorder %v565, 0.0
        %vm586 = vmand %vm584, %vm585
        %v587 = vsel %vm586, 1, 0
        %v588 = vcvt.s32.f32 %v587
        %vm589 = vcmp.ge.f32.partialorder %v565, 0.0
        %vm590 = vcmp.lt.f32.partialorder %v566, 0.0
        %vm591 = vmand %vm589, %vm590
        %v592 = vsel %vm591, 1, 0
        %v593 = vcvt.s32.f32 %v592
        %vm594 = vcmp.ge.f32.partialorder %v566, 0.0
        %vm595 = vcmp.lt.f32.partialorder %v567, 0.0
        %vm596 = vmand %vm594, %vm595
        %v597 = vsel %vm596, 1, 0
        %v598 = vcvt.s32.f32 %v597
        %vm599 = vcmp.ge.f32.partialorder %v567, 0.0
        %vm600 = vcmp.lt.f32.partialorder %v568, 0.0
        %vm601 = vmand %vm599, %vm600
        %v602 = vsel %vm601, 1, 0
        %v603 = vcvt.s32.f32 %v602
        %vm604 = vcmp.ge.f32.partialorder %v568, 0.0
        %vm605 = vcmp.lt.f32.partialorder %v569, 0.0
        %vm606 = vmand %vm604, %vm605
        %v607 = vsel %vm606, 1, 0
        %v608 = vcvt.s32.f32 %v607
        %vm609 = vcmp.ge.f32.partialorder %v569, 0.0
        %vm610 = vcmp.lt.f32.partialorder %v570, 0.0
        %vm611 = vmand %vm609, %vm610
        %v612 = vsel %vm611, 1, 0
        %v613 = vcvt.s32.f32 %v612
        %vm614 = vcmp.ge.f32.partialorder %v570, 0.0
        %vm615 = vcmp.lt.f32.partialorder %v571, 0.0
        %vm616 = vmand %vm614, %vm615
        %v617 = vsel %vm616, 1, 0
        %v618 = vcvt.s32.f32 %v617
        %vm619 = vcmp.ge.f32.partialorder %v571, 0.0
        %vm620 = vcmp.lt.f32.partialorder %v572, 0.0
        %vm621 = vmand %vm619, %vm620
        %v622 = vsel %vm621, 1, 0
        %v623 = vcvt.s32.f32 %v622
        %vm624 = vcmp.ge.f32.partialorder %v572, 0.0
        %vm625 = vcmp.lt.f32.partialorder %v573, 0.0
        %vm626 = vmand %vm624, %vm625
        %v627 = vsel %vm626, 1, 0
        %v628 = vcvt.s32.f32 %v627
        %v629 = vmul.f32 %v562, 2.5
        %v630 = vmul.f32 %v629, %v578
        %v631 = vmul.f32 %v564, -2.5
        %v632 = vmul.f32 %v631, %v583
        %v633 = vadd.f32 %v630, %v632
        %v634 = vmul.f32 %v563, 2.5
        %v635 = vmul.f32 %v634, %v583
        %v636 = vmul.f32 %v565, -2.5
        %v637 = vmul.f32 %v636, %v588
        %v638 = vadd.f32 %v635, %v637
        %v639 = vmul.f32 %v564, 2.5
        %v640 = vmul.f32 %v639, %v588
        %v641 = vmul.f32 %v566, -2.5
        %v642 = vmul.f32 %v641, %v593
        %v643 = vadd.f32 %v640, %v642
        %v644 = vmul.f32 %v565, 2.5
        %v645 = vmul.f32 %v644, %v593
        %v646 = vmul.f32 %v567, -2.5
        %v647 = vmul.f32 %v646, %v598
        %v648 = vadd.f32 %v645, %v647
        %v649 = vmul.f32 %v566, 2.5
        %v650 = vmul.f32 %v649, %v598
        %v651 = vmul.f32 %v568, -2.5
        %v652 = vmul.f32 %v651, %v603
        %v653 = vadd.f32 %v650, %v652
        %v654 = vmul.f32 %v567, 2.5
        %v655 = vmul.f32 %v654, %v603
        %v656 = vmul.f32 %v569, -2.5
        %v657 = vmul.f32 %v656, %v608
        %v658 = vadd.f32 %v655, %v657
        %v659 = vmul.f32 %v568, 2.5
        %v660 = vmul.f32 %v659, %v608
        %v661 = vmul.f32 %v570, -2.5
        %v662 = vmul.f32 %v661, %v613
        %v663 = vadd.f32 %v660, %v662
        %v664 = vmul.f32 %v569, 2.5
        %v665 = vmul.f32 %v664, %v613
        %v666 = vmul.f32 %v571, -2.5
        %v667 = vmul.f32 %v666, %v618
        %v668 = vadd.f32 %v665, %v667
        %v669 = vmul.f32 %v570, 2.5
        %v670 = vmul.f32 %v669, %v618
        %v671 = vmul.f32 %v572, -2.5
        %v672 = vmul.f32 %v671, %v623
        %v673 = vadd.f32 %v670, %v672
        %v674 = vmul.f32 %v571, 2.5
        %v675 = vmul.f32 %v674, %v623
        %v676 = vmul.f32 %v573, -2.5
        %v677 = vmul.f32 %v676, %v628
        %v678 = vadd.f32 %v675, %v677
        %v679 = vmul.f32 %v562, 1.25
        %v680 = vmul.f32 %v679, %v633
        %v681 = vmul.f32 %v565, -1.25
        %v682 = vmul.f32 %v681, %v638
        %v683 = vadd.f32 %v680, %v682
        %v684 = vmul.f32 %v563, 1.25
        %v685 = vmul.f32 %v684, %v638
        %v686 = vmul.f32 %v566, -1.25
        %v687 = vmul.f32 %v686, %v643
        %v688 = vadd.f32 %v685, %v687
        %v689 = vmul.f32 %v564, 1.25
        %v690 = vmul.f32 %v689, %v643
        %v691 = vmul.f32 %v567, -1.25
        %v692 = vmul.f32 %v691, %v648
        %v693 = vadd.f32 %v690, %v692
        %v694 = vmul.f32 %v565, 1.25
        %v695 = vmul.f32 %v694, %v648
        %v696 = vmul.f32 %v568, -1.25
        %v697 = vmul.f32 %v696, %v653
        %v698 = vadd.f32 %v695, %v697
        %v699 = vmul.f32 %v566, 1.25
        %v700 = vmul.f32 %v699, %v653
        %v701 = vmul.f32 %v569, -1.25
        %v702 = vmul.f32 %v701, %v658
        %v703 = vadd.f32 %v700, %v702
        %v704 = vmul.f32 %v567, 1.25
        %v705 = vmul.f32 %v704, %v658
        %v706 = vmul.f32 %v570, -1.25
        %v707 = vmul.f32 %v706, %v663
        %v708 = vadd.f32 %v705, %v707
        %v709 = vmul.f32 %v568, 1.25
        %v710 = vmul.f32 %v709, %v663
        %v711 = vmul.f32 %v571, -1.25
        %v712 = vmul.f32 %v711, %v668
        %v713 = vadd.f32 %v710, %v712
        %v714 = vmul.f32 %v569, 1.25
        %v715 = vmul.f32 %v714, %v668
        %v716 = vmul.f32 %v572, -1.25
        %v717 = vmul.f32 %v716, %v673
        %v718 = vadd.f32 %v715, %v717
        %v719 = vmul.f32 %v570, 1.25
        %v720 = vmul.f32 %v719, %v673
        %v721 = vmul.f32 %v573, -1.25
        %v722 = vmul.f32 %v721, %v678
        %v723 = vadd.f32 %v720, %v722
        %v724 = vmul.f32 %v562, 0.8333333
        %v725 = vmul.f32 %v724, %v683
        %v726 = vmul.f32 %v566, -0.8333333
        %v727 = vmul.f32 %v726, %v688
        %v728 = vadd.f32 %v725, %v727
        %v729 = vmul.f32 %v563, 0.8333333
        %v730 = vmul.f32 %v729, %v688
        %v731 = vmul.f32 %v567, -0.8333333
        %v732 = vmul.f32 %v731, %v693
        %v733 = vadd.f32 %v730, %v732
        %v734 = vmul.f32 %v564, 0.8333333
        %v735 = vmul.f32 %v734, %v693
        %v736 = vmul.f32 %v568, -0.8333333
        %v737 = vmul.f32 %v736, %v698
        %v738 = vadd.f32 %v735, %v737
        %v739 = vmul.f32 %v565, 0.8333333
        %v740 = vmul.f32 %v739, %v698
        %v741 = vmul.f32 %v569, -0.8333333
        %v742 = vmul.f32 %v741, %v703
        %v743 = vadd.f32 %v740, %v742
        %v744 = vmul.f32 %v566, 0.8333333
        %v745 = vmul.f32 %v744, %v703
        %v746 = vmul.f32 %v570, -0.8333333
        %v747 = vmul.f32 %v746, %v708
        %v748 = vadd.f32 %v745, %v747
        %v749 = vmul.f32 %v567, 0.8333333
        %v750 = vmul.f32 %v749, %v708
        %v751 = vmul.f32 %v571, -0.8333333
        %v752 = vmul.f32 %v751, %v713
        %v753 = vadd.f32 %v750, %v752
        %v754 = vmul.f32 %v568, 0.8333333
        %v755 = vmul.f32 %v754, %v713
        %v756 = vmul.f32 %v572, -0.8333333
        %v757 = vmul.f32 %v756, %v718
        %v758 = vadd.f32 %v755, %v757
        %v759 = vmul.f32 %v569, 0.8333333
        %v760 = vmul.f32 %v759, %v718
        %v761 = vmul.f32 %v573, -0.8333333
        %v762 = vmul.f32 %v761, %v723
        %v763 = vadd.f32 %v760, %v762
        %s764 = sld [smem:[#allocation2 + $0xa]]
        %v765 = vstv %s764
        %v766 = vmul.f32 %v765, %v728
        %v767 = vadd.f32 %v557, %v766
        %s768 = sld [smem:[#allocation2 + $0x5b]]
        %v769 = vstv %s768
        %v770 = vmul.f32 %v769, %v728
        %v771 = vadd.f32 %v561, %v770
        %s772 = sld [smem:[#allocation2 + $0xb]]
        %v773 = vstv %s772
        %v774 = vmul.f32 %v773, %v733
        %v775 = vadd.f32 %v767, %v774
        %s776 = sld [smem:[#allocation2 + $0x5c]]
        %v777 = vstv %s776
        %v778 = vmul.f32 %v777, %v733
        %v779 = vadd.f32 %v771, %v778
        %s780 = sld [smem:[#allocation2 + $0xc]]
        %v781 = vstv %s780
        %v782 = vmul.f32 %v781, %v738
        %v783 = vadd.f32 %v775, %v782
        %s784 = sld [smem:[#allocation2 + $0x5d]]
        %v785 = vstv %s784
        %v786 = vmul.f32 %v785, %v738
        %v787 = vadd.f32 %v779, %v786
        %s788 = sld [smem:[#allocation2 + $0xd]]
        %v789 = vstv %s788
        %v790 = vmul.f32 %v789, %v743
        %v791 = vadd.f32 %v783, %v790
        %s792 = sld [smem:[#allocation2 + $0x5e]]
        %v793 = vstv %s792
        %v794 = vmul.f32 %v793, %v743
        %v795 = vadd.f32 %v787, %v794
        %s796 = sld [smem:[#allocation2 + $0xe]]
        %v797 = vstv %s796
        %v798 = vmul.f32 %v797, %v748
        %v799 = vadd.f32 %v791, %v798
        %s800 = sld [smem:[#allocation2 + $0x5f]]
        %v801 = vstv %s800
        %v802 = vmul.f32 %v801, %v748
        %v803 = vadd.f32 %v795, %v802
        %s804 = sld [smem:[#allocation2 + $0xf]]
        %v805 = vstv %s804
        %v806 = vmul.f32 %v805, %v753
        %v807 = vadd.f32 %v799, %v806
        %s808 = sld [smem:[#allocation2 + $0x60]]
        %v809 = vstv %s808
        %v810 = vmul.f32 %v809, %v753
        %v811 = vadd.f32 %v803, %v810
        %s812 = sld [smem:[#allocation2 + $0x10]]
        %v813 = vstv %s812
        %v814 = vmul.f32 %v813, %v758
        %v815 = vadd.f32 %v807, %v814
        %s816 = sld [smem:[#allocation2 + $0x61]]
        %v817 = vstv %s816
        %v818 = vmul.f32 %v817, %v758
        %v819 = vadd.f32 %v811, %v818
        %s820 = sld [smem:[#allocation2 + $0x11]]
        %v821 = vstv %s820
        %v822 = vmul.f32 %v821, %v763
        %v823 = vadd.f32 %v815, %v822
        %s824 = sld [smem:[#allocation2 + $0x62]]
        %v825 = vstv %s824
        %v826 = vmul.f32 %v825, %v763
        %v827 = vadd.f32 %v819, %v826
        %s828 = scalar_lea.vmem %s218, 16 [#allocation4]
        %v829 = vld [vmem:[%s828] sm:$0xff]
        %v830 = vxor.u32 %v829, 2147483648
        %v831 = vmul.f32 %v830, 1.442695
        %v832 = vpow.pop %v831
        %v833 = vadd.f32 %v832, 1.0
        %v834 = vrcp.pop %v833
        %v835 = vmul.f32 %v833, %v834
        %v836 = vsub.f32 1.0, %v835
        %v837 = vmul.f32 %v834, %v836
        %v838 = vadd.f32 %v834, %v837
        %vm839 = vweird.f32 %v833
        %vm840 = vweird.f32 %v834
        %vm841 = vmor %vm839, %vm840
        %v842 = vsel %vm841, %v834, %v838
        %v843 = vand.u32 2147483647, %v833
        %vm844 = vcmp.eq.f32.partialorder %v843, 8.507059e+37
        %v845 = vand.u32 %v833, 2147483648
        %v846 = vor.u32 1.1754944e-38, %v845
        %v847 = vsel %vm844, %v846, %v842
        %v848 = vmul.f32 1.0, %v847
        %v849 = vmul.f32 %v829, %v848
        %s850 = sld [smem:[#allocation2 + $0x12]]
        %v851 = vstv %s850
        %v852 = vmul.f32 %v851, %v849
        %v853 = vadd.f32 %v823, %v852
        %s854 = sld [smem:[#allocation2 + $0x63]]
        %v855 = vstv %s854
        %v856 = vmul.f32 %v855, %v849
        %v857 = vadd.f32 %v827, %v856
        %v858 = vsub.f32 %v829, -2.2
        %v859 = vsub.f32 %v829, -1.8
        %v860 = vsub.f32 %v829, -1.4
        %v861 = vsub.f32 %v829, -1.0
        %v862 = vsub.f32 %v829, -0.6
        %v863 = vsub.f32 %v829, -0.2
        %v864 = vsub.f32 %v829, 0.2
        %v865 = vsub.f32 %v829, 0.6
        %v866 = vsub.f32 %v829, 1.0
        %v867 = vsub.f32 %v829, 1.4
        %v868 = vsub.f32 %v829, 1.8
        %v869 = vsub.f32 %v829, 2.2
        %vm870 = vcmp.ge.f32.partialorder %v858, 0.0
        %vm871 = vcmp.lt.f32.partialorder %v859, 0.0
        %vm872 = vmand %vm870, %vm871
        %v873 = vsel %vm872, 1, 0
        %v874 = vcvt.s32.f32 %v873
        %vm875 = vcmp.ge.f32.partialorder %v859, 0.0
        %vm876 = vcmp.lt.f32.partialorder %v860, 0.0
        %vm877 = vmand %vm875, %vm876
        %v878 = vsel %vm877, 1, 0
        %v879 = vcvt.s32.f32 %v878
        %vm880 = vcmp.ge.f32.partialorder %v860, 0.0
        %vm881 = vcmp.lt.f32.partialorder %v861, 0.0
        %vm882 = vmand %vm880, %vm881
        %v883 = vsel %vm882, 1, 0
        %v884 = vcvt.s32.f32 %v883
        %vm885 = vcmp.ge.f32.partialorder %v861, 0.0
        %vm886 = vcmp.lt.f32.partialorder %v862, 0.0
        %vm887 = vmand %vm885, %vm886
        %v888 = vsel %vm887, 1, 0
        %v889 = vcvt.s32.f32 %v888
        %vm890 = vcmp.ge.f32.partialorder %v862, 0.0
        %vm891 = vcmp.lt.f32.partialorder %v863, 0.0
        %vm892 = vmand %vm890, %vm891
        %v893 = vsel %vm892, 1, 0
        %v894 = vcvt.s32.f32 %v893
        %vm895 = vcmp.ge.f32.partialorder %v863, 0.0
        %vm896 = vcmp.lt.f32.partialorder %v864, 0.0
        %vm897 = vmand %vm895, %vm896
        %v898 = vsel %vm897, 1, 0
        %v899 = vcvt.s32.f32 %v898
        %vm900 = vcmp.ge.f32.partialorder %v864, 0.0
        %vm901 = vcmp.lt.f32.partialorder %v865, 0.0
        %vm902 = vmand %vm900, %vm901
        %v903 = vsel %vm902, 1, 0
        %v904 = vcvt.s32.f32 %v903
        %vm905 = vcmp.ge.f32.partialorder %v865, 0.0
        %vm906 = vcmp.lt.f32.partialorder %v866, 0.0
        %vm907 = vmand %vm905, %vm906
        %v908 = vsel %vm907, 1, 0
        %v909 = vcvt.s32.f32 %v908
        %vm910 = vcmp.ge.f32.partialorder %v866, 0.0
        %vm911 = vcmp.lt.f32.partialorder %v867, 0.0
        %vm912 = vmand %vm910, %vm911
        %v913 = vsel %vm912, 1, 0
        %v914 = vcvt.s32.f32 %v913
        %vm915 = vcmp.ge.f32.partialorder %v867, 0.0
        %vm916 = vcmp.lt.f32.partialorder %v868, 0.0
        %vm917 = vmand %vm915, %vm916
        %v918 = vsel %vm917, 1, 0
        %v919 = vcvt.s32.f32 %v918
        %vm920 = vcmp.ge.f32.partialorder %v868, 0.0
        %vm921 = vcmp.lt.f32.partialorder %v869, 0.0
        %vm922 = vmand %vm920, %vm921
        %v923 = vsel %vm922, 1, 0
        %v924 = vcvt.s32.f32 %v923
        %v925 = vmul.f32 %v858, 2.5
        %v926 = vmul.f32 %v925, %v874
        %v927 = vmul.f32 %v860, -2.5
        %v928 = vmul.f32 %v927, %v879
        %v929 = vadd.f32 %v926, %v928
        %v930 = vmul.f32 %v859, 2.5
        %v931 = vmul.f32 %v930, %v879
        %v932 = vmul.f32 %v861, -2.5
        %v933 = vmul.f32 %v932, %v884
        %v934 = vadd.f32 %v931, %v933
        %v935 = vmul.f32 %v860, 2.5
        %v936 = vmul.f32 %v935, %v884
        %v937 = vmul.f32 %v862, -2.5
        %v938 = vmul.f32 %v937, %v889
        %v939 = vadd.f32 %v936, %v938
        %v940 = vmul.f32 %v861, 2.5
        %v941 = vmul.f32 %v940, %v889
        %v942 = vmul.f32 %v863, -2.5
        %v943 = vmul.f32 %v942, %v894
        %v944 = vadd.f32 %v941, %v943
        %v945 = vmul.f32 %v862, 2.5
        %v946 = vmul.f32 %v945, %v894
        %v947 = vmul.f32 %v864, -2.5
        %v948 = vmul.f32 %v947, %v899
        %v949 = vadd.f32 %v946, %v948
        %v950 = vmul.f32 %v863, 2.5
        %v951 = vmul.f32 %v950, %v899
        %v952 = vmul.f32 %v865, -2.5
        %v953 = vmul.f32 %v952, %v904
        %v954 = vadd.f32 %v951, %v953
        %v955 = vmul.f32 %v864, 2.5
        %v956 = vmul.f32 %v955, %v904
        %v957 = vmul.f32 %v866, -2.5
        %v958 = vmul.f32 %v957, %v909
        %v959 = vadd.f32 %v956, %v958
        %v960 = vmul.f32 %v865, 2.5
        %v961 = vmul.f32 %v960, %v909
        %v962 = vmul.f32 %v867, -2.5
        %v963 = vmul.f32 %v962, %v914
        %v964 = vadd.f32 %v961, %v963
        %v965 = vmul.f32 %v866, 2.5
        %v966 = vmul.f32 %v965, %v914
        %v967 = vmul.f32 %v868, -2.5
        %v968 = vmul.f32 %v967, %v919
        %v969 = vadd.f32 %v966, %v968
        %v970 = vmul.f32 %v867, 2.5
        %v971 = vmul.f32 %v970, %v919
        %v972 = vmul.f32 %v869, -2.5
        %v973 = vmul.f32 %v972, %v924
        %v974 = vadd.f32 %v971, %v973
        %v975 = vmul.f32 %v858, 1.25
        %v976 = vmul.f32 %v975, %v929
        %v977 = vmul.f32 %v861, -1.25
        %v978 = vmul.f32 %v977, %v934
        %v979 = vadd.f32 %v976, %v978
        %v980 = vmul.f32 %v859, 1.25
        %v981 = vmul.f32 %v980, %v934
        %v982 = vmul.f32 %v862, -1.25
        %v983 = vmul.f32 %v982, %v939
        %v984 = vadd.f32 %v981, %v983
        %v985 = vmul.f32 %v860, 1.25
        %v986 = vmul.f32 %v985, %v939
        %v987 = vmul.f32 %v863, -1.25
        %v988 = vmul.f32 %v987, %v944
        %v989 = vadd.f32 %v986, %v988
        %v990 = vmul.f32 %v861, 1.25
        %v991 = vmul.f32 %v990, %v944
        %v992 = vmul.f32 %v864, -1.25
        %v993 = vmul.f32 %v992, %v949
        %v994 = vadd.f32 %v991, %v993
        %v995 = vmul.f32 %v862, 1.25
        %v996 = vmul.f32 %v995, %v949
        %v997 = vmul.f32 %v865, -1.25
        %v998 = vmul.f32 %v997, %v954
        %v999 = vadd.f32 %v996, %v998
        %v1000 = vmul.f32 %v863, 1.25
        %v1001 = vmul.f32 %v1000, %v954
        %v1002 = vmul.f32 %v866, -1.25
        %v1003 = vmul.f32 %v1002, %v959
        %v1004 = vadd.f32 %v1001, %v1003
        %v1005 = vmul.f32 %v864, 1.25
        %v1006 = vmul.f32 %v1005, %v959
        %v1007 = vmul.f32 %v867, -1.25
        %v1008 = vmul.f32 %v1007, %v964
        %v1009 = vadd.f32 %v1006, %v1008
        %v1010 = vmul.f32 %v865, 1.25
        %v1011 = vmul.f32 %v1010, %v964
        %v1012 = vmul.f32 %v868, -1.25
        %v1013 = vmul.f32 %v1012, %v969
        %v1014 = vadd.f32 %v1011, %v1013
        %v1015 = vmul.f32 %v866, 1.25
        %v1016 = vmul.f32 %v1015, %v969
        %v1017 = vmul.f32 %v869, -1.25
        %v1018 = vmul.f32 %v1017, %v974
        %v1019 = vadd.f32 %v1016, %v1018
        %v1020 = vmul.f32 %v858, 0.8333333
        %v1021 = vmul.f32 %v1020, %v979
        %v1022 = vmul.f32 %v862, -0.8333333
        %v1023 = vmul.f32 %v1022, %v984
        %v1024 = vadd.f32 %v1021, %v1023
        %v1025 = vmul.f32 %v859, 0.8333333
        %v1026 = vmul.f32 %v1025, %v984
        %v1027 = vmul.f32 %v863, -0.8333333
        %v1028 = vmul.f32 %v1027, %v989
        %v1029 = vadd.f32 %v1026, %v1028
        %v1030 = vmul.f32 %v860, 0.8333333
        %v1031 = vmul.f32 %v1030, %v989
        %v1032 = vmul.f32 %v864, -0.8333333
        %v1033 = vmul.f32 %v1032, %v994
        %v1034 = vadd.f32 %v1031, %v1033
        %v1035 = vmul.f32 %v861, 0.8333333
        %v1036 = vmul.f32 %v1035, %v994
        %v1037 = vmul.f32 %v865, -0.8333333
        %v1038 = vmul.f32 %v1037, %v999
        %v1039 = vadd.f32 %v1036, %v1038
        %v1040 = vmul.f32 %v862, 0.8333333
        %v1041 = vmul.f32 %v1040, %v999
        %v1042 = vmul.f32 %v866, -0.8333333
        %v1043 = vmul.f32 %v1042, %v1004
        %v1044 = vadd.f32 %v1041, %v1043
        %v1045 = vmul.f32 %v863, 0.8333333
        %v1046 = vmul.f32 %v1045, %v1004
        %v1047 = vmul.f32 %v867, -0.8333333
        %v1048 = vmul.f32 %v1047, %v1009
        %v1049 = vadd.f32 %v1046, %v1048
        %v1050 = vmul.f32 %v864, 0.8333333
        %v1051 = vmul.f32 %v1050, %v1009
        %v1052 = vmul.f32 %v868, -0.8333333
        %v1053 = vmul.f32 %v1052, %v1014
        %v1054 = vadd.f32 %v1051, %v1053
        %v1055 = vmul.f32 %v865, 0.8333333
        %v1056 = vmul.f32 %v1055, %v1014
        %v1057 = vmul.f32 %v869, -0.8333333
        %v1058 = vmul.f32 %v1057, %v1019
        %v1059 = vadd.f32 %v1056, %v1058
        %s1060 = sld [smem:[#allocation2 + $0x13]]
        %v1061 = vstv %s1060
        %v1062 = vmul.f32 %v1061, %v1024
        %v1063 = vadd.f32 %v853, %v1062
        %s1064 = sld [smem:[#allocation2 + $0x64]]
        %v1065 = vstv %s1064
        %v1066 = vmul.f32 %v1065, %v1024
        %v1067 = vadd.f32 %v857, %v1066
        %s1068 = sld [smem:[#allocation2 + $0x14]]
        %v1069 = vstv %s1068
        %v1070 = vmul.f32 %v1069, %v1029
        %v1071 = vadd.f32 %v1063, %v1070
        %s1072 = sld [smem:[#allocation2 + $0x65]]
        %v1073 = vstv %s1072
        %v1074 = vmul.f32 %v1073, %v1029
        %v1075 = vadd.f32 %v1067, %v1074
        %s1076 = sld [smem:[#allocation2 + $0x15]]
        %v1077 = vstv %s1076
        %v1078 = vmul.f32 %v1077, %v1034
        %v1079 = vadd.f32 %v1071, %v1078
        %s1080 = sld [smem:[#allocation2 + $0x66]]
        %v1081 = vstv %s1080
        %v1082 = vmul.f32 %v1081, %v1034
        %v1083 = vadd.f32 %v1075, %v1082
        %s1084 = sld [smem:[#allocation2 + $0x16]]
        %v1085 = vstv %s1084
        %v1086 = vmul.f32 %v1085, %v1039
        %v1087 = vadd.f32 %v1079, %v1086
        %s1088 = sld [smem:[#allocation2 + $0x67]]
        %v1089 = vstv %s1088
        %v1090 = vmul.f32 %v1089, %v1039
        %v1091 = vadd.f32 %v1083, %v1090
        %s1092 = sld [smem:[#allocation2 + $0x17]]
        %v1093 = vstv %s1092
        %v1094 = vmul.f32 %v1093, %v1044
        %v1095 = vadd.f32 %v1087, %v1094
        %s1096 = sld [smem:[#allocation2 + $0x68]]
        %v1097 = vstv %s1096
        %v1098 = vmul.f32 %v1097, %v1044
        %v1099 = vadd.f32 %v1091, %v1098
        %s1100 = sld [smem:[#allocation2 + $0x18]]
        %v1101 = vstv %s1100
        %v1102 = vmul.f32 %v1101, %v1049
        %v1103 = vadd.f32 %v1095, %v1102
        %s1104 = sld [smem:[#allocation2 + $0x69]]
        %v1105 = vstv %s1104
        %v1106 = vmul.f32 %v1105, %v1049
        %v1107 = vadd.f32 %v1099, %v1106
        %s1108 = sld [smem:[#allocation2 + $0x19]]
        %v1109 = vstv %s1108
        %v1110 = vmul.f32 %v1109, %v1054
        %v1111 = vadd.f32 %v1103, %v1110
        %s1112 = sld [smem:[#allocation2 + $0x6a]]
        %v1113 = vstv %s1112
        %v1114 = vmul.f32 %v1113, %v1054
        %v1115 = vadd.f32 %v1107, %v1114
        %s1116 = sld [smem:[#allocation2 + $0x1a]]
        %v1117 = vstv %s1116
        %v1118 = vmul.f32 %v1117, %v1059
        %v1119 = vadd.f32 %v1111, %v1118
        %s1120 = sld [smem:[#allocation2 + $0x6b]]
        %v1121 = vstv %s1120
        %v1122 = vmul.f32 %v1121, %v1059
        %v1123 = vadd.f32 %v1115, %v1122
        %s1124 = scalar_lea.vmem %s218, 24 [#allocation4]
        %v1125 = vld [vmem:[%s1124] sm:$0xff]
        %v1126 = vxor.u32 %v1125, 2147483648
        %v1127 = vmul.f32 %v1126, 1.442695
        %v1128 = vpow.pop %v1127
        %v1129 = vadd.f32 %v1128, 1.0
        %v1130 = vrcp.pop %v1129
        %v1131 = vmul.f32 %v1129, %v1130
        %v1132 = vsub.f32 1.0, %v1131
        %v1133 = vmul.f32 %v1130, %v1132
        %v1134 = vadd.f32 %v1130, %v1133
        %vm1135 = vweird.f32 %v1129
        %vm1136 = vweird.f32 %v1130
        %vm1137 = vmor %vm1135, %vm1136
        %v1138 = vsel %vm1137, %v1130, %v1134
        %v1139 = vand.u32 2147483647, %v1129
        %vm1140 = vcmp.eq.f32.partialorder %v1139, 8.507059e+37
        %v1141 = vand.u32 %v1129, 2147483648
        %v1142 = vor.u32 1.1754944e-38, %v1141
        %v1143 = vsel %vm1140, %v1142, %v1138
        %v1144 = vmul.f32 1.0, %v1143
        %v1145 = vmul.f32 %v1125, %v1144
        %s1146 = sld [smem:[#allocation2 + $0x1b]]
        %v1147 = vstv %s1146
        %v1148 = vmul.f32 %v1147, %v1145
        %v1149 = vadd.f32 %v1119, %v1148
        %s1150 = sld [smem:[#allocation2 + $0x6c]]
        %v1151 = vstv %s1150
        %v1152 = vmul.f32 %v1151, %v1145
        %v1153 = vadd.f32 %v1123, %v1152
        %v1154 = vsub.f32 %v1125, -2.2
        %v1155 = vsub.f32 %v1125, -1.8
        %v1156 = vsub.f32 %v1125, -1.4
        %v1157 = vsub.f32 %v1125, -1.0
        %v1158 = vsub.f32 %v1125, -0.6
        %v1159 = vsub.f32 %v1125, -0.2
        %v1160 = vsub.f32 %v1125, 0.2
        %v1161 = vsub.f32 %v1125, 0.6
        %v1162 = vsub.f32 %v1125, 1.0
        %v1163 = vsub.f32 %v1125, 1.4
        %v1164 = vsub.f32 %v1125, 1.8
        %v1165 = vsub.f32 %v1125, 2.2
        %vm1166 = vcmp.ge.f32.partialorder %v1154, 0.0
        %vm1167 = vcmp.lt.f32.partialorder %v1155, 0.0
        %vm1168 = vmand %vm1166, %vm1167
        %v1169 = vsel %vm1168, 1, 0
        %v1170 = vcvt.s32.f32 %v1169
        %vm1171 = vcmp.ge.f32.partialorder %v1155, 0.0
        %vm1172 = vcmp.lt.f32.partialorder %v1156, 0.0
        %vm1173 = vmand %vm1171, %vm1172
        %v1174 = vsel %vm1173, 1, 0
        %v1175 = vcvt.s32.f32 %v1174
        %vm1176 = vcmp.ge.f32.partialorder %v1156, 0.0
        %vm1177 = vcmp.lt.f32.partialorder %v1157, 0.0
        %vm1178 = vmand %vm1176, %vm1177
        %v1179 = vsel %vm1178, 1, 0
        %v1180 = vcvt.s32.f32 %v1179
        %vm1181 = vcmp.ge.f32.partialorder %v1157, 0.0
        %vm1182 = vcmp.lt.f32.partialorder %v1158, 0.0
        %vm1183 = vmand %vm1181, %vm1182
        %v1184 = vsel %vm1183, 1, 0
        %v1185 = vcvt.s32.f32 %v1184
        %vm1186 = vcmp.ge.f32.partialorder %v1158, 0.0
        %vm1187 = vcmp.lt.f32.partialorder %v1159, 0.0
        %vm1188 = vmand %vm1186, %vm1187
        %v1189 = vsel %vm1188, 1, 0
        %v1190 = vcvt.s32.f32 %v1189
        %vm1191 = vcmp.ge.f32.partialorder %v1159, 0.0
        %vm1192 = vcmp.lt.f32.partialorder %v1160, 0.0
        %vm1193 = vmand %vm1191, %vm1192
        %v1194 = vsel %vm1193, 1, 0
        %v1195 = vcvt.s32.f32 %v1194
        %vm1196 = vcmp.ge.f32.partialorder %v1160, 0.0
        %vm1197 = vcmp.lt.f32.partialorder %v1161, 0.0
        %vm1198 = vmand %vm1196, %vm1197
        %v1199 = vsel %vm1198, 1, 0
        %v1200 = vcvt.s32.f32 %v1199
        %vm1201 = vcmp.ge.f32.partialorder %v1161, 0.0
        %vm1202 = vcmp.lt.f32.partialorder %v1162, 0.0
        %vm1203 = vmand %vm1201, %vm1202
        %v1204 = vsel %vm1203, 1, 0
        %v1205 = vcvt.s32.f32 %v1204
        %vm1206 = vcmp.ge.f32.partialorder %v1162, 0.0
        %vm1207 = vcmp.lt.f32.partialorder %v1163, 0.0
        %vm1208 = vmand %vm1206, %vm1207
        %v1209 = vsel %vm1208, 1, 0
        %v1210 = vcvt.s32.f32 %v1209
        %vm1211 = vcmp.ge.f32.partialorder %v1163, 0.0
        %vm1212 = vcmp.lt.f32.partialorder %v1164, 0.0
        %vm1213 = vmand %vm1211, %vm1212
        %v1214 = vsel %vm1213, 1, 0
        %v1215 = vcvt.s32.f32 %v1214
        %vm1216 = vcmp.ge.f32.partialorder %v1164, 0.0
        %vm1217 = vcmp.lt.f32.partialorder %v1165, 0.0
        %vm1218 = vmand %vm1216, %vm1217
        %v1219 = vsel %vm1218, 1, 0
        %v1220 = vcvt.s32.f32 %v1219
        %v1221 = vmul.f32 %v1154, 2.5
        %v1222 = vmul.f32 %v1221, %v1170
        %v1223 = vmul.f32 %v1156, -2.5
        %v1224 = vmul.f32 %v1223, %v1175
        %v1225 = vadd.f32 %v1222, %v1224
        %v1226 = vmul.f32 %v1155, 2.5
        %v1227 = vmul.f32 %v1226, %v1175
        %v1228 = vmul.f32 %v1157, -2.5
        %v1229 = vmul.f32 %v1228, %v1180
        %v1230 = vadd.f32 %v1227, %v1229
        %v1231 = vmul.f32 %v1156, 2.5
        %v1232 = vmul.f32 %v1231, %v1180
        %v1233 = vmul.f32 %v1158, -2.5
        %v1234 = vmul.f32 %v1233, %v1185
        %v1235 = vadd.f32 %v1232, %v1234
        %v1236 = vmul.f32 %v1157, 2.5
        %v1237 = vmul.f32 %v1236, %v1185
        %v1238 = vmul.f32 %v1159, -2.5
        %v1239 = vmul.f32 %v1238, %v1190
        %v1240 = vadd.f32 %v1237, %v1239
        %v1241 = vmul.f32 %v1158, 2.5
        %v1242 = vmul.f32 %v1241, %v1190
        %v1243 = vmul.f32 %v1160, -2.5
        %v1244 = vmul.f32 %v1243, %v1195
        %v1245 = vadd.f32 %v1242, %v1244
        %v1246 = vmul.f32 %v1159, 2.5
        %v1247 = vmul.f32 %v1246, %v1195
        %v1248 = vmul.f32 %v1161, -2.5
        %v1249 = vmul.f32 %v1248, %v1200
        %v1250 = vadd.f32 %v1247, %v1249
        %v1251 = vmul.f32 %v1160, 2.5
        %v1252 = vmul.f32 %v1251, %v1200
        %v1253 = vmul.f32 %v1162, -2.5
        %v1254 = vmul.f32 %v1253, %v1205
        %v1255 = vadd.f32 %v1252, %v1254
        %v1256 = vmul.f32 %v1161, 2.5
        %v1257 = vmul.f32 %v1256, %v1205
        %v1258 = vmul.f32 %v1163, -2.5
        %v1259 = vmul.f32 %v1258, %v1210
        %v1260 = vadd.f32 %v1257, %v1259
        %v1261 = vmul.f32 %v1162, 2.5
        %v1262 = vmul.f32 %v1261, %v1210
        %v1263 = vmul.f32 %v1164, -2.5
        %v1264 = vmul.f32 %v1263, %v1215
        %v1265 = vadd.f32 %v1262, %v1264
        %v1266 = vmul.f32 %v1163, 2.5
        %v1267 = vmul.f32 %v1266, %v1215
        %v1268 = vmul.f32 %v1165, -2.5
        %v1269 = vmul.f32 %v1268, %v1220
        %v1270 = vadd.f32 %v1267, %v1269
        %v1271 = vmul.f32 %v1154, 1.25
        %v1272 = vmul.f32 %v1271, %v1225
        %v1273 = vmul.f32 %v1157, -1.25
        %v1274 = vmul.f32 %v1273, %v1230
        %v1275 = vadd.f32 %v1272, %v1274
        %v1276 = vmul.f32 %v1155, 1.25
        %v1277 = vmul.f32 %v1276, %v1230
        %v1278 = vmul.f32 %v1158, -1.25
        %v1279 = vmul.f32 %v1278, %v1235
        %v1280 = vadd.f32 %v1277, %v1279
        %v1281 = vmul.f32 %v1156, 1.25
        %v1282 = vmul.f32 %v1281, %v1235
        %v1283 = vmul.f32 %v1159, -1.25
        %v1284 = vmul.f32 %v1283, %v1240
        %v1285 = vadd.f32 %v1282, %v1284
        %v1286 = vmul.f32 %v1157, 1.25
        %v1287 = vmul.f32 %v1286, %v1240
        %v1288 = vmul.f32 %v1160, -1.25
        %v1289 = vmul.f32 %v1288, %v1245
        %v1290 = vadd.f32 %v1287, %v1289
        %v1291 = vmul.f32 %v1158, 1.25
        %v1292 = vmul.f32 %v1291, %v1245
        %v1293 = vmul.f32 %v1161, -1.25
        %v1294 = vmul.f32 %v1293, %v1250
        %v1295 = vadd.f32 %v1292, %v1294
        %v1296 = vmul.f32 %v1159, 1.25
        %v1297 = vmul.f32 %v1296, %v1250
        %v1298 = vmul.f32 %v1162, -1.25
        %v1299 = vmul.f32 %v1298, %v1255
        %v1300 = vadd.f32 %v1297, %v1299
        %v1301 = vmul.f32 %v1160, 1.25
        %v1302 = vmul.f32 %v1301, %v1255
        %v1303 = vmul.f32 %v1163, -1.25
        %v1304 = vmul.f32 %v1303, %v1260
        %v1305 = vadd.f32 %v1302, %v1304
        %v1306 = vmul.f32 %v1161, 1.25
        %v1307 = vmul.f32 %v1306, %v1260
        %v1308 = vmul.f32 %v1164, -1.25
        %v1309 = vmul.f32 %v1308, %v1265
        %v1310 = vadd.f32 %v1307, %v1309
        %v1311 = vmul.f32 %v1162, 1.25
        %v1312 = vmul.f32 %v1311, %v1265
        %v1313 = vmul.f32 %v1165, -1.25
        %v1314 = vmul.f32 %v1313, %v1270
        %v1315 = vadd.f32 %v1312, %v1314
        %v1316 = vmul.f32 %v1154, 0.8333333
        %v1317 = vmul.f32 %v1316, %v1275
        %v1318 = vmul.f32 %v1158, -0.8333333
        %v1319 = vmul.f32 %v1318, %v1280
        %v1320 = vadd.f32 %v1317, %v1319
        %v1321 = vmul.f32 %v1155, 0.8333333
        %v1322 = vmul.f32 %v1321, %v1280
        %v1323 = vmul.f32 %v1159, -0.8333333
        %v1324 = vmul.f32 %v1323, %v1285
        %v1325 = vadd.f32 %v1322, %v1324
        %v1326 = vmul.f32 %v1156, 0.8333333
        %v1327 = vmul.f32 %v1326, %v1285
        %v1328 = vmul.f32 %v1160, -0.8333333
        %v1329 = vmul.f32 %v1328, %v1290
        %v1330 = vadd.f32 %v1327, %v1329
        %v1331 = vmul.f32 %v1157, 0.8333333
        %v1332 = vmul.f32 %v1331, %v1290
        %v1333 = vmul.f32 %v1161, -0.8333333
        %v1334 = vmul.f32 %v1333, %v1295
        %v1335 = vadd.f32 %v1332, %v1334
        %v1336 = vmul.f32 %v1158, 0.8333333
        %v1337 = vmul.f32 %v1336, %v1295
        %v1338 = vmul.f32 %v1162, -0.8333333
        %v1339 = vmul.f32 %v1338, %v1300
        %v1340 = vadd.f32 %v1337, %v1339
        %v1341 = vmul.f32 %v1159, 0.8333333
        %v1342 = vmul.f32 %v1341, %v1300
        %v1343 = vmul.f32 %v1163, -0.8333333
        %v1344 = vmul.f32 %v1343, %v1305
        %v1345 = vadd.f32 %v1342, %v1344
        %v1346 = vmul.f32 %v1160, 0.8333333
        %v1347 = vmul.f32 %v1346, %v1305
        %v1348 = vmul.f32 %v1164, -0.8333333
        %v1349 = vmul.f32 %v1348, %v1310
        %v1350 = vadd.f32 %v1347, %v1349
        %v1351 = vmul.f32 %v1161, 0.8333333
        %v1352 = vmul.f32 %v1351, %v1310
        %v1353 = vmul.f32 %v1165, -0.8333333
        %v1354 = vmul.f32 %v1353, %v1315
        %v1355 = vadd.f32 %v1352, %v1354
        %s1356 = sld [smem:[#allocation2 + $0x1c]]
        %v1357 = vstv %s1356
        %v1358 = vmul.f32 %v1357, %v1320
        %v1359 = vadd.f32 %v1149, %v1358
        %s1360 = sld [smem:[#allocation2 + $0x6d]]
        %v1361 = vstv %s1360
        %v1362 = vmul.f32 %v1361, %v1320
        %v1363 = vadd.f32 %v1153, %v1362
        %s1364 = sld [smem:[#allocation2 + $0x1d]]
        %v1365 = vstv %s1364
        %v1366 = vmul.f32 %v1365, %v1325
        %v1367 = vadd.f32 %v1359, %v1366
        %s1368 = sld [smem:[#allocation2 + $0x6e]]
        %v1369 = vstv %s1368
        %v1370 = vmul.f32 %v1369, %v1325
        %v1371 = vadd.f32 %v1363, %v1370
        %s1372 = sld [smem:[#allocation2 + $0x1e]]
        %v1373 = vstv %s1372
        %v1374 = vmul.f32 %v1373, %v1330
        %v1375 = vadd.f32 %v1367, %v1374
        %s1376 = sld [smem:[#allocation2 + $0x6f]]
        %v1377 = vstv %s1376
        %v1378 = vmul.f32 %v1377, %v1330
        %v1379 = vadd.f32 %v1371, %v1378
        %s1380 = sld [smem:[#allocation2 + $0x1f]]
        %v1381 = vstv %s1380
        %v1382 = vmul.f32 %v1381, %v1335
        %v1383 = vadd.f32 %v1375, %v1382
        %s1384 = sld [smem:[#allocation2 + $0x70]]
        %v1385 = vstv %s1384
        %v1386 = vmul.f32 %v1385, %v1335
        %v1387 = vadd.f32 %v1379, %v1386
        %s1388 = sld [smem:[#allocation2 + $0x20]]
        %v1389 = vstv %s1388
        %v1390 = vmul.f32 %v1389, %v1340
        %v1391 = vadd.f32 %v1383, %v1390
        %s1392 = sld [smem:[#allocation2 + $0x71]]
        %v1393 = vstv %s1392
        %v1394 = vmul.f32 %v1393, %v1340
        %v1395 = vadd.f32 %v1387, %v1394
        %s1396 = sld [smem:[#allocation2 + $0x21]]
        %v1397 = vstv %s1396
        %v1398 = vmul.f32 %v1397, %v1345
        %v1399 = vadd.f32 %v1391, %v1398
        %s1400 = sld [smem:[#allocation2 + $0x72]]
        %v1401 = vstv %s1400
        %v1402 = vmul.f32 %v1401, %v1345
        %v1403 = vadd.f32 %v1395, %v1402
        %s1404 = sld [smem:[#allocation2 + $0x22]]
        %v1405 = vstv %s1404
        %v1406 = vmul.f32 %v1405, %v1350
        %v1407 = vadd.f32 %v1399, %v1406
        %s1408 = sld [smem:[#allocation2 + $0x73]]
        %v1409 = vstv %s1408
        %v1410 = vmul.f32 %v1409, %v1350
        %v1411 = vadd.f32 %v1403, %v1410
        %s1412 = sld [smem:[#allocation2 + $0x23]]
        %v1413 = vstv %s1412
        %v1414 = vmul.f32 %v1413, %v1355
        %v1415 = vadd.f32 %v1407, %v1414
        %s1416 = sld [smem:[#allocation2 + $0x74]]
        %v1417 = vstv %s1416
        %v1418 = vmul.f32 %v1417, %v1355
        %v1419 = vadd.f32 %v1411, %v1418
        %s1420 = scalar_lea.vmem %s218, 32 [#allocation4]
        %v1421 = vld [vmem:[%s1420] sm:$0xff]
        %v1422 = vxor.u32 %v1421, 2147483648
        %v1423 = vmul.f32 %v1422, 1.442695
        %v1424 = vpow.pop %v1423
        %v1425 = vadd.f32 %v1424, 1.0
        %v1426 = vrcp.pop %v1425
        %v1427 = vmul.f32 %v1425, %v1426
        %v1428 = vsub.f32 1.0, %v1427
        %v1429 = vmul.f32 %v1426, %v1428
        %v1430 = vadd.f32 %v1426, %v1429
        %vm1431 = vweird.f32 %v1425
        %vm1432 = vweird.f32 %v1426
        %vm1433 = vmor %vm1431, %vm1432
        %v1434 = vsel %vm1433, %v1426, %v1430
        %v1435 = vand.u32 2147483647, %v1425
        %vm1436 = vcmp.eq.f32.partialorder %v1435, 8.507059e+37
        %v1437 = vand.u32 %v1425, 2147483648
        %v1438 = vor.u32 1.1754944e-38, %v1437
        %v1439 = vsel %vm1436, %v1438, %v1434
        %v1440 = vmul.f32 1.0, %v1439
        %v1441 = vmul.f32 %v1421, %v1440
        %s1442 = sld [smem:[#allocation2 + $0x24]]
        %v1443 = vstv %s1442
        %v1444 = vmul.f32 %v1443, %v1441
        %v1445 = vadd.f32 %v1415, %v1444
        %s1446 = sld [smem:[#allocation2 + $0x75]]
        %v1447 = vstv %s1446
        %v1448 = vmul.f32 %v1447, %v1441
        %v1449 = vadd.f32 %v1419, %v1448
        %v1450 = vsub.f32 %v1421, -2.2
        %v1451 = vsub.f32 %v1421, -1.8
        %v1452 = vsub.f32 %v1421, -1.4
        %v1453 = vsub.f32 %v1421, -1.0
        %v1454 = vsub.f32 %v1421, -0.6
        %v1455 = vsub.f32 %v1421, -0.2
        %v1456 = vsub.f32 %v1421, 0.2
        %v1457 = vsub.f32 %v1421, 0.6
        %v1458 = vsub.f32 %v1421, 1.0
        %v1459 = vsub.f32 %v1421, 1.4
        %v1460 = vsub.f32 %v1421, 1.8
        %v1461 = vsub.f32 %v1421, 2.2
        %vm1462 = vcmp.ge.f32.partialorder %v1450, 0.0
        %vm1463 = vcmp.lt.f32.partialorder %v1451, 0.0
        %vm1464 = vmand %vm1462, %vm1463
        %v1465 = vsel %vm1464, 1, 0
        %v1466 = vcvt.s32.f32 %v1465
        %vm1467 = vcmp.ge.f32.partialorder %v1451, 0.0
        %vm1468 = vcmp.lt.f32.partialorder %v1452, 0.0
        %vm1469 = vmand %vm1467, %vm1468
        %v1470 = vsel %vm1469, 1, 0
        %v1471 = vcvt.s32.f32 %v1470
        %vm1472 = vcmp.ge.f32.partialorder %v1452, 0.0
        %vm1473 = vcmp.lt.f32.partialorder %v1453, 0.0
        %vm1474 = vmand %vm1472, %vm1473
        %v1475 = vsel %vm1474, 1, 0
        %v1476 = vcvt.s32.f32 %v1475
        %vm1477 = vcmp.ge.f32.partialorder %v1453, 0.0
        %vm1478 = vcmp.lt.f32.partialorder %v1454, 0.0
        %vm1479 = vmand %vm1477, %vm1478
        %v1480 = vsel %vm1479, 1, 0
        %v1481 = vcvt.s32.f32 %v1480
        %vm1482 = vcmp.ge.f32.partialorder %v1454, 0.0
        %vm1483 = vcmp.lt.f32.partialorder %v1455, 0.0
        %vm1484 = vmand %vm1482, %vm1483
        %v1485 = vsel %vm1484, 1, 0
        %v1486 = vcvt.s32.f32 %v1485
        %vm1487 = vcmp.ge.f32.partialorder %v1455, 0.0
        %vm1488 = vcmp.lt.f32.partialorder %v1456, 0.0
        %vm1489 = vmand %vm1487, %vm1488
        %v1490 = vsel %vm1489, 1, 0
        %v1491 = vcvt.s32.f32 %v1490
        %vm1492 = vcmp.ge.f32.partialorder %v1456, 0.0
        %vm1493 = vcmp.lt.f32.partialorder %v1457, 0.0
        %vm1494 = vmand %vm1492, %vm1493
        %v1495 = vsel %vm1494, 1, 0
        %v1496 = vcvt.s32.f32 %v1495
        %vm1497 = vcmp.ge.f32.partialorder %v1457, 0.0
        %vm1498 = vcmp.lt.f32.partialorder %v1458, 0.0
        %vm1499 = vmand %vm1497, %vm1498
        %v1500 = vsel %vm1499, 1, 0
        %v1501 = vcvt.s32.f32 %v1500
        %vm1502 = vcmp.ge.f32.partialorder %v1458, 0.0
        %vm1503 = vcmp.lt.f32.partialorder %v1459, 0.0
        %vm1504 = vmand %vm1502, %vm1503
        %v1505 = vsel %vm1504, 1, 0
        %v1506 = vcvt.s32.f32 %v1505
        %vm1507 = vcmp.ge.f32.partialorder %v1459, 0.0
        %vm1508 = vcmp.lt.f32.partialorder %v1460, 0.0
        %vm1509 = vmand %vm1507, %vm1508
        %v1510 = vsel %vm1509, 1, 0
        %v1511 = vcvt.s32.f32 %v1510
        %vm1512 = vcmp.ge.f32.partialorder %v1460, 0.0
        %vm1513 = vcmp.lt.f32.partialorder %v1461, 0.0
        %vm1514 = vmand %vm1512, %vm1513
        %v1515 = vsel %vm1514, 1, 0
        %v1516 = vcvt.s32.f32 %v1515
        %v1517 = vmul.f32 %v1450, 2.5
        %v1518 = vmul.f32 %v1517, %v1466
        %v1519 = vmul.f32 %v1452, -2.5
        %v1520 = vmul.f32 %v1519, %v1471
        %v1521 = vadd.f32 %v1518, %v1520
        %v1522 = vmul.f32 %v1451, 2.5
        %v1523 = vmul.f32 %v1522, %v1471
        %v1524 = vmul.f32 %v1453, -2.5
        %v1525 = vmul.f32 %v1524, %v1476
        %v1526 = vadd.f32 %v1523, %v1525
        %v1527 = vmul.f32 %v1452, 2.5
        %v1528 = vmul.f32 %v1527, %v1476
        %v1529 = vmul.f32 %v1454, -2.5
        %v1530 = vmul.f32 %v1529, %v1481
        %v1531 = vadd.f32 %v1528, %v1530
        %v1532 = vmul.f32 %v1453, 2.5
        %v1533 = vmul.f32 %v1532, %v1481
        %v1534 = vmul.f32 %v1455, -2.5
        %v1535 = vmul.f32 %v1534, %v1486
        %v1536 = vadd.f32 %v1533, %v1535
        %v1537 = vmul.f32 %v1454, 2.5
        %v1538 = vmul.f32 %v1537, %v1486
        %v1539 = vmul.f32 %v1456, -2.5
        %v1540 = vmul.f32 %v1539, %v1491
        %v1541 = vadd.f32 %v1538, %v1540
        %v1542 = vmul.f32 %v1455, 2.5
        %v1543 = vmul.f32 %v1542, %v1491
        %v1544 = vmul.f32 %v1457, -2.5
        %v1545 = vmul.f32 %v1544, %v1496
        %v1546 = vadd.f32 %v1543, %v1545
        %v1547 = vmul.f32 %v1456, 2.5
        %v1548 = vmul.f32 %v1547, %v1496
        %v1549 = vmul.f32 %v1458, -2.5
        %v1550 = vmul.f32 %v1549, %v1501
        %v1551 = vadd.f32 %v1548, %v1550
        %v1552 = vmul.f32 %v1457, 2.5
        %v1553 = vmul.f32 %v1552, %v1501
        %v1554 = vmul.f32 %v1459, -2.5
        %v1555 = vmul.f32 %v1554, %v1506
        %v1556 = vadd.f32 %v1553, %v1555
        %v1557 = vmul.f32 %v1458, 2.5
        %v1558 = vmul.f32 %v1557, %v1506
        %v1559 = vmul.f32 %v1460, -2.5
        %v1560 = vmul.f32 %v1559, %v1511
        %v1561 = vadd.f32 %v1558, %v1560
        %v1562 = vmul.f32 %v1459, 2.5
        %v1563 = vmul.f32 %v1562, %v1511
        %v1564 = vmul.f32 %v1461, -2.5
        %v1565 = vmul.f32 %v1564, %v1516
        %v1566 = vadd.f32 %v1563, %v1565
        %v1567 = vmul.f32 %v1450, 1.25
        %v1568 = vmul.f32 %v1567, %v1521
        %v1569 = vmul.f32 %v1453, -1.25
        %v1570 = vmul.f32 %v1569, %v1526
        %v1571 = vadd.f32 %v1568, %v1570
        %v1572 = vmul.f32 %v1451, 1.25
        %v1573 = vmul.f32 %v1572, %v1526
        %v1574 = vmul.f32 %v1454, -1.25
        %v1575 = vmul.f32 %v1574, %v1531
        %v1576 = vadd.f32 %v1573, %v1575
        %v1577 = vmul.f32 %v1452, 1.25
        %v1578 = vmul.f32 %v1577, %v1531
        %v1579 = vmul.f32 %v1455, -1.25
        %v1580 = vmul.f32 %v1579, %v1536
        %v1581 = vadd.f32 %v1578, %v1580
        %v1582 = vmul.f32 %v1453, 1.25
        %v1583 = vmul.f32 %v1582, %v1536
        %v1584 = vmul.f32 %v1456, -1.25
        %v1585 = vmul.f32 %v1584, %v1541
        %v1586 = vadd.f32 %v1583, %v1585
        %v1587 = vmul.f32 %v1454, 1.25
        %v1588 = vmul.f32 %v1587, %v1541
        %v1589 = vmul.f32 %v1457, -1.25
        %v1590 = vmul.f32 %v1589, %v1546
        %v1591 = vadd.f32 %v1588, %v1590
        %v1592 = vmul.f32 %v1455, 1.25
        %v1593 = vmul.f32 %v1592, %v1546
        %v1594 = vmul.f32 %v1458, -1.25
        %v1595 = vmul.f32 %v1594, %v1551
        %v1596 = vadd.f32 %v1593, %v1595
        %v1597 = vmul.f32 %v1456, 1.25
        %v1598 = vmul.f32 %v1597, %v1551
        %v1599 = vmul.f32 %v1459, -1.25
        %v1600 = vmul.f32 %v1599, %v1556
        %v1601 = vadd.f32 %v1598, %v1600
        %v1602 = vmul.f32 %v1457, 1.25
        %v1603 = vmul.f32 %v1602, %v1556
        %v1604 = vmul.f32 %v1460, -1.25
        %v1605 = vmul.f32 %v1604, %v1561
        %v1606 = vadd.f32 %v1603, %v1605
        %v1607 = vmul.f32 %v1458, 1.25
        %v1608 = vmul.f32 %v1607, %v1561
        %v1609 = vmul.f32 %v1461, -1.25
        %v1610 = vmul.f32 %v1609, %v1566
        %v1611 = vadd.f32 %v1608, %v1610
        %v1612 = vmul.f32 %v1450, 0.8333333
        %v1613 = vmul.f32 %v1612, %v1571
        %v1614 = vmul.f32 %v1454, -0.8333333
        %v1615 = vmul.f32 %v1614, %v1576
        %v1616 = vadd.f32 %v1613, %v1615
        %v1617 = vmul.f32 %v1451, 0.8333333
        %v1618 = vmul.f32 %v1617, %v1576
        %v1619 = vmul.f32 %v1455, -0.8333333
        %v1620 = vmul.f32 %v1619, %v1581
        %v1621 = vadd.f32 %v1618, %v1620
        %v1622 = vmul.f32 %v1452, 0.8333333
        %v1623 = vmul.f32 %v1622, %v1581
        %v1624 = vmul.f32 %v1456, -0.8333333
        %v1625 = vmul.f32 %v1624, %v1586
        %v1626 = vadd.f32 %v1623, %v1625
        %v1627 = vmul.f32 %v1453, 0.8333333
        %v1628 = vmul.f32 %v1627, %v1586
        %v1629 = vmul.f32 %v1457, -0.8333333
        %v1630 = vmul.f32 %v1629, %v1591
        %v1631 = vadd.f32 %v1628, %v1630
        %v1632 = vmul.f32 %v1454, 0.8333333
        %v1633 = vmul.f32 %v1632, %v1591
        %v1634 = vmul.f32 %v1458, -0.8333333
        %v1635 = vmul.f32 %v1634, %v1596
        %v1636 = vadd.f32 %v1633, %v1635
        %v1637 = vmul.f32 %v1455, 0.8333333
        %v1638 = vmul.f32 %v1637, %v1596
        %v1639 = vmul.f32 %v1459, -0.8333333
        %v1640 = vmul.f32 %v1639, %v1601
        %v1641 = vadd.f32 %v1638, %v1640
        %v1642 = vmul.f32 %v1456, 0.8333333
        %v1643 = vmul.f32 %v1642, %v1601
        %v1644 = vmul.f32 %v1460, -0.8333333
        %v1645 = vmul.f32 %v1644, %v1606
        %v1646 = vadd.f32 %v1643, %v1645
        %v1647 = vmul.f32 %v1457, 0.8333333
        %v1648 = vmul.f32 %v1647, %v1606
        %v1649 = vmul.f32 %v1461, -0.8333333
        %v1650 = vmul.f32 %v1649, %v1611
        %v1651 = vadd.f32 %v1648, %v1650
        %s1652 = sld [smem:[#allocation2 + $0x25]]
        %v1653 = vstv %s1652
        %v1654 = vmul.f32 %v1653, %v1616
        %v1655 = vadd.f32 %v1445, %v1654
        %s1656 = sld [smem:[#allocation2 + $0x76]]
        %v1657 = vstv %s1656
        %v1658 = vmul.f32 %v1657, %v1616
        %v1659 = vadd.f32 %v1449, %v1658
        %s1660 = sld [smem:[#allocation2 + $0x26]]
        %v1661 = vstv %s1660
        %v1662 = vmul.f32 %v1661, %v1621
        %v1663 = vadd.f32 %v1655, %v1662
        %s1664 = sld [smem:[#allocation2 + $0x77]]
        %v1665 = vstv %s1664
        %v1666 = vmul.f32 %v1665, %v1621
        %v1667 = vadd.f32 %v1659, %v1666
        %s1668 = sld [smem:[#allocation2 + $0x27]]
        %v1669 = vstv %s1668
        %v1670 = vmul.f32 %v1669, %v1626
        %v1671 = vadd.f32 %v1663, %v1670
        %s1672 = sld [smem:[#allocation2 + $0x78]]
        %v1673 = vstv %s1672
        %v1674 = vmul.f32 %v1673, %v1626
        %v1675 = vadd.f32 %v1667, %v1674
        %s1676 = sld [smem:[#allocation2 + $0x28]]
        %v1677 = vstv %s1676
        %v1678 = vmul.f32 %v1677, %v1631
        %v1679 = vadd.f32 %v1671, %v1678
        %s1680 = sld [smem:[#allocation2 + $0x79]]
        %v1681 = vstv %s1680
        %v1682 = vmul.f32 %v1681, %v1631
        %v1683 = vadd.f32 %v1675, %v1682
        %s1684 = sld [smem:[#allocation2 + $0x29]]
        %v1685 = vstv %s1684
        %v1686 = vmul.f32 %v1685, %v1636
        %v1687 = vadd.f32 %v1679, %v1686
        %s1688 = sld [smem:[#allocation2 + $0x7a]]
        %v1689 = vstv %s1688
        %v1690 = vmul.f32 %v1689, %v1636
        %v1691 = vadd.f32 %v1683, %v1690
        %s1692 = sld [smem:[#allocation2 + $0x2a]]
        %v1693 = vstv %s1692
        %v1694 = vmul.f32 %v1693, %v1641
        %v1695 = vadd.f32 %v1687, %v1694
        %s1696 = sld [smem:[#allocation2 + $0x7b]]
        %v1697 = vstv %s1696
        %v1698 = vmul.f32 %v1697, %v1641
        %v1699 = vadd.f32 %v1691, %v1698
        %s1700 = sld [smem:[#allocation2 + $0x2b]]
        %v1701 = vstv %s1700
        %v1702 = vmul.f32 %v1701, %v1646
        %v1703 = vadd.f32 %v1695, %v1702
        %s1704 = sld [smem:[#allocation2 + $0x7c]]
        %v1705 = vstv %s1704
        %v1706 = vmul.f32 %v1705, %v1646
        %v1707 = vadd.f32 %v1699, %v1706
        %s1708 = sld [smem:[#allocation2 + $0x2c]]
        %v1709 = vstv %s1708
        %v1710 = vmul.f32 %v1709, %v1651
        %v1711 = vadd.f32 %v1703, %v1710
        %s1712 = sld [smem:[#allocation2 + $0x7d]]
        %v1713 = vstv %s1712
        %v1714 = vmul.f32 %v1713, %v1651
        %v1715 = vadd.f32 %v1707, %v1714
        %s1716 = scalar_lea.vmem %s218, 40 [#allocation4]
        %v1717 = vld [vmem:[%s1716] sm:$0xff]
        %v1718 = vxor.u32 %v1717, 2147483648
        %v1719 = vmul.f32 %v1718, 1.442695
        %v1720 = vpow.pop %v1719
        %v1721 = vadd.f32 %v1720, 1.0
        %v1722 = vrcp.pop %v1721
        %v1723 = vmul.f32 %v1721, %v1722
        %v1724 = vsub.f32 1.0, %v1723
        %v1725 = vmul.f32 %v1722, %v1724
        %v1726 = vadd.f32 %v1722, %v1725
        %vm1727 = vweird.f32 %v1721
        %vm1728 = vweird.f32 %v1722
        %vm1729 = vmor %vm1727, %vm1728
        %v1730 = vsel %vm1729, %v1722, %v1726
        %v1731 = vand.u32 2147483647, %v1721
        %vm1732 = vcmp.eq.f32.partialorder %v1731, 8.507059e+37
        %v1733 = vand.u32 %v1721, 2147483648
        %v1734 = vor.u32 1.1754944e-38, %v1733
        %v1735 = vsel %vm1732, %v1734, %v1730
        %v1736 = vmul.f32 1.0, %v1735
        %v1737 = vmul.f32 %v1717, %v1736
        %s1738 = sld [smem:[#allocation2 + $0x2d]]
        %v1739 = vstv %s1738
        %v1740 = vmul.f32 %v1739, %v1737
        %v1741 = vadd.f32 %v1711, %v1740
        %s1742 = sld [smem:[#allocation2 + $0x7e]]
        %v1743 = vstv %s1742
        %v1744 = vmul.f32 %v1743, %v1737
        %v1745 = vadd.f32 %v1715, %v1744
        %v1746 = vsub.f32 %v1717, -2.2
        %v1747 = vsub.f32 %v1717, -1.8
        %v1748 = vsub.f32 %v1717, -1.4
        %v1749 = vsub.f32 %v1717, -1.0
        %v1750 = vsub.f32 %v1717, -0.6
        %v1751 = vsub.f32 %v1717, -0.2
        %v1752 = vsub.f32 %v1717, 0.2
        %v1753 = vsub.f32 %v1717, 0.6
        %v1754 = vsub.f32 %v1717, 1.0
        %v1755 = vsub.f32 %v1717, 1.4
        %v1756 = vsub.f32 %v1717, 1.8
        %v1757 = vsub.f32 %v1717, 2.2
        %vm1758 = vcmp.ge.f32.partialorder %v1746, 0.0
        %vm1759 = vcmp.lt.f32.partialorder %v1747, 0.0
        %vm1760 = vmand %vm1758, %vm1759
        %v1761 = vsel %vm1760, 1, 0
        %v1762 = vcvt.s32.f32 %v1761
        %vm1763 = vcmp.ge.f32.partialorder %v1747, 0.0
        %vm1764 = vcmp.lt.f32.partialorder %v1748, 0.0
        %vm1765 = vmand %vm1763, %vm1764
        %v1766 = vsel %vm1765, 1, 0
        %v1767 = vcvt.s32.f32 %v1766
        %vm1768 = vcmp.ge.f32.partialorder %v1748, 0.0
        %vm1769 = vcmp.lt.f32.partialorder %v1749, 0.0
        %vm1770 = vmand %vm1768, %vm1769
        %v1771 = vsel %vm1770, 1, 0
        %v1772 = vcvt.s32.f32 %v1771
        %vm1773 = vcmp.ge.f32.partialorder %v1749, 0.0
        %vm1774 = vcmp.lt.f32.partialorder %v1750, 0.0
        %vm1775 = vmand %vm1773, %vm1774
        %v1776 = vsel %vm1775, 1, 0
        %v1777 = vcvt.s32.f32 %v1776
        %vm1778 = vcmp.ge.f32.partialorder %v1750, 0.0
        %vm1779 = vcmp.lt.f32.partialorder %v1751, 0.0
        %vm1780 = vmand %vm1778, %vm1779
        %v1781 = vsel %vm1780, 1, 0
        %v1782 = vcvt.s32.f32 %v1781
        %vm1783 = vcmp.ge.f32.partialorder %v1751, 0.0
        %vm1784 = vcmp.lt.f32.partialorder %v1752, 0.0
        %vm1785 = vmand %vm1783, %vm1784
        %v1786 = vsel %vm1785, 1, 0
        %v1787 = vcvt.s32.f32 %v1786
        %vm1788 = vcmp.ge.f32.partialorder %v1752, 0.0
        %vm1789 = vcmp.lt.f32.partialorder %v1753, 0.0
        %vm1790 = vmand %vm1788, %vm1789
        %v1791 = vsel %vm1790, 1, 0
        %v1792 = vcvt.s32.f32 %v1791
        %vm1793 = vcmp.ge.f32.partialorder %v1753, 0.0
        %vm1794 = vcmp.lt.f32.partialorder %v1754, 0.0
        %vm1795 = vmand %vm1793, %vm1794
        %v1796 = vsel %vm1795, 1, 0
        %v1797 = vcvt.s32.f32 %v1796
        %vm1798 = vcmp.ge.f32.partialorder %v1754, 0.0
        %vm1799 = vcmp.lt.f32.partialorder %v1755, 0.0
        %vm1800 = vmand %vm1798, %vm1799
        %v1801 = vsel %vm1800, 1, 0
        %v1802 = vcvt.s32.f32 %v1801
        %vm1803 = vcmp.ge.f32.partialorder %v1755, 0.0
        %vm1804 = vcmp.lt.f32.partialorder %v1756, 0.0
        %vm1805 = vmand %vm1803, %vm1804
        %v1806 = vsel %vm1805, 1, 0
        %v1807 = vcvt.s32.f32 %v1806
        %vm1808 = vcmp.ge.f32.partialorder %v1756, 0.0
        %vm1809 = vcmp.lt.f32.partialorder %v1757, 0.0
        %vm1810 = vmand %vm1808, %vm1809
        %v1811 = vsel %vm1810, 1, 0
        %v1812 = vcvt.s32.f32 %v1811
        %v1813 = vmul.f32 %v1746, 2.5
        %v1814 = vmul.f32 %v1813, %v1762
        %v1815 = vmul.f32 %v1748, -2.5
        %v1816 = vmul.f32 %v1815, %v1767
        %v1817 = vadd.f32 %v1814, %v1816
        %v1818 = vmul.f32 %v1747, 2.5
        %v1819 = vmul.f32 %v1818, %v1767
        %v1820 = vmul.f32 %v1749, -2.5
        %v1821 = vmul.f32 %v1820, %v1772
        %v1822 = vadd.f32 %v1819, %v1821
        %v1823 = vmul.f32 %v1748, 2.5
        %v1824 = vmul.f32 %v1823, %v1772
        %v1825 = vmul.f32 %v1750, -2.5
        %v1826 = vmul.f32 %v1825, %v1777
        %v1827 = vadd.f32 %v1824, %v1826
        %v1828 = vmul.f32 %v1749, 2.5
        %v1829 = vmul.f32 %v1828, %v1777
        %v1830 = vmul.f32 %v1751, -2.5
        %v1831 = vmul.f32 %v1830, %v1782
        %v1832 = vadd.f32 %v1829, %v1831
        %v1833 = vmul.f32 %v1750, 2.5
        %v1834 = vmul.f32 %v1833, %v1782
        %v1835 = vmul.f32 %v1752, -2.5
        %v1836 = vmul.f32 %v1835, %v1787
        %v1837 = vadd.f32 %v1834, %v1836
        %v1838 = vmul.f32 %v1751, 2.5
        %v1839 = vmul.f32 %v1838, %v1787
        %v1840 = vmul.f32 %v1753, -2.5
        %v1841 = vmul.f32 %v1840, %v1792
        %v1842 = vadd.f32 %v1839, %v1841
        %v1843 = vmul.f32 %v1752, 2.5
        %v1844 = vmul.f32 %v1843, %v1792
        %v1845 = vmul.f32 %v1754, -2.5
        %v1846 = vmul.f32 %v1845, %v1797
        %v1847 = vadd.f32 %v1844, %v1846
        %v1848 = vmul.f32 %v1753, 2.5
        %v1849 = vmul.f32 %v1848, %v1797
        %v1850 = vmul.f32 %v1755, -2.5
        %v1851 = vmul.f32 %v1850, %v1802
        %v1852 = vadd.f32 %v1849, %v1851
        %v1853 = vmul.f32 %v1754, 2.5
        %v1854 = vmul.f32 %v1853, %v1802
        %v1855 = vmul.f32 %v1756, -2.5
        %v1856 = vmul.f32 %v1855, %v1807
        %v1857 = vadd.f32 %v1854, %v1856
        %v1858 = vmul.f32 %v1755, 2.5
        %v1859 = vmul.f32 %v1858, %v1807
        %v1860 = vmul.f32 %v1757, -2.5
        %v1861 = vmul.f32 %v1860, %v1812
        %v1862 = vadd.f32 %v1859, %v1861
        %v1863 = vmul.f32 %v1746, 1.25
        %v1864 = vmul.f32 %v1863, %v1817
        %v1865 = vmul.f32 %v1749, -1.25
        %v1866 = vmul.f32 %v1865, %v1822
        %v1867 = vadd.f32 %v1864, %v1866
        %v1868 = vmul.f32 %v1747, 1.25
        %v1869 = vmul.f32 %v1868, %v1822
        %v1870 = vmul.f32 %v1750, -1.25
        %v1871 = vmul.f32 %v1870, %v1827
        %v1872 = vadd.f32 %v1869, %v1871
        %v1873 = vmul.f32 %v1748, 1.25
        %v1874 = vmul.f32 %v1873, %v1827
        %v1875 = vmul.f32 %v1751, -1.25
        %v1876 = vmul.f32 %v1875, %v1832
        %v1877 = vadd.f32 %v1874, %v1876
        %v1878 = vmul.f32 %v1749, 1.25
        %v1879 = vmul.f32 %v1878, %v1832
        %v1880 = vmul.f32 %v1752, -1.25
        %v1881 = vmul.f32 %v1880, %v1837
        %v1882 = vadd.f32 %v1879, %v1881
        %v1883 = vmul.f32 %v1750, 1.25
        %v1884 = vmul.f32 %v1883, %v1837
        %v1885 = vmul.f32 %v1753, -1.25
        %v1886 = vmul.f32 %v1885, %v1842
        %v1887 = vadd.f32 %v1884, %v1886
        %v1888 = vmul.f32 %v1751, 1.25
        %v1889 = vmul.f32 %v1888, %v1842
        %v1890 = vmul.f32 %v1754, -1.25
        %v1891 = vmul.f32 %v1890, %v1847
        %v1892 = vadd.f32 %v1889, %v1891
        %v1893 = vmul.f32 %v1752, 1.25
        %v1894 = vmul.f32 %v1893, %v1847
        %v1895 = vmul.f32 %v1755, -1.25
        %v1896 = vmul.f32 %v1895, %v1852
        %v1897 = vadd.f32 %v1894, %v1896
        %v1898 = vmul.f32 %v1753, 1.25
        %v1899 = vmul.f32 %v1898, %v1852
        %v1900 = vmul.f32 %v1756, -1.25
        %v1901 = vmul.f32 %v1900, %v1857
        %v1902 = vadd.f32 %v1899, %v1901
        %v1903 = vmul.f32 %v1754, 1.25
        %v1904 = vmul.f32 %v1903, %v1857
        %v1905 = vmul.f32 %v1757, -1.25
        %v1906 = vmul.f32 %v1905, %v1862
        %v1907 = vadd.f32 %v1904, %v1906
        %v1908 = vmul.f32 %v1746, 0.8333333
        %v1909 = vmul.f32 %v1908, %v1867
        %v1910 = vmul.f32 %v1750, -0.8333333
        %v1911 = vmul.f32 %v1910, %v1872
        %v1912 = vadd.f32 %v1909, %v1911
        %v1913 = vmul.f32 %v1747, 0.8333333
        %v1914 = vmul.f32 %v1913, %v1872
        %v1915 = vmul.f32 %v1751, -0.8333333
        %v1916 = vmul.f32 %v1915, %v1877
        %v1917 = vadd.f32 %v1914, %v1916
        %v1918 = vmul.f32 %v1748, 0.8333333
        %v1919 = vmul.f32 %v1918, %v1877
        %v1920 = vmul.f32 %v1752, -0.8333333
        %v1921 = vmul.f32 %v1920, %v1882
        %v1922 = vadd.f32 %v1919, %v1921
        %v1923 = vmul.f32 %v1749, 0.8333333
        %v1924 = vmul.f32 %v1923, %v1882
        %v1925 = vmul.f32 %v1753, -0.8333333
        %v1926 = vmul.f32 %v1925, %v1887
        %v1927 = vadd.f32 %v1924, %v1926
        %v1928 = vmul.f32 %v1750, 0.8333333
        %v1929 = vmul.f32 %v1928, %v1887
        %v1930 = vmul.f32 %v1754, -0.8333333
        %v1931 = vmul.f32 %v1930, %v1892
        %v1932 = vadd.f32 %v1929, %v1931
        %v1933 = vmul.f32 %v1751, 0.8333333
        %v1934 = vmul.f32 %v1933, %v1892
        %v1935 = vmul.f32 %v1755, -0.8333333
        %v1936 = vmul.f32 %v1935, %v1897
        %v1937 = vadd.f32 %v1934, %v1936
        %v1938 = vmul.f32 %v1752, 0.8333333
        %v1939 = vmul.f32 %v1938, %v1897
        %v1940 = vmul.f32 %v1756, -0.8333333
        %v1941 = vmul.f32 %v1940, %v1902
        %v1942 = vadd.f32 %v1939, %v1941
        %v1943 = vmul.f32 %v1753, 0.8333333
        %v1944 = vmul.f32 %v1943, %v1902
        %v1945 = vmul.f32 %v1757, -0.8333333
        %v1946 = vmul.f32 %v1945, %v1907
        %v1947 = vadd.f32 %v1944, %v1946
        %s1948 = sld [smem:[#allocation2 + $0x2e]]
        %v1949 = vstv %s1948
        %v1950 = vmul.f32 %v1949, %v1912
        %v1951 = vadd.f32 %v1741, %v1950
        %s1952 = sld [smem:[#allocation2 + $0x7f]]
        %v1953 = vstv %s1952
        %v1954 = vmul.f32 %v1953, %v1912
        %v1955 = vadd.f32 %v1745, %v1954
        %s1956 = sld [smem:[#allocation2 + $0x2f]]
        %v1957 = vstv %s1956
        %v1958 = vmul.f32 %v1957, %v1917
        %v1959 = vadd.f32 %v1951, %v1958
        %s1960 = sld [smem:[#allocation2 + $0x80]]
        %v1961 = vstv %s1960
        %v1962 = vmul.f32 %v1961, %v1917
        %v1963 = vadd.f32 %v1955, %v1962
        %s1964 = sld [smem:[#allocation2 + $0x30]]
        %v1965 = vstv %s1964
        %v1966 = vmul.f32 %v1965, %v1922
        %v1967 = vadd.f32 %v1959, %v1966
        %s1968 = sld [smem:[#allocation2 + $0x81]]
        %v1969 = vstv %s1968
        %v1970 = vmul.f32 %v1969, %v1922
        %v1971 = vadd.f32 %v1963, %v1970
        %s1972 = sld [smem:[#allocation2 + $0x31]]
        %v1973 = vstv %s1972
        %v1974 = vmul.f32 %v1973, %v1927
        %v1975 = vadd.f32 %v1967, %v1974
        %s1976 = sld [smem:[#allocation2 + $0x82]]
        %v1977 = vstv %s1976
        %v1978 = vmul.f32 %v1977, %v1927
        %v1979 = vadd.f32 %v1971, %v1978
        %s1980 = sld [smem:[#allocation2 + $0x32]]
        %v1981 = vstv %s1980
        %v1982 = vmul.f32 %v1981, %v1932
        %v1983 = vadd.f32 %v1975, %v1982
        %s1984 = sld [smem:[#allocation2 + $0x83]]
        %v1985 = vstv %s1984
        %v1986 = vmul.f32 %v1985, %v1932
        %v1987 = vadd.f32 %v1979, %v1986
        %s1988 = sld [smem:[#allocation2 + $0x33]]
        %v1989 = vstv %s1988
        %v1990 = vmul.f32 %v1989, %v1937
        %v1991 = vadd.f32 %v1983, %v1990
        %s1992 = sld [smem:[#allocation2 + $0x84]]
        %v1993 = vstv %s1992
        %v1994 = vmul.f32 %v1993, %v1937
        %v1995 = vadd.f32 %v1987, %v1994
        %s1996 = sld [smem:[#allocation2 + $0x34]]
        %v1997 = vstv %s1996
        %v1998 = vmul.f32 %v1997, %v1942
        %v1999 = vadd.f32 %v1991, %v1998
        %s2000 = sld [smem:[#allocation2 + $0x85]]
        %v2001 = vstv %s2000
        %v2002 = vmul.f32 %v2001, %v1942
        %v2003 = vadd.f32 %v1995, %v2002
        %s2004 = sld [smem:[#allocation2 + $0x35]]
        %v2005 = vstv %s2004
        %v2006 = vmul.f32 %v2005, %v1947
        %v2007 = vadd.f32 %v1999, %v2006
        %s2008 = sld [smem:[#allocation2 + $0x86]]
        %v2009 = vstv %s2008
        %v2010 = vmul.f32 %v2009, %v1947
        %v2011 = vadd.f32 %v2003, %v2010
        %s2012 = scalar_lea.vmem %s218, 48 [#allocation4]
        %v2013 = vld [vmem:[%s2012] sm:$0xff]
        %v2014 = vxor.u32 %v2013, 2147483648
        %v2015 = vmul.f32 %v2014, 1.442695
        %v2016 = vpow.pop %v2015
        %v2017 = vadd.f32 %v2016, 1.0
        %v2018 = vrcp.pop %v2017
        %v2019 = vmul.f32 %v2017, %v2018
        %v2020 = vsub.f32 1.0, %v2019
        %v2021 = vmul.f32 %v2018, %v2020
        %v2022 = vadd.f32 %v2018, %v2021
        %vm2023 = vweird.f32 %v2017
        %vm2024 = vweird.f32 %v2018
        %vm2025 = vmor %vm2023, %vm2024
        %v2026 = vsel %vm2025, %v2018, %v2022
        %v2027 = vand.u32 2147483647, %v2017
        %vm2028 = vcmp.eq.f32.partialorder %v2027, 8.507059e+37
        %v2029 = vand.u32 %v2017, 2147483648
        %v2030 = vor.u32 1.1754944e-38, %v2029
        %v2031 = vsel %vm2028, %v2030, %v2026
        %v2032 = vmul.f32 1.0, %v2031
        %v2033 = vmul.f32 %v2013, %v2032
        %s2034 = sld [smem:[#allocation2 + $0x36]]
        %v2035 = vstv %s2034
        %v2036 = vmul.f32 %v2035, %v2033
        %v2037 = vadd.f32 %v2007, %v2036
        %s2038 = sld [smem:[#allocation2 + $0x87]]
        %v2039 = vstv %s2038
        %v2040 = vmul.f32 %v2039, %v2033
        %v2041 = vadd.f32 %v2011, %v2040
        %v2042 = vsub.f32 %v2013, -2.2
        %v2043 = vsub.f32 %v2013, -1.8
        %v2044 = vsub.f32 %v2013, -1.4
        %v2045 = vsub.f32 %v2013, -1.0
        %v2046 = vsub.f32 %v2013, -0.6
        %v2047 = vsub.f32 %v2013, -0.2
        %v2048 = vsub.f32 %v2013, 0.2
        %v2049 = vsub.f32 %v2013, 0.6
        %v2050 = vsub.f32 %v2013, 1.0
        %v2051 = vsub.f32 %v2013, 1.4
        %v2052 = vsub.f32 %v2013, 1.8
        %v2053 = vsub.f32 %v2013, 2.2
        %vm2054 = vcmp.ge.f32.partialorder %v2042, 0.0
        %vm2055 = vcmp.lt.f32.partialorder %v2043, 0.0
        %vm2056 = vmand %vm2054, %vm2055
        %v2057 = vsel %vm2056, 1, 0
        %v2058 = vcvt.s32.f32 %v2057
        %vm2059 = vcmp.ge.f32.partialorder %v2043, 0.0
        %vm2060 = vcmp.lt.f32.partialorder %v2044, 0.0
        %vm2061 = vmand %vm2059, %vm2060
        %v2062 = vsel %vm2061, 1, 0
        %v2063 = vcvt.s32.f32 %v2062
        %vm2064 = vcmp.ge.f32.partialorder %v2044, 0.0
        %vm2065 = vcmp.lt.f32.partialorder %v2045, 0.0
        %vm2066 = vmand %vm2064, %vm2065
        %v2067 = vsel %vm2066, 1, 0
        %v2068 = vcvt.s32.f32 %v2067
        %vm2069 = vcmp.ge.f32.partialorder %v2045, 0.0
        %vm2070 = vcmp.lt.f32.partialorder %v2046, 0.0
        %vm2071 = vmand %vm2069, %vm2070
        %v2072 = vsel %vm2071, 1, 0
        %v2073 = vcvt.s32.f32 %v2072
        %vm2074 = vcmp.ge.f32.partialorder %v2046, 0.0
        %vm2075 = vcmp.lt.f32.partialorder %v2047, 0.0
        %vm2076 = vmand %vm2074, %vm2075
        %v2077 = vsel %vm2076, 1, 0
        %v2078 = vcvt.s32.f32 %v2077
        %vm2079 = vcmp.ge.f32.partialorder %v2047, 0.0
        %vm2080 = vcmp.lt.f32.partialorder %v2048, 0.0
        %vm2081 = vmand %vm2079, %vm2080
        %v2082 = vsel %vm2081, 1, 0
        %v2083 = vcvt.s32.f32 %v2082
        %vm2084 = vcmp.ge.f32.partialorder %v2048, 0.0
        %vm2085 = vcmp.lt.f32.partialorder %v2049, 0.0
        %vm2086 = vmand %vm2084, %vm2085
        %v2087 = vsel %vm2086, 1, 0
        %v2088 = vcvt.s32.f32 %v2087
        %vm2089 = vcmp.ge.f32.partialorder %v2049, 0.0
        %vm2090 = vcmp.lt.f32.partialorder %v2050, 0.0
        %vm2091 = vmand %vm2089, %vm2090
        %v2092 = vsel %vm2091, 1, 0
        %v2093 = vcvt.s32.f32 %v2092
        %vm2094 = vcmp.ge.f32.partialorder %v2050, 0.0
        %vm2095 = vcmp.lt.f32.partialorder %v2051, 0.0
        %vm2096 = vmand %vm2094, %vm2095
        %v2097 = vsel %vm2096, 1, 0
        %v2098 = vcvt.s32.f32 %v2097
        %vm2099 = vcmp.ge.f32.partialorder %v2051, 0.0
        %vm2100 = vcmp.lt.f32.partialorder %v2052, 0.0
        %vm2101 = vmand %vm2099, %vm2100
        %v2102 = vsel %vm2101, 1, 0
        %v2103 = vcvt.s32.f32 %v2102
        %vm2104 = vcmp.ge.f32.partialorder %v2052, 0.0
        %vm2105 = vcmp.lt.f32.partialorder %v2053, 0.0
        %vm2106 = vmand %vm2104, %vm2105
        %v2107 = vsel %vm2106, 1, 0
        %v2108 = vcvt.s32.f32 %v2107
        %v2109 = vmul.f32 %v2042, 2.5
        %v2110 = vmul.f32 %v2109, %v2058
        %v2111 = vmul.f32 %v2044, -2.5
        %v2112 = vmul.f32 %v2111, %v2063
        %v2113 = vadd.f32 %v2110, %v2112
        %v2114 = vmul.f32 %v2043, 2.5
        %v2115 = vmul.f32 %v2114, %v2063
        %v2116 = vmul.f32 %v2045, -2.5
        %v2117 = vmul.f32 %v2116, %v2068
        %v2118 = vadd.f32 %v2115, %v2117
        %v2119 = vmul.f32 %v2044, 2.5
        %v2120 = vmul.f32 %v2119, %v2068
        %v2121 = vmul.f32 %v2046, -2.5
        %v2122 = vmul.f32 %v2121, %v2073
        %v2123 = vadd.f32 %v2120, %v2122
        %v2124 = vmul.f32 %v2045, 2.5
        %v2125 = vmul.f32 %v2124, %v2073
        %v2126 = vmul.f32 %v2047, -2.5
        %v2127 = vmul.f32 %v2126, %v2078
        %v2128 = vadd.f32 %v2125, %v2127
        %v2129 = vmul.f32 %v2046, 2.5
        %v2130 = vmul.f32 %v2129, %v2078
        %v2131 = vmul.f32 %v2048, -2.5
        %v2132 = vmul.f32 %v2131, %v2083
        %v2133 = vadd.f32 %v2130, %v2132
        %v2134 = vmul.f32 %v2047, 2.5
        %v2135 = vmul.f32 %v2134, %v2083
        %v2136 = vmul.f32 %v2049, -2.5
        %v2137 = vmul.f32 %v2136, %v2088
        %v2138 = vadd.f32 %v2135, %v2137
        %v2139 = vmul.f32 %v2048, 2.5
        %v2140 = vmul.f32 %v2139, %v2088
        %v2141 = vmul.f32 %v2050, -2.5
        %v2142 = vmul.f32 %v2141, %v2093
        %v2143 = vadd.f32 %v2140, %v2142
        %v2144 = vmul.f32 %v2049, 2.5
        %v2145 = vmul.f32 %v2144, %v2093
        %v2146 = vmul.f32 %v2051, -2.5
        %v2147 = vmul.f32 %v2146, %v2098
        %v2148 = vadd.f32 %v2145, %v2147
        %v2149 = vmul.f32 %v2050, 2.5
        %v2150 = vmul.f32 %v2149, %v2098
        %v2151 = vmul.f32 %v2052, -2.5
        %v2152 = vmul.f32 %v2151, %v2103
        %v2153 = vadd.f32 %v2150, %v2152
        %v2154 = vmul.f32 %v2051, 2.5
        %v2155 = vmul.f32 %v2154, %v2103
        %v2156 = vmul.f32 %v2053, -2.5
        %v2157 = vmul.f32 %v2156, %v2108
        %v2158 = vadd.f32 %v2155, %v2157
        %v2159 = vmul.f32 %v2042, 1.25
        %v2160 = vmul.f32 %v2159, %v2113
        %v2161 = vmul.f32 %v2045, -1.25
        %v2162 = vmul.f32 %v2161, %v2118
        %v2163 = vadd.f32 %v2160, %v2162
        %v2164 = vmul.f32 %v2043, 1.25
        %v2165 = vmul.f32 %v2164, %v2118
        %v2166 = vmul.f32 %v2046, -1.25
        %v2167 = vmul.f32 %v2166, %v2123
        %v2168 = vadd.f32 %v2165, %v2167
        %v2169 = vmul.f32 %v2044, 1.25
        %v2170 = vmul.f32 %v2169, %v2123
        %v2171 = vmul.f32 %v2047, -1.25
        %v2172 = vmul.f32 %v2171, %v2128
        %v2173 = vadd.f32 %v2170, %v2172
        %v2174 = vmul.f32 %v2045, 1.25
        %v2175 = vmul.f32 %v2174, %v2128
        %v2176 = vmul.f32 %v2048, -1.25
        %v2177 = vmul.f32 %v2176, %v2133
        %v2178 = vadd.f32 %v2175, %v2177
        %v2179 = vmul.f32 %v2046, 1.25
        %v2180 = vmul.f32 %v2179, %v2133
        %v2181 = vmul.f32 %v2049, -1.25
        %v2182 = vmul.f32 %v2181, %v2138
        %v2183 = vadd.f32 %v2180, %v2182
        %v2184 = vmul.f32 %v2047, 1.25
        %v2185 = vmul.f32 %v2184, %v2138
        %v2186 = vmul.f32 %v2050, -1.25
        %v2187 = vmul.f32 %v2186, %v2143
        %v2188 = vadd.f32 %v2185, %v2187
        %v2189 = vmul.f32 %v2048, 1.25
        %v2190 = vmul.f32 %v2189, %v2143
        %v2191 = vmul.f32 %v2051, -1.25
        %v2192 = vmul.f32 %v2191, %v2148
        %v2193 = vadd.f32 %v2190, %v2192
        %v2194 = vmul.f32 %v2049, 1.25
        %v2195 = vmul.f32 %v2194, %v2148
        %v2196 = vmul.f32 %v2052, -1.25
        %v2197 = vmul.f32 %v2196, %v2153
        %v2198 = vadd.f32 %v2195, %v2197
        %v2199 = vmul.f32 %v2050, 1.25
        %v2200 = vmul.f32 %v2199, %v2153
        %v2201 = vmul.f32 %v2053, -1.25
        %v2202 = vmul.f32 %v2201, %v2158
        %v2203 = vadd.f32 %v2200, %v2202
        %v2204 = vmul.f32 %v2042, 0.8333333
        %v2205 = vmul.f32 %v2204, %v2163
        %v2206 = vmul.f32 %v2046, -0.8333333
        %v2207 = vmul.f32 %v2206, %v2168
        %v2208 = vadd.f32 %v2205, %v2207
        %v2209 = vmul.f32 %v2043, 0.8333333
        %v2210 = vmul.f32 %v2209, %v2168
        %v2211 = vmul.f32 %v2047, -0.8333333
        %v2212 = vmul.f32 %v2211, %v2173
        %v2213 = vadd.f32 %v2210, %v2212
        %v2214 = vmul.f32 %v2044, 0.8333333
        %v2215 = vmul.f32 %v2214, %v2173
        %v2216 = vmul.f32 %v2048, -0.8333333
        %v2217 = vmul.f32 %v2216, %v2178
        %v2218 = vadd.f32 %v2215, %v2217
        %v2219 = vmul.f32 %v2045, 0.8333333
        %v2220 = vmul.f32 %v2219, %v2178
        %v2221 = vmul.f32 %v2049, -0.8333333
        %v2222 = vmul.f32 %v2221, %v2183
        %v2223 = vadd.f32 %v2220, %v2222
        %v2224 = vmul.f32 %v2046, 0.8333333
        %v2225 = vmul.f32 %v2224, %v2183
        %v2226 = vmul.f32 %v2050, -0.8333333
        %v2227 = vmul.f32 %v2226, %v2188
        %v2228 = vadd.f32 %v2225, %v2227
        %v2229 = vmul.f32 %v2047, 0.8333333
        %v2230 = vmul.f32 %v2229, %v2188
        %v2231 = vmul.f32 %v2051, -0.8333333
        %v2232 = vmul.f32 %v2231, %v2193
        %v2233 = vadd.f32 %v2230, %v2232
        %v2234 = vmul.f32 %v2048, 0.8333333
        %v2235 = vmul.f32 %v2234, %v2193
        %v2236 = vmul.f32 %v2052, -0.8333333
        %v2237 = vmul.f32 %v2236, %v2198
        %v2238 = vadd.f32 %v2235, %v2237
        %v2239 = vmul.f32 %v2049, 0.8333333
        %v2240 = vmul.f32 %v2239, %v2198
        %v2241 = vmul.f32 %v2053, -0.8333333
        %v2242 = vmul.f32 %v2241, %v2203
        %v2243 = vadd.f32 %v2240, %v2242
        %s2244 = sld [smem:[#allocation2 + $0x37]]
        %v2245 = vstv %s2244
        %v2246 = vmul.f32 %v2245, %v2208
        %v2247 = vadd.f32 %v2037, %v2246
        %s2248 = sld [smem:[#allocation2 + $0x88]]
        %v2249 = vstv %s2248
        %v2250 = vmul.f32 %v2249, %v2208
        %v2251 = vadd.f32 %v2041, %v2250
        %s2252 = sld [smem:[#allocation2 + $0x38]]
        %v2253 = vstv %s2252
        %v2254 = vmul.f32 %v2253, %v2213
        %v2255 = vadd.f32 %v2247, %v2254
        %s2256 = sld [smem:[#allocation2 + $0x89]]
        %v2257 = vstv %s2256
        %v2258 = vmul.f32 %v2257, %v2213
        %v2259 = vadd.f32 %v2251, %v2258
        %s2260 = sld [smem:[#allocation2 + $0x39]]
        %v2261 = vstv %s2260
        %v2262 = vmul.f32 %v2261, %v2218
        %v2263 = vadd.f32 %v2255, %v2262
        %s2264 = sld [smem:[#allocation2 + $0x8a]]
        %v2265 = vstv %s2264
        %v2266 = vmul.f32 %v2265, %v2218
        %v2267 = vadd.f32 %v2259, %v2266
        %s2268 = sld [smem:[#allocation2 + $0x3a]]
        %v2269 = vstv %s2268
        %v2270 = vmul.f32 %v2269, %v2223
        %v2271 = vadd.f32 %v2263, %v2270
        %s2272 = sld [smem:[#allocation2 + $0x8b]]
        %v2273 = vstv %s2272
        %v2274 = vmul.f32 %v2273, %v2223
        %v2275 = vadd.f32 %v2267, %v2274
        %s2276 = sld [smem:[#allocation2 + $0x3b]]
        %v2277 = vstv %s2276
        %v2278 = vmul.f32 %v2277, %v2228
        %v2279 = vadd.f32 %v2271, %v2278
        %s2280 = sld [smem:[#allocation2 + $0x8c]]
        %v2281 = vstv %s2280
        %v2282 = vmul.f32 %v2281, %v2228
        %v2283 = vadd.f32 %v2275, %v2282
        %s2284 = sld [smem:[#allocation2 + $0x3c]]
        %v2285 = vstv %s2284
        %v2286 = vmul.f32 %v2285, %v2233
        %v2287 = vadd.f32 %v2279, %v2286
        %s2288 = sld [smem:[#allocation2 + $0x8d]]
        %v2289 = vstv %s2288
        %v2290 = vmul.f32 %v2289, %v2233
        %v2291 = vadd.f32 %v2283, %v2290
        %s2292 = sld [smem:[#allocation2 + $0x3d]]
        %v2293 = vstv %s2292
        %v2294 = vmul.f32 %v2293, %v2238
        %v2295 = vadd.f32 %v2287, %v2294
        %s2296 = sld [smem:[#allocation2 + $0x8e]]
        %v2297 = vstv %s2296
        %v2298 = vmul.f32 %v2297, %v2238
        %v2299 = vadd.f32 %v2291, %v2298
        %s2300 = sld [smem:[#allocation2 + $0x3e]]
        %v2301 = vstv %s2300
        %v2302 = vmul.f32 %v2301, %v2243
        %v2303 = vadd.f32 %v2295, %v2302
        %s2304 = sld [smem:[#allocation2 + $0x8f]]
        %v2305 = vstv %s2304
        %v2306 = vmul.f32 %v2305, %v2243
        %v2307 = vadd.f32 %v2299, %v2306
        %s2308 = scalar_lea.vmem %s218, 56 [#allocation4]
        %v2309 = vld [vmem:[%s2308] sm:$0xff]
        %v2310 = vxor.u32 %v2309, 2147483648
        %v2311 = vmul.f32 %v2310, 1.442695
        %v2312 = vpow.pop %v2311
        %v2313 = vadd.f32 %v2312, 1.0
        %v2314 = vrcp.pop %v2313
        %v2315 = vmul.f32 %v2313, %v2314
        %v2316 = vsub.f32 1.0, %v2315
        %v2317 = vmul.f32 %v2314, %v2316
        %v2318 = vadd.f32 %v2314, %v2317
        %vm2319 = vweird.f32 %v2313
        %vm2320 = vweird.f32 %v2314
        %vm2321 = vmor %vm2319, %vm2320
        %v2322 = vsel %vm2321, %v2314, %v2318
        %v2323 = vand.u32 2147483647, %v2313
        %vm2324 = vcmp.eq.f32.partialorder %v2323, 8.507059e+37
        %v2325 = vand.u32 %v2313, 2147483648
        %v2326 = vor.u32 1.1754944e-38, %v2325
        %v2327 = vsel %vm2324, %v2326, %v2322
        %v2328 = vmul.f32 1.0, %v2327
        %v2329 = vmul.f32 %v2309, %v2328
        %s2330 = sld [smem:[#allocation2 + $0x3f]]
        %v2331 = vstv %s2330
        %v2332 = vmul.f32 %v2331, %v2329
        %v2333 = vadd.f32 %v2303, %v2332
        %s2334 = sld [smem:[#allocation2 + $0x90]]
        %v2335 = vstv %s2334
        %v2336 = vmul.f32 %v2335, %v2329
        %v2337 = vadd.f32 %v2307, %v2336
        %v2338 = vsub.f32 %v2309, -2.2
        %v2339 = vsub.f32 %v2309, -1.8
        %v2340 = vsub.f32 %v2309, -1.4
        %v2341 = vsub.f32 %v2309, -1.0
        %v2342 = vsub.f32 %v2309, -0.6
        %v2343 = vsub.f32 %v2309, -0.2
        %v2344 = vsub.f32 %v2309, 0.2
        %v2345 = vsub.f32 %v2309, 0.6
        %v2346 = vsub.f32 %v2309, 1.0
        %v2347 = vsub.f32 %v2309, 1.4
        %v2348 = vsub.f32 %v2309, 1.8
        %v2349 = vsub.f32 %v2309, 2.2
        %vm2350 = vcmp.ge.f32.partialorder %v2338, 0.0
        %vm2351 = vcmp.lt.f32.partialorder %v2339, 0.0
        %vm2352 = vmand %vm2350, %vm2351
        %v2353 = vsel %vm2352, 1, 0
        %v2354 = vcvt.s32.f32 %v2353
        %vm2355 = vcmp.ge.f32.partialorder %v2339, 0.0
        %vm2356 = vcmp.lt.f32.partialorder %v2340, 0.0
        %vm2357 = vmand %vm2355, %vm2356
        %v2358 = vsel %vm2357, 1, 0
        %v2359 = vcvt.s32.f32 %v2358
        %vm2360 = vcmp.ge.f32.partialorder %v2340, 0.0
        %vm2361 = vcmp.lt.f32.partialorder %v2341, 0.0
        %vm2362 = vmand %vm2360, %vm2361
        %v2363 = vsel %vm2362, 1, 0
        %v2364 = vcvt.s32.f32 %v2363
        %vm2365 = vcmp.ge.f32.partialorder %v2341, 0.0
        %vm2366 = vcmp.lt.f32.partialorder %v2342, 0.0
        %vm2367 = vmand %vm2365, %vm2366
        %v2368 = vsel %vm2367, 1, 0
        %v2369 = vcvt.s32.f32 %v2368
        %vm2370 = vcmp.ge.f32.partialorder %v2342, 0.0
        %vm2371 = vcmp.lt.f32.partialorder %v2343, 0.0
        %vm2372 = vmand %vm2370, %vm2371
        %v2373 = vsel %vm2372, 1, 0
        %v2374 = vcvt.s32.f32 %v2373
        %vm2375 = vcmp.ge.f32.partialorder %v2343, 0.0
        %vm2376 = vcmp.lt.f32.partialorder %v2344, 0.0
        %vm2377 = vmand %vm2375, %vm2376
        %v2378 = vsel %vm2377, 1, 0
        %v2379 = vcvt.s32.f32 %v2378
        %vm2380 = vcmp.ge.f32.partialorder %v2344, 0.0
        %vm2381 = vcmp.lt.f32.partialorder %v2345, 0.0
        %vm2382 = vmand %vm2380, %vm2381
        %v2383 = vsel %vm2382, 1, 0
        %v2384 = vcvt.s32.f32 %v2383
        %vm2385 = vcmp.ge.f32.partialorder %v2345, 0.0
        %vm2386 = vcmp.lt.f32.partialorder %v2346, 0.0
        %vm2387 = vmand %vm2385, %vm2386
        %v2388 = vsel %vm2387, 1, 0
        %v2389 = vcvt.s32.f32 %v2388
        %vm2390 = vcmp.ge.f32.partialorder %v2346, 0.0
        %vm2391 = vcmp.lt.f32.partialorder %v2347, 0.0
        %vm2392 = vmand %vm2390, %vm2391
        %v2393 = vsel %vm2392, 1, 0
        %v2394 = vcvt.s32.f32 %v2393
        %vm2395 = vcmp.ge.f32.partialorder %v2347, 0.0
        %vm2396 = vcmp.lt.f32.partialorder %v2348, 0.0
        %vm2397 = vmand %vm2395, %vm2396
        %v2398 = vsel %vm2397, 1, 0
        %v2399 = vcvt.s32.f32 %v2398
        %vm2400 = vcmp.ge.f32.partialorder %v2348, 0.0
        %vm2401 = vcmp.lt.f32.partialorder %v2349, 0.0
        %vm2402 = vmand %vm2400, %vm2401
        %v2403 = vsel %vm2402, 1, 0
        %v2404 = vcvt.s32.f32 %v2403
        %v2405 = vmul.f32 %v2338, 2.5
        %v2406 = vmul.f32 %v2405, %v2354
        %v2407 = vmul.f32 %v2340, -2.5
        %v2408 = vmul.f32 %v2407, %v2359
        %v2409 = vadd.f32 %v2406, %v2408
        %v2410 = vmul.f32 %v2339, 2.5
        %v2411 = vmul.f32 %v2410, %v2359
        %v2412 = vmul.f32 %v2341, -2.5
        %v2413 = vmul.f32 %v2412, %v2364
        %v2414 = vadd.f32 %v2411, %v2413
        %v2415 = vmul.f32 %v2340, 2.5
        %v2416 = vmul.f32 %v2415, %v2364
        %v2417 = vmul.f32 %v2342, -2.5
        %v2418 = vmul.f32 %v2417, %v2369
        %v2419 = vadd.f32 %v2416, %v2418
        %v2420 = vmul.f32 %v2341, 2.5
        %v2421 = vmul.f32 %v2420, %v2369
        %v2422 = vmul.f32 %v2343, -2.5
        %v2423 = vmul.f32 %v2422, %v2374
        %v2424 = vadd.f32 %v2421, %v2423
        %v2425 = vmul.f32 %v2342, 2.5
        %v2426 = vmul.f32 %v2425, %v2374
        %v2427 = vmul.f32 %v2344, -2.5
        %v2428 = vmul.f32 %v2427, %v2379
        %v2429 = vadd.f32 %v2426, %v2428
        %v2430 = vmul.f32 %v2343, 2.5
        %v2431 = vmul.f32 %v2430, %v2379
        %v2432 = vmul.f32 %v2345, -2.5
        %v2433 = vmul.f32 %v2432, %v2384
        %v2434 = vadd.f32 %v2431, %v2433
        %v2435 = vmul.f32 %v2344, 2.5
        %v2436 = vmul.f32 %v2435, %v2384
        %v2437 = vmul.f32 %v2346, -2.5
        %v2438 = vmul.f32 %v2437, %v2389
        %v2439 = vadd.f32 %v2436, %v2438
        %v2440 = vmul.f32 %v2345, 2.5
        %v2441 = vmul.f32 %v2440, %v2389
        %v2442 = vmul.f32 %v2347, -2.5
        %v2443 = vmul.f32 %v2442, %v2394
        %v2444 = vadd.f32 %v2441, %v2443
        %v2445 = vmul.f32 %v2346, 2.5
        %v2446 = vmul.f32 %v2445, %v2394
        %v2447 = vmul.f32 %v2348, -2.5
        %v2448 = vmul.f32 %v2447, %v2399
        %v2449 = vadd.f32 %v2446, %v2448
        %v2450 = vmul.f32 %v2347, 2.5
        %v2451 = vmul.f32 %v2450, %v2399
        %v2452 = vmul.f32 %v2349, -2.5
        %v2453 = vmul.f32 %v2452, %v2404
        %v2454 = vadd.f32 %v2451, %v2453
        %v2455 = vmul.f32 %v2338, 1.25
        %v2456 = vmul.f32 %v2455, %v2409
        %v2457 = vmul.f32 %v2341, -1.25
        %v2458 = vmul.f32 %v2457, %v2414
        %v2459 = vadd.f32 %v2456, %v2458
        %v2460 = vmul.f32 %v2339, 1.25
        %v2461 = vmul.f32 %v2460, %v2414
        %v2462 = vmul.f32 %v2342, -1.25
        %v2463 = vmul.f32 %v2462, %v2419
        %v2464 = vadd.f32 %v2461, %v2463
        %v2465 = vmul.f32 %v2340, 1.25
        %v2466 = vmul.f32 %v2465, %v2419
        %v2467 = vmul.f32 %v2343, -1.25
        %v2468 = vmul.f32 %v2467, %v2424
        %v2469 = vadd.f32 %v2466, %v2468
        %v2470 = vmul.f32 %v2341, 1.25
        %v2471 = vmul.f32 %v2470, %v2424
        %v2472 = vmul.f32 %v2344, -1.25
        %v2473 = vmul.f32 %v2472, %v2429
        %v2474 = vadd.f32 %v2471, %v2473
        %v2475 = vmul.f32 %v2342, 1.25
        %v2476 = vmul.f32 %v2475, %v2429
        %v2477 = vmul.f32 %v2345, -1.25
        %v2478 = vmul.f32 %v2477, %v2434
        %v2479 = vadd.f32 %v2476, %v2478
        %v2480 = vmul.f32 %v2343, 1.25
        %v2481 = vmul.f32 %v2480, %v2434
        %v2482 = vmul.f32 %v2346, -1.25
        %v2483 = vmul.f32 %v2482, %v2439
        %v2484 = vadd.f32 %v2481, %v2483
        %v2485 = vmul.f32 %v2344, 1.25
        %v2486 = vmul.f32 %v2485, %v2439
        %v2487 = vmul.f32 %v2347, -1.25
        %v2488 = vmul.f32 %v2487, %v2444
        %v2489 = vadd.f32 %v2486, %v2488
        %v2490 = vmul.f32 %v2345, 1.25
        %v2491 = vmul.f32 %v2490, %v2444
        %v2492 = vmul.f32 %v2348, -1.25
        %v2493 = vmul.f32 %v2492, %v2449
        %v2494 = vadd.f32 %v2491, %v2493
        %v2495 = vmul.f32 %v2346, 1.25
        %v2496 = vmul.f32 %v2495, %v2449
        %v2497 = vmul.f32 %v2349, -1.25
        %v2498 = vmul.f32 %v2497, %v2454
        %v2499 = vadd.f32 %v2496, %v2498
        %v2500 = vmul.f32 %v2338, 0.8333333
        %v2501 = vmul.f32 %v2500, %v2459
        %v2502 = vmul.f32 %v2342, -0.8333333
        %v2503 = vmul.f32 %v2502, %v2464
        %v2504 = vadd.f32 %v2501, %v2503
        %v2505 = vmul.f32 %v2339, 0.8333333
        %v2506 = vmul.f32 %v2505, %v2464
        %v2507 = vmul.f32 %v2343, -0.8333333
        %v2508 = vmul.f32 %v2507, %v2469
        %v2509 = vadd.f32 %v2506, %v2508
        %v2510 = vmul.f32 %v2340, 0.8333333
        %v2511 = vmul.f32 %v2510, %v2469
        %v2512 = vmul.f32 %v2344, -0.8333333
        %v2513 = vmul.f32 %v2512, %v2474
        %v2514 = vadd.f32 %v2511, %v2513
        %v2515 = vmul.f32 %v2341, 0.8333333
        %v2516 = vmul.f32 %v2515, %v2474
        %v2517 = vmul.f32 %v2345, -0.8333333
        %v2518 = vmul.f32 %v2517, %v2479
        %v2519 = vadd.f32 %v2516, %v2518
        %v2520 = vmul.f32 %v2342, 0.8333333
        %v2521 = vmul.f32 %v2520, %v2479
        %v2522 = vmul.f32 %v2346, -0.8333333
        %v2523 = vmul.f32 %v2522, %v2484
        %v2524 = vadd.f32 %v2521, %v2523
        %v2525 = vmul.f32 %v2343, 0.8333333
        %v2526 = vmul.f32 %v2525, %v2484
        %v2527 = vmul.f32 %v2347, -0.8333333
        %v2528 = vmul.f32 %v2527, %v2489
        %v2529 = vadd.f32 %v2526, %v2528
        %v2530 = vmul.f32 %v2344, 0.8333333
        %v2531 = vmul.f32 %v2530, %v2489
        %v2532 = vmul.f32 %v2348, -0.8333333
        %v2533 = vmul.f32 %v2532, %v2494
        %v2534 = vadd.f32 %v2531, %v2533
        %v2535 = vmul.f32 %v2345, 0.8333333
        %v2536 = vmul.f32 %v2535, %v2494
        %v2537 = vmul.f32 %v2349, -0.8333333
        %v2538 = vmul.f32 %v2537, %v2499
        %v2539 = vadd.f32 %v2536, %v2538
        %s2540 = sld [smem:[#allocation2 + $0x40]]
        %v2541 = vstv %s2540
        %v2542 = vmul.f32 %v2541, %v2504
        %v2543 = vadd.f32 %v2333, %v2542
        %s2544 = sld [smem:[#allocation2 + $0x91]]
        %v2545 = vstv %s2544
        %v2546 = vmul.f32 %v2545, %v2504
        %v2547 = vadd.f32 %v2337, %v2546
        %s2548 = sld [smem:[#allocation2 + $0x41]]
        %v2549 = vstv %s2548
        %v2550 = vmul.f32 %v2549, %v2509
        %v2551 = vadd.f32 %v2543, %v2550
        %s2552 = sld [smem:[#allocation2 + $0x92]]
        %v2553 = vstv %s2552
        %v2554 = vmul.f32 %v2553, %v2509
        %v2555 = vadd.f32 %v2547, %v2554
        %s2556 = sld [smem:[#allocation2 + $0x42]]
        %v2557 = vstv %s2556
        %v2558 = vmul.f32 %v2557, %v2514
        %v2559 = vadd.f32 %v2551, %v2558
        %s2560 = sld [smem:[#allocation2 + $0x93]]
        %v2561 = vstv %s2560
        %v2562 = vmul.f32 %v2561, %v2514
        %v2563 = vadd.f32 %v2555, %v2562
        %s2564 = sld [smem:[#allocation2 + $0x43]]
        %v2565 = vstv %s2564
        %v2566 = vmul.f32 %v2565, %v2519
        %v2567 = vadd.f32 %v2559, %v2566
        %s2568 = sld [smem:[#allocation2 + $0x94]]
        %v2569 = vstv %s2568
        %v2570 = vmul.f32 %v2569, %v2519
        %v2571 = vadd.f32 %v2563, %v2570
        %s2572 = sld [smem:[#allocation2 + $0x44]]
        %v2573 = vstv %s2572
        %v2574 = vmul.f32 %v2573, %v2524
        %v2575 = vadd.f32 %v2567, %v2574
        %s2576 = sld [smem:[#allocation2 + $0x95]]
        %v2577 = vstv %s2576
        %v2578 = vmul.f32 %v2577, %v2524
        %v2579 = vadd.f32 %v2571, %v2578
        %s2580 = sld [smem:[#allocation2 + $0x45]]
        %v2581 = vstv %s2580
        %v2582 = vmul.f32 %v2581, %v2529
        %v2583 = vadd.f32 %v2575, %v2582
        %s2584 = sld [smem:[#allocation2 + $0x96]]
        %v2585 = vstv %s2584
        %v2586 = vmul.f32 %v2585, %v2529
        %v2587 = vadd.f32 %v2579, %v2586
        %s2588 = sld [smem:[#allocation2 + $0x46]]
        %v2589 = vstv %s2588
        %v2590 = vmul.f32 %v2589, %v2534
        %v2591 = vadd.f32 %v2583, %v2590
        %s2592 = sld [smem:[#allocation2 + $0x97]]
        %v2593 = vstv %s2592
        %v2594 = vmul.f32 %v2593, %v2534
        %v2595 = vadd.f32 %v2587, %v2594
        %s2596 = sld [smem:[#allocation2 + $0x47]]
        %v2597 = vstv %s2596
        %v2598 = vmul.f32 %v2597, %v2539
        %v2599 = vadd.f32 %v2591, %v2598
        %s2600 = sld [smem:[#allocation2 + $0x98]]
        %v2601 = vstv %s2600
        %v2602 = vmul.f32 %v2601, %v2539
        %v2603 = vadd.f32 %v2595, %v2602
        %s2604 = scalar_lea.vmem %s218, 64 [#allocation4]
        %v2605 = vld [vmem:[%s2604] sm:$0xff]
        %v2606 = vxor.u32 %v2605, 2147483648
        %v2607 = vmul.f32 %v2606, 1.442695
        %v2608 = vpow.pop %v2607
        %v2609 = vadd.f32 %v2608, 1.0
        %v2610 = vrcp.pop %v2609
        %v2611 = vmul.f32 %v2609, %v2610
        %v2612 = vsub.f32 1.0, %v2611
        %v2613 = vmul.f32 %v2610, %v2612
        %v2614 = vadd.f32 %v2610, %v2613
        %vm2615 = vweird.f32 %v2609
        %vm2616 = vweird.f32 %v2610
        %vm2617 = vmor %vm2615, %vm2616
        %v2618 = vsel %vm2617, %v2610, %v2614
        %v2619 = vand.u32 2147483647, %v2609
        %vm2620 = vcmp.eq.f32.partialorder %v2619, 8.507059e+37
        %v2621 = vand.u32 %v2609, 2147483648
        %v2622 = vor.u32 1.1754944e-38, %v2621
        %v2623 = vsel %vm2620, %v2622, %v2618
        %v2624 = vmul.f32 1.0, %v2623
        %v2625 = vmul.f32 %v2605, %v2624
        %s2626 = sld [smem:[#allocation2 + $0x48]]
        %v2627 = vstv %s2626
        %v2628 = vmul.f32 %v2627, %v2625
        %v2629 = vadd.f32 %v2599, %v2628
        %s2630 = sld [smem:[#allocation2 + $0x99]]
        %v2631 = vstv %s2630
        %v2632 = vmul.f32 %v2631, %v2625
        %v2633 = vadd.f32 %v2603, %v2632
        %v2634 = vsub.f32 %v2605, -2.2
        %v2635 = vsub.f32 %v2605, -1.8
        %v2636 = vsub.f32 %v2605, -1.4
        %v2637 = vsub.f32 %v2605, -1.0
        %v2638 = vsub.f32 %v2605, -0.6
        %v2639 = vsub.f32 %v2605, -0.2
        %v2640 = vsub.f32 %v2605, 0.2
        %v2641 = vsub.f32 %v2605, 0.6
        %v2642 = vsub.f32 %v2605, 1.0
        %v2643 = vsub.f32 %v2605, 1.4
        %v2644 = vsub.f32 %v2605, 1.8
        %v2645 = vsub.f32 %v2605, 2.2
        %vm2646 = vcmp.ge.f32.partialorder %v2634, 0.0
        %vm2647 = vcmp.lt.f32.partialorder %v2635, 0.0
        %vm2648 = vmand %vm2646, %vm2647
        %v2649 = vsel %vm2648, 1, 0
        %v2650 = vcvt.s32.f32 %v2649
        %vm2651 = vcmp.ge.f32.partialorder %v2635, 0.0
        %vm2652 = vcmp.lt.f32.partialorder %v2636, 0.0
        %vm2653 = vmand %vm2651, %vm2652
        %v2654 = vsel %vm2653, 1, 0
        %v2655 = vcvt.s32.f32 %v2654
        %vm2656 = vcmp.ge.f32.partialorder %v2636, 0.0
        %vm2657 = vcmp.lt.f32.partialorder %v2637, 0.0
        %vm2658 = vmand %vm2656, %vm2657
        %v2659 = vsel %vm2658, 1, 0
        %v2660 = vcvt.s32.f32 %v2659
        %vm2661 = vcmp.ge.f32.partialorder %v2637, 0.0
        %vm2662 = vcmp.lt.f32.partialorder %v2638, 0.0
        %vm2663 = vmand %vm2661, %vm2662
        %v2664 = vsel %vm2663, 1, 0
        %v2665 = vcvt.s32.f32 %v2664
        %vm2666 = vcmp.ge.f32.partialorder %v2638, 0.0
        %vm2667 = vcmp.lt.f32.partialorder %v2639, 0.0
        %vm2668 = vmand %vm2666, %vm2667
        %v2669 = vsel %vm2668, 1, 0
        %v2670 = vcvt.s32.f32 %v2669
        %vm2671 = vcmp.ge.f32.partialorder %v2639, 0.0
        %vm2672 = vcmp.lt.f32.partialorder %v2640, 0.0
        %vm2673 = vmand %vm2671, %vm2672
        %v2674 = vsel %vm2673, 1, 0
        %v2675 = vcvt.s32.f32 %v2674
        %vm2676 = vcmp.ge.f32.partialorder %v2640, 0.0
        %vm2677 = vcmp.lt.f32.partialorder %v2641, 0.0
        %vm2678 = vmand %vm2676, %vm2677
        %v2679 = vsel %vm2678, 1, 0
        %v2680 = vcvt.s32.f32 %v2679
        %vm2681 = vcmp.ge.f32.partialorder %v2641, 0.0
        %vm2682 = vcmp.lt.f32.partialorder %v2642, 0.0
        %vm2683 = vmand %vm2681, %vm2682
        %v2684 = vsel %vm2683, 1, 0
        %v2685 = vcvt.s32.f32 %v2684
        %vm2686 = vcmp.ge.f32.partialorder %v2642, 0.0
        %vm2687 = vcmp.lt.f32.partialorder %v2643, 0.0
        %vm2688 = vmand %vm2686, %vm2687
        %v2689 = vsel %vm2688, 1, 0
        %v2690 = vcvt.s32.f32 %v2689
        %vm2691 = vcmp.ge.f32.partialorder %v2643, 0.0
        %vm2692 = vcmp.lt.f32.partialorder %v2644, 0.0
        %vm2693 = vmand %vm2691, %vm2692
        %v2694 = vsel %vm2693, 1, 0
        %v2695 = vcvt.s32.f32 %v2694
        %vm2696 = vcmp.ge.f32.partialorder %v2644, 0.0
        %vm2697 = vcmp.lt.f32.partialorder %v2645, 0.0
        %vm2698 = vmand %vm2696, %vm2697
        %v2699 = vsel %vm2698, 1, 0
        %v2700 = vcvt.s32.f32 %v2699
        %v2701 = vmul.f32 %v2634, 2.5
        %v2702 = vmul.f32 %v2701, %v2650
        %v2703 = vmul.f32 %v2636, -2.5
        %v2704 = vmul.f32 %v2703, %v2655
        %v2705 = vadd.f32 %v2702, %v2704
        %v2706 = vmul.f32 %v2635, 2.5
        %v2707 = vmul.f32 %v2706, %v2655
        %v2708 = vmul.f32 %v2637, -2.5
        %v2709 = vmul.f32 %v2708, %v2660
        %v2710 = vadd.f32 %v2707, %v2709
        %v2711 = vmul.f32 %v2636, 2.5
        %v2712 = vmul.f32 %v2711, %v2660
        %v2713 = vmul.f32 %v2638, -2.5
        %v2714 = vmul.f32 %v2713, %v2665
        %v2715 = vadd.f32 %v2712, %v2714
        %v2716 = vmul.f32 %v2637, 2.5
        %v2717 = vmul.f32 %v2716, %v2665
        %v2718 = vmul.f32 %v2639, -2.5
        %v2719 = vmul.f32 %v2718, %v2670
        %v2720 = vadd.f32 %v2717, %v2719
        %v2721 = vmul.f32 %v2638, 2.5
        %v2722 = vmul.f32 %v2721, %v2670
        %v2723 = vmul.f32 %v2640, -2.5
        %v2724 = vmul.f32 %v2723, %v2675
        %v2725 = vadd.f32 %v2722, %v2724
        %v2726 = vmul.f32 %v2639, 2.5
        %v2727 = vmul.f32 %v2726, %v2675
        %v2728 = vmul.f32 %v2641, -2.5
        %v2729 = vmul.f32 %v2728, %v2680
        %v2730 = vadd.f32 %v2727, %v2729
        %v2731 = vmul.f32 %v2640, 2.5
        %v2732 = vmul.f32 %v2731, %v2680
        %v2733 = vmul.f32 %v2642, -2.5
        %v2734 = vmul.f32 %v2733, %v2685
        %v2735 = vadd.f32 %v2732, %v2734
        %v2736 = vmul.f32 %v2641, 2.5
        %v2737 = vmul.f32 %v2736, %v2685
        %v2738 = vmul.f32 %v2643, -2.5
        %v2739 = vmul.f32 %v2738, %v2690
        %v2740 = vadd.f32 %v2737, %v2739
        %v2741 = vmul.f32 %v2642, 2.5
        %v2742 = vmul.f32 %v2741, %v2690
        %v2743 = vmul.f32 %v2644, -2.5
        %v2744 = vmul.f32 %v2743, %v2695
        %v2745 = vadd.f32 %v2742, %v2744
        %v2746 = vmul.f32 %v2643, 2.5
        %v2747 = vmul.f32 %v2746, %v2695
        %v2748 = vmul.f32 %v2645, -2.5
        %v2749 = vmul.f32 %v2748, %v2700
        %v2750 = vadd.f32 %v2747, %v2749
        %v2751 = vmul.f32 %v2634, 1.25
        %v2752 = vmul.f32 %v2751, %v2705
        %v2753 = vmul.f32 %v2637, -1.25
        %v2754 = vmul.f32 %v2753, %v2710
        %v2755 = vadd.f32 %v2752, %v2754
        %v2756 = vmul.f32 %v2635, 1.25
        %v2757 = vmul.f32 %v2756, %v2710
        %v2758 = vmul.f32 %v2638, -1.25
        %v2759 = vmul.f32 %v2758, %v2715
        %v2760 = vadd.f32 %v2757, %v2759
        %v2761 = vmul.f32 %v2636, 1.25
        %v2762 = vmul.f32 %v2761, %v2715
        %v2763 = vmul.f32 %v2639, -1.25
        %v2764 = vmul.f32 %v2763, %v2720
        %v2765 = vadd.f32 %v2762, %v2764
        %v2766 = vmul.f32 %v2637, 1.25
        %v2767 = vmul.f32 %v2766, %v2720
        %v2768 = vmul.f32 %v2640, -1.25
        %v2769 = vmul.f32 %v2768, %v2725
        %v2770 = vadd.f32 %v2767, %v2769
        %v2771 = vmul.f32 %v2638, 1.25
        %v2772 = vmul.f32 %v2771, %v2725
        %v2773 = vmul.f32 %v2641, -1.25
        %v2774 = vmul.f32 %v2773, %v2730
        %v2775 = vadd.f32 %v2772, %v2774
        %v2776 = vmul.f32 %v2639, 1.25
        %v2777 = vmul.f32 %v2776, %v2730
        %v2778 = vmul.f32 %v2642, -1.25
        %v2779 = vmul.f32 %v2778, %v2735
        %v2780 = vadd.f32 %v2777, %v2779
        %v2781 = vmul.f32 %v2640, 1.25
        %v2782 = vmul.f32 %v2781, %v2735
        %v2783 = vmul.f32 %v2643, -1.25
        %v2784 = vmul.f32 %v2783, %v2740
        %v2785 = vadd.f32 %v2782, %v2784
        %v2786 = vmul.f32 %v2641, 1.25
        %v2787 = vmul.f32 %v2786, %v2740
        %v2788 = vmul.f32 %v2644, -1.25
        %v2789 = vmul.f32 %v2788, %v2745
        %v2790 = vadd.f32 %v2787, %v2789
        %v2791 = vmul.f32 %v2642, 1.25
        %v2792 = vmul.f32 %v2791, %v2745
        %v2793 = vmul.f32 %v2645, -1.25
        %v2794 = vmul.f32 %v2793, %v2750
        %v2795 = vadd.f32 %v2792, %v2794
        %v2796 = vmul.f32 %v2634, 0.8333333
        %v2797 = vmul.f32 %v2796, %v2755
        %v2798 = vmul.f32 %v2638, -0.8333333
        %v2799 = vmul.f32 %v2798, %v2760
        %v2800 = vadd.f32 %v2797, %v2799
        %v2801 = vmul.f32 %v2635, 0.8333333
        %v2802 = vmul.f32 %v2801, %v2760
        %v2803 = vmul.f32 %v2639, -0.8333333
        %v2804 = vmul.f32 %v2803, %v2765
        %v2805 = vadd.f32 %v2802, %v2804
        %v2806 = vmul.f32 %v2636, 0.8333333
        %v2807 = vmul.f32 %v2806, %v2765
        %v2808 = vmul.f32 %v2640, -0.8333333
        %v2809 = vmul.f32 %v2808, %v2770
        %v2810 = vadd.f32 %v2807, %v2809
        %v2811 = vmul.f32 %v2637, 0.8333333
        %v2812 = vmul.f32 %v2811, %v2770
        %v2813 = vmul.f32 %v2641, -0.8333333
        %v2814 = vmul.f32 %v2813, %v2775
        %v2815 = vadd.f32 %v2812, %v2814
        %v2816 = vmul.f32 %v2638, 0.8333333
        %v2817 = vmul.f32 %v2816, %v2775
        %v2818 = vmul.f32 %v2642, -0.8333333
        %v2819 = vmul.f32 %v2818, %v2780
        %v2820 = vadd.f32 %v2817, %v2819
        %v2821 = vmul.f32 %v2639, 0.8333333
        %v2822 = vmul.f32 %v2821, %v2780
        %v2823 = vmul.f32 %v2643, -0.8333333
        %v2824 = vmul.f32 %v2823, %v2785
        %v2825 = vadd.f32 %v2822, %v2824
        %v2826 = vmul.f32 %v2640, 0.8333333
        %v2827 = vmul.f32 %v2826, %v2785
        %v2828 = vmul.f32 %v2644, -0.8333333
        %v2829 = vmul.f32 %v2828, %v2790
        %v2830 = vadd.f32 %v2827, %v2829
        %v2831 = vmul.f32 %v2641, 0.8333333
        %v2832 = vmul.f32 %v2831, %v2790
        %v2833 = vmul.f32 %v2645, -0.8333333
        %v2834 = vmul.f32 %v2833, %v2795
        %v2835 = vadd.f32 %v2832, %v2834
        %s2836 = sld [smem:[#allocation2 + $0x49]]
        %v2837 = vstv %s2836
        %v2838 = vmul.f32 %v2837, %v2800
        %v2839 = vadd.f32 %v2629, %v2838
        %s2840 = sld [smem:[#allocation2 + $0x9a]]
        %v2841 = vstv %s2840
        %v2842 = vmul.f32 %v2841, %v2800
        %v2843 = vadd.f32 %v2633, %v2842
        %s2844 = sld [smem:[#allocation2 + $0x4a]]
        %v2845 = vstv %s2844
        %v2846 = vmul.f32 %v2845, %v2805
        %v2847 = vadd.f32 %v2839, %v2846
        %s2848 = sld [smem:[#allocation2 + $0x9b]]
        %v2849 = vstv %s2848
        %v2850 = vmul.f32 %v2849, %v2805
        %v2851 = vadd.f32 %v2843, %v2850
        %s2852 = sld [smem:[#allocation2 + $0x4b]]
        %v2853 = vstv %s2852
        %v2854 = vmul.f32 %v2853, %v2810
        %v2855 = vadd.f32 %v2847, %v2854
        %s2856 = sld [smem:[#allocation2 + $0x9c]]
        %v2857 = vstv %s2856
        %v2858 = vmul.f32 %v2857, %v2810
        %v2859 = vadd.f32 %v2851, %v2858
        %s2860 = sld [smem:[#allocation2 + $0x4c]]
        %v2861 = vstv %s2860
        %v2862 = vmul.f32 %v2861, %v2815
        %v2863 = vadd.f32 %v2855, %v2862
        %s2864 = sld [smem:[#allocation2 + $0x9d]]
        %v2865 = vstv %s2864
        %v2866 = vmul.f32 %v2865, %v2815
        %v2867 = vadd.f32 %v2859, %v2866
        %s2868 = sld [smem:[#allocation2 + $0x4d]]
        %v2869 = vstv %s2868
        %v2870 = vmul.f32 %v2869, %v2820
        %v2871 = vadd.f32 %v2863, %v2870
        %s2872 = sld [smem:[#allocation2 + $0x9e]]
        %v2873 = vstv %s2872
        %v2874 = vmul.f32 %v2873, %v2820
        %v2875 = vadd.f32 %v2867, %v2874
        %s2876 = sld [smem:[#allocation2 + $0x4e]]
        %v2877 = vstv %s2876
        %v2878 = vmul.f32 %v2877, %v2825
        %v2879 = vadd.f32 %v2871, %v2878
        %s2880 = sld [smem:[#allocation2 + $0x9f]]
        %v2881 = vstv %s2880
        %v2882 = vmul.f32 %v2881, %v2825
        %v2883 = vadd.f32 %v2875, %v2882
        %s2884 = sld [smem:[#allocation2 + $0x4f]]
        %v2885 = vstv %s2884
        %v2886 = vmul.f32 %v2885, %v2830
        %v2887 = vadd.f32 %v2879, %v2886
        %s2888 = sld [smem:[#allocation2 + $0xa0]]
        %v2889 = vstv %s2888
        %v2890 = vmul.f32 %v2889, %v2830
        %v2891 = vadd.f32 %v2883, %v2890
        %s2892 = sld [smem:[#allocation2 + $0x50]]
        %v2893 = vstv %s2892
        %v2894 = vmul.f32 %v2893, %v2835
        %v2895 = vadd.f32 %v2887, %v2894
        %s2896 = sld [smem:[#allocation2 + $0xa1]]
        %v2897 = vstv %s2896
        %v2898 = vmul.f32 %v2897, %v2835
        %v2899 = vadd.f32 %v2891, %v2898
        %2900 = vst [vmem:[%s236] sm:$0xff] %v2895
        %s2901 = scalar_lea.vmem %s236, 8 [#allocation5]
        %2902 = vst [vmem:[%s2901] sm:$0xff] %v2899
        %s2903 = sand.u32 %s85, 1
        %s2904 = sand.u32 %s85, 1
        %s2905 = smul.addr %s2904, 16
        %s2906 = scalar_lea.vmem [#allocation5], %s2905
        // Predicated region
        $region71: #{cnn_kan_forward.15} parent=61 // pred_check
          %p2907 = pneg %p95
        $region72: #{cnn_kan_forward.15} parent=61 // pred_check_branch
          %2909 = sbr.rel (%p2907) target = $region74
        $region73: #{cnn_kan_forward.15} parent=61 // pred_region
          %s2910 = smul.addr %s18, 2
          %s2911 = sadd.s32 %s19, %s2910
          %s2912 = smul.addr %s2911, 8
          %s2913 = scalar_lea.vmem %s2, %s2912
          // Predicated region
          $region75: #{cnn_kan_forward.15} parent=73 // pred_check
            _
          $region76: #{cnn_kan_forward.15} parent=73 // pred_check_branch
            %2915 = sbr.rel (0) target = $region78
          $region77: #{cnn_kan_forward.15} parent=73 // pred_region
            // Predicated region
            $region79: #{cnn_kan_forward.15} parent=77 // pred_check
              _
            $region80: #{cnn_kan_forward.15} parent=77 // pred_check_branch
              %2917 = sbr.rel (0) target = $region82
            $region81: #{cnn_kan_forward.15} parent=77 // pred_region
              // Predicated region
              $region94: #{cnn_kan_forward.15} parent=81 // pred_check
                _
              $region95: #{cnn_kan_forward.15} parent=81 // pred_check_branch
                %2935 = sbr.rel (0) target = $region97
              $region96: #{cnn_kan_forward.15} parent=81 // pred_region
                loop: start=0, step=1, limit=1
                $region98: #{cnn_kan_forward.15} parent=96 // loop_pre_header
                  _
                $region99: #{cnn_kan_forward.15} parent=96 // loop_header
                  %s2937 = sphi 0, %s2941
                  %p2938 = scmp.ge.s32.totalorder %s2937, 1
                  %s2942 = sphi %s2906, %s2906
                  %s2943 = sphi %s2913, %s2913
                $region100: #{cnn_kan_forward.15} parent=96 // loop_header_branch
                  %2940 = sbr.rel (%p2938) target = $region104
                $region101: #{cnn_kan_forward.15} parent=96 // loop_body
                  %v2944 = vld [vmem:[%s2942] sm:$0xff]
                  %2945 = vst [vmem:[%s2943] sm:$0xff] %v2944
                  %v2946 = vld [vmem:[%s2942 + $0x8] sm:$0xff]
                  %2947 = vst [vmem:[%s2943 + $0x10] sm:$0xff] %v2946
                $region102: #{cnn_kan_forward.15} parent=96 // loop_footer
                  %s2941 = sadd.s32 1, %s2937
                $region103: #{cnn_kan_forward.15} parent=96 // loop_footer_branch
                  %2936 = sbr.rel target = $region99
                $region104: #{cnn_kan_forward.15} parent=96 // loop_exit
                  _
              $region97: #{cnn_kan_forward.15} parent=81 // pred_fallthru
                _
              // Predicated region
              $region105: #{cnn_kan_forward.15} parent=81 // pred_check
                _
              $region106: #{cnn_kan_forward.15} parent=81 // pred_check_branch
                %2949 = sbr.rel target = $region108
              $region107: #{cnn_kan_forward.15} parent=81 // pred_region
                _
              $region108: #{cnn_kan_forward.15} parent=81 // pred_fallthru
                _
            $region82: #{cnn_kan_forward.15} parent=77 // pred_fallthru
              _
            // Predicated region
            $region83: #{cnn_kan_forward.15} parent=77 // pred_check
              _
            $region84: #{cnn_kan_forward.15} parent=77 // pred_check_branch
              %2919 = sbr.rel target = $region86
            $region85: #{cnn_kan_forward.15} parent=77 // pred_region
              %s2921 = ssub.s32 256, 1
              loop: start=0, step=1, limit=1
              $region87: #{cnn_kan_forward.15} parent=85 // loop_pre_header
                _
              $region88: #{cnn_kan_forward.15} parent=85 // loop_header
                %s2923 = sphi 0, %s2927
                %p2924 = scmp.ge.s32.totalorder %s2923, 1
                %s2928 = sphi %s2906, %s2906
                %s2929 = sphi %s2913, %s2913
              $region89: #{cnn_kan_forward.15} parent=85 // loop_header_branch
                %2926 = sbr.rel (%p2924) target = $region93
              $region90: #{cnn_kan_forward.15} parent=85 // loop_body
                %v2930 = vld [vmem:[%s2928] sm:%s2921]
                %2931 = vst [vmem:[%s2929] sm:%s2921] %v2930
                %v2932 = vld [vmem:[%s2928 + $0x8] sm:%s2921]
                %2933 = vst [vmem:[%s2929 + $0x10] sm:%s2921] %v2932
              $region91: #{cnn_kan_forward.15} parent=85 // loop_footer
                %s2927 = sadd.s32 1, %s2923
              $region92: #{cnn_kan_forward.15} parent=85 // loop_footer_branch
                %2922 = sbr.rel target = $region88
              $region93: #{cnn_kan_forward.15} parent=85 // loop_exit
                _
            $region86: #{cnn_kan_forward.15} parent=77 // pred_fallthru
              _
          $region78: #{cnn_kan_forward.15} parent=73 // pred_fallthru
            _
          %2950 = vnop
        $region74: #{cnn_kan_forward.15} parent=61 // pred_fallthru
          _
      $region62: #{cnn_kan_forward.15} parent=5 // pred_fallthru
        _
      %p2951 = scmp.le.s32.totalorder 2, %s9
      // Predicated region
      $region109: #{cnn_kan_forward.15} parent=5 // pred_check
        %p2952 = pneg %p2951
      $region110: #{cnn_kan_forward.15} parent=5 // pred_check_branch
        %2954 = sbr.rel (%p2952) target = $region112
      $region111: #{cnn_kan_forward.15} parent=5 // pred_region
        %s2955 = ssub.s32 %s9, 2
        // Predicated region
        $region113: #{cnn_kan_forward.15} parent=111 // pred_check
          %p2956 = pneg %p101
        $region114: #{cnn_kan_forward.15} parent=111 // pred_check_branch
          %2958 = sbr.rel (%p2956) target = $region116
        $region115: #{cnn_kan_forward.15} parent=111 // pred_region
          %s2959 = sand.u32 %s86, 1
          %s2960 = sand.u32 %s86, 1
          %s2961 = smul.addr %s2960, 16
          %s2962 = scalar_lea.vmem [#allocation5], %s2961
        $region116: #{cnn_kan_forward.15} parent=111 // pred_fallthru
          _
      $region112: #{cnn_kan_forward.15} parent=5 // pred_fallthru
        _
    $region6: #{cnn_kan_forward.15} parent=1 // loop_footer
      %s13 = sadd.s32 1, %s9
    $region7: #{cnn_kan_forward.15} parent=1 // loop_footer_branch
      %8 = sbr.rel target = $region3
    $region8: #{cnn_kan_forward.15} parent=1 // loop_exit
      _
    %2963 = vsyncpa [#allocation3], 1
    %s2964 = scalar_lea.sflag [#allocation3], 1
    %2965 = vsyncpa %s2964, 1

</llo_original>
